<compile_context>
chip_gen: v7x
topology: tpu7x:2x2x1
jax: 0.10.0
libtpu: 0.0.40
codegen_flags: <defaults>
</compile_context>

<pallas_src>
import functools

import jax
import jax.numpy as jnp
from jax import lax
from jax.experimental import pallas as pl
from jax.experimental.pallas import tpu as pltpu

EPS = 1e-5


def _pick_row_tile(m):
    for t in (512, 256, 224, 128, 112, 64, 16):
        if m % t == 0:
            return t
    return m


def _pick_h_tile(h, w):
    for th in (4, 2, 8, 7, 14, 1):
        if th <= h and h % th == 0 and (th * w) % 16 == 0:
            return th
    return h


# ---------------- kernel A: ReLU + 1x1 conv (+ per-channel stats) ------------

def _relu_conv1x1_kernel(x_ref, w_ref, y_ref, st_ref):
    x = jnp.maximum(x_ref[...], 0.0)                       # relu43 (bf16)
    acc = jnp.dot(x, w_ref[...], preferred_element_type=jnp.float32)
    y_ref[...] = acc.astype(y_ref.dtype)
    st_ref[0, 0:1, :] = jnp.sum(acc, axis=0, keepdims=True)
    st_ref[0, 1:2, :] = jnp.sum(acc * acc, axis=0, keepdims=True)


def relu_conv1x1(x2d, w, *, tm):
    m, k = x2d.shape
    cout = w.shape[1]
    g = m // tm
    return pl.pallas_call(
        _relu_conv1x1_kernel,
        out_shape=(jax.ShapeDtypeStruct((m, cout), jnp.bfloat16),
                   jax.ShapeDtypeStruct((g, 2, cout), jnp.float32)),
        grid=(g,),
        in_specs=[pl.BlockSpec((tm, k), lambda i: (i, 0)),
                  pl.BlockSpec((k, cout), lambda i: (0, 0))],
        out_specs=[pl.BlockSpec((tm, cout), lambda i: (i, 0)),
                   pl.BlockSpec((1, 2, cout), lambda i: (i, 0, 0))],
        compiler_params=pltpu.CompilerParams(dimension_semantics=("parallel",)),
    )(x2d, w)


# -------- kernel B: fused BN1+ReLU prologue + dilated 3x3 conv (+ stats) -----

def _dilated_conv_kernel(scale_ref, shift_ref, x_ref, w_ref, y_ref, st_ref,
                         zbuf, acc, *, th):
    H, W, C = x_ref.shape[1], x_ref.shape[2], x_ref.shape[3]
    r = pl.program_id(1)

    # Stage BN1(scale,shift)+ReLU of image rows [r*th-2, r*th+th+2) into a
    # zero-padded VMEM scratch (halo + width padding live only in VMEM).
    zbuf[...] = jnp.zeros_like(zbuf)
    scale = scale_ref[...]                                  # (1, C) f32
    shift = shift_ref[...]
    base = r * th - 2
    for j in range(th + 4):
        src = base + j

        @pl.when(jnp.logical_and(src >= 0, src < H))
        def _(j=j, src=src):
            row = x_ref[0, pl.ds(src, 1), :, :].astype(jnp.float32)   # (1, W, C)
            z = jnp.maximum(row * scale + shift, 0.0)                 # BN1 + relu46
            zbuf[pl.ds(j, 1), pl.ds(2, W), :] = z.astype(zbuf.dtype)

    # 9 dilated taps: small bf16 matmuls accumulated in a VMEM f32 accumulator.
    for kh in range(3):
        for kw in range(3):
            xs = zbuf[pl.ds(2 * kh, th), pl.ds(2 * kw, W), :]
            xs = xs.reshape(th * W, C)
            v = jnp.dot(xs, w_ref[kh * 3 + kw], preferred_element_type=jnp.float32)
            if kh == 0 and kw == 0:
                acc[...] = v
            else:
                acc[...] += v

    a = acc[...]
    y_ref[...] = a.astype(y_ref.dtype)                      # lane-dense flat slab
    st_ref[0, 0, 0:1, :] = jnp.sum(a, axis=0, keepdims=True)
    st_ref[0, 0, 1:2, :] = jnp.sum(a * a, axis=0, keepdims=True)


def dilated_conv_bn_relu(y1_img, w9, scale1, shift1, *, th):
    n, h, w, c = y1_img.shape
    cout = w9.shape[-1]
    rr = h // th
    kern = functools.partial(_dilated_conv_kernel, th=th)
    return pl.pallas_call(
        kern,
        out_shape=(jax.ShapeDtypeStruct((n * h * w, cout), jnp.bfloat16),
                   jax.ShapeDtypeStruct((n, rr, 2, cout), jnp.float32)),
        grid=(n, rr),
        in_specs=[pl.BlockSpec((1, c), lambda b, r: (0, 0)),
                  pl.BlockSpec((1, c), lambda b, r: (0, 0)),
                  pl.BlockSpec((1, h, w, c), lambda b, r: (b, 0, 0, 0)),
                  pl.BlockSpec((9, c, cout), lambda b, r: (0, 0, 0))],
        out_specs=[pl.BlockSpec((th * w, cout), lambda b, r: (b * rr + r, 0)),
                   pl.BlockSpec((1, 1, 2, cout), lambda b, r: (b, r, 0, 0))],
        scratch_shapes=[pltpu.VMEM((th + 4, w + 4, c), jnp.bfloat16),
                        pltpu.VMEM((th * w, cout), jnp.float32)],
        compiler_params=pltpu.CompilerParams(
            dimension_semantics=("parallel", "parallel")),
    )(scale1, shift1, y1_img, w9)


# ---------------------- kernel C: BatchNorm affine apply ---------------------

def _bn_apply_kernel(x_ref, scale_ref, shift_ref, o_ref):
    o_ref[...] = x_ref[...].astype(jnp.float32) * scale_ref[...] + shift_ref[...]


def bn_apply(x2d, scale, shift, *, tm):
    m, c = x2d.shape
    g = m // tm
    return pl.pallas_call(
        _bn_apply_kernel,
        out_shape=jax.ShapeDtypeStruct((m, c), jnp.float32),
        grid=(g,),
        in_specs=[pl.BlockSpec((tm, c), lambda i: (i, 0)),
                  pl.BlockSpec((1, c), lambda i: (0, 0)),
                  pl.BlockSpec((1, c), lambda i: (0, 0))],
        out_specs=pl.BlockSpec((tm, c), lambda i: (i, 0)),
        compiler_params=pltpu.CompilerParams(dimension_semantics=("parallel",)),
    )(x2d, scale, shift)


# ------------------------------- glue (JAX) ----------------------------------

@jax.jit
def forward(x_nchw, params):
    w1 = params["w1"].astype(jnp.bfloat16)
    w2 = params["w2"].astype(jnp.bfloat16)
    g1, b1 = params["gamma1"], params["beta1"]
    g2, b2 = params["gamma2"], params["beta2"]

    n, cin, h, w = x_nchw.shape
    cmid = w1.shape[1]
    m = n * h * w

    # TODO(synk): NCHW->NHWC boundary transpose is left to XLA (full-HBM pass).
    x2d = jnp.transpose(x_nchw, (0, 2, 3, 1)).reshape(m, cin).astype(jnp.bfloat16)

    tm = _pick_row_tile(m)
    th = _pick_h_tile(h, w)

    # relu43 + conv2d49 (1x1) with in-kernel per-channel sum / sum-of-squares.
    y1, st1 = relu_conv1x1(x2d, w1, tm=tm)
    mean1 = jnp.sum(st1[:, 0, :], axis=0) / m
    var1 = jnp.maximum(jnp.sum(st1[:, 1, :], axis=0) / m - mean1 * mean1, 0.0)
    scale1 = g1 * lax.rsqrt(var1 + EPS)
    shift1 = b1 - mean1 * scale1

    # batchnorm2d49 + relu46 fused into conv2d50 (3x3, dilation 2, padding 2).
    y2, st2 = dilated_conv_bn_relu(
        y1.reshape(n, h, w, cmid), w2,
        scale1.reshape(1, cmid).astype(jnp.float32),
        shift1.reshape(1, cmid).astype(jnp.float32), th=th)
    mean2 = jnp.sum(st2[:, :, 0, :], axis=(0, 1)) / m
    var2 = jnp.maximum(jnp.sum(st2[:, :, 1, :], axis=(0, 1)) / m - mean2 * mean2, 0.0)
    scale2 = g2 * lax.rsqrt(var2 + EPS)
    shift2 = b2 - mean2 * scale2

    # batchnorm2d50 affine apply.
    out2d = bn_apply(y2,
                     scale2.reshape(1, cmid).astype(jnp.float32),
                     shift2.reshape(1, cmid).astype(jnp.float32), tm=tm)
    return jnp.transpose(out2d.reshape(n, h, w, cmid), (0, 3, 1, 2))


def reference(x_nchw, params):
    # pure-JAX reference (f32, HIGHEST precision) for verification
    w1, w2 = params["w1"], params["w2"]
    g1, b1 = params["gamma1"], params["beta1"]
    g2, b2 = params["gamma2"], params["beta2"]
    c, cout = w2.shape[1], w2.shape[2]

    x = jnp.maximum(x_nchw, 0.0)
    x = jnp.transpose(x, (0, 2, 3, 1))                       # NHWC
    w1_hwio = w1.reshape(1, 1, w1.shape[0], w1.shape[1])
    y1 = lax.conv_general_dilated(
        x, w1_hwio, (1, 1), "VALID",
        dimension_numbers=("NHWC", "HWIO", "NHWC"),
        precision=lax.Precision.HIGHEST)
    m1 = jnp.mean(y1, axis=(0, 1, 2))
    v1 = jnp.var(y1, axis=(0, 1, 2))
    z1 = (y1 - m1) * lax.rsqrt(v1 + EPS) * g1 + b1
    z1 = jnp.maximum(z1, 0.0)

    w2_hwio = w2.reshape(3, 3, c, cout)
    y2 = lax.conv_general_dilated(
        z1, w2_hwio, (1, 1), ((2, 2), (2, 2)), rhs_dilation=(2, 2),
        dimension_numbers=("NHWC", "HWIO", "NHWC"),
        precision=lax.Precision.HIGHEST)
    m2 = jnp.mean(y2, axis=(0, 1, 2))
    v2 = jnp.var(y2, axis=(0, 1, 2))
    out = (y2 - m2) * lax.rsqrt(v2 + EPS) * g2 + b2
    return jnp.transpose(out, (0, 3, 1, 2))


if __name__ == "__main__":
    # Module shapes: (1, 1024, 28, 28) -> (1, 256, 28, 28).
    N, Cin, Cmid, H, W = 1, 1024, 256, 28, 28

    key = jax.random.PRNGKey(0)
    ks = jax.random.split(key, 7)
    x = jax.random.normal(ks[0], (N, Cin, H, W), jnp.float32)
    params = dict(
        w1=jax.random.normal(ks[1], (Cin, Cmid), jnp.float32) / jnp.sqrt(float(Cin)),
        w2=jax.random.normal(ks[2], (9, Cmid, Cmid), jnp.float32) / jnp.sqrt(9.0 * Cmid),
        gamma1=1.0 + 0.1 * jax.random.normal(ks[3], (Cmid,), jnp.float32),
        beta1=0.1 * jax.random.normal(ks[4], (Cmid,), jnp.float32),
        gamma2=1.0 + 0.1 * jax.random.normal(ks[5], (Cmid,), jnp.float32),
        beta2=0.1 * jax.random.normal(ks[6], (Cmid,), jnp.float32),
    )

    out = jax.block_until_ready(forward(x, params))
    ref = jax.block_until_ready(reference(x, params))

    assert out.shape == (N, Cmid, H, W), out.shape
    max_err = float(jnp.max(jnp.abs(out - ref)))
    if not max_err < 5e-2:
        raise SystemExit(f"mismatch vs reference: max abs err = {max_err}")
    print("KERNEL_OK")
</pallas_src>

<mosaic_0001>
module attributes {stable_mosaic.version = 11 : i64} {
  func.func @_relu_conv1x1_kernel(%arg0: i32, %arg1: memref<112x1024xbf16, #tpu.memory_space<vmem>>, %arg2: memref<1024x256xbf16, #tpu.memory_space<vmem>>, %arg3: memref<112x256xbf16, #tpu.memory_space<vmem>>, %arg4: memref<1x2x256xf32, #tpu.memory_space<vmem>>) attributes {dimension_semantics = [#tpu.dimension_semantics<parallel>], iteration_bounds = array<i64: 7>, scalar_prefetch = 0 : i64, scratch_operands = 0 : i64, tpu.core_type = #tpu.core_type<tc>, window_params = [{transform_indices = @transform_0, window_bounds = array<i64: 112, 1024>}, {pipeline_mode = #tpu.pipeline_mode<synchronous>, transform_indices = @transform_1, window_bounds = array<i64: 1024, 256>}, {transform_indices = @transform_2, window_bounds = array<i64: 112, 256>}, {transform_indices = @transform_3, window_bounds = array<i64: 1, 2, 256>}]} {
    %c0 = arith.constant 0 : index
    %c0_0 = arith.constant 0 : index
    %0 = vector.load %arg1[%c0, %c0_0] : memref<112x1024xbf16, #tpu.memory_space<vmem>>, vector<112x1024xbf16>
    %cst = arith.constant 0.000000e+00 : bf16
    %1 = vector.broadcast %cst : bf16 to vector<112x1024xbf16>
    %2 = arith.maximumf %0, %1 : vector<112x1024xbf16>
    %c0_1 = arith.constant 0 : index
    %c0_2 = arith.constant 0 : index
    %3 = vector.load %arg2[%c0_1, %c0_2] : memref<1024x256xbf16, #tpu.memory_space<vmem>>, vector<1024x256xbf16>
    %cst_3 = arith.constant dense<0.000000e+00> : vector<112x256xf32>
    %4 = tpu.matmul %2, %3, %cst_3 {dimension_numbers = #tpu.dot_dimension_numbers<[1], [0], [0], [1], [0, 0, 1, 1], [], []>} : vector<112x1024xbf16>, vector<1024x256xbf16>, vector<112x256xf32> -> vector<112x256xf32>
    %5 = arith.truncf %4 : vector<112x256xf32> to vector<112x256xbf16>
    %c0_4 = arith.constant 0 : index
    %c0_5 = arith.constant 0 : index
    %6 = vector.load %arg3[%c0_4, %c0_5] : memref<112x256xbf16, #tpu.memory_space<vmem>>, vector<112x256xbf16>
    tpu.vector_store %arg3[%c0_4, %c0_5], %5 {strides = array<i32>} : memref<112x256xbf16, #tpu.memory_space<vmem>>, vector<112x256xbf16>,
    %cst_6 = arith.constant dense<0.000000e+00> : vector<256xf32>
    %7 = vector.multi_reduction <add>, %4, %cst_6 [0] : vector<112x256xf32> to vector<256xf32>
    %8 = vector.shape_cast %7 : vector<256xf32> to vector<1x256xf32>
    %c0_7 = arith.constant 0 : index
    %c0_8 = arith.constant 0 : index
    %c0_9 = arith.constant 0 : index
    %9 = vector.load %arg4[%c0_7, %c0_8, %c0_9] : memref<1x2x256xf32, #tpu.memory_space<vmem>>, vector<1x1x256xf32>
    %10 = vector.shape_cast %9 : vector<1x1x256xf32> to vector<1x256xf32>
    %11 = vector.shape_cast %8 : vector<1x256xf32> to vector<1x1x256xf32>
    tpu.vector_store %arg4[%c0_7, %c0_8, %c0_9], %11 {strides = array<i32>} : memref<1x2x256xf32, #tpu.memory_space<vmem>>, vector<1x1x256xf32>,
    %12 = arith.mulf %4, %4 : vector<112x256xf32>
    %cst_10 = arith.constant dense<0.000000e+00> : vector<256xf32>
    %13 = vector.multi_reduction <add>, %12, %cst_10 [0] : vector<112x256xf32> to vector<256xf32>
    %14 = vector.shape_cast %13 : vector<256xf32> to vector<1x256xf32>
    %c0_11 = arith.constant 0 : index
    %c1 = arith.constant 1 : index
    %c0_12 = arith.constant 0 : index
    %15 = vector.load %arg4[%c0_11, %c1, %c0_12] : memref<1x2x256xf32, #tpu.memory_space<vmem>>, vector<1x1x256xf32>
    %16 = vector.shape_cast %15 : vector<1x1x256xf32> to vector<1x256xf32>
    %17 = vector.shape_cast %14 : vector<1x256xf32> to vector<1x1x256xf32>
    tpu.vector_store %arg4[%c0_11, %c1, %c0_12], %17 {strides = array<i32>} : memref<1x2x256xf32, #tpu.memory_space<vmem>>, vector<1x1x256xf32>,
    return
  }
  func.func @transform_0(%arg0: i32) -> (i32, i32) {
    %c0_i32 = arith.constant 0 : i32
    %c0_i32_0 = arith.constant 0 : i32
    return %arg0, %c0_i32 : i32, i32
  }
  func.func @transform_1(%arg0: i32) -> (i32, i32) {
    %c0_i32 = arith.constant 0 : i32
    %c0_i32_0 = arith.constant 0 : i32
    %c0_i32_1 = arith.constant 0 : i32
    return %c0_i32, %c0_i32_0 : i32, i32
  }
  func.func @transform_2(%arg0: i32) -> (i32, i32) {
    %c0_i32 = arith.constant 0 : i32
    %c0_i32_0 = arith.constant 0 : i32
    return %arg0, %c0_i32 : i32, i32
  }
  func.func @transform_3(%arg0: i32) -> (i32, i32, i32) {
    %c0_i32 = arith.constant 0 : i32
    %c0_i32_0 = arith.constant 0 : i32
    %c0_i32_1 = arith.constant 0 : i32
    return %arg0, %c0_i32, %c0_i32_0 : i32, i32, i32
  }
}

module attributes {stable_mosaic.version = 11 : i64} {
  func.func @_dilated_conv_kernel(%arg0: i32, %arg1: i32, %arg2: memref<1x256xf32, #tpu.memory_space<vmem>>, %arg3: memref<1x256xf32, #tpu.memory_space<vmem>>, %arg4: memref<1x28x28x256xbf16, #tpu.memory_space<vmem>>, %arg5: memref<9x256x256xbf16, #tpu.memory_space<vmem>>, %arg6: memref<112x256xbf16, #tpu.memory_space<vmem>>, %arg7: memref<1x1x2x256xf32, #tpu.memory_space<vmem>>, %arg8: memref<8x32x256xbf16, #tpu.memory_space<vmem>>, %arg9: memref<112x256xf32, #tpu.memory_space<vmem>>) attributes {dimension_semantics = [#tpu.dimension_semantics<parallel>, #tpu.dimension_semantics<parallel>], iteration_bounds = array<i64: 1, 7>, scalar_prefetch = 0 : i64, scratch_operands = 2 : i64, tpu.core_type = #tpu.core_type<tc>, window_params = [{pipeline_mode = #tpu.pipeline_mode<synchronous>, transform_indices = @transform_0, window_bounds = array<i64: 1, 256>}, {pipeline_mode = #tpu.pipeline_mode<synchronous>, transform_indices = @transform_1, window_bounds = array<i64: 1, 256>}, {transform_indices = @transform_2, window_bounds = array<i64: 1, 28, 28, 256>}, {pipeline_mode = #tpu.pipeline_mode<synchronous>, transform_indices = @transform_3, window_bounds = array<i64: 9, 256, 256>}, {transform_indices = @transform_4, window_bounds = array<i64: 112, 256>}, {transform_indices = @transform_5, window_bounds = array<i64: 1, 1, 2, 256>}]} {
    %cst = arith.constant 0.000000e+00 : bf16
    %0 = vector.broadcast %cst : bf16 to vector<8x32x256xbf16>
    %c0 = arith.constant 0 : index
    %c0_0 = arith.constant 0 : index
    %c0_1 = arith.constant 0 : index
    %1 = vector.load %arg8[%c0, %c0_0, %c0_1] : memref<8x32x256xbf16, #tpu.memory_space<vmem>>, vector<8x32x256xbf16>
    tpu.vector_store %arg8[%c0, %c0_0, %c0_1], %0 {strides = array<i32>} : memref<8x32x256xbf16, #tpu.memory_space<vmem>>, vector<8x32x256xbf16>,
    %c0_2 = arith.constant 0 : index
    %c0_3 = arith.constant 0 : index
    %2 = vector.load %arg2[%c0_2, %c0_3] : memref<1x256xf32, #tpu.memory_space<vmem>>, vector<1x256xf32>
    %c0_4 = arith.constant 0 : index
    %c0_5 = arith.constant 0 : index
    %3 = vector.load %arg3[%c0_4, %c0_5] : memref<1x256xf32, #tpu.memory_space<vmem>>, vector<1x256xf32>
    %c4_i32 = arith.constant 4 : i32
    %4 = arith.muli %arg1, %c4_i32 : i32
    %c2_i32 = arith.constant 2 : i32
    %5 = arith.subi %4, %c2_i32 : i32
    %c0_i32 = arith.constant 0 : i32
    %6 = arith.addi %5, %c0_i32 : i32
    %c0_i32_6 = arith.constant 0 : i32
    %7 = arith.cmpi sge, %6, %c0_i32_6 : i32
    %c28_i32 = arith.constant 28 : i32
    %8 = arith.cmpi slt, %6, %c28_i32 : i32
    %9 = arith.andi %7, %8 : i1
    %10 = arith.extui %9 : i1 to i32
    %c0_i32_7 = arith.constant 0 : i32
    %11 = arith.cmpi ne, %10, %c0_i32_7 : i32
    scf.if %11 {
      %c0_134 = arith.constant 0 : index
      %138 = arith.index_cast %6 : i32 to index
      %c0_135 = arith.constant 0 : index
      %c0_136 = arith.constant 0 : index
      %139 = vector.load %arg4[%c0_134, %138, %c0_135, %c0_136] : memref<1x28x28x256xbf16, #tpu.memory_space<vmem>>, vector<1x1x28x256xbf16>
      %140 = vector.shape_cast %139 : vector<1x1x28x256xbf16> to vector<1x28x256xbf16>
      %141 = arith.extf %140 : vector<1x28x256xbf16> to vector<1x28x256xf32>
      %142 = vector.shape_cast %2 : vector<1x256xf32> to vector<1x1x256xf32>
      %143 = vector.broadcast %142 : vector<1x1x256xf32> to vector<1x28x256xf32>
      %144 = arith.mulf %141, %143 : vector<1x28x256xf32>
      %145 = vector.shape_cast %3 : vector<1x256xf32> to vector<1x1x256xf32>
      %146 = vector.broadcast %145 : vector<1x1x256xf32> to vector<1x28x256xf32>
      %147 = arith.addf %144, %146 : vector<1x28x256xf32>
      %cst_137 = arith.constant 0.000000e+00 : f32
      %148 = vector.broadcast %cst_137 : f32 to vector<1x28x256xf32>
      %149 = arith.maximumf %147, %148 : vector<1x28x256xf32>
      %150 = arith.truncf %149 : vector<1x28x256xf32> to vector<1x28x256xbf16>
      %c0_138 = arith.constant 0 : index
      %c2_139 = arith.constant 2 : index
      %c0_140 = arith.constant 0 : index
      %151 = vector.load %arg8[%c0_138, %c2_139, %c0_140] : memref<8x32x256xbf16, #tpu.memory_space<vmem>>, vector<1x28x256xbf16>
      tpu.vector_store %arg8[%c0_138, %c2_139, %c0_140], %150 {strides = array<i32>} : memref<8x32x256xbf16, #tpu.memory_space<vmem>>, vector<1x28x256xbf16>,
    } else {
    }
    %c1_i32 = arith.constant 1 : i32
    %12 = arith.addi %5, %c1_i32 : i32
    %c0_i32_8 = arith.constant 0 : i32
    %13 = arith.cmpi sge, %12, %c0_i32_8 : i32
    %c28_i32_9 = arith.constant 28 : i32
    %14 = arith.cmpi slt, %12, %c28_i32_9 : i32
    %15 = arith.andi %13, %14 : i1
    %16 = arith.extui %15 : i1 to i32
    %c0_i32_10 = arith.constant 0 : i32
    %17 = arith.cmpi ne, %16, %c0_i32_10 : i32
    scf.if %17 {
      %c0_134 = arith.constant 0 : index
      %138 = arith.index_cast %12 : i32 to index
      %c0_135 = arith.constant 0 : index
      %c0_136 = arith.constant 0 : index
      %139 = vector.load %arg4[%c0_134, %138, %c0_135, %c0_136] : memref<1x28x28x256xbf16, #tpu.memory_space<vmem>>, vector<1x1x28x256xbf16>
      %140 = vector.shape_cast %139 : vector<1x1x28x256xbf16> to vector<1x28x256xbf16>
      %141 = arith.extf %140 : vector<1x28x256xbf16> to vector<1x28x256xf32>
      %142 = vector.shape_cast %2 : vector<1x256xf32> to vector<1x1x256xf32>
      %143 = vector.broadcast %142 : vector<1x1x256xf32> to vector<1x28x256xf32>
      %144 = arith.mulf %141, %143 : vector<1x28x256xf32>
      %145 = vector.shape_cast %3 : vector<1x256xf32> to vector<1x1x256xf32>
      %146 = vector.broadcast %145 : vector<1x1x256xf32> to vector<1x28x256xf32>
      %147 = arith.addf %144, %146 : vector<1x28x256xf32>
      %cst_137 = arith.constant 0.000000e+00 : f32
      %148 = vector.broadcast %cst_137 : f32 to vector<1x28x256xf32>
      %149 = arith.maximumf %147, %148 : vector<1x28x256xf32>
      %150 = arith.truncf %149 : vector<1x28x256xf32> to vector<1x28x256xbf16>
      %c1_138 = arith.constant 1 : index
      %c2_139 = arith.constant 2 : index
      %c0_140 = arith.constant 0 : index
      %151 = vector.load %arg8[%c1_138, %c2_139, %c0_140] : memref<8x32x256xbf16, #tpu.memory_space<vmem>>, vector<1x28x256xbf16>
      tpu.vector_store %arg8[%c1_138, %c2_139, %c0_140], %150 {strides = array<i32>} : memref<8x32x256xbf16, #tpu.memory_space<vmem>>, vector<1x28x256xbf16>,
    } else {
    }
    %c2_i32_11 = arith.constant 2 : i32
    %18 = arith.addi %5, %c2_i32_11 : i32
    %c0_i32_12 = arith.constant 0 : i32
    %19 = arith.cmpi sge, %18, %c0_i32_12 : i32
    %c28_i32_13 = arith.constant 28 : i32
    %20 = arith.cmpi slt, %18, %c28_i32_13 : i32
    %21 = arith.andi %19, %20 : i1
    %22 = arith.extui %21 : i1 to i32
    %c0_i32_14 = arith.constant 0 : i32
    %23 = arith.cmpi ne, %22, %c0_i32_14 : i32
    scf.if %23 {
      %c0_134 = arith.constant 0 : index
      %138 = arith.index_cast %18 : i32 to index
      %c0_135 = arith.constant 0 : index
      %c0_136 = arith.constant 0 : index
      %139 = vector.load %arg4[%c0_134, %138, %c0_135, %c0_136] : memref<1x28x28x256xbf16, #tpu.memory_space<vmem>>, vector<1x1x28x256xbf16>
      %140 = vector.shape_cast %139 : vector<1x1x28x256xbf16> to vector<1x28x256xbf16>
      %141 = arith.extf %140 : vector<1x28x256xbf16> to vector<1x28x256xf32>
      %142 = vector.shape_cast %2 : vector<1x256xf32> to vector<1x1x256xf32>
      %143 = vector.broadcast %142 : vector<1x1x256xf32> to vector<1x28x256xf32>
      %144 = arith.mulf %141, %143 : vector<1x28x256xf32>
      %145 = vector.shape_cast %3 : vector<1x256xf32> to vector<1x1x256xf32>
      %146 = vector.broadcast %145 : vector<1x1x256xf32> to vector<1x28x256xf32>
      %147 = arith.addf %144, %146 : vector<1x28x256xf32>
      %cst_137 = arith.constant 0.000000e+00 : f32
      %148 = vector.broadcast %cst_137 : f32 to vector<1x28x256xf32>
      %149 = arith.maximumf %147, %148 : vector<1x28x256xf32>
      %150 = arith.truncf %149 : vector<1x28x256xf32> to vector<1x28x256xbf16>
      %c2_138 = arith.constant 2 : index
      %c2_139 = arith.constant 2 : index
      %c0_140 = arith.constant 0 : index
      %151 = vector.load %arg8[%c2_138, %c2_139, %c0_140] : memref<8x32x256xbf16, #tpu.memory_space<vmem>>, vector<1x28x256xbf16>
      tpu.vector_store %arg8[%c2_138, %c2_139, %c0_140], %150 {strides = array<i32>} : memref<8x32x256xbf16, #tpu.memory_space<vmem>>, vector<1x28x256xbf16>,
    } else {
    }
    %c3_i32 = arith.constant 3 : i32
    %24 = arith.addi %5, %c3_i32 : i32
    %c0_i32_15 = arith.constant 0 : i32
    %25 = arith.cmpi sge, %24, %c0_i32_15 : i32
    %c28_i32_16 = arith.constant 28 : i32
    %26 = arith.cmpi slt, %24, %c28_i32_16 : i32
    %27 = arith.andi %25, %26 : i1
    %28 = arith.extui %27 : i1 to i32
    %c0_i32_17 = arith.constant 0 : i32
    %29 = arith.cmpi ne, %28, %c0_i32_17 : i32
    scf.if %29 {
      %c0_134 = arith.constant 0 : index
      %138 = arith.index_cast %24 : i32 to index
      %c0_135 = arith.constant 0 : index
      %c0_136 = arith.constant 0 : index
      %139 = vector.load %arg4[%c0_134, %138, %c0_135, %c0_136] : memref<1x28x28x256xbf16, #tpu.memory_space<vmem>>, vector<1x1x28x256xbf16>
      %140 = vector.shape_cast %139 : vector<1x1x28x256xbf16> to vector<1x28x256xbf16>
      %141 = arith.extf %140 : vector<1x28x256xbf16> to vector<1x28x256xf32>
      %142 = vector.shape_cast %2 : vector<1x256xf32> to vector<1x1x256xf32>
      %143 = vector.broadcast %142 : vector<1x1x256xf32> to vector<1x28x256xf32>
      %144 = arith.mulf %141, %143 : vector<1x28x256xf32>
      %145 = vector.shape_cast %3 : vector<1x256xf32> to vector<1x1x256xf32>
      %146 = vector.broadcast %145 : vector<1x1x256xf32> to vector<1x28x256xf32>
      %147 = arith.addf %144, %146 : vector<1x28x256xf32>
      %cst_137 = arith.constant 0.000000e+00 : f32
      %148 = vector.broadcast %cst_137 : f32 to vector<1x28x256xf32>
      %149 = arith.maximumf %147, %148 : vector<1x28x256xf32>
      %150 = arith.truncf %149 : vector<1x28x256xf32> to vector<1x28x256xbf16>
      %c3_138 = arith.constant 3 : index
      %c2_139 = arith.constant 2 : index
      %c0_140 = arith.constant 0 : index
      %151 = vector.load %arg8[%c3_138, %c2_139, %c0_140] : memref<8x32x256xbf16, #tpu.memory_space<vmem>>, vector<1x28x256xbf16>
      tpu.vector_store %arg8[%c3_138, %c2_139, %c0_140], %150 {strides = array<i32>} : memref<8x32x256xbf16, #tpu.memory_space<vmem>>, vector<1x28x256xbf16>,
    } else {
    }
    %c4_i32_18 = arith.constant 4 : i32
    %30 = arith.addi %5, %c4_i32_18 : i32
    %c0_i32_19 = arith.constant 0 : i32
    %31 = arith.cmpi sge, %30, %c0_i32_19 : i32
    %c28_i32_20 = arith.constant 28 : i32
    %32 = arith.cmpi slt, %30, %c28_i32_20 : i32
    %33 = arith.andi %31, %32 : i1
    %34 = arith.extui %33 : i1 to i32
    %c0_i32_21 = arith.constant 0 : i32
    %35 = arith.cmpi ne, %34, %c0_i32_21 : i32
    scf.if %35 {
      %c0_134 = arith.constant 0 : index
      %138 = arith.index_cast %30 : i32 to index
      %c0_135 = arith.constant 0 : index
      %c0_136 = arith.constant 0 : index
      %139 = vector.load %arg4[%c0_134, %138, %c0_135, %c0_136] : memref<1x28x28x256xbf16, #tpu.memory_space<vmem>>, vector<1x1x28x256xbf16>
      %140 = vector.shape_cast %139 : vector<1x1x28x256xbf16> to vector<1x28x256xbf16>
      %141 = arith.extf %140 : vector<1x28x256xbf16> to vector<1x28x256xf32>
      %142 = vector.shape_cast %2 : vector<1x256xf32> to vector<1x1x256xf32>
      %143 = vector.broadcast %142 : vector<1x1x256xf32> to vector<1x28x256xf32>
      %144 = arith.mulf %141, %143 : vector<1x28x256xf32>
      %145 = vector.shape_cast %3 : vector<1x256xf32> to vector<1x1x256xf32>
      %146 = vector.broadcast %145 : vector<1x1x256xf32> to vector<1x28x256xf32>
      %147 = arith.addf %144, %146 : vector<1x28x256xf32>
      %cst_137 = arith.constant 0.000000e+00 : f32
      %148 = vector.broadcast %cst_137 : f32 to vector<1x28x256xf32>
      %149 = arith.maximumf %147, %148 : vector<1x28x256xf32>
      %150 = arith.truncf %149 : vector<1x28x256xf32> to vector<1x28x256xbf16>
      %c4_138 = arith.constant 4 : index
      %c2_139 = arith.constant 2 : index
      %c0_140 = arith.constant 0 : index
      %151 = vector.load %arg8[%c4_138, %c2_139, %c0_140] : memref<8x32x256xbf16, #tpu.memory_space<vmem>>, vector<1x28x256xbf16>
      tpu.vector_store %arg8[%c4_138, %c2_139, %c0_140], %150 {strides = array<i32>} : memref<8x32x256xbf16, #tpu.memory_space<vmem>>, vector<1x28x256xbf16>,
    } else {
    }
    %c5_i32 = arith.constant 5 : i32
    %36 = arith.addi %5, %c5_i32 : i32
    %c0_i32_22 = arith.constant 0 : i32
    %37 = arith.cmpi sge, %36, %c0_i32_22 : i32
    %c28_i32_23 = arith.constant 28 : i32
    %38 = arith.cmpi slt, %36, %c28_i32_23 : i32
    %39 = arith.andi %37, %38 : i1
    %40 = arith.extui %39 : i1 to i32
    %c0_i32_24 = arith.constant 0 : i32
    %41 = arith.cmpi ne, %40, %c0_i32_24 : i32
    scf.if %41 {
      %c0_134 = arith.constant 0 : index
      %138 = arith.index_cast %36 : i32 to index
      %c0_135 = arith.constant 0 : index
      %c0_136 = arith.constant 0 : index
      %139 = vector.load %arg4[%c0_134, %138, %c0_135, %c0_136] : memref<1x28x28x256xbf16, #tpu.memory_space<vmem>>, vector<1x1x28x256xbf16>
      %140 = vector.shape_cast %139 : vector<1x1x28x256xbf16> to vector<1x28x256xbf16>
      %141 = arith.extf %140 : vector<1x28x256xbf16> to vector<1x28x256xf32>
      %142 = vector.shape_cast %2 : vector<1x256xf32> to vector<1x1x256xf32>
      %143 = vector.broadcast %142 : vector<1x1x256xf32> to vector<1x28x256xf32>
      %144 = arith.mulf %141, %143 : vector<1x28x256xf32>
      %145 = vector.shape_cast %3 : vector<1x256xf32> to vector<1x1x256xf32>
      %146 = vector.broadcast %145 : vector<1x1x256xf32> to vector<1x28x256xf32>
      %147 = arith.addf %144, %146 : vector<1x28x256xf32>
      %cst_137 = arith.constant 0.000000e+00 : f32
      %148 = vector.broadcast %cst_137 : f32 to vector<1x28x256xf32>
      %149 = arith.maximumf %147, %148 : vector<1x28x256xf32>
      %150 = arith.truncf %149 : vector<1x28x256xf32> to vector<1x28x256xbf16>
      %c5_138 = arith.constant 5 : index
      %c2_139 = arith.constant 2 : index
      %c0_140 = arith.constant 0 : index
      %151 = vector.load %arg8[%c5_138, %c2_139, %c0_140] : memref<8x32x256xbf16, #tpu.memory_space<vmem>>, vector<1x28x256xbf16>
      tpu.vector_store %arg8[%c5_138, %c2_139, %c0_140], %150 {strides = array<i32>} : memref<8x32x256xbf16, #tpu.memory_space<vmem>>, vector<1x28x256xbf16>,
    } else {
    }
    %c6_i32 = arith.constant 6 : i32
    %42 = arith.addi %5, %c6_i32 : i32
    %c0_i32_25 = arith.constant 0 : i32
    %43 = arith.cmpi sge, %42, %c0_i32_25 : i32
    %c28_i32_26 = arith.constant 28 : i32
    %44 = arith.cmpi slt, %42, %c28_i32_26 : i32
    %45 = arith.andi %43, %44 : i1
    %46 = arith.extui %45 : i1 to i32
    %c0_i32_27 = arith.constant 0 : i32
    %47 = arith.cmpi ne, %46, %c0_i32_27 : i32
    scf.if %47 {
      %c0_134 = arith.constant 0 : index
      %138 = arith.index_cast %42 : i32 to index
      %c0_135 = arith.constant 0 : index
      %c0_136 = arith.constant 0 : index
      %139 = vector.load %arg4[%c0_134, %138, %c0_135, %c0_136] : memref<1x28x28x256xbf16, #tpu.memory_space<vmem>>, vector<1x1x28x256xbf16>
      %140 = vector.shape_cast %139 : vector<1x1x28x256xbf16> to vector<1x28x256xbf16>
      %141 = arith.extf %140 : vector<1x28x256xbf16> to vector<1x28x256xf32>
      %142 = vector.shape_cast %2 : vector<1x256xf32> to vector<1x1x256xf32>
      %143 = vector.broadcast %142 : vector<1x1x256xf32> to vector<1x28x256xf32>
      %144 = arith.mulf %141, %143 : vector<1x28x256xf32>
      %145 = vector.shape_cast %3 : vector<1x256xf32> to vector<1x1x256xf32>
      %146 = vector.broadcast %145 : vector<1x1x256xf32> to vector<1x28x256xf32>
      %147 = arith.addf %144, %146 : vector<1x28x256xf32>
      %cst_137 = arith.constant 0.000000e+00 : f32
      %148 = vector.broadcast %cst_137 : f32 to vector<1x28x256xf32>
      %149 = arith.maximumf %147, %148 : vector<1x28x256xf32>
      %150 = arith.truncf %149 : vector<1x28x256xf32> to vector<1x28x256xbf16>
      %c6_138 = arith.constant 6 : index
      %c2_139 = arith.constant 2 : index
      %c0_140 = arith.constant 0 : index
      %151 = vector.load %arg8[%c6_138, %c2_139, %c0_140] : memref<8x32x256xbf16, #tpu.memory_space<vmem>>, vector<1x28x256xbf16>
      tpu.vector_store %arg8[%c6_138, %c2_139, %c0_140], %150 {strides = array<i32>} : memref<8x32x256xbf16, #tpu.memory_space<vmem>>, vector<1x28x256xbf16>,
    } else {
    }
    %c7_i32 = arith.constant 7 : i32
    %48 = arith.addi %5, %c7_i32 : i32
    %c0_i32_28 = arith.constant 0 : i32
    %49 = arith.cmpi sge, %48, %c0_i32_28 : i32
    %c28_i32_29 = arith.constant 28 : i32
    %50 = arith.cmpi slt, %48, %c28_i32_29 : i32
    %51 = arith.andi %49, %50 : i1
    %52 = arith.extui %51 : i1 to i32
    %c0_i32_30 = arith.constant 0 : i32
    %53 = arith.cmpi ne, %52, %c0_i32_30 : i32
    scf.if %53 {
      %c0_134 = arith.constant 0 : index
      %138 = arith.index_cast %48 : i32 to index
      %c0_135 = arith.constant 0 : index
      %c0_136 = arith.constant 0 : index
      %139 = vector.load %arg4[%c0_134, %138, %c0_135, %c0_136] : memref<1x28x28x256xbf16, #tpu.memory_space<vmem>>, vector<1x1x28x256xbf16>
      %140 = vector.shape_cast %139 : vector<1x1x28x256xbf16> to vector<1x28x256xbf16>
      %141 = arith.extf %140 : vector<1x28x256xbf16> to vector<1x28x256xf32>
      %142 = vector.shape_cast %2 : vector<1x256xf32> to vector<1x1x256xf32>
      %143 = vector.broadcast %142 : vector<1x1x256xf32> to vector<1x28x256xf32>
      %144 = arith.mulf %141, %143 : vector<1x28x256xf32>
      %145 = vector.shape_cast %3 : vector<1x256xf32> to vector<1x1x256xf32>
      %146 = vector.broadcast %145 : vector<1x1x256xf32> to vector<1x28x256xf32>
      %147 = arith.addf %144, %146 : vector<1x28x256xf32>
      %cst_137 = arith.constant 0.000000e+00 : f32
      %148 = vector.broadcast %cst_137 : f32 to vector<1x28x256xf32>
      %149 = arith.maximumf %147, %148 : vector<1x28x256xf32>
      %150 = arith.truncf %149 : vector<1x28x256xf32> to vector<1x28x256xbf16>
      %c7_138 = arith.constant 7 : index
      %c2_139 = arith.constant 2 : index
      %c0_140 = arith.constant 0 : index
      %151 = vector.load %arg8[%c7_138, %c2_139, %c0_140] : memref<8x32x256xbf16, #tpu.memory_space<vmem>>, vector<1x28x256xbf16>
      tpu.vector_store %arg8[%c7_138, %c2_139, %c0_140], %150 {strides = array<i32>} : memref<8x32x256xbf16, #tpu.memory_space<vmem>>, vector<1x28x256xbf16>,
    } else {
    }
    %c0_31 = arith.constant 0 : index
    %c0_32 = arith.constant 0 : index
    %c0_33 = arith.constant 0 : index
    %54 = vector.load %arg8[%c0_31, %c0_32, %c0_33] : memref<8x32x256xbf16, #tpu.memory_space<vmem>>, vector<4x28x256xbf16>
    %55 = vector.shape_cast %54 : vector<4x28x256xbf16> to vector<112x256xbf16>
    %c0_34 = arith.constant 0 : index
    %c0_35 = arith.constant 0 : index
    %c0_36 = arith.constant 0 : index
    %56 = vector.load %arg5[%c0_34, %c0_35, %c0_36] : memref<9x256x256xbf16, #tpu.memory_space<vmem>>, vector<1x256x256xbf16>
    %57 = vector.shape_cast %56 : vector<1x256x256xbf16> to vector<256x256xbf16>
    %cst_37 = arith.constant dense<0.000000e+00> : vector<112x256xf32>
    %58 = tpu.matmul %55, %57, %cst_37 {dimension_numbers = #tpu.dot_dimension_numbers<[1], [0], [0], [1], [0, 0, 1, 1], [], []>} : vector<112x256xbf16>, vector<256x256xbf16>, vector<112x256xf32> -> vector<112x256xf32>
    %c0_38 = arith.constant 0 : index
    %c0_39 = arith.constant 0 : index
    %59 = vector.load %arg9[%c0_38, %c0_39] : memref<112x256xf32, #tpu.memory_space<vmem>>, vector<112x256xf32>
    tpu.vector_store %arg9[%c0_38, %c0_39], %58 {strides = array<i32>} : memref<112x256xf32, #tpu.memory_space<vmem>>, vector<112x256xf32>,
    %c0_40 = arith.constant 0 : index
    %c2 = arith.constant 2 : index
    %c0_41 = arith.constant 0 : index
    %60 = vector.load %arg8[%c0_40, %c2, %c0_41] : memref<8x32x256xbf16, #tpu.memory_space<vmem>>, vector<4x28x256xbf16>
    %61 = vector.shape_cast %60 : vector<4x28x256xbf16> to vector<112x256xbf16>
    %c1 = arith.constant 1 : index
    %c0_42 = arith.constant 0 : index
    %c0_43 = arith.constant 0 : index
    %62 = vector.load %arg5[%c1, %c0_42, %c0_43] : memref<9x256x256xbf16, #tpu.memory_space<vmem>>, vector<1x256x256xbf16>
    %63 = vector.shape_cast %62 : vector<1x256x256xbf16> to vector<256x256xbf16>
    %cst_44 = arith.constant dense<0.000000e+00> : vector<112x256xf32>
    %64 = tpu.matmul %61, %63, %cst_44 {dimension_numbers = #tpu.dot_dimension_numbers<[1], [0], [0], [1], [0, 0, 1, 1], [], []>} : vector<112x256xbf16>, vector<256x256xbf16>, vector<112x256xf32> -> vector<112x256xf32>
    %c0_45 = arith.constant 0 : index
    %c0_46 = arith.constant 0 : index
    %65 = vector.load %arg9[%c0_45, %c0_46] : memref<112x256xf32, #tpu.memory_space<vmem>>, vector<112x256xf32>
    %66 = arith.addf %65, %64 : vector<112x256xf32>
    %c0_47 = arith.constant 0 : index
    %c0_48 = arith.constant 0 : index
    %67 = vector.load %arg9[%c0_47, %c0_48] : memref<112x256xf32, #tpu.memory_space<vmem>>, vector<112x256xf32>
    tpu.vector_store %arg9[%c0_47, %c0_48], %66 {strides = array<i32>} : memref<112x256xf32, #tpu.memory_space<vmem>>, vector<112x256xf32>,
    %c0_49 = arith.constant 0 : index
    %c4 = arith.constant 4 : index
    %c0_50 = arith.constant 0 : index
    %68 = vector.load %arg8[%c0_49, %c4, %c0_50] : memref<8x32x256xbf16, #tpu.memory_space<vmem>>, vector<4x28x256xbf16>
    %69 = vector.shape_cast %68 : vector<4x28x256xbf16> to vector<112x256xbf16>
    %c2_51 = arith.constant 2 : index
    %c0_52 = arith.constant 0 : index
    %c0_53 = arith.constant 0 : index
    %70 = vector.load %arg5[%c2_51, %c0_52, %c0_53] : memref<9x256x256xbf16, #tpu.memory_space<vmem>>, vector<1x256x256xbf16>
    %71 = vector.shape_cast %70 : vector<1x256x256xbf16> to vector<256x256xbf16>
    %cst_54 = arith.constant dense<0.000000e+00> : vector<112x256xf32>
    %72 = tpu.matmul %69, %71, %cst_54 {dimension_numbers = #tpu.dot_dimension_numbers<[1], [0], [0], [1], [0, 0, 1, 1], [], []>} : vector<112x256xbf16>, vector<256x256xbf16>, vector<112x256xf32> -> vector<112x256xf32>
    %c0_55 = arith.constant 0 : index
    %c0_56 = arith.constant 0 : index
    %73 = vector.load %arg9[%c0_55, %c0_56] : memref<112x256xf32, #tpu.memory_space<vmem>>, vector<112x256xf32>
    %74 = arith.addf %73, %72 : vector<112x256xf32>
    %c0_57 = arith.constant 0 : index
    %c0_58 = arith.constant 0 : index
    %75 = vector.load %arg9[%c0_57, %c0_58] : memref<112x256xf32, #tpu.memory_space<vmem>>, vector<112x256xf32>
    tpu.vector_store %arg9[%c0_57, %c0_58], %74 {strides = array<i32>} : memref<112x256xf32, #tpu.memory_space<vmem>>, vector<112x256xf32>,
    %c2_59 = arith.constant 2 : index
    %c0_60 = arith.constant 0 : index
    %c0_61 = arith.constant 0 : index
    %76 = vector.load %arg8[%c2_59, %c0_60, %c0_61] : memref<8x32x256xbf16, #tpu.memory_space<vmem>>, vector<4x28x256xbf16>
    %77 = vector.shape_cast %76 : vector<4x28x256xbf16> to vector<112x256xbf16>
    %c3 = arith.constant 3 : index
    %c0_62 = arith.constant 0 : index
    %c0_63 = arith.constant 0 : index
    %78 = vector.load %arg5[%c3, %c0_62, %c0_63] : memref<9x256x256xbf16, #tpu.memory_space<vmem>>, vector<1x256x256xbf16>
    %79 = vector.shape_cast %78 : vector<1x256x256xbf16> to vector<256x256xbf16>
    %cst_64 = arith.constant dense<0.000000e+00> : vector<112x256xf32>
    %80 = tpu.matmul %77, %79, %cst_64 {dimension_numbers = #tpu.dot_dimension_numbers<[1], [0], [0], [1], [0, 0, 1, 1], [], []>} : vector<112x256xbf16>, vector<256x256xbf16>, vector<112x256xf32> -> vector<112x256xf32>
    %c0_65 = arith.constant 0 : index
    %c0_66 = arith.constant 0 : index
    %81 = vector.load %arg9[%c0_65, %c0_66] : memref<112x256xf32, #tpu.memory_space<vmem>>, vector<112x256xf32>
    %82 = arith.addf %81, %80 : vector<112x256xf32>
    %c0_67 = arith.constant 0 : index
    %c0_68 = arith.constant 0 : index
    %83 = vector.load %arg9[%c0_67, %c0_68] : memref<112x256xf32, #tpu.memory_space<vmem>>, vector<112x256xf32>
    tpu.vector_store %arg9[%c0_67, %c0_68], %82 {strides = array<i32>} : memref<112x256xf32, #tpu.memory_space<vmem>>, vector<112x256xf32>,
    %c2_69 = arith.constant 2 : index
    %c2_70 = arith.constant 2 : index
    %c0_71 = arith.constant 0 : index
    %84 = vector.load %arg8[%c2_69, %c2_70, %c0_71] : memref<8x32x256xbf16, #tpu.memory_space<vmem>>, vector<4x28x256xbf16>
    %85 = vector.shape_cast %84 : vector<4x28x256xbf16> to vector<112x256xbf16>
    %c4_72 = arith.constant 4 : index
    %c0_73 = arith.constant 0 : index
    %c0_74 = arith.constant 0 : index
    %86 = vector.load %arg5[%c4_72, %c0_73, %c0_74] : memref<9x256x256xbf16, #tpu.memory_space<vmem>>, vector<1x256x256xbf16>
    %87 = vector.shape_cast %86 : vector<1x256x256xbf16> to vector<256x256xbf16>
    %cst_75 = arith.constant dense<0.000000e+00> : vector<112x256xf32>
    %88 = tpu.matmul %85, %87, %cst_75 {dimension_numbers = #tpu.dot_dimension_numbers<[1], [0], [0], [1], [0, 0, 1, 1], [], []>} : vector<112x256xbf16>, vector<256x256xbf16>, vector<112x256xf32> -> vector<112x256xf32>
    %c0_76 = arith.constant 0 : index
    %c0_77 = arith.constant 0 : index
    %89 = vector.load %arg9[%c0_76, %c0_77] : memref<112x256xf32, #tpu.memory_space<vmem>>, vector<112x256xf32>
    %90 = arith.addf %89, %88 : vector<112x256xf32>
    %c0_78 = arith.constant 0 : index
    %c0_79 = arith.constant 0 : index
    %91 = vector.load %arg9[%c0_78, %c0_79] : memref<112x256xf32, #tpu.memory_space<vmem>>, vector<112x256xf32>
    tpu.vector_store %arg9[%c0_78, %c0_79], %90 {strides = array<i32>} : memref<112x256xf32, #tpu.memory_space<vmem>>, vector<112x256xf32>,
    %c2_80 = arith.constant 2 : index
    %c4_81 = arith.constant 4 : index
    %c0_82 = arith.constant 0 : index
    %92 = vector.load %arg8[%c2_80, %c4_81, %c0_82] : memref<8x32x256xbf16, #tpu.memory_space<vmem>>, vector<4x28x256xbf16>
    %93 = vector.shape_cast %92 : vector<4x28x256xbf16> to vector<112x256xbf16>
    %c5 = arith.constant 5 : index
    %c0_83 = arith.constant 0 : index
    %c0_84 = arith.constant 0 : index
    %94 = vector.load %arg5[%c5, %c0_83, %c0_84] : memref<9x256x256xbf16, #tpu.memory_space<vmem>>, vector<1x256x256xbf16>
    %95 = vector.shape_cast %94 : vector<1x256x256xbf16> to vector<256x256xbf16>
    %cst_85 = arith.constant dense<0.000000e+00> : vector<112x256xf32>
    %96 = tpu.matmul %93, %95, %cst_85 {dimension_numbers = #tpu.dot_dimension_numbers<[1], [0], [0], [1], [0, 0, 1, 1], [], []>} : vector<112x256xbf16>, vector<256x256xbf16>, vector<112x256xf32> -> vector<112x256xf32>
    %c0_86 = arith.constant 0 : index
    %c0_87 = arith.constant 0 : index
    %97 = vector.load %arg9[%c0_86, %c0_87] : memref<112x256xf32, #tpu.memory_space<vmem>>, vector<112x256xf32>
    %98 = arith.addf %97, %96 : vector<112x256xf32>
    %c0_88 = arith.constant 0 : index
    %c0_89 = arith.constant 0 : index
    %99 = vector.load %arg9[%c0_88, %c0_89] : memref<112x256xf32, #tpu.memory_space<vmem>>, vector<112x256xf32>
    tpu.vector_store %arg9[%c0_88, %c0_89], %98 {strides = array<i32>} : memref<112x256xf32, #tpu.memory_space<vmem>>, vector<112x256xf32>,
    %c4_90 = arith.constant 4 : index
    %c0_91 = arith.constant 0 : index
    %c0_92 = arith.constant 0 : index
    %100 = vector.load %arg8[%c4_90, %c0_91, %c0_92] : memref<8x32x256xbf16, #tpu.memory_space<vmem>>, vector<4x28x256xbf16>
    %101 = vector.shape_cast %100 : vector<4x28x256xbf16> to vector<112x256xbf16>
    %c6 = arith.constant 6 : index
    %c0_93 = arith.constant 0 : index
    %c0_94 = arith.constant 0 : index
    %102 = vector.load %arg5[%c6, %c0_93, %c0_94] : memref<9x256x256xbf16, #tpu.memory_space<vmem>>, vector<1x256x256xbf16>
    %103 = vector.shape_cast %102 : vector<1x256x256xbf16> to vector<256x256xbf16>
    %cst_95 = arith.constant dense<0.000000e+00> : vector<112x256xf32>
    %104 = tpu.matmul %101, %103, %cst_95 {dimension_numbers = #tpu.dot_dimension_numbers<[1], [0], [0], [1], [0, 0, 1, 1], [], []>} : vector<112x256xbf16>, vector<256x256xbf16>, vector<112x256xf32> -> vector<112x256xf32>
    %c0_96 = arith.constant 0 : index
    %c0_97 = arith.constant 0 : index
    %105 = vector.load %arg9[%c0_96, %c0_97] : memref<112x256xf32, #tpu.memory_space<vmem>>, vector<112x256xf32>
    %106 = arith.addf %105, %104 : vector<112x256xf32>
    %c0_98 = arith.constant 0 : index
    %c0_99 = arith.constant 0 : index
    %107 = vector.load %arg9[%c0_98, %c0_99] : memref<112x256xf32, #tpu.memory_space<vmem>>, vector<112x256xf32>
    tpu.vector_store %arg9[%c0_98, %c0_99], %106 {strides = array<i32>} : memref<112x256xf32, #tpu.memory_space<vmem>>, vector<112x256xf32>,
    %c4_100 = arith.constant 4 : index
    %c2_101 = arith.constant 2 : index
    %c0_102 = arith.constant 0 : index
    %108 = vector.load %arg8[%c4_100, %c2_101, %c0_102] : memref<8x32x256xbf16, #tpu.memory_space<vmem>>, vector<4x28x256xbf16>
    %109 = vector.shape_cast %108 : vector<4x28x256xbf16> to vector<112x256xbf16>
    %c7 = arith.constant 7 : index
    %c0_103 = arith.constant 0 : index
    %c0_104 = arith.constant 0 : index
    %110 = vector.load %arg5[%c7, %c0_103, %c0_104] : memref<9x256x256xbf16, #tpu.memory_space<vmem>>, vector<1x256x256xbf16>
    %111 = vector.shape_cast %110 : vector<1x256x256xbf16> to vector<256x256xbf16>
    %cst_105 = arith.constant dense<0.000000e+00> : vector<112x256xf32>
    %112 = tpu.matmul %109, %111, %cst_105 {dimension_numbers = #tpu.dot_dimension_numbers<[1], [0], [0], [1], [0, 0, 1, 1], [], []>} : vector<112x256xbf16>, vector<256x256xbf16>, vector<112x256xf32> -> vector<112x256xf32>
    %c0_106 = arith.constant 0 : index
    %c0_107 = arith.constant 0 : index
    %113 = vector.load %arg9[%c0_106, %c0_107] : memref<112x256xf32, #tpu.memory_space<vmem>>, vector<112x256xf32>
    %114 = arith.addf %113, %112 : vector<112x256xf32>
    %c0_108 = arith.constant 0 : index
    %c0_109 = arith.constant 0 : index
    %115 = vector.load %arg9[%c0_108, %c0_109] : memref<112x256xf32, #tpu.memory_space<vmem>>, vector<112x256xf32>
    tpu.vector_store %arg9[%c0_108, %c0_109], %114 {strides = array<i32>} : memref<112x256xf32, #tpu.memory_space<vmem>>, vector<112x256xf32>,
    %c4_110 = arith.constant 4 : index
    %c4_111 = arith.constant 4 : index
    %c0_112 = arith.constant 0 : index
    %116 = vector.load %arg8[%c4_110, %c4_111, %c0_112] : memref<8x32x256xbf16, #tpu.memory_space<vmem>>, vector<4x28x256xbf16>
    %117 = vector.shape_cast %116 : vector<4x28x256xbf16> to vector<112x256xbf16>
    %c8 = arith.constant 8 : index
    %c0_113 = arith.constant 0 : index
    %c0_114 = arith.constant 0 : index
    %118 = vector.load %arg5[%c8, %c0_113, %c0_114] : memref<9x256x256xbf16, #tpu.memory_space<vmem>>, vector<1x256x256xbf16>
    %119 = vector.shape_cast %118 : vector<1x256x256xbf16> to vector<256x256xbf16>
    %cst_115 = arith.constant dense<0.000000e+00> : vector<112x256xf32>
    %120 = tpu.matmul %117, %119, %cst_115 {dimension_numbers = #tpu.dot_dimension_numbers<[1], [0], [0], [1], [0, 0, 1, 1], [], []>} : vector<112x256xbf16>, vector<256x256xbf16>, vector<112x256xf32> -> vector<112x256xf32>
    %c0_116 = arith.constant 0 : index
    %c0_117 = arith.constant 0 : index
    %121 = vector.load %arg9[%c0_116, %c0_117] : memref<112x256xf32, #tpu.memory_space<vmem>>, vector<112x256xf32>
    %122 = arith.addf %121, %120 : vector<112x256xf32>
    %c0_118 = arith.constant 0 : index
    %c0_119 = arith.constant 0 : index
    %123 = vector.load %arg9[%c0_118, %c0_119] : memref<112x256xf32, #tpu.memory_space<vmem>>, vector<112x256xf32>
    tpu.vector_store %arg9[%c0_118, %c0_119], %122 {strides = array<i32>} : memref<112x256xf32, #tpu.memory_space<vmem>>, vector<112x256xf32>,
    %c0_120 = arith.constant 0 : index
    %c0_121 = arith.constant 0 : index
    %124 = vector.load %arg9[%c0_120, %c0_121] : memref<112x256xf32, #tpu.memory_space<vmem>>, vector<112x256xf32>
    %125 = arith.truncf %124 : vector<112x256xf32> to vector<112x256xbf16>
    %c0_122 = arith.constant 0 : index
    %c0_123 = arith.constant 0 : index
    %126 = vector.load %arg6[%c0_122, %c0_123] : memref<112x256xbf16, #tpu.memory_space<vmem>>, vector<112x256xbf16>
    tpu.vector_store %arg6[%c0_122, %c0_123], %125 {strides = array<i32>} : memref<112x256xbf16, #tpu.memory_space<vmem>>, vector<112x256xbf16>,
    %cst_124 = arith.constant dense<0.000000e+00> : vector<256xf32>
    %127 = vector.multi_reduction <add>, %124, %cst_124 [0] : vector<112x256xf32> to vector<256xf32>
    %128 = vector.shape_cast %127 : vector<256xf32> to vector<1x256xf32>
    %c0_125 = arith.constant 0 : index
    %c0_126 = arith.constant 0 : index
    %c0_127 = arith.constant 0 : index
    %c0_128 = arith.constant 0 : index
    %129 = vector.load %arg7[%c0_125, %c0_126, %c0_127, %c0_128] : memref<1x1x2x256xf32, #tpu.memory_space<vmem>>, vector<1x1x1x256xf32>
    %130 = vector.shape_cast %129 : vector<1x1x1x256xf32> to vector<1x256xf32>
    %131 = vector.shape_cast %128 : vector<1x256xf32> to vector<1x1x1x256xf32>
    tpu.vector_store %arg7[%c0_125, %c0_126, %c0_127, %c0_128], %131 {strides = array<i32>} : memref<1x1x2x256xf32, #tpu.memory_space<vmem>>, vector<1x1x1x256xf32>,
    %132 = arith.mulf %124, %124 : vector<112x256xf32>
    %cst_129 = arith.constant dense<0.000000e+00> : vector<256xf32>
    %133 = vector.multi_reduction <add>, %132, %cst_129 [0] : vector<112x256xf32> to vector<256xf32>
    %134 = vector.shape_cast %133 : vector<256xf32> to vector<1x256xf32>
    %c0_130 = arith.constant 0 : index
    %c0_131 = arith.constant 0 : index
    %c1_132 = arith.constant 1 : index
    %c0_133 = arith.constant 0 : index
    %135 = vector.load %arg7[%c0_130, %c0_131, %c1_132, %c0_133] : memref<1x1x2x256xf32, #tpu.memory_space<vmem>>, vector<1x1x1x256xf32>
    %136 = vector.shape_cast %135 : vector<1x1x1x256xf32> to vector<1x256xf32>
    %137 = vector.shape_cast %134 : vector<1x256xf32> to vector<1x1x1x256xf32>
    tpu.vector_store %arg7[%c0_130, %c0_131, %c1_132, %c0_133], %137 {strides = array<i32>} : memref<1x1x2x256xf32, #tpu.memory_space<vmem>>, vector<1x1x1x256xf32>,
    return
  }
  func.func @transform_0(%arg0: i32, %arg1: i32) -> (i32, i32) {
    %c0_i32 = arith.constant 0 : i32
    %c0_i32_0 = arith.constant 0 : i32
    %c0_i32_1 = arith.constant 0 : i32
    return %c0_i32, %c0_i32_0 : i32, i32
  }
  func.func @transform_1(%arg0: i32, %arg1: i32) -> (i32, i32) {
    %c0_i32 = arith.constant 0 : i32
    %c0_i32_0 = arith.constant 0 : i32
    %c0_i32_1 = arith.constant 0 : i32
    return %c0_i32, %c0_i32_0 : i32, i32
  }
  func.func @transform_2(%arg0: i32, %arg1: i32) -> (i32, i32, i32, i32) {
    %c0_i32 = arith.constant 0 : i32
    %c0_i32_0 = arith.constant 0 : i32
    %c0_i32_1 = arith.constant 0 : i32
    %c0_i32_2 = arith.constant 0 : i32
    return %arg0, %c0_i32, %c0_i32_0, %c0_i32_1 : i32, i32, i32, i32
  }
  func.func @transform_3(%arg0: i32, %arg1: i32) -> (i32, i32, i32) {
    %c0_i32 = arith.constant 0 : i32
    %c0_i32_0 = arith.constant 0 : i32
    %c0_i32_1 = arith.constant 0 : i32
    %c0_i32_2 = arith.constant 0 : i32
    return %c0_i32, %c0_i32_0, %c0_i32_1 : i32, i32, i32
  }
  func.func @transform_4(%arg0: i32, %arg1: i32) -> (i32, i32) {
    %c7_i32 = arith.constant 7 : i32
    %0 = arith.muli %arg0, %c7_i32 : i32
    %1 = arith.addi %0, %arg1 : i32
    %c0_i32 = arith.constant 0 : i32
    %c0_i32_0 = arith.constant 0 : i32
    return %1, %c0_i32 : i32, i32
  }
  func.func @transform_5(%arg0: i32, %arg1: i32) -> (i32, i32, i32, i32) {
    %c0_i32 = arith.constant 0 : i32
    %c0_i32_0 = arith.constant 0 : i32
    %c0_i32_1 = arith.constant 0 : i32
    return %arg0, %arg1, %c0_i32, %c0_i32_0 : i32, i32, i32, i32
  }
}

module attributes {stable_mosaic.version = 11 : i64} {
  func.func @_bn_apply_kernel(%arg0: i32, %arg1: memref<112x256xbf16, #tpu.memory_space<vmem>>, %arg2: memref<1x256xf32, #tpu.memory_space<vmem>>, %arg3: memref<1x256xf32, #tpu.memory_space<vmem>>, %arg4: memref<112x256xf32, #tpu.memory_space<vmem>>) attributes {dimension_semantics = [#tpu.dimension_semantics<parallel>], iteration_bounds = array<i64: 7>, scalar_prefetch = 0 : i64, scratch_operands = 0 : i64, tpu.core_type = #tpu.core_type<tc>, window_params = [{transform_indices = @transform_0, window_bounds = array<i64: 112, 256>}, {pipeline_mode = #tpu.pipeline_mode<synchronous>, transform_indices = @transform_1, window_bounds = array<i64: 1, 256>}, {pipeline_mode = #tpu.pipeline_mode<synchronous>, transform_indices = @transform_2, window_bounds = array<i64: 1, 256>}, {transform_indices = @transform_3, window_bounds = array<i64: 112, 256>}]} {
    %c0 = arith.constant 0 : index
    %c0_0 = arith.constant 0 : index
    %0 = vector.load %arg1[%c0, %c0_0] : memref<112x256xbf16, #tpu.memory_space<vmem>>, vector<112x256xbf16>
    %1 = arith.extf %0 : vector<112x256xbf16> to vector<112x256xf32>
    %c0_1 = arith.constant 0 : index
    %c0_2 = arith.constant 0 : index
    %2 = vector.load %arg2[%c0_1, %c0_2] : memref<1x256xf32, #tpu.memory_space<vmem>>, vector<1x256xf32>
    %3 = vector.broadcast %2 : vector<1x256xf32> to vector<112x256xf32>
    %4 = arith.mulf %1, %3 : vector<112x256xf32>
    %c0_3 = arith.constant 0 : index
    %c0_4 = arith.constant 0 : index
    %5 = vector.load %arg3[%c0_3, %c0_4] : memref<1x256xf32, #tpu.memory_space<vmem>>, vector<1x256xf32>
    %6 = vector.broadcast %5 : vector<1x256xf32> to vector<112x256xf32>
    %7 = arith.addf %4, %6 : vector<112x256xf32>
    %c0_5 = arith.constant 0 : index
    %c0_6 = arith.constant 0 : index
    %8 = vector.load %arg4[%c0_5, %c0_6] : memref<112x256xf32, #tpu.memory_space<vmem>>, vector<112x256xf32>
    tpu.vector_store %arg4[%c0_5, %c0_6], %7 {strides = array<i32>} : memref<112x256xf32, #tpu.memory_space<vmem>>, vector<112x256xf32>,
    return
  }
  func.func @transform_0(%arg0: i32) -> (i32, i32) {
    %c0_i32 = arith.constant 0 : i32
    %c0_i32_0 = arith.constant 0 : i32
    return %arg0, %c0_i32 : i32, i32
  }
  func.func @transform_1(%arg0: i32) -> (i32, i32) {
    %c0_i32 = arith.constant 0 : i32
    %c0_i32_0 = arith.constant 0 : i32
    %c0_i32_1 = arith.constant 0 : i32
    return %c0_i32, %c0_i32_0 : i32, i32
  }
  func.func @transform_2(%arg0: i32) -> (i32, i32) {
    %c0_i32 = arith.constant 0 : i32
    %c0_i32_0 = arith.constant 0 : i32
    %c0_i32_1 = arith.constant 0 : i32
    return %c0_i32, %c0_i32_0 : i32, i32
  }
  func.func @transform_3(%arg0: i32) -> (i32, i32) {
    %c0_i32 = arith.constant 0 : i32
    %c0_i32_0 = arith.constant 0 : i32
    return %arg0, %c0_i32 : i32, i32
  }
}

</mosaic_0001>

<llo_original>
// kernel: forward.3
$region0: #{forward.3}
  #allocation0 [shape = 'u32[]', space=smem, size = 0x4, offset = 0x4, fixed_abs, tag = 'smem constant byte address 0x4 - core index']
  #allocation1 [shape = 'u32[144,128]{1,0:T(1,128)}', space=vmem, size = 0x12000, scoped, tag = 'internal scratch']
  %s0 = inlined_call_operand.vmem [shape: bf16[784,1024], index: 0, kind: input, shape index: {}]
  %s1 = inlined_call_operand.vmem [shape: bf16[1024,256], index: 1, kind: input, shape index: {}]
  %s2 = inlined_call_operand.vmem [shape: bf16[784,256], index: 2, kind: output, shape index: {0}]
  %s3 = inlined_call_operand.vmem [shape: f32[7,2,256], index: 3, kind: output, shape index: {1}]
  %4 = xla_tuple %s2, %s3
  %s5 = sld [smem:[#allocation0]]
  $region49: #{forward.3} parent=0
    _
  %s7 = ssub.s32 1, %s5
  %s8 = scalar_select 0, %s7, %s5
  loop: start=0, step=1, limit=9
  $region2: #{forward.3} parent=0 // loop_pre_header
    _
  $region3: #{forward.3} parent=0 // loop_header
    %s10 = sphi 0, %s14
    %p11 = scmp.ge.s32.totalorder %s10, 9
    %s20 = sphi 0, %s22
    %s23 = sphi 0, %s20
    %s24 = sphi 0, %s23
    %s40 = sphi 0, %s24
    %s44 = sphi 0, %s44
    %s46 = sphi 0, %s44
    %s47 = sphi 0, %s46
    %s61 = sphi 0, %s47
    %s67 = sphi 0, %s69
    %s70 = sphi 0, %s67
    %s71 = sphi 0, %s70
    %s87 = sphi 0, %s71
    %s93 = sphi 0, %s95
    %s96 = sphi 0, %s93
    %s97 = sphi 0, %s96
    %s113 = sphi 0, %s97
  $region4: #{forward.3} parent=0 // loop_header_branch
    %13 = sbr.rel (%p11) target = $region8
  $region5: #{forward.3} parent=0 // loop_body
    %s15 = ssub.s32 %s10, 1
    %s16 = ssub.s32 %s10, 2
    %s17 = sadd.s32 %s10, 1
    %s18 = ssub.s32 %s10, %s17
    %p19 = scmp.eq.s32.totalorder %s18, 0
    %s21 = sadd.s32 %s20, 1
    %s22 = scalar_select %p19, %s20, %s21
    %p25 = pneg %p19
    %p26 = scmp.eq.s32.totalorder %s10, 6
    %p27 = por %p25, %p26
    %p28 = scmp.ne.s32.totalorder %s20, %s23
    %p29 = scmp.eq.s32.totalorder %s10, 0
    %p30 = por %p28, %p29
    %p31 = scmp.ne.s32.totalorder %s20, %s23
    %p32 = scmp.eq.s32.totalorder %s15, 6
    %p33 = por %p31, %p32
    %p34 = scmp.ne.s32.totalorder %s23, %s24
    %p35 = scmp.eq.s32.totalorder %s15, 0
    %p36 = por %p34, %p35
    %p37 = scmp.ne.s32.totalorder %s23, %s24
    %p38 = scmp.eq.s32.totalorder %s16, 6
    %p39 = por %p37, %p38
    %p41 = scmp.ne.s32.totalorder %s24, %s40
    %p42 = scmp.eq.s32.totalorder %s16, 0
    %p43 = por %p41, %p42
    %s45 = sadd.s32 %s44, 1
    %p48 = scmp.eq.s32.totalorder %s10, 6
    %p49 = scmp.ne.s32.totalorder %s44, %s46
    %p50 = scmp.eq.s32.totalorder %s10, 0
    %p51 = por %p49, %p50
    %p52 = scmp.ne.s32.totalorder %s44, %s46
    %p53 = scmp.eq.s32.totalorder %s15, 6
    %p54 = por %p52, %p53
    %p55 = scmp.ne.s32.totalorder %s46, %s47
    %p56 = scmp.eq.s32.totalorder %s15, 0
    %p57 = por %p55, %p56
    %p58 = scmp.ne.s32.totalorder %s46, %s47
    %p59 = scmp.eq.s32.totalorder %s16, 6
    %p60 = por %p58, %p59
    %p62 = scmp.ne.s32.totalorder %s47, %s61
    %p63 = scmp.eq.s32.totalorder %s16, 0
    %p64 = por %p62, %p63
    %s65 = ssub.s32 %s10, %s17
    %p66 = scmp.eq.s32.totalorder %s65, 0
    %s68 = sadd.s32 %s67, 1
    %s69 = scalar_select %p66, %s67, %s68
    %p72 = pneg %p66
    %p73 = scmp.eq.s32.totalorder %s10, 6
    %p74 = por %p72, %p73
    %p75 = scmp.ne.s32.totalorder %s67, %s70
    %p76 = scmp.eq.s32.totalorder %s10, 0
    %p77 = por %p75, %p76
    %p78 = scmp.ne.s32.totalorder %s67, %s70
    %p79 = scmp.eq.s32.totalorder %s15, 6
    %p80 = por %p78, %p79
    %p81 = scmp.ne.s32.totalorder %s70, %s71
    %p82 = scmp.eq.s32.totalorder %s15, 0
    %p83 = por %p81, %p82
    %p84 = scmp.ne.s32.totalorder %s70, %s71
    %p85 = scmp.eq.s32.totalorder %s16, 6
    %p86 = por %p84, %p85
    %p88 = scmp.ne.s32.totalorder %s71, %s87
    %p89 = scmp.eq.s32.totalorder %s16, 0
    %p90 = por %p88, %p89
    %s91 = ssub.s32 %s10, %s17
    %p92 = scmp.eq.s32.totalorder %s91, 0
    %s94 = sadd.s32 %s93, 1
    %s95 = scalar_select %p92, %s93, %s94
    %p98 = pneg %p92
    %p99 = scmp.eq.s32.totalorder %s10, 6
    %p100 = por %p98, %p99
    %p101 = scmp.ne.s32.totalorder %s93, %s96
    %p102 = scmp.eq.s32.totalorder %s10, 0
    %p103 = por %p101, %p102
    %p104 = scmp.ne.s32.totalorder %s93, %s96
    %p105 = scmp.eq.s32.totalorder %s15, 6
    %p106 = por %p104, %p105
    %p107 = scmp.ne.s32.totalorder %s96, %s97
    %p108 = scmp.eq.s32.totalorder %s15, 0
    %p109 = por %p107, %p108
    %p110 = scmp.ne.s32.totalorder %s96, %s97
    %p111 = scmp.eq.s32.totalorder %s16, 6
    %p112 = por %p110, %p111
    %p114 = scmp.ne.s32.totalorder %s97, %s113
    %p115 = scmp.eq.s32.totalorder %s16, 0
    %p116 = por %p114, %p115
    %p117 = scmp.le.s32.totalorder 1, %s10
    %p118 = scmp.lt.s32.totalorder %s10, 8
    %p119 = pnand %p117, %p118
    %p120 = pneg %p119
    // Predicated region
    $region9: #{forward.3} parent=5 // pred_check
      _
    $region10: #{forward.3} parent=5 // pred_check_branch
      %122 = sbr.rel (%p119) target = $region12
    $region11: #{forward.3} parent=5 // pred_region
      %s123 = ssub.s32 %s10, 1
      // Predicated region
      $region13: #{forward.3} parent=11 // pred_check
        %p124 = pneg %p57
      $region14: #{forward.3} parent=11 // pred_check_branch
        %126 = sbr.rel (%p124) target = $region16
      $region15: #{forward.3} parent=11 // pred_region
        _
      $region16: #{forward.3} parent=11 // pred_fallthru
        _
    $region12: #{forward.3} parent=5 // pred_fallthru
      _
    %p127 = scmp.lt.s32.totalorder %s10, 7
    // Predicated region
    $region17: #{forward.3} parent=5 // pred_check
      %p128 = pneg %p127
    $region18: #{forward.3} parent=5 // pred_check_branch
      %130 = sbr.rel (%p128) target = $region20
    $region19: #{forward.3} parent=5 // pred_region
      // Predicated region
      $region21: #{forward.3} parent=19 // pred_check
        %p131 = pneg %p30
      $region22: #{forward.3} parent=19 // pred_check_branch
        %133 = sbr.rel (%p131) target = $region24
      $region23: #{forward.3} parent=19 // pred_region
        %s134 = smul.u32 14, %s10
        %p135 = scmp.lt.s32.totalorder %s134, 97
        %s136 = scalar_select %p135, %s134, 97
        %s137 = smul.addr %s136, 8
        %s138 = smul.addr %s137, 4
        %s139 = scalar_lea.vmem %s0, %s138
        %s140 = smul.u32 14, %s10
      $region24: #{forward.3} parent=19 // pred_fallthru
        _
    $region20: #{forward.3} parent=5 // pred_fallthru
      _
    %p141 = scmp.le.s32.totalorder 1, %s10
    %p142 = scmp.lt.s32.totalorder %s10, 8
    %p143 = pnand %p141, %p142
    %p144 = pneg %p143
    // Predicated region
    $region25: #{forward.3} parent=5 // pred_check
      _
    $region26: #{forward.3} parent=5 // pred_check_branch
      %146 = sbr.rel (%p143) target = $region28
    $region27: #{forward.3} parent=5 // pred_region
      %s147 = ssub.s32 %s10, 1
      %s148 = smul.u32 14, %s15
      %p149 = scmp.lt.s32.totalorder %s148, 97
      %s150 = scalar_select %p149, %s148, 97
      %s151 = smul.addr %s150, 8
      %s152 = smul.addr %s151, 4
      %s153 = scalar_lea.vmem %s0, %s152
      %p154 = pneg %p36
      %p155 = pneg %p33
      %p156 = pneg %p57
      %p157 = pneg %p54
      %p158 = pneg %p83
      %p159 = pneg %p80
      %s160 = smul.u32 14, %s15
      %p161 = scmp.lt.s32.totalorder %s160, 97
      %s162 = scalar_select %p161, %s160, 97
      %s163 = smul.addr %s162, 2
      %s164 = smul.addr %s163, 4
      %s165 = scalar_lea.vmem %s2, %s164
      %p166 = pneg %p109
      %p167 = pneg %p106
      %p168 = scmp.lt.s32.totalorder %s15, 6
      %s169 = scalar_select %p168, %s15, 6
      %s170 = smul.addr %s169, 2
      %s171 = smul.addr %s170, 2
      %s172 = scalar_lea.vmem %s3, %s171
      %s173 = smul.u32 14, %s15
      %p174 = scmp.lt.s32.totalorder %s173, 97
      %s175 = scalar_select %p174, %s173, 97
      %s176 = smul.addr %s175, 8
      %s177 = smul.addr %s176, 4
      %s178 = scalar_lea.vmem %s0, %s177
      %s179 = smul.u32 14, %s15
      %s180 = smul.u32 14, %s15
      %p181 = scmp.lt.s32.totalorder %s180, 97
      %s182 = scalar_select %p181, %s180, 97
      %s183 = smul.addr %s182, 2
      %s184 = smul.addr %s183, 4
      %s185 = scalar_lea.vmem %s2, %s184
      %s186 = smul.u32 14, %s15
      %p187 = scmp.lt.s32.totalorder %s15, 6
      %s188 = scalar_select %p187, %s15, 6
      %s189 = smul.addr %s188, 2
      %s190 = smul.addr %s189, 2
      %s191 = scalar_lea.vmem %s3, %s190
      %v193 = vld [vmem:[%s178] sm:$0xff]
      %v194 = vld [vmem:[%s178 + $0x8] sm:$0xff]
      %v195 = vld [vmem:[%s178 + $0x10] sm:$0xff]
      %v196 = vld [vmem:[%s178 + $0x18] sm:$0xff]
      %v197 = vld [vmem:[%s178 + $0x20] sm:$0xff]
      %v198 = vld [vmem:[%s178 + $0x28] sm:$0xff]
      %v199 = vld [vmem:[%s178 + $0x30] sm:$0xff]
      %v200 = vld [vmem:[%s178 + $0x38] sm:$0xff]
      %v201 = vld [vmem:[%s178 + $0x40] sm:$0xff]
      %v202 = vld [vmem:[%s178 + $0x48] sm:$0xff]
      %v203 = vld [vmem:[%s178 + $0x50] sm:$0xff]
      %v204 = vld [vmem:[%s178 + $0x58] sm:$0xff]
      %v205 = vld [vmem:[%s178 + $0x60] sm:$0xff]
      %v206 = vld [vmem:[%s178 + $0x68] sm:$0xff]
      %v207 = vld [vmem:[%s178 + $0x70] sm:$0xff]
      %v208 = vld [vmem:[%s178 + $0x78] sm:$0xff]
      %v209 = vld [vmem:[%s178 + $0x80] sm:$0xff]
      %v210 = vld [vmem:[%s178 + $0x88] sm:$0xff]
      %v211 = vld [vmem:[%s178 + $0x90] sm:$0xff]
      %v212 = vld [vmem:[%s178 + $0x98] sm:$0xff]
      %v213 = vld [vmem:[%s178 + $0xa0] sm:$0xff]
      %v214 = vld [vmem:[%s178 + $0xa8] sm:$0xff]
      %v215 = vld [vmem:[%s178 + $0xb0] sm:$0xff]
      %v216 = vld [vmem:[%s178 + $0xb8] sm:$0xff]
      %v217 = vld [vmem:[%s178 + $0xc0] sm:$0xff]
      %v218 = vld [vmem:[%s178 + $0xc8] sm:$0xff]
      %v219 = vld [vmem:[%s178 + $0xd0] sm:$0xff]
      %v220 = vld [vmem:[%s178 + $0xd8] sm:$0xff]
      %v221 = vld [vmem:[%s178 + $0xe0] sm:$0xff]
      %v222 = vld [vmem:[%s178 + $0xe8] sm:$0xff]
      %v223 = vld [vmem:[%s178 + $0xf0] sm:$0xff]
      %v224 = vld [vmem:[%s178 + $0xf8] sm:$0xff]
      %v225 = vld [vmem:[%s178 + $0x100] sm:$0xff]
      %v226 = vld [vmem:[%s178 + $0x108] sm:$0xff]
      %v227 = vld [vmem:[%s178 + $0x110] sm:$0xff]
      %v228 = vld [vmem:[%s178 + $0x118] sm:$0xff]
      %v229 = vld [vmem:[%s178 + $0x120] sm:$0xff]
      %v230 = vld [vmem:[%s178 + $0x128] sm:$0xff]
      %v231 = vld [vmem:[%s178 + $0x130] sm:$0xff]
      %v232 = vld [vmem:[%s178 + $0x138] sm:$0xff]
      %v233 = vld [vmem:[%s178 + $0x140] sm:$0xff]
      %v234 = vld [vmem:[%s178 + $0x148] sm:$0xff]
      %v235 = vld [vmem:[%s178 + $0x150] sm:$0xff]
      %v236 = vld [vmem:[%s178 + $0x158] sm:$0xff]
      %v237 = vld [vmem:[%s178 + $0x160] sm:$0xff]
      %v238 = vld [vmem:[%s178 + $0x168] sm:$0xff]
      %v239 = vld [vmem:[%s178 + $0x170] sm:$0xff]
      %v240 = vld [vmem:[%s178 + $0x178] sm:$0xff]
      %v241 = vld [vmem:[%s178 + $0x180] sm:$0xff]
      %v242 = vld [vmem:[%s178 + $0x188] sm:$0xff]
      %v243 = vld [vmem:[%s178 + $0x190] sm:$0xff]
      %v244 = vld [vmem:[%s178 + $0x198] sm:$0xff]
      %v245 = vld [vmem:[%s178 + $0x1a0] sm:$0xff]
      %v246 = vld [vmem:[%s178 + $0x1a8] sm:$0xff]
      %v247 = vld [vmem:[%s178 + $0x1b0] sm:$0xff]
      %v248 = vld [vmem:[%s178 + $0x1b8] sm:$0xff]
      %v249 = vmax.bf16 %v193, 0
      %v250 = vmax.bf16 %v194, 0
      %v251 = vmax.bf16 %v195, 0
      %v252 = vmax.bf16 %v196, 0
      %v253 = vmax.bf16 %v197, 0
      %v254 = vmax.bf16 %v198, 0
      %v255 = vmax.bf16 %v199, 0
      %v256 = vmax.bf16 %v200, 0
      %v257 = vmax.bf16 %v201, 0
      %v258 = vmax.bf16 %v202, 0
      %v259 = vmax.bf16 %v203, 0
      %v260 = vmax.bf16 %v204, 0
      %v261 = vmax.bf16 %v205, 0
      %v262 = vmax.bf16 %v206, 0
      %v263 = vmax.bf16 %v207, 0
      %v264 = vmax.bf16 %v208, 0
      %v265 = vmax.bf16 %v209, 0
      %v266 = vmax.bf16 %v210, 0
      %v267 = vmax.bf16 %v211, 0
      %v268 = vmax.bf16 %v212, 0
      %v269 = vmax.bf16 %v213, 0
      %v270 = vmax.bf16 %v214, 0
      %v271 = vmax.bf16 %v215, 0
      %v272 = vmax.bf16 %v216, 0
      %v273 = vmax.bf16 %v217, 0
      %v274 = vmax.bf16 %v218, 0
      %v275 = vmax.bf16 %v219, 0
      %v276 = vmax.bf16 %v220, 0
      %v277 = vmax.bf16 %v221, 0
      %v278 = vmax.bf16 %v222, 0
      %v279 = vmax.bf16 %v223, 0
      %v280 = vmax.bf16 %v224, 0
      %v281 = vmax.bf16 %v225, 0
      %v282 = vmax.bf16 %v226, 0
      %v283 = vmax.bf16 %v227, 0
      %v284 = vmax.bf16 %v228, 0
      %v285 = vmax.bf16 %v229, 0
      %v286 = vmax.bf16 %v230, 0
      %v287 = vmax.bf16 %v231, 0
      %v288 = vmax.bf16 %v232, 0
      %v289 = vmax.bf16 %v233, 0
      %v290 = vmax.bf16 %v234, 0
      %v291 = vmax.bf16 %v235, 0
      %v292 = vmax.bf16 %v236, 0
      %v293 = vmax.bf16 %v237, 0
      %v294 = vmax.bf16 %v238, 0
      %v295 = vmax.bf16 %v239, 0
      %v296 = vmax.bf16 %v240, 0
      %v297 = vmax.bf16 %v241, 0
      %v298 = vmax.bf16 %v242, 0
      %v299 = vmax.bf16 %v243, 0
      %v300 = vmax.bf16 %v244, 0
      %v301 = vmax.bf16 %v245, 0
      %v302 = vmax.bf16 %v246, 0
      %v303 = vmax.bf16 %v247, 0
      %v304 = vmax.bf16 %v248, 0
      %v305 = vld [vmem:[%s1] sm:$0xff]
      %v306 = vld [vmem:[%s1 + $0x8] sm:$0xff]
      %v307 = vld [vmem:[%s1 + $0x10] sm:$0xff]
      %v308 = vld [vmem:[%s1 + $0x18] sm:$0xff]
      %v309 = vld [vmem:[%s1 + $0x20] sm:$0xff]
      %v310 = vld [vmem:[%s1 + $0x28] sm:$0xff]
      %v311 = vld [vmem:[%s1 + $0x30] sm:$0xff]
      %v312 = vld [vmem:[%s1 + $0x38] sm:$0xff]
      %v313 = vld [vmem:[%s1 + $0x40] sm:$0xff]
      %v314 = vld [vmem:[%s1 + $0x48] sm:$0xff]
      %v315 = vld [vmem:[%s1 + $0x50] sm:$0xff]
      %v316 = vld [vmem:[%s1 + $0x58] sm:$0xff]
      %v317 = vld [vmem:[%s1 + $0x60] sm:$0xff]
      %v318 = vld [vmem:[%s1 + $0x68] sm:$0xff]
      %v319 = vld [vmem:[%s1 + $0x70] sm:$0xff]
      %v320 = vld [vmem:[%s1 + $0x78] sm:$0xff]
      %v321 = vld [vmem:[%s1 + $0x80] sm:$0xff]
      %v322 = vld [vmem:[%s1 + $0x88] sm:$0xff]
      %v323 = vld [vmem:[%s1 + $0x90] sm:$0xff]
      %v324 = vld [vmem:[%s1 + $0x98] sm:$0xff]
      %v325 = vld [vmem:[%s1 + $0xa0] sm:$0xff]
      %v326 = vld [vmem:[%s1 + $0xa8] sm:$0xff]
      %v327 = vld [vmem:[%s1 + $0xb0] sm:$0xff]
      %v328 = vld [vmem:[%s1 + $0xb8] sm:$0xff]
      %v329 = vld [vmem:[%s1 + $0xc0] sm:$0xff]
      %v330 = vld [vmem:[%s1 + $0xc8] sm:$0xff]
      %v331 = vld [vmem:[%s1 + $0xd0] sm:$0xff]
      %v332 = vld [vmem:[%s1 + $0xd8] sm:$0xff]
      %v333 = vld [vmem:[%s1 + $0xe0] sm:$0xff]
      %v334 = vld [vmem:[%s1 + $0xe8] sm:$0xff]
      %v335 = vld [vmem:[%s1 + $0xf0] sm:$0xff]
      %v336 = vld [vmem:[%s1 + $0xf8] sm:$0xff]
      %v337 = vld [vmem:[%s1 + $0x100] sm:$0xff]
      %v338 = vld [vmem:[%s1 + $0x108] sm:$0xff]
      %v339 = vld [vmem:[%s1 + $0x110] sm:$0xff]
      %v340 = vld [vmem:[%s1 + $0x118] sm:$0xff]
      %v341 = vld [vmem:[%s1 + $0x120] sm:$0xff]
      %v342 = vld [vmem:[%s1 + $0x128] sm:$0xff]
      %v343 = vld [vmem:[%s1 + $0x130] sm:$0xff]
      %v344 = vld [vmem:[%s1 + $0x138] sm:$0xff]
      %v345 = vld [vmem:[%s1 + $0x140] sm:$0xff]
      %v346 = vld [vmem:[%s1 + $0x148] sm:$0xff]
      %v347 = vld [vmem:[%s1 + $0x150] sm:$0xff]
      %v348 = vld [vmem:[%s1 + $0x158] sm:$0xff]
      %v349 = vld [vmem:[%s1 + $0x160] sm:$0xff]
      %v350 = vld [vmem:[%s1 + $0x168] sm:$0xff]
      %v351 = vld [vmem:[%s1 + $0x170] sm:$0xff]
      %v352 = vld [vmem:[%s1 + $0x178] sm:$0xff]
      %v353 = vld [vmem:[%s1 + $0x180] sm:$0xff]
      %v354 = vld [vmem:[%s1 + $0x188] sm:$0xff]
      %v355 = vld [vmem:[%s1 + $0x190] sm:$0xff]
      %v356 = vld [vmem:[%s1 + $0x198] sm:$0xff]
      %v357 = vld [vmem:[%s1 + $0x1a0] sm:$0xff]
      %v358 = vld [vmem:[%s1 + $0x1a8] sm:$0xff]
      %v359 = vld [vmem:[%s1 + $0x1b0] sm:$0xff]
      %v360 = vld [vmem:[%s1 + $0x1b8] sm:$0xff]
      %v361 = vld [vmem:[%s1 + $0x1c0] sm:$0xff]
      %v362 = vld [vmem:[%s1 + $0x1c8] sm:$0xff]
      %v363 = vld [vmem:[%s1 + $0x1d0] sm:$0xff]
      %v364 = vld [vmem:[%s1 + $0x1d8] sm:$0xff]
      %v365 = vld [vmem:[%s1 + $0x1e0] sm:$0xff]
      %v366 = vld [vmem:[%s1 + $0x1e8] sm:$0xff]
      %v367 = vld [vmem:[%s1 + $0x1f0] sm:$0xff]
      %v368 = vld [vmem:[%s1 + $0x1f8] sm:$0xff]
      %v369 = vld [vmem:[%s1 + $0x200] sm:$0xff]
      %v370 = vld [vmem:[%s1 + $0x208] sm:$0xff]
      %v371 = vld [vmem:[%s1 + $0x210] sm:$0xff]
      %v372 = vld [vmem:[%s1 + $0x218] sm:$0xff]
      %v373 = vld [vmem:[%s1 + $0x220] sm:$0xff]
      %v374 = vld [vmem:[%s1 + $0x228] sm:$0xff]
      %v375 = vld [vmem:[%s1 + $0x230] sm:$0xff]
      %v376 = vld [vmem:[%s1 + $0x238] sm:$0xff]
      %v377 = vld [vmem:[%s1 + $0x240] sm:$0xff]
      %v378 = vld [vmem:[%s1 + $0x248] sm:$0xff]
      %v379 = vld [vmem:[%s1 + $0x250] sm:$0xff]
      %v380 = vld [vmem:[%s1 + $0x258] sm:$0xff]
      %v381 = vld [vmem:[%s1 + $0x260] sm:$0xff]
      %v382 = vld [vmem:[%s1 + $0x268] sm:$0xff]
      %v383 = vld [vmem:[%s1 + $0x270] sm:$0xff]
      %v384 = vld [vmem:[%s1 + $0x278] sm:$0xff]
      %v385 = vld [vmem:[%s1 + $0x280] sm:$0xff]
      %v386 = vld [vmem:[%s1 + $0x288] sm:$0xff]
      %v387 = vld [vmem:[%s1 + $0x290] sm:$0xff]
      %v388 = vld [vmem:[%s1 + $0x298] sm:$0xff]
      %v389 = vld [vmem:[%s1 + $0x2a0] sm:$0xff]
      %v390 = vld [vmem:[%s1 + $0x2a8] sm:$0xff]
      %v391 = vld [vmem:[%s1 + $0x2b0] sm:$0xff]
      %v392 = vld [vmem:[%s1 + $0x2b8] sm:$0xff]
      %v393 = vld [vmem:[%s1 + $0x2c0] sm:$0xff]
      %v394 = vld [vmem:[%s1 + $0x2c8] sm:$0xff]
      %v395 = vld [vmem:[%s1 + $0x2d0] sm:$0xff]
      %v396 = vld [vmem:[%s1 + $0x2d8] sm:$0xff]
      %v397 = vld [vmem:[%s1 + $0x2e0] sm:$0xff]
      %v398 = vld [vmem:[%s1 + $0x2e8] sm:$0xff]
      %v399 = vld [vmem:[%s1 + $0x2f0] sm:$0xff]
      %v400 = vld [vmem:[%s1 + $0x2f8] sm:$0xff]
      %v401 = vld [vmem:[%s1 + $0x300] sm:$0xff]
      %v402 = vld [vmem:[%s1 + $0x308] sm:$0xff]
      %v403 = vld [vmem:[%s1 + $0x310] sm:$0xff]
      %v404 = vld [vmem:[%s1 + $0x318] sm:$0xff]
      %v405 = vld [vmem:[%s1 + $0x320] sm:$0xff]
      %v406 = vld [vmem:[%s1 + $0x328] sm:$0xff]
      %v407 = vld [vmem:[%s1 + $0x330] sm:$0xff]
      %v408 = vld [vmem:[%s1 + $0x338] sm:$0xff]
      %v409 = vld [vmem:[%s1 + $0x340] sm:$0xff]
      %v410 = vld [vmem:[%s1 + $0x348] sm:$0xff]
      %v411 = vld [vmem:[%s1 + $0x350] sm:$0xff]
      %v412 = vld [vmem:[%s1 + $0x358] sm:$0xff]
      %v413 = vld [vmem:[%s1 + $0x360] sm:$0xff]
      %v414 = vld [vmem:[%s1 + $0x368] sm:$0xff]
      %v415 = vld [vmem:[%s1 + $0x370] sm:$0xff]
      %v416 = vld [vmem:[%s1 + $0x378] sm:$0xff]
      %v417 = vld [vmem:[%s1 + $0x380] sm:$0xff]
      %v418 = vld [vmem:[%s1 + $0x388] sm:$0xff]
      %v419 = vld [vmem:[%s1 + $0x390] sm:$0xff]
      %v420 = vld [vmem:[%s1 + $0x398] sm:$0xff]
      %v421 = vld [vmem:[%s1 + $0x3a0] sm:$0xff]
      %v422 = vld [vmem:[%s1 + $0x3a8] sm:$0xff]
      %v423 = vld [vmem:[%s1 + $0x3b0] sm:$0xff]
      %v424 = vld [vmem:[%s1 + $0x3b8] sm:$0xff]
      %v425 = vld [vmem:[%s1 + $0x3c0] sm:$0xff]
      %v426 = vld [vmem:[%s1 + $0x3c8] sm:$0xff]
      %v427 = vld [vmem:[%s1 + $0x3d0] sm:$0xff]
      %v428 = vld [vmem:[%s1 + $0x3d8] sm:$0xff]
      %v429 = vld [vmem:[%s1 + $0x3e0] sm:$0xff]
      %v430 = vld [vmem:[%s1 + $0x3e8] sm:$0xff]
      %v431 = vld [vmem:[%s1 + $0x3f0] sm:$0xff]
      %v432 = vld [vmem:[%s1 + $0x3f8] sm:$0xff]
      %v489 = vunpack.c.l.b16 %v249
      %v490 = vunpack.c.h.b16 %v249
      %v491 = vunpack.c.l.b16 %v250
      %v492 = vunpack.c.h.b16 %v250
      %v493 = vunpack.c.l.b16 %v251
      %v494 = vunpack.c.h.b16 %v251
      %v495 = vunpack.c.l.b16 %v252
      %v496 = vunpack.c.h.b16 %v252
      %v497 = vunpack.c.l.b16 %v253
      %v498 = vunpack.c.h.b16 %v253
      %v499 = vunpack.c.l.b16 %v254
      %v500 = vunpack.c.h.b16 %v254
      %v501 = vunpack.c.l.b16 %v255
      %v502 = vunpack.c.h.b16 %v255
      %v503 = vunpack.c.l.b16 %v256
      %v504 = vunpack.c.h.b16 %v256
      %v505 = vunpack.c.l.b16 %v257
      %v506 = vunpack.c.h.b16 %v257
      %v507 = vunpack.c.l.b16 %v258
      %v508 = vunpack.c.h.b16 %v258
      %v509 = vunpack.c.l.b16 %v259
      %v510 = vunpack.c.h.b16 %v259
      %v511 = vunpack.c.l.b16 %v260
      %v512 = vunpack.c.h.b16 %v260
      %v513 = vunpack.c.l.b16 %v261
      %v514 = vunpack.c.h.b16 %v261
      %v515 = vunpack.c.l.b16 %v262
      %v516 = vunpack.c.h.b16 %v262
      %v517 = vunpack.c.l.b16 %v263
      %v518 = vunpack.c.h.b16 %v263
      %v519 = vunpack.c.l.b16 %v264
      %v520 = vunpack.c.h.b16 %v264
      %v521 = vunpack.c.l.b16 %v265
      %v522 = vunpack.c.h.b16 %v265
      %v523 = vunpack.c.l.b16 %v266
      %v524 = vunpack.c.h.b16 %v266
      %v525 = vunpack.c.l.b16 %v267
      %v526 = vunpack.c.h.b16 %v267
      %v527 = vunpack.c.l.b16 %v268
      %v528 = vunpack.c.h.b16 %v268
      %v529 = vunpack.c.l.b16 %v269
      %v530 = vunpack.c.h.b16 %v269
      %v531 = vunpack.c.l.b16 %v270
      %v532 = vunpack.c.h.b16 %v270
      %v533 = vunpack.c.l.b16 %v271
      %v534 = vunpack.c.h.b16 %v271
      %v535 = vunpack.c.l.b16 %v272
      %v536 = vunpack.c.h.b16 %v272
      %v537 = vunpack.c.l.b16 %v273
      %v538 = vunpack.c.h.b16 %v273
      %v539 = vunpack.c.l.b16 %v274
      %v540 = vunpack.c.h.b16 %v274
      %v541 = vunpack.c.l.b16 %v275
      %v542 = vunpack.c.h.b16 %v275
      %v543 = vunpack.c.l.b16 %v276
      %v544 = vunpack.c.h.b16 %v276
      %v545 = vunpack.c.l.b16 %v277
      %v546 = vunpack.c.h.b16 %v277
      %v547 = vunpack.c.l.b16 %v278
      %v548 = vunpack.c.h.b16 %v278
      %v549 = vunpack.c.l.b16 %v279
      %v550 = vunpack.c.h.b16 %v279
      %v551 = vunpack.c.l.b16 %v280
      %v552 = vunpack.c.h.b16 %v280
      %v553 = vunpack.c.l.b16 %v281
      %v554 = vunpack.c.h.b16 %v281
      %v555 = vunpack.c.l.b16 %v282
      %v556 = vunpack.c.h.b16 %v282
      %v557 = vunpack.c.l.b16 %v283
      %v558 = vunpack.c.h.b16 %v283
      %v559 = vunpack.c.l.b16 %v284
      %v560 = vunpack.c.h.b16 %v284
      %v561 = vunpack.c.l.b16 %v285
      %v562 = vunpack.c.h.b16 %v285
      %v563 = vunpack.c.l.b16 %v286
      %v564 = vunpack.c.h.b16 %v286
      %v565 = vunpack.c.l.b16 %v287
      %v566 = vunpack.c.h.b16 %v287
      %v567 = vunpack.c.l.b16 %v288
      %v568 = vunpack.c.h.b16 %v288
      %v569 = vunpack.c.l.b16 %v289
      %v570 = vunpack.c.h.b16 %v289
      %v571 = vunpack.c.l.b16 %v290
      %v572 = vunpack.c.h.b16 %v290
      %v573 = vunpack.c.l.b16 %v291
      %v574 = vunpack.c.h.b16 %v291
      %v575 = vunpack.c.l.b16 %v292
      %v576 = vunpack.c.h.b16 %v292
      %v577 = vunpack.c.l.b16 %v293
      %v578 = vunpack.c.h.b16 %v293
      %v579 = vunpack.c.l.b16 %v294
      %v580 = vunpack.c.h.b16 %v294
      %v581 = vunpack.c.l.b16 %v295
      %v582 = vunpack.c.h.b16 %v295
      %v583 = vunpack.c.l.b16 %v296
      %v584 = vunpack.c.h.b16 %v296
      %v585 = vunpack.c.l.b16 %v297
      %v586 = vunpack.c.h.b16 %v297
      %v587 = vunpack.c.l.b16 %v298
      %v588 = vunpack.c.h.b16 %v298
      %v589 = vunpack.c.l.b16 %v299
      %v590 = vunpack.c.h.b16 %v299
      %v591 = vunpack.c.l.b16 %v300
      %v592 = vunpack.c.h.b16 %v300
      %v593 = vunpack.c.l.b16 %v301
      %v594 = vunpack.c.h.b16 %v301
      %v595 = vunpack.c.l.b16 %v302
      %v596 = vunpack.c.h.b16 %v302
      %v597 = vunpack.c.l.b16 %v303
      %v598 = vunpack.c.h.b16 %v303
      %v599 = vunpack.c.l.b16 %v304
      %v600 = vunpack.c.h.b16 %v304
      %v601 = vpack.c.b16 %v497, %v489
      %v602 = vpack.c.b16 %v498, %v490
      %v603 = vpack.c.b16 %v499, %v491
      %v604 = vpack.c.b16 %v500, %v492
      %v605 = vpack.c.b16 %v501, %v493
      %v606 = vpack.c.b16 %v502, %v494
      %v607 = vpack.c.b16 %v503, %v495
      %v608 = vpack.c.b16 %v504, %v496
      %v609 = vpack.c.b16 %v513, %v505
      %v610 = vpack.c.b16 %v514, %v506
      %v611 = vpack.c.b16 %v515, %v507
      %v612 = vpack.c.b16 %v516, %v508
      %v613 = vpack.c.b16 %v517, %v509
      %v614 = vpack.c.b16 %v518, %v510
      %v615 = vpack.c.b16 %v519, %v511
      %v616 = vpack.c.b16 %v520, %v512
      %v617 = vpack.c.b16 %v529, %v521
      %v618 = vpack.c.b16 %v530, %v522
      %v619 = vpack.c.b16 %v531, %v523
      %v620 = vpack.c.b16 %v532, %v524
      %v621 = vpack.c.b16 %v533, %v525
      %v622 = vpack.c.b16 %v534, %v526
      %v623 = vpack.c.b16 %v535, %v527
      %v624 = vpack.c.b16 %v536, %v528
      %v625 = vpack.c.b16 %v545, %v537
      %v626 = vpack.c.b16 %v546, %v538
      %v627 = vpack.c.b16 %v547, %v539
      %v628 = vpack.c.b16 %v548, %v540
      %v629 = vpack.c.b16 %v549, %v541
      %v630 = vpack.c.b16 %v550, %v542
      %v631 = vpack.c.b16 %v551, %v543
      %v632 = vpack.c.b16 %v552, %v544
      %v633 = vpack.c.b16 %v561, %v553
      %v634 = vpack.c.b16 %v562, %v554
      %v635 = vpack.c.b16 %v563, %v555
      %v636 = vpack.c.b16 %v564, %v556
      %v637 = vpack.c.b16 %v565, %v557
      %v638 = vpack.c.b16 %v566, %v558
      %v639 = vpack.c.b16 %v567, %v559
      %v640 = vpack.c.b16 %v568, %v560
      %v641 = vpack.c.b16 %v577, %v569
      %v642 = vpack.c.b16 %v578, %v570
      %v643 = vpack.c.b16 %v579, %v571
      %v644 = vpack.c.b16 %v580, %v572
      %v645 = vpack.c.b16 %v581, %v573
      %v646 = vpack.c.b16 %v582, %v574
      %v647 = vpack.c.b16 %v583, %v575
      %v648 = vpack.c.b16 %v584, %v576
      %v649 = vpack.c.b16 %v593, %v585
      %v650 = vpack.c.b16 %v594, %v586
      %v651 = vpack.c.b16 %v595, %v587
      %v652 = vpack.c.b16 %v596, %v588
      %v653 = vpack.c.b16 %v597, %v589
      %v654 = vpack.c.b16 %v598, %v590
      %v655 = vpack.c.b16 %v599, %v591
      %v656 = vpack.c.b16 %v600, %v592
      %v841 = vunpack.c.l.b16 %v305
      %v842 = vunpack.c.h.b16 %v305
      %v843 = vunpack.c.l.b16 %v306
      %v844 = vunpack.c.h.b16 %v306
      %v845 = vunpack.c.l.b16 %v307
      %v846 = vunpack.c.h.b16 %v307
      %v847 = vunpack.c.l.b16 %v308
      %v848 = vunpack.c.h.b16 %v308
      %v849 = vunpack.c.l.b16 %v309
      %v850 = vunpack.c.h.b16 %v309
      %v851 = vunpack.c.l.b16 %v310
      %v852 = vunpack.c.h.b16 %v310
      %v853 = vunpack.c.l.b16 %v311
      %v854 = vunpack.c.h.b16 %v311
      %v855 = vunpack.c.l.b16 %v312
      %v856 = vunpack.c.h.b16 %v312
      %v857 = vunpack.c.l.b16 %v313
      %v858 = vunpack.c.h.b16 %v313
      %v859 = vunpack.c.l.b16 %v314
      %v860 = vunpack.c.h.b16 %v314
      %v861 = vunpack.c.l.b16 %v315
      %v862 = vunpack.c.h.b16 %v315
      %v863 = vunpack.c.l.b16 %v316
      %v864 = vunpack.c.h.b16 %v316
      %v865 = vunpack.c.l.b16 %v317
      %v866 = vunpack.c.h.b16 %v317
      %v867 = vunpack.c.l.b16 %v318
      %v868 = vunpack.c.h.b16 %v318
      %v869 = vunpack.c.l.b16 %v319
      %v870 = vunpack.c.h.b16 %v319
      %v871 = vunpack.c.l.b16 %v320
      %v872 = vunpack.c.h.b16 %v320
      %v873 = vunpack.c.l.b16 %v321
      %v874 = vunpack.c.h.b16 %v321
      %v875 = vunpack.c.l.b16 %v322
      %v876 = vunpack.c.h.b16 %v322
      %v877 = vunpack.c.l.b16 %v323
      %v878 = vunpack.c.h.b16 %v323
      %v879 = vunpack.c.l.b16 %v324
      %v880 = vunpack.c.h.b16 %v324
      %v881 = vunpack.c.l.b16 %v325
      %v882 = vunpack.c.h.b16 %v325
      %v883 = vunpack.c.l.b16 %v326
      %v884 = vunpack.c.h.b16 %v326
      %v885 = vunpack.c.l.b16 %v327
      %v886 = vunpack.c.h.b16 %v327
      %v887 = vunpack.c.l.b16 %v328
      %v888 = vunpack.c.h.b16 %v328
      %v889 = vunpack.c.l.b16 %v329
      %v890 = vunpack.c.h.b16 %v329
      %v891 = vunpack.c.l.b16 %v330
      %v892 = vunpack.c.h.b16 %v330
      %v893 = vunpack.c.l.b16 %v331
      %v894 = vunpack.c.h.b16 %v331
      %v895 = vunpack.c.l.b16 %v332
      %v896 = vunpack.c.h.b16 %v332
      %v897 = vunpack.c.l.b16 %v333
      %v898 = vunpack.c.h.b16 %v333
      %v899 = vunpack.c.l.b16 %v334
      %v900 = vunpack.c.h.b16 %v334
      %v901 = vunpack.c.l.b16 %v335
      %v902 = vunpack.c.h.b16 %v335
      %v903 = vunpack.c.l.b16 %v336
      %v904 = vunpack.c.h.b16 %v336
      %v905 = vunpack.c.l.b16 %v337
      %v906 = vunpack.c.h.b16 %v337
      %v907 = vunpack.c.l.b16 %v338
      %v908 = vunpack.c.h.b16 %v338
      %v909 = vunpack.c.l.b16 %v339
      %v910 = vunpack.c.h.b16 %v339
      %v911 = vunpack.c.l.b16 %v340
      %v912 = vunpack.c.h.b16 %v340
      %v913 = vunpack.c.l.b16 %v341
      %v914 = vunpack.c.h.b16 %v341
      %v915 = vunpack.c.l.b16 %v342
      %v916 = vunpack.c.h.b16 %v342
      %v917 = vunpack.c.l.b16 %v343
      %v918 = vunpack.c.h.b16 %v343
      %v919 = vunpack.c.l.b16 %v344
      %v920 = vunpack.c.h.b16 %v344
      %v921 = vunpack.c.l.b16 %v345
      %v922 = vunpack.c.h.b16 %v345
      %v923 = vunpack.c.l.b16 %v346
      %v924 = vunpack.c.h.b16 %v346
      %v925 = vunpack.c.l.b16 %v347
      %v926 = vunpack.c.h.b16 %v347
      %v927 = vunpack.c.l.b16 %v348
      %v928 = vunpack.c.h.b16 %v348
      %v929 = vunpack.c.l.b16 %v349
      %v930 = vunpack.c.h.b16 %v349
      %v931 = vunpack.c.l.b16 %v350
      %v932 = vunpack.c.h.b16 %v350
      %v933 = vunpack.c.l.b16 %v351
      %v934 = vunpack.c.h.b16 %v351
      %v935 = vunpack.c.l.b16 %v352
      %v936 = vunpack.c.h.b16 %v352
      %v937 = vunpack.c.l.b16 %v353
      %v938 = vunpack.c.h.b16 %v353
      %v939 = vunpack.c.l.b16 %v354
      %v940 = vunpack.c.h.b16 %v354
      %v941 = vunpack.c.l.b16 %v355
      %v942 = vunpack.c.h.b16 %v355
      %v943 = vunpack.c.l.b16 %v356
      %v944 = vunpack.c.h.b16 %v356
      %v945 = vunpack.c.l.b16 %v357
      %v946 = vunpack.c.h.b16 %v357
      %v947 = vunpack.c.l.b16 %v358
      %v948 = vunpack.c.h.b16 %v358
      %v949 = vunpack.c.l.b16 %v359
      %v950 = vunpack.c.h.b16 %v359
      %v951 = vunpack.c.l.b16 %v360
      %v952 = vunpack.c.h.b16 %v360
      %v953 = vunpack.c.l.b16 %v361
      %v954 = vunpack.c.h.b16 %v361
      %v955 = vunpack.c.l.b16 %v362
      %v956 = vunpack.c.h.b16 %v362
      %v957 = vunpack.c.l.b16 %v363
      %v958 = vunpack.c.h.b16 %v363
      %v959 = vunpack.c.l.b16 %v364
      %v960 = vunpack.c.h.b16 %v364
      %v961 = vunpack.c.l.b16 %v365
      %v962 = vunpack.c.h.b16 %v365
      %v963 = vunpack.c.l.b16 %v366
      %v964 = vunpack.c.h.b16 %v366
      %v965 = vunpack.c.l.b16 %v367
      %v966 = vunpack.c.h.b16 %v367
      %v967 = vunpack.c.l.b16 %v368
      %v968 = vunpack.c.h.b16 %v368
      %v969 = vunpack.c.l.b16 %v369
      %v970 = vunpack.c.h.b16 %v369
      %v971 = vunpack.c.l.b16 %v370
      %v972 = vunpack.c.h.b16 %v370
      %v973 = vunpack.c.l.b16 %v371
      %v974 = vunpack.c.h.b16 %v371
      %v975 = vunpack.c.l.b16 %v372
      %v976 = vunpack.c.h.b16 %v372
      %v977 = vunpack.c.l.b16 %v373
      %v978 = vunpack.c.h.b16 %v373
      %v979 = vunpack.c.l.b16 %v374
      %v980 = vunpack.c.h.b16 %v374
      %v981 = vunpack.c.l.b16 %v375
      %v982 = vunpack.c.h.b16 %v375
      %v983 = vunpack.c.l.b16 %v376
      %v984 = vunpack.c.h.b16 %v376
      %v985 = vunpack.c.l.b16 %v377
      %v986 = vunpack.c.h.b16 %v377
      %v987 = vunpack.c.l.b16 %v378
      %v988 = vunpack.c.h.b16 %v378
      %v989 = vunpack.c.l.b16 %v379
      %v990 = vunpack.c.h.b16 %v379
      %v991 = vunpack.c.l.b16 %v380
      %v992 = vunpack.c.h.b16 %v380
      %v993 = vunpack.c.l.b16 %v381
      %v994 = vunpack.c.h.b16 %v381
      %v995 = vunpack.c.l.b16 %v382
      %v996 = vunpack.c.h.b16 %v382
      %v997 = vunpack.c.l.b16 %v383
      %v998 = vunpack.c.h.b16 %v383
      %v999 = vunpack.c.l.b16 %v384
      %v1000 = vunpack.c.h.b16 %v384
      %v1001 = vunpack.c.l.b16 %v385
      %v1002 = vunpack.c.h.b16 %v385
      %v1003 = vunpack.c.l.b16 %v386
      %v1004 = vunpack.c.h.b16 %v386
      %v1005 = vunpack.c.l.b16 %v387
      %v1006 = vunpack.c.h.b16 %v387
      %v1007 = vunpack.c.l.b16 %v388
      %v1008 = vunpack.c.h.b16 %v388
      %v1009 = vunpack.c.l.b16 %v389
      %v1010 = vunpack.c.h.b16 %v389
      %v1011 = vunpack.c.l.b16 %v390
      %v1012 = vunpack.c.h.b16 %v390
      %v1013 = vunpack.c.l.b16 %v391
      %v1014 = vunpack.c.h.b16 %v391
      %v1015 = vunpack.c.l.b16 %v392
      %v1016 = vunpack.c.h.b16 %v392
      %v1017 = vunpack.c.l.b16 %v393
      %v1018 = vunpack.c.h.b16 %v393
      %v1019 = vunpack.c.l.b16 %v394
      %v1020 = vunpack.c.h.b16 %v394
      %v1021 = vunpack.c.l.b16 %v395
      %v1022 = vunpack.c.h.b16 %v395
      %v1023 = vunpack.c.l.b16 %v396
      %v1024 = vunpack.c.h.b16 %v396
      %v1025 = vunpack.c.l.b16 %v397
      %v1026 = vunpack.c.h.b16 %v397
      %v1027 = vunpack.c.l.b16 %v398
      %v1028 = vunpack.c.h.b16 %v398
      %v1029 = vunpack.c.l.b16 %v399
      %v1030 = vunpack.c.h.b16 %v399
      %v1031 = vunpack.c.l.b16 %v400
      %v1032 = vunpack.c.h.b16 %v400
      %v1033 = vunpack.c.l.b16 %v401
      %v1034 = vunpack.c.h.b16 %v401
      %v1035 = vunpack.c.l.b16 %v402
      %v1036 = vunpack.c.h.b16 %v402
      %v1037 = vunpack.c.l.b16 %v403
      %v1038 = vunpack.c.h.b16 %v403
      %v1039 = vunpack.c.l.b16 %v404
      %v1040 = vunpack.c.h.b16 %v404
      %v1041 = vunpack.c.l.b16 %v405
      %v1042 = vunpack.c.h.b16 %v405
      %v1043 = vunpack.c.l.b16 %v406
      %v1044 = vunpack.c.h.b16 %v406
      %v1045 = vunpack.c.l.b16 %v407
      %v1046 = vunpack.c.h.b16 %v407
      %v1047 = vunpack.c.l.b16 %v408
      %v1048 = vunpack.c.h.b16 %v408
      %v1049 = vunpack.c.l.b16 %v409
      %v1050 = vunpack.c.h.b16 %v409
      %v1051 = vunpack.c.l.b16 %v410
      %v1052 = vunpack.c.h.b16 %v410
      %v1053 = vunpack.c.l.b16 %v411
      %v1054 = vunpack.c.h.b16 %v411
      %v1055 = vunpack.c.l.b16 %v412
      %v1056 = vunpack.c.h.b16 %v412
      %v1057 = vunpack.c.l.b16 %v413
      %v1058 = vunpack.c.h.b16 %v413
      %v1059 = vunpack.c.l.b16 %v414
      %v1060 = vunpack.c.h.b16 %v414
      %v1061 = vunpack.c.l.b16 %v415
      %v1062 = vunpack.c.h.b16 %v415
      %v1063 = vunpack.c.l.b16 %v416
      %v1064 = vunpack.c.h.b16 %v416
      %v1065 = vunpack.c.l.b16 %v417
      %v1066 = vunpack.c.h.b16 %v417
      %v1067 = vunpack.c.l.b16 %v418
      %v1068 = vunpack.c.h.b16 %v418
      %v1069 = vunpack.c.l.b16 %v419
      %v1070 = vunpack.c.h.b16 %v419
      %v1071 = vunpack.c.l.b16 %v420
      %v1072 = vunpack.c.h.b16 %v420
      %v1073 = vunpack.c.l.b16 %v421
      %v1074 = vunpack.c.h.b16 %v421
      %v1075 = vunpack.c.l.b16 %v422
      %v1076 = vunpack.c.h.b16 %v422
      %v1077 = vunpack.c.l.b16 %v423
      %v1078 = vunpack.c.h.b16 %v423
      %v1079 = vunpack.c.l.b16 %v424
      %v1080 = vunpack.c.h.b16 %v424
      %v1081 = vunpack.c.l.b16 %v425
      %v1082 = vunpack.c.h.b16 %v425
      %v1083 = vunpack.c.l.b16 %v426
      %v1084 = vunpack.c.h.b16 %v426
      %v1085 = vunpack.c.l.b16 %v427
      %v1086 = vunpack.c.h.b16 %v427
      %v1087 = vunpack.c.l.b16 %v428
      %v1088 = vunpack.c.h.b16 %v428
      %v1089 = vunpack.c.l.b16 %v429
      %v1090 = vunpack.c.h.b16 %v429
      %v1091 = vunpack.c.l.b16 %v430
      %v1092 = vunpack.c.h.b16 %v430
      %v1093 = vunpack.c.l.b16 %v431
      %v1094 = vunpack.c.h.b16 %v431
      %v1095 = vunpack.c.l.b16 %v432
      %v1096 = vunpack.c.h.b16 %v432
      %v1097 = vpack.c.b16 %v843, %v841
      %v1098 = vpack.c.b16 %v844, %v842
      %v1099 = vpack.c.b16 %v847, %v845
      %v1100 = vpack.c.b16 %v848, %v846
      %v1101 = vpack.c.b16 %v851, %v849
      %v1102 = vpack.c.b16 %v852, %v850
      %v1103 = vpack.c.b16 %v855, %v853
      %v1104 = vpack.c.b16 %v856, %v854
      %v1105 = vpack.c.b16 %v859, %v857
      %v1106 = vpack.c.b16 %v860, %v858
      %v1107 = vpack.c.b16 %v863, %v861
      %v1108 = vpack.c.b16 %v864, %v862
      %v1109 = vpack.c.b16 %v867, %v865
      %v1110 = vpack.c.b16 %v868, %v866
      %v1111 = vpack.c.b16 %v871, %v869
      %v1112 = vpack.c.b16 %v872, %v870
      %v1113 = vpack.c.b16 %v875, %v873
      %v1114 = vpack.c.b16 %v876, %v874
      %v1115 = vpack.c.b16 %v879, %v877
      %v1116 = vpack.c.b16 %v880, %v878
      %v1117 = vpack.c.b16 %v883, %v881
      %v1118 = vpack.c.b16 %v884, %v882
      %v1119 = vpack.c.b16 %v887, %v885
      %v1120 = vpack.c.b16 %v888, %v886
      %v1121 = vpack.c.b16 %v891, %v889
      %v1122 = vpack.c.b16 %v892, %v890
      %v1123 = vpack.c.b16 %v895, %v893
      %v1124 = vpack.c.b16 %v896, %v894
      %v1125 = vpack.c.b16 %v899, %v897
      %v1126 = vpack.c.b16 %v900, %v898
      %v1127 = vpack.c.b16 %v903, %v901
      %v1128 = vpack.c.b16 %v904, %v902
      %v1129 = vpack.c.b16 %v907, %v905
      %v1130 = vpack.c.b16 %v908, %v906
      %v1131 = vpack.c.b16 %v911, %v909
      %v1132 = vpack.c.b16 %v912, %v910
      %v1133 = vpack.c.b16 %v915, %v913
      %v1134 = vpack.c.b16 %v916, %v914
      %v1135 = vpack.c.b16 %v919, %v917
      %v1136 = vpack.c.b16 %v920, %v918
      %v1137 = vpack.c.b16 %v923, %v921
      %v1138 = vpack.c.b16 %v924, %v922
      %v1139 = vpack.c.b16 %v927, %v925
      %v1140 = vpack.c.b16 %v928, %v926
      %v1141 = vpack.c.b16 %v931, %v929
      %v1142 = vpack.c.b16 %v932, %v930
      %v1143 = vpack.c.b16 %v935, %v933
      %v1144 = vpack.c.b16 %v936, %v934
      %v1145 = vpack.c.b16 %v939, %v937
      %v1146 = vpack.c.b16 %v940, %v938
      %v1147 = vpack.c.b16 %v943, %v941
      %v1148 = vpack.c.b16 %v944, %v942
      %v1149 = vpack.c.b16 %v947, %v945
      %v1150 = vpack.c.b16 %v948, %v946
      %v1151 = vpack.c.b16 %v951, %v949
      %v1152 = vpack.c.b16 %v952, %v950
      %v1153 = vpack.c.b16 %v955, %v953
      %v1154 = vpack.c.b16 %v956, %v954
      %v1155 = vpack.c.b16 %v959, %v957
      %v1156 = vpack.c.b16 %v960, %v958
      %v1157 = vpack.c.b16 %v963, %v961
      %v1158 = vpack.c.b16 %v964, %v962
      %v1159 = vpack.c.b16 %v967, %v965
      %v1160 = vpack.c.b16 %v968, %v966
      %v1161 = vpack.c.b16 %v971, %v969
      %v1162 = vpack.c.b16 %v972, %v970
      %v1163 = vpack.c.b16 %v975, %v973
      %v1164 = vpack.c.b16 %v976, %v974
      %v1165 = vpack.c.b16 %v979, %v977
      %v1166 = vpack.c.b16 %v980, %v978
      %v1167 = vpack.c.b16 %v983, %v981
      %v1168 = vpack.c.b16 %v984, %v982
      %v1169 = vpack.c.b16 %v987, %v985
      %v1170 = vpack.c.b16 %v988, %v986
      %v1171 = vpack.c.b16 %v991, %v989
      %v1172 = vpack.c.b16 %v992, %v990
      %v1173 = vpack.c.b16 %v995, %v993
      %v1174 = vpack.c.b16 %v996, %v994
      %v1175 = vpack.c.b16 %v999, %v997
      %v1176 = vpack.c.b16 %v1000, %v998
      %v1177 = vpack.c.b16 %v1003, %v1001
      %v1178 = vpack.c.b16 %v1004, %v1002
      %v1179 = vpack.c.b16 %v1007, %v1005
      %v1180 = vpack.c.b16 %v1008, %v1006
      %v1181 = vpack.c.b16 %v1011, %v1009
      %v1182 = vpack.c.b16 %v1012, %v1010
      %v1183 = vpack.c.b16 %v1015, %v1013
      %v1184 = vpack.c.b16 %v1016, %v1014
      %v1185 = vpack.c.b16 %v1019, %v1017
      %v1186 = vpack.c.b16 %v1020, %v1018
      %v1187 = vpack.c.b16 %v1023, %v1021
      %v1188 = vpack.c.b16 %v1024, %v1022
      %v1189 = vpack.c.b16 %v1027, %v1025
      %v1190 = vpack.c.b16 %v1028, %v1026
      %v1191 = vpack.c.b16 %v1031, %v1029
      %v1192 = vpack.c.b16 %v1032, %v1030
      %v1193 = vpack.c.b16 %v1035, %v1033
      %v1194 = vpack.c.b16 %v1036, %v1034
      %v1195 = vpack.c.b16 %v1039, %v1037
      %v1196 = vpack.c.b16 %v1040, %v1038
      %v1197 = vpack.c.b16 %v1043, %v1041
      %v1198 = vpack.c.b16 %v1044, %v1042
      %v1199 = vpack.c.b16 %v1047, %v1045
      %v1200 = vpack.c.b16 %v1048, %v1046
      %v1201 = vpack.c.b16 %v1051, %v1049
      %v1202 = vpack.c.b16 %v1052, %v1050
      %v1203 = vpack.c.b16 %v1055, %v1053
      %v1204 = vpack.c.b16 %v1056, %v1054
      %v1205 = vpack.c.b16 %v1059, %v1057
      %v1206 = vpack.c.b16 %v1060, %v1058
      %v1207 = vpack.c.b16 %v1063, %v1061
      %v1208 = vpack.c.b16 %v1064, %v1062
      %v1209 = vpack.c.b16 %v1067, %v1065
      %v1210 = vpack.c.b16 %v1068, %v1066
      %v1211 = vpack.c.b16 %v1071, %v1069
      %v1212 = vpack.c.b16 %v1072, %v1070
      %v1213 = vpack.c.b16 %v1075, %v1073
      %v1214 = vpack.c.b16 %v1076, %v1074
      %v1215 = vpack.c.b16 %v1079, %v1077
      %v1216 = vpack.c.b16 %v1080, %v1078
      %v1217 = vpack.c.b16 %v1083, %v1081
      %v1218 = vpack.c.b16 %v1084, %v1082
      %v1219 = vpack.c.b16 %v1087, %v1085
      %v1220 = vpack.c.b16 %v1088, %v1086
      %v1221 = vpack.c.b16 %v1091, %v1089
      %v1222 = vpack.c.b16 %v1092, %v1090
      %v1223 = vpack.c.b16 %v1095, %v1093
      %v1224 = vpack.c.b16 %v1096, %v1094
      %1353 = vmatprep.subr.bf16.mxu0 %v1098
      %1354 = vmatpush1.bf16.msra.mxu0 %v1097
      %1355 = vmatprep.subr.bf16.mxu0 %v1100
      %1356 = vmatpush1.bf16.msra.mxu0 %v1099
      %1357 = vmatprep.subr.bf16.mxu0 %v1102
      %1358 = vmatpush1.bf16.msra.mxu0 %v1101
      %1359 = vmatprep.subr.bf16.mxu0 %v1104
      %1360 = vmatpush1.bf16.msra.mxu0 %v1103
      %1361 = vmatprep.subr.bf16.mxu0 %v1106
      %1362 = vmatpush1.bf16.msra.mxu0 %v1105
      %1363 = vmatprep.subr.bf16.mxu0 %v1108
      %1364 = vmatpush1.bf16.msra.mxu0 %v1107
      %1365 = vmatprep.subr.bf16.mxu0 %v1110
      %1366 = vmatpush1.bf16.msra.mxu0 %v1109
      %1367 = vmatprep.subr.bf16.mxu0 %v1112
      %1368 = vmatpush1.bf16.msra.mxu0 %v1111
      %1369 = vmatprep.subr.bf16.mxu0 %v1114
      %1370 = vmatpush1.bf16.msra.mxu0 %v1113
      %1371 = vmatprep.subr.bf16.mxu0 %v1116
      %1372 = vmatpush1.bf16.msra.mxu0 %v1115
      %1373 = vmatprep.subr.bf16.mxu0 %v1118
      %1374 = vmatpush1.bf16.msra.mxu0 %v1117
      %1375 = vmatprep.subr.bf16.mxu0 %v1120
      %1376 = vmatpush1.bf16.msra.mxu0 %v1119
      %1377 = vmatprep.subr.bf16.mxu0 %v1122
      %1378 = vmatpush1.bf16.msra.mxu0 %v1121
      %1379 = vmatprep.subr.bf16.mxu0 %v1124
      %1380 = vmatpush1.bf16.msra.mxu0 %v1123
      %1381 = vmatprep.subr.bf16.mxu0 %v1126
      %1382 = vmatpush1.bf16.msra.mxu0 %v1125
      %1383 = vmatprep.subr.bf16.mxu0 %v1128
      %1384 = vmatpush1.bf16.msra.mxu0 %v1127
      %1385 = vmatprep.mubr.bf16.mxu0 %v602
      %1386 = vmatmul.mubr.bf16.gmra.mrb[0].mxu0 %v601
      %v1387 = vpop.f32.mrb[0].mxu0
      %v1388 = vadd.f32 0.0, %v1387
      %v1389 = vpop.f32.mrb[0].mxu0
      %v1390 = vadd.f32 0.0, %v1389
      %v1391 = vpop.f32.mrb[0].mxu0
      %v1392 = vadd.f32 0.0, %v1391
      %v1393 = vpop.f32.mrb[0].mxu0
      %v1394 = vadd.f32 0.0, %v1393
      %1395 = vmatprep.mubr.bf16.mxu0 %v610
      %1396 = vmatmul.mubr.bf16.gmra.mrb[0].mxu0 %v609
      %v1397 = vpop.f32.mrb[0].mxu0
      %v1398 = vadd.f32 0.0, %v1397
      %v1399 = vpop.f32.mrb[0].mxu0
      %v1400 = vadd.f32 0.0, %v1399
      %v1401 = vpop.f32.mrb[0].mxu0
      %v1402 = vadd.f32 0.0, %v1401
      %v1403 = vpop.f32.mrb[0].mxu0
      %v1404 = vadd.f32 0.0, %v1403
      %1405 = vmatprep.mubr.bf16.mxu0 %v618
      %1406 = vmatmul.mubr.bf16.gmra.mrb[0].mxu0 %v617
      %v1407 = vpop.f32.mrb[0].mxu0
      %v1408 = vadd.f32 0.0, %v1407
      %v1409 = vpop.f32.mrb[0].mxu0
      %v1410 = vadd.f32 0.0, %v1409
      %v1411 = vpop.f32.mrb[0].mxu0
      %v1412 = vadd.f32 0.0, %v1411
      %v1413 = vpop.f32.mrb[0].mxu0
      %v1414 = vadd.f32 0.0, %v1413
      %1415 = vmatprep.mubr.bf16.mxu0 %v626
      %1416 = vmatmul.mubr.bf16.gmra.mrb[0].mxu0 %v625
      %v1417 = vpop.f32.mrb[0].mxu0
      %v1418 = vadd.f32 0.0, %v1417
      %v1419 = vpop.f32.mrb[0].mxu0
      %v1420 = vadd.f32 0.0, %v1419
      %v1421 = vpop.f32.mrb[0].mxu0
      %v1422 = vadd.f32 0.0, %v1421
      %v1423 = vpop.f32.mrb[0].mxu0
      %v1424 = vadd.f32 0.0, %v1423
      %1425 = vmatprep.mubr.bf16.mxu0 %v634
      %1426 = vmatmul.mubr.bf16.gmra.mrb[0].mxu0 %v633
      %v1427 = vpop.f32.mrb[0].mxu0
      %v1428 = vadd.f32 0.0, %v1427
      %v1429 = vpop.f32.mrb[0].mxu0
      %v1430 = vadd.f32 0.0, %v1429
      %v1431 = vpop.f32.mrb[0].mxu0
      %v1432 = vadd.f32 0.0, %v1431
      %v1433 = vpop.f32.mrb[0].mxu0
      %v1434 = vadd.f32 0.0, %v1433
      %1435 = vmatprep.mubr.bf16.mxu0 %v642
      %1436 = vmatmul.mubr.bf16.gmra.mrb[0].mxu0 %v641
      %v1437 = vpop.f32.mrb[0].mxu0
      %v1438 = vadd.f32 0.0, %v1437
      %v1439 = vpop.f32.mrb[0].mxu0
      %v1440 = vadd.f32 0.0, %v1439
      %v1441 = vpop.f32.mrb[0].mxu0
      %v1442 = vadd.f32 0.0, %v1441
      %v1443 = vpop.f32.mrb[0].mxu0
      %v1444 = vadd.f32 0.0, %v1443
      %1445 = vmatprep.mubr.bf16.mxu0 %v650
      %1446 = vmatmul.mubr.bf16.gmra.mrb[0].mxu0 %v649
      %v1447 = vpop.f32.mrb[0].mxu0
      %v1448 = vadd.f32 0.0, %v1447
      %v1449 = vpop.f32.mrb[0].mxu0
      %v1450 = vadd.f32 0.0, %v1449
      %v1451 = vpop.f32.mrb[0].mxu0
      %v1452 = vadd.f32 0.0, %v1451
      %v1453 = vpop.f32.mrb[0].mxu0
      %v1454 = vadd.f32 0.0, %v1453
      %1455 = vdwg.mxu0
      %1456 = vmatprep.subr.bf16.mxu0 %v1130
      %1457 = vmatpush1.bf16.msra.mxu0 %v1129
      %1458 = vmatprep.subr.bf16.mxu0 %v1132
      %1459 = vmatpush1.bf16.msra.mxu0 %v1131
      %1460 = vmatprep.subr.bf16.mxu0 %v1134
      %1461 = vmatpush1.bf16.msra.mxu0 %v1133
      %1462 = vmatprep.subr.bf16.mxu0 %v1136
      %1463 = vmatpush1.bf16.msra.mxu0 %v1135
      %1464 = vmatprep.subr.bf16.mxu0 %v1138
      %1465 = vmatpush1.bf16.msra.mxu0 %v1137
      %1466 = vmatprep.subr.bf16.mxu0 %v1140
      %1467 = vmatpush1.bf16.msra.mxu0 %v1139
      %1468 = vmatprep.subr.bf16.mxu0 %v1142
      %1469 = vmatpush1.bf16.msra.mxu0 %v1141
      %1470 = vmatprep.subr.bf16.mxu0 %v1144
      %1471 = vmatpush1.bf16.msra.mxu0 %v1143
      %1472 = vmatprep.subr.bf16.mxu0 %v1146
      %1473 = vmatpush1.bf16.msra.mxu0 %v1145
      %1474 = vmatprep.subr.bf16.mxu0 %v1148
      %1475 = vmatpush1.bf16.msra.mxu0 %v1147
      %1476 = vmatprep.subr.bf16.mxu0 %v1150
      %1477 = vmatpush1.bf16.msra.mxu0 %v1149
      %1478 = vmatprep.subr.bf16.mxu0 %v1152
      %1479 = vmatpush1.bf16.msra.mxu0 %v1151
      %1480 = vmatprep.subr.bf16.mxu0 %v1154
      %1481 = vmatpush1.bf16.msra.mxu0 %v1153
      %1482 = vmatprep.subr.bf16.mxu0 %v1156
      %1483 = vmatpush1.bf16.msra.mxu0 %v1155
      %1484 = vmatprep.subr.bf16.mxu0 %v1158
      %1485 = vmatpush1.bf16.msra.mxu0 %v1157
      %1486 = vmatprep.subr.bf16.mxu0 %v1160
      %1487 = vmatpush1.bf16.msra.mxu0 %v1159
      %1488 = vmatprep.mubr.bf16.mxu0 %v604
      %1489 = vmatmul.mubr.bf16.gmra.mrb[0].mxu0 %v603
      %v1490 = vpop.f32.mrb[0].mxu0
      %v1491 = vadd.f32 %v1388, %v1490
      %v1492 = vpop.f32.mrb[0].mxu0
      %v1493 = vadd.f32 %v1390, %v1492
      %v1494 = vpop.f32.mrb[0].mxu0
      %v1495 = vadd.f32 %v1392, %v1494
      %v1496 = vpop.f32.mrb[0].mxu0
      %v1497 = vadd.f32 %v1394, %v1496
      %1498 = vmatprep.mubr.bf16.mxu0 %v612
      %1499 = vmatmul.mubr.bf16.gmra.mrb[0].mxu0 %v611
      %v1500 = vpop.f32.mrb[0].mxu0
      %v1501 = vadd.f32 %v1398, %v1500
      %v1502 = vpop.f32.mrb[0].mxu0
      %v1503 = vadd.f32 %v1400, %v1502
      %v1504 = vpop.f32.mrb[0].mxu0
      %v1505 = vadd.f32 %v1402, %v1504
      %v1506 = vpop.f32.mrb[0].mxu0
      %v1507 = vadd.f32 %v1404, %v1506
      %1508 = vmatprep.mubr.bf16.mxu0 %v620
      %1509 = vmatmul.mubr.bf16.gmra.mrb[0].mxu0 %v619
      %v1510 = vpop.f32.mrb[0].mxu0
      %v1511 = vadd.f32 %v1408, %v1510
      %v1512 = vpop.f32.mrb[0].mxu0
      %v1513 = vadd.f32 %v1410, %v1512
      %v1514 = vpop.f32.mrb[0].mxu0
      %v1515 = vadd.f32 %v1412, %v1514
      %v1516 = vpop.f32.mrb[0].mxu0
      %v1517 = vadd.f32 %v1414, %v1516
      %1518 = vmatprep.mubr.bf16.mxu0 %v628
      %1519 = vmatmul.mubr.bf16.gmra.mrb[0].mxu0 %v627
      %v1520 = vpop.f32.mrb[0].mxu0
      %v1521 = vadd.f32 %v1418, %v1520
      %v1522 = vpop.f32.mrb[0].mxu0
      %v1523 = vadd.f32 %v1420, %v1522
      %v1524 = vpop.f32.mrb[0].mxu0
      %v1525 = vadd.f32 %v1422, %v1524
      %v1526 = vpop.f32.mrb[0].mxu0
      %v1527 = vadd.f32 %v1424, %v1526
      %1528 = vmatprep.mubr.bf16.mxu0 %v636
      %1529 = vmatmul.mubr.bf16.gmra.mrb[0].mxu0 %v635
      %v1530 = vpop.f32.mrb[0].mxu0
      %v1531 = vadd.f32 %v1428, %v1530
      %v1532 = vpop.f32.mrb[0].mxu0
      %v1533 = vadd.f32 %v1430, %v1532
      %v1534 = vpop.f32.mrb[0].mxu0
      %v1535 = vadd.f32 %v1432, %v1534
      %v1536 = vpop.f32.mrb[0].mxu0
      %v1537 = vadd.f32 %v1434, %v1536
      %1538 = vmatprep.mubr.bf16.mxu0 %v644
      %1539 = vmatmul.mubr.bf16.gmra.mrb[0].mxu0 %v643
      %v1540 = vpop.f32.mrb[0].mxu0
      %v1541 = vadd.f32 %v1438, %v1540
      %v1542 = vpop.f32.mrb[0].mxu0
      %v1543 = vadd.f32 %v1440, %v1542
      %v1544 = vpop.f32.mrb[0].mxu0
      %v1545 = vadd.f32 %v1442, %v1544
      %v1546 = vpop.f32.mrb[0].mxu0
      %v1547 = vadd.f32 %v1444, %v1546
      %1548 = vmatprep.mubr.bf16.mxu0 %v652
      %1549 = vmatmul.mubr.bf16.gmra.mrb[0].mxu0 %v651
      %v1550 = vpop.f32.mrb[0].mxu0
      %v1551 = vadd.f32 %v1448, %v1550
      %v1552 = vpop.f32.mrb[0].mxu0
      %v1553 = vadd.f32 %v1450, %v1552
      %v1554 = vpop.f32.mrb[0].mxu0
      %v1555 = vadd.f32 %v1452, %v1554
      %v1556 = vpop.f32.mrb[0].mxu0
      %v1557 = vadd.f32 %v1454, %v1556
      %1558 = vdwg.mxu0
      %1559 = vmatprep.subr.bf16.mxu0 %v1162
      %1560 = vmatpush1.bf16.msra.mxu0 %v1161
      %1561 = vmatprep.subr.bf16.mxu0 %v1164
      %1562 = vmatpush1.bf16.msra.mxu0 %v1163
      %1563 = vmatprep.subr.bf16.mxu0 %v1166
      %1564 = vmatpush1.bf16.msra.mxu0 %v1165
      %1565 = vmatprep.subr.bf16.mxu0 %v1168
      %1566 = vmatpush1.bf16.msra.mxu0 %v1167
      %1567 = vmatprep.subr.bf16.mxu0 %v1170
      %1568 = vmatpush1.bf16.msra.mxu0 %v1169
      %1569 = vmatprep.subr.bf16.mxu0 %v1172
      %1570 = vmatpush1.bf16.msra.mxu0 %v1171
      %1571 = vmatprep.subr.bf16.mxu0 %v1174
      %1572 = vmatpush1.bf16.msra.mxu0 %v1173
      %1573 = vmatprep.subr.bf16.mxu0 %v1176
      %1574 = vmatpush1.bf16.msra.mxu0 %v1175
      %1575 = vmatprep.subr.bf16.mxu0 %v1178
      %1576 = vmatpush1.bf16.msra.mxu0 %v1177
      %1577 = vmatprep.subr.bf16.mxu0 %v1180
      %1578 = vmatpush1.bf16.msra.mxu0 %v1179
      %1579 = vmatprep.subr.bf16.mxu0 %v1182
      %1580 = vmatpush1.bf16.msra.mxu0 %v1181
      %1581 = vmatprep.subr.bf16.mxu0 %v1184
      %1582 = vmatpush1.bf16.msra.mxu0 %v1183
      %1583 = vmatprep.subr.bf16.mxu0 %v1186
      %1584 = vmatpush1.bf16.msra.mxu0 %v1185
      %1585 = vmatprep.subr.bf16.mxu0 %v1188
      %1586 = vmatpush1.bf16.msra.mxu0 %v1187
      %1587 = vmatprep.subr.bf16.mxu0 %v1190
      %1588 = vmatpush1.bf16.msra.mxu0 %v1189
      %1589 = vmatprep.subr.bf16.mxu0 %v1192
      %1590 = vmatpush1.bf16.msra.mxu0 %v1191
      %1591 = vmatprep.mubr.bf16.mxu0 %v606
      %1592 = vmatmul.mubr.bf16.gmra.mrb[0].mxu0 %v605
      %v1593 = vpop.f32.mrb[0].mxu0
      %v1594 = vadd.f32 %v1491, %v1593
      %v1595 = vpop.f32.mrb[0].mxu0
      %v1596 = vadd.f32 %v1493, %v1595
      %v1597 = vpop.f32.mrb[0].mxu0
      %v1598 = vadd.f32 %v1495, %v1597
      %v1599 = vpop.f32.mrb[0].mxu0
      %v1600 = vadd.f32 %v1497, %v1599
      %1601 = vmatprep.mubr.bf16.mxu0 %v614
      %1602 = vmatmul.mubr.bf16.gmra.mrb[0].mxu0 %v613
      %v1603 = vpop.f32.mrb[0].mxu0
      %v1604 = vadd.f32 %v1501, %v1603
      %v1605 = vpop.f32.mrb[0].mxu0
      %v1606 = vadd.f32 %v1503, %v1605
      %v1607 = vpop.f32.mrb[0].mxu0
      %v1608 = vadd.f32 %v1505, %v1607
      %v1609 = vpop.f32.mrb[0].mxu0
      %v1610 = vadd.f32 %v1507, %v1609
      %1611 = vmatprep.mubr.bf16.mxu0 %v622
      %1612 = vmatmul.mubr.bf16.gmra.mrb[0].mxu0 %v621
      %v1613 = vpop.f32.mrb[0].mxu0
      %v1614 = vadd.f32 %v1511, %v1613
      %v1615 = vpop.f32.mrb[0].mxu0
      %v1616 = vadd.f32 %v1513, %v1615
      %v1617 = vpop.f32.mrb[0].mxu0
      %v1618 = vadd.f32 %v1515, %v1617
      %v1619 = vpop.f32.mrb[0].mxu0
      %v1620 = vadd.f32 %v1517, %v1619
      %1621 = vmatprep.mubr.bf16.mxu0 %v630
      %1622 = vmatmul.mubr.bf16.gmra.mrb[0].mxu0 %v629
      %v1623 = vpop.f32.mrb[0].mxu0
      %v1624 = vadd.f32 %v1521, %v1623
      %v1625 = vpop.f32.mrb[0].mxu0
      %v1626 = vadd.f32 %v1523, %v1625
      %v1627 = vpop.f32.mrb[0].mxu0
      %v1628 = vadd.f32 %v1525, %v1627
      %v1629 = vpop.f32.mrb[0].mxu0
      %v1630 = vadd.f32 %v1527, %v1629
      %1631 = vmatprep.mubr.bf16.mxu0 %v638
      %1632 = vmatmul.mubr.bf16.gmra.mrb[0].mxu0 %v637
      %v1633 = vpop.f32.mrb[0].mxu0
      %v1634 = vadd.f32 %v1531, %v1633
      %v1635 = vpop.f32.mrb[0].mxu0
      %v1636 = vadd.f32 %v1533, %v1635
      %v1637 = vpop.f32.mrb[0].mxu0
      %v1638 = vadd.f32 %v1535, %v1637
      %v1639 = vpop.f32.mrb[0].mxu0
      %v1640 = vadd.f32 %v1537, %v1639
      %1641 = vmatprep.mubr.bf16.mxu0 %v646
      %1642 = vmatmul.mubr.bf16.gmra.mrb[0].mxu0 %v645
      %v1643 = vpop.f32.mrb[0].mxu0
      %v1644 = vadd.f32 %v1541, %v1643
      %v1645 = vpop.f32.mrb[0].mxu0
      %v1646 = vadd.f32 %v1543, %v1645
      %v1647 = vpop.f32.mrb[0].mxu0
      %v1648 = vadd.f32 %v1545, %v1647
      %v1649 = vpop.f32.mrb[0].mxu0
      %v1650 = vadd.f32 %v1547, %v1649
      %1651 = vmatprep.mubr.bf16.mxu0 %v654
      %1652 = vmatmul.mubr.bf16.gmra.mrb[0].mxu0 %v653
      %v1653 = vpop.f32.mrb[0].mxu0
      %v1654 = vadd.f32 %v1551, %v1653
      %v1655 = vpop.f32.mrb[0].mxu0
      %v1656 = vadd.f32 %v1553, %v1655
      %v1657 = vpop.f32.mrb[0].mxu0
      %v1658 = vadd.f32 %v1555, %v1657
      %v1659 = vpop.f32.mrb[0].mxu0
      %v1660 = vadd.f32 %v1557, %v1659
      %1661 = vdwg.mxu0
      %1662 = vmatprep.subr.bf16.mxu0 %v1194
      %1663 = vmatpush1.bf16.msra.mxu0 %v1193
      %1664 = vmatprep.subr.bf16.mxu0 %v1196
      %1665 = vmatpush1.bf16.msra.mxu0 %v1195
      %1666 = vmatprep.subr.bf16.mxu0 %v1198
      %1667 = vmatpush1.bf16.msra.mxu0 %v1197
      %1668 = vmatprep.subr.bf16.mxu0 %v1200
      %1669 = vmatpush1.bf16.msra.mxu0 %v1199
      %1670 = vmatprep.subr.bf16.mxu0 %v1202
      %1671 = vmatpush1.bf16.msra.mxu0 %v1201
      %1672 = vmatprep.subr.bf16.mxu0 %v1204
      %1673 = vmatpush1.bf16.msra.mxu0 %v1203
      %1674 = vmatprep.subr.bf16.mxu0 %v1206
      %1675 = vmatpush1.bf16.msra.mxu0 %v1205
      %1676 = vmatprep.subr.bf16.mxu0 %v1208
      %1677 = vmatpush1.bf16.msra.mxu0 %v1207
      %1678 = vmatprep.subr.bf16.mxu0 %v1210
      %1679 = vmatpush1.bf16.msra.mxu0 %v1209
      %1680 = vmatprep.subr.bf16.mxu0 %v1212
      %1681 = vmatpush1.bf16.msra.mxu0 %v1211
      %1682 = vmatprep.subr.bf16.mxu0 %v1214
      %1683 = vmatpush1.bf16.msra.mxu0 %v1213
      %1684 = vmatprep.subr.bf16.mxu0 %v1216
      %1685 = vmatpush1.bf16.msra.mxu0 %v1215
      %1686 = vmatprep.subr.bf16.mxu0 %v1218
      %1687 = vmatpush1.bf16.msra.mxu0 %v1217
      %1688 = vmatprep.subr.bf16.mxu0 %v1220
      %1689 = vmatpush1.bf16.msra.mxu0 %v1219
      %1690 = vmatprep.subr.bf16.mxu0 %v1222
      %1691 = vmatpush1.bf16.msra.mxu0 %v1221
      %1692 = vmatprep.subr.bf16.mxu0 %v1224
      %1693 = vmatpush1.bf16.msra.mxu0 %v1223
      %1694 = vmatprep.mubr.bf16.mxu0 %v608
      %1695 = vmatmul.mubr.bf16.gmra.mrb[0].mxu0 %v607
      %v1696 = vpop.f32.mrb[0].mxu0
      %v1697 = vadd.f32 %v1594, %v1696
      %v1698 = vpop.f32.mrb[0].mxu0
      %v1699 = vadd.f32 %v1596, %v1698
      %v1700 = vpop.f32.mrb[0].mxu0
      %v1701 = vadd.f32 %v1598, %v1700
      %v1702 = vpop.f32.mrb[0].mxu0
      %v1703 = vadd.f32 %v1600, %v1702
      %1704 = vmatprep.mubr.bf16.mxu0 %v616
      %1705 = vmatmul.mubr.bf16.gmra.mrb[0].mxu0 %v615
      %v1706 = vpop.f32.mrb[0].mxu0
      %v1707 = vadd.f32 %v1604, %v1706
      %v1708 = vpop.f32.mrb[0].mxu0
      %v1709 = vadd.f32 %v1606, %v1708
      %v1710 = vpop.f32.mrb[0].mxu0
      %v1711 = vadd.f32 %v1608, %v1710
      %v1712 = vpop.f32.mrb[0].mxu0
      %v1713 = vadd.f32 %v1610, %v1712
      %1714 = vmatprep.mubr.bf16.mxu0 %v624
      %1715 = vmatmul.mubr.bf16.gmra.mrb[0].mxu0 %v623
      %v1716 = vpop.f32.mrb[0].mxu0
      %v1717 = vadd.f32 %v1614, %v1716
      %v1718 = vpop.f32.mrb[0].mxu0
      %v1719 = vadd.f32 %v1616, %v1718
      %v1720 = vpop.f32.mrb[0].mxu0
      %v1721 = vadd.f32 %v1618, %v1720
      %v1722 = vpop.f32.mrb[0].mxu0
      %v1723 = vadd.f32 %v1620, %v1722
      %1724 = vmatprep.mubr.bf16.mxu0 %v632
      %1725 = vmatmul.mubr.bf16.gmra.mrb[0].mxu0 %v631
      %v1726 = vpop.f32.mrb[0].mxu0
      %v1727 = vadd.f32 %v1624, %v1726
      %v1728 = vpop.f32.mrb[0].mxu0
      %v1729 = vadd.f32 %v1626, %v1728
      %v1730 = vpop.f32.mrb[0].mxu0
      %v1731 = vadd.f32 %v1628, %v1730
      %v1732 = vpop.f32.mrb[0].mxu0
      %v1733 = vadd.f32 %v1630, %v1732
      %1734 = vmatprep.mubr.bf16.mxu0 %v640
      %1735 = vmatmul.mubr.bf16.gmra.mrb[0].mxu0 %v639
      %v1736 = vpop.f32.mrb[0].mxu0
      %v1737 = vadd.f32 %v1634, %v1736
      %v1738 = vpop.f32.mrb[0].mxu0
      %v1739 = vadd.f32 %v1636, %v1738
      %v1740 = vpop.f32.mrb[0].mxu0
      %v1741 = vadd.f32 %v1638, %v1740
      %v1742 = vpop.f32.mrb[0].mxu0
      %v1743 = vadd.f32 %v1640, %v1742
      %1744 = vmatprep.mubr.bf16.mxu0 %v648
      %1745 = vmatmul.mubr.bf16.gmra.mrb[0].mxu0 %v647
      %v1746 = vpop.f32.mrb[0].mxu0
      %v1747 = vadd.f32 %v1644, %v1746
      %v1748 = vpop.f32.mrb[0].mxu0
      %v1749 = vadd.f32 %v1646, %v1748
      %v1750 = vpop.f32.mrb[0].mxu0
      %v1751 = vadd.f32 %v1648, %v1750
      %v1752 = vpop.f32.mrb[0].mxu0
      %v1753 = vadd.f32 %v1650, %v1752
      %1754 = vmatprep.mubr.bf16.mxu0 %v656
      %1755 = vmatmul.mubr.bf16.gmra.mrb[0].mxu0 %v655
      %v1756 = vpop.f32.mrb[0].mxu0
      %v1757 = vadd.f32 %v1654, %v1756
      %v1758 = vpop.f32.mrb[0].mxu0
      %v1759 = vadd.f32 %v1656, %v1758
      %v1760 = vpop.f32.mrb[0].mxu0
      %v1761 = vadd.f32 %v1658, %v1760
      %v1762 = vpop.f32.mrb[0].mxu0
      %v1763 = vadd.f32 %v1660, %v1762
      %1764 = vdwg.mxu0
      %v1765 = vpack.c.bf16 %v1701, %v1697
      %v1766 = vpack.c.bf16 %v1703, %v1699
      %v1767 = vpack.c.bf16 %v1711, %v1707
      %v1768 = vpack.c.bf16 %v1713, %v1709
      %v1769 = vpack.c.bf16 %v1721, %v1717
      %v1770 = vpack.c.bf16 %v1723, %v1719
      %v1771 = vpack.c.bf16 %v1731, %v1727
      %v1772 = vpack.c.bf16 %v1733, %v1729
      %v1773 = vpack.c.bf16 %v1741, %v1737
      %v1774 = vpack.c.bf16 %v1743, %v1739
      %v1775 = vpack.c.bf16 %v1751, %v1747
      %v1776 = vpack.c.bf16 %v1753, %v1749
      %v1777 = vpack.c.bf16 %v1761, %v1757
      %v1778 = vpack.c.bf16 %v1763, %v1759
      %v1793 = vunpack.c.l.b16 %v1765
      %v1794 = vunpack.c.l.b16 %v1766
      %v1795 = vunpack.c.h.b16 %v1765
      %v1796 = vunpack.c.h.b16 %v1766
      %v1797 = vunpack.c.l.b16 %v1767
      %v1798 = vunpack.c.l.b16 %v1768
      %v1799 = vunpack.c.h.b16 %v1767
      %v1800 = vunpack.c.h.b16 %v1768
      %v1801 = vunpack.c.l.b16 %v1769
      %v1802 = vunpack.c.l.b16 %v1770
      %v1803 = vunpack.c.h.b16 %v1769
      %v1804 = vunpack.c.h.b16 %v1770
      %v1805 = vunpack.c.l.b16 %v1771
      %v1806 = vunpack.c.l.b16 %v1772
      %v1807 = vunpack.c.h.b16 %v1771
      %v1808 = vunpack.c.h.b16 %v1772
      %v1809 = vunpack.c.l.b16 %v1773
      %v1810 = vunpack.c.l.b16 %v1774
      %v1811 = vunpack.c.h.b16 %v1773
      %v1812 = vunpack.c.h.b16 %v1774
      %v1813 = vunpack.c.l.b16 %v1775
      %v1814 = vunpack.c.l.b16 %v1776
      %v1815 = vunpack.c.h.b16 %v1775
      %v1816 = vunpack.c.h.b16 %v1776
      %v1817 = vunpack.c.l.b16 %v1777
      %v1818 = vunpack.c.l.b16 %v1778
      %v1819 = vunpack.c.h.b16 %v1777
      %v1820 = vunpack.c.h.b16 %v1778
      %v1821 = vpack.c.b16 %v1794, %v1793
      %v1822 = vpack.c.b16 %v1796, %v1795
      %v1823 = vpack.c.b16 %v1798, %v1797
      %v1824 = vpack.c.b16 %v1800, %v1799
      %v1825 = vpack.c.b16 %v1802, %v1801
      %v1826 = vpack.c.b16 %v1804, %v1803
      %v1827 = vpack.c.b16 %v1806, %v1805
      %v1828 = vpack.c.b16 %v1808, %v1807
      %v1829 = vpack.c.b16 %v1810, %v1809
      %v1830 = vpack.c.b16 %v1812, %v1811
      %v1831 = vpack.c.b16 %v1814, %v1813
      %v1832 = vpack.c.b16 %v1816, %v1815
      %v1833 = vpack.c.b16 %v1818, %v1817
      %v1834 = vpack.c.b16 %v1820, %v1819
      %1849 = vst [vmem:[%s185] sm:$0xff] %v1821
      %1850 = vst [vmem:[%s185 + $0x8] sm:$0xff] %v1822
      %1851 = vst [vmem:[%s185 + $0x10] sm:$0xff] %v1823
      %1852 = vst [vmem:[%s185 + $0x18] sm:$0xff] %v1824
      %1853 = vst [vmem:[%s185 + $0x20] sm:$0xff] %v1825
      %1854 = vst [vmem:[%s185 + $0x28] sm:$0xff] %v1826
      %1855 = vst [vmem:[%s185 + $0x30] sm:$0xff] %v1827
      %1856 = vst [vmem:[%s185 + $0x38] sm:$0xff] %v1828
      %1857 = vst [vmem:[%s185 + $0x40] sm:$0xff] %v1829
      %1858 = vst [vmem:[%s185 + $0x48] sm:$0xff] %v1830
      %1859 = vst [vmem:[%s185 + $0x50] sm:$0xff] %v1831
      %1860 = vst [vmem:[%s185 + $0x58] sm:$0xff] %v1832
      %1861 = vst [vmem:[%s185 + $0x60] sm:$0xff] %v1833
      %1862 = vst [vmem:[%s185 + $0x68] sm:$0xff] %v1834
      %v1863 = vadd.f32 %v1697, %v1701
      %v1864 = vadd.f32 %v1863, %v1707
      %v1865 = vadd.f32 %v1864, %v1711
      %v1866 = vadd.f32 %v1865, %v1717
      %v1867 = vadd.f32 %v1866, %v1721
      %v1868 = vadd.f32 %v1867, %v1727
      %v1869 = vadd.f32 %v1868, %v1731
      %v1870 = vadd.f32 %v1869, %v1737
      %v1871 = vadd.f32 %v1870, %v1741
      %v1872 = vadd.f32 %v1871, %v1747
      %v1873 = vadd.f32 %v1872, %v1751
      %v1874 = vadd.f32 %v1873, %v1757
      %v1875 = vadd.f32 %v1874, %v1761
      %v1876 = vrot.slane %v1875, 4
      %v1877 = vadd.f32 %v1875, %v1876
      %v1878 = vrot.slane %v1877, 2
      %v1879 = vadd.f32 %v1877, %v1878
      %v1880 = vrot.slane %v1879, 1
      %v1881 = vadd.f32 %v1879, %v1880
      %v1882 = vadd.f32 %v1699, %v1703
      %v1883 = vadd.f32 %v1882, %v1709
      %v1884 = vadd.f32 %v1883, %v1713
      %v1885 = vadd.f32 %v1884, %v1719
      %v1886 = vadd.f32 %v1885, %v1723
      %v1887 = vadd.f32 %v1886, %v1729
      %v1888 = vadd.f32 %v1887, %v1733
      %v1889 = vadd.f32 %v1888, %v1739
      %v1890 = vadd.f32 %v1889, %v1743
      %v1891 = vadd.f32 %v1890, %v1749
      %v1892 = vadd.f32 %v1891, %v1753
      %v1893 = vadd.f32 %v1892, %v1759
      %v1894 = vadd.f32 %v1893, %v1763
      %v1895 = vrot.slane %v1894, 4
      %v1896 = vadd.f32 %v1894, %v1895
      %v1897 = vrot.slane %v1896, 2
      %v1898 = vadd.f32 %v1896, %v1897
      %v1899 = vrot.slane %v1898, 1
      %v1900 = vadd.f32 %v1898, %v1899
      %v1903 = vcombine.low %v1881, %v1900
      %v1905 = vunpack.c.l.s4 1966171168
      %v1906 = vunpack.c.0.s8 %v1905
      %v1907 = vlaneseq
      %v1908 = vshrl.u32 %v1907, 7
      %v1909 = vsub.s32 %v1906, %v1908
      %v1910 = vrot.slane %v1903, %v1909
      %v1912 = vunpack.c.l.s4 1966171168
      %v1913 = vunpack.c.0.s8 %v1912
      %v1914 = vlaneseq
      %v1915 = vshrl.u32 %v1914, 7
      %v1916 = vsub.s32 %v1913, %v1915
      %v1917 = vrot.slane %v1910, %v1916
      %v1919 = vlaneseq
      %vm1920 = vcmp.ge.s32.totalorder %v1919, 0
      %vm1921 = vcmp.lt.s32.totalorder %v1919, 256
      %vm1922 = vmand %vm1920, %vm1921
      %1923 = vst.msk [vmem:[%s191] ss:$2 sm:$0x3] %vm1922, %v1917
      %v1924 = vmul.f32 %v1697, %v1697
      %v1925 = vmul.f32 %v1699, %v1699
      %v1926 = vmul.f32 %v1701, %v1701
      %v1927 = vmul.f32 %v1703, %v1703
      %v1928 = vmul.f32 %v1707, %v1707
      %v1929 = vmul.f32 %v1709, %v1709
      %v1930 = vmul.f32 %v1711, %v1711
      %v1931 = vmul.f32 %v1713, %v1713
      %v1932 = vmul.f32 %v1717, %v1717
      %v1933 = vmul.f32 %v1719, %v1719
      %v1934 = vmul.f32 %v1721, %v1721
      %v1935 = vmul.f32 %v1723, %v1723
      %v1936 = vmul.f32 %v1727, %v1727
      %v1937 = vmul.f32 %v1729, %v1729
      %v1938 = vmul.f32 %v1731, %v1731
      %v1939 = vmul.f32 %v1733, %v1733
      %v1940 = vmul.f32 %v1737, %v1737
      %v1941 = vmul.f32 %v1739, %v1739
      %v1942 = vmul.f32 %v1741, %v1741
      %v1943 = vmul.f32 %v1743, %v1743
      %v1944 = vmul.f32 %v1747, %v1747
      %v1945 = vmul.f32 %v1749, %v1749
      %v1946 = vmul.f32 %v1751, %v1751
      %v1947 = vmul.f32 %v1753, %v1753
      %v1948 = vmul.f32 %v1757, %v1757
      %v1949 = vmul.f32 %v1759, %v1759
      %v1950 = vmul.f32 %v1761, %v1761
      %v1951 = vmul.f32 %v1763, %v1763
      %v1952 = vadd.f32 %v1924, %v1926
      %v1953 = vadd.f32 %v1952, %v1928
      %v1954 = vadd.f32 %v1953, %v1930
      %v1955 = vadd.f32 %v1954, %v1932
      %v1956 = vadd.f32 %v1955, %v1934
      %v1957 = vadd.f32 %v1956, %v1936
      %v1958 = vadd.f32 %v1957, %v1938
      %v1959 = vadd.f32 %v1958, %v1940
      %v1960 = vadd.f32 %v1959, %v1942
      %v1961 = vadd.f32 %v1960, %v1944
      %v1962 = vadd.f32 %v1961, %v1946
      %v1963 = vadd.f32 %v1962, %v1948
      %v1964 = vadd.f32 %v1963, %v1950
      %v1965 = vrot.slane %v1964, 4
      %v1966 = vadd.f32 %v1964, %v1965
      %v1967 = vrot.slane %v1966, 2
      %v1968 = vadd.f32 %v1966, %v1967
      %v1969 = vrot.slane %v1968, 1
      %v1970 = vadd.f32 %v1968, %v1969
      %v1971 = vadd.f32 %v1925, %v1927
      %v1972 = vadd.f32 %v1971, %v1929
      %v1973 = vadd.f32 %v1972, %v1931
      %v1974 = vadd.f32 %v1973, %v1933
      %v1975 = vadd.f32 %v1974, %v1935
      %v1976 = vadd.f32 %v1975, %v1937
      %v1977 = vadd.f32 %v1976, %v1939
      %v1978 = vadd.f32 %v1977, %v1941
      %v1979 = vadd.f32 %v1978, %v1943
      %v1980 = vadd.f32 %v1979, %v1945
      %v1981 = vadd.f32 %v1980, %v1947
      %v1982 = vadd.f32 %v1981, %v1949
      %v1983 = vadd.f32 %v1982, %v1951
      %v1984 = vrot.slane %v1983, 4
      %v1985 = vadd.f32 %v1983, %v1984
      %v1986 = vrot.slane %v1985, 2
      %v1987 = vadd.f32 %v1985, %v1986
      %v1988 = vrot.slane %v1987, 1
      %v1989 = vadd.f32 %v1987, %v1988
      %v1992 = vcombine.low %v1970, %v1989
      %v1994 = vunpack.c.l.s4 1966171168
      %v1995 = vunpack.c.0.s8 %v1994
      %v1996 = vlaneseq
      %v1997 = vshrl.u32 %v1996, 7
      %v1998 = vsub.s32 %v1995, %v1997
      %v1999 = vrot.slane %v1992, %v1998
      %v2001 = vunpack.c.l.s4 1966171168
      %v2002 = vunpack.c.0.s8 %v2001
      %v2003 = vlaneseq
      %v2004 = vshrl.u32 %v2003, 7
      %v2005 = vsub.s32 %v2002, %v2004
      %v2006 = vrot.slane %v1999, %v2005
      %s2008 = scalar_lea.vmem %s191, 1
      %2009 = vst.msk [vmem:[%s2008] ss:$2 sm:$0x3] %vm1922, %v2006
      %s2010 = smul.u32 14, %s15
      %p2011 = scmp.lt.s32.totalorder %s2010, 97
      %s2012 = scalar_select %p2011, %s2010, 97
      %s2013 = smul.addr %s2012, 2
      %s2014 = smul.addr %s2013, 4
      %s2015 = scalar_lea.vmem %s2, %s2014
      %p2016 = scmp.lt.s32.totalorder %s15, 6
      %s2017 = scalar_select %p2016, %s15, 6
      %s2018 = smul.addr %s2017, 2
      %s2019 = smul.addr %s2018, 2
      %s2020 = scalar_lea.vmem %s3, %s2019
      // Predicated region
      $region29: #{forward.3} parent=27 // pred_check
        %p2021 = pneg %p80
      $region30: #{forward.3} parent=27 // pred_check_branch
        %2023 = sbr.rel (%p2021) target = $region32
      $region31: #{forward.3} parent=27 // pred_region
        %s2024 = smul.u32 14, %s15
      $region32: #{forward.3} parent=27 // pred_fallthru
        _
      // Predicated region
      $region33: #{forward.3} parent=27 // pred_check
        %p2025 = pneg %p106
      $region34: #{forward.3} parent=27 // pred_check_branch
        %2027 = sbr.rel (%p2025) target = $region36
      $region35: #{forward.3} parent=27 // pred_region
        _
      $region36: #{forward.3} parent=27 // pred_fallthru
        _
    $region28: #{forward.3} parent=5 // pred_fallthru
      _
    %p2028 = scmp.le.s32.totalorder 2, %s10
    // Predicated region
    $region37: #{forward.3} parent=5 // pred_check
      %p2029 = pneg %p2028
    $region38: #{forward.3} parent=5 // pred_check_branch
      %2031 = sbr.rel (%p2029) target = $region40
    $region39: #{forward.3} parent=5 // pred_region
      %s2032 = ssub.s32 %s10, 2
      // Predicated region
      $region41: #{forward.3} parent=39 // pred_check
        %p2033 = pneg %p86
      $region42: #{forward.3} parent=39 // pred_check_branch
        %2035 = sbr.rel (%p2033) target = $region44
      $region43: #{forward.3} parent=39 // pred_region
        %s2036 = smul.u32 14, %s16
        %p2037 = scmp.lt.s32.totalorder %s2036, 97
        %s2038 = scalar_select %p2037, %s2036, 97
        %s2039 = smul.addr %s2038, 2
        %s2040 = smul.addr %s2039, 4
        %s2041 = scalar_lea.vmem %s2, %s2040
      $region44: #{forward.3} parent=39 // pred_fallthru
        _
      // Predicated region
      $region45: #{forward.3} parent=39 // pred_check
        %p2042 = pneg %p112
      $region46: #{forward.3} parent=39 // pred_check_branch
        %2044 = sbr.rel (%p2042) target = $region48
      $region47: #{forward.3} parent=39 // pred_region
        %p2045 = scmp.lt.s32.totalorder %s16, 6
        %s2046 = scalar_select %p2045, %s16, 6
        %s2047 = smul.addr %s2046, 2
        %s2048 = smul.addr %s2047, 2
        %s2049 = scalar_lea.vmem %s3, %s2048
      $region48: #{forward.3} parent=39 // pred_fallthru
        _
    $region40: #{forward.3} parent=5 // pred_fallthru
      _
  $region6: #{forward.3} parent=0 // loop_footer
    %s14 = sadd.s32 1, %s10
  $region7: #{forward.3} parent=0 // loop_footer_branch
    %9 = sbr.rel target = $region3
  $region8: #{forward.3} parent=0 // loop_exit
    _

// kernel: forward.5
$region0: #{forward.5}
  #allocation0 [shape = 'u32[]', space=smem, size = 0x4, offset = 0x4, fixed_abs, tag = 'smem constant byte address 0x4 - core index']
  #allocation1 [shape = 'u32[144,128]{1,0:T(1,128)}', space=vmem, size = 0x12000, scoped, tag = 'internal scratch']
  %s0 = inlined_call_operand.vmem [shape: bf16[784,256], index: 0, kind: input, shape index: {}]
  %s1 = inlined_call_operand.vmem [shape: f32[1,256], index: 1, kind: input, shape index: {}]
  %s2 = inlined_call_operand.vmem [shape: f32[1,256], index: 2, kind: input, shape index: {}]
  %s3 = inlined_call_operand.vmem [shape: f32[784,256], index: 3, kind: output, shape index: {}]
  %s4 = sld [smem:[#allocation0]]
  $region45: #{forward.5} parent=0
    _
  %s6 = ssub.s32 1, %s4
  %s7 = scalar_select 0, %s6, %s4
  loop: start=0, step=1, limit=9
  $region2: #{forward.5} parent=0 // loop_pre_header
    _
  $region3: #{forward.5} parent=0 // loop_header
    %s9 = sphi 0, %s13
    %p10 = scmp.ge.s32.totalorder %s9, 9
    %s19 = sphi 0, %s21
    %s22 = sphi 0, %s19
    %s23 = sphi 0, %s22
    %s39 = sphi 0, %s23
    %s43 = sphi 0, %s43
    %s45 = sphi 0, %s43
    %s46 = sphi 0, %s45
    %s60 = sphi 0, %s46
    %s64 = sphi 0, %s64
    %s66 = sphi 0, %s64
    %s67 = sphi 0, %s66
    %s81 = sphi 0, %s67
    %s87 = sphi 0, %s89
    %s90 = sphi 0, %s87
    %s91 = sphi 0, %s90
    %s107 = sphi 0, %s91
  $region4: #{forward.5} parent=0 // loop_header_branch
    %12 = sbr.rel (%p10) target = $region8
  $region5: #{forward.5} parent=0 // loop_body
    %s14 = ssub.s32 %s9, 1
    %s15 = ssub.s32 %s9, 2
    %s16 = sadd.s32 %s9, 1
    %s17 = ssub.s32 %s9, %s16
    %p18 = scmp.eq.s32.totalorder %s17, 0
    %s20 = sadd.s32 %s19, 1
    %s21 = scalar_select %p18, %s19, %s20
    %p24 = pneg %p18
    %p25 = scmp.eq.s32.totalorder %s9, 6
    %p26 = por %p24, %p25
    %p27 = scmp.ne.s32.totalorder %s19, %s22
    %p28 = scmp.eq.s32.totalorder %s9, 0
    %p29 = por %p27, %p28
    %p30 = scmp.ne.s32.totalorder %s19, %s22
    %p31 = scmp.eq.s32.totalorder %s14, 6
    %p32 = por %p30, %p31
    %p33 = scmp.ne.s32.totalorder %s22, %s23
    %p34 = scmp.eq.s32.totalorder %s14, 0
    %p35 = por %p33, %p34
    %p36 = scmp.ne.s32.totalorder %s22, %s23
    %p37 = scmp.eq.s32.totalorder %s15, 6
    %p38 = por %p36, %p37
    %p40 = scmp.ne.s32.totalorder %s23, %s39
    %p41 = scmp.eq.s32.totalorder %s15, 0
    %p42 = por %p40, %p41
    %s44 = sadd.s32 %s43, 1
    %p47 = scmp.eq.s32.totalorder %s9, 6
    %p48 = scmp.ne.s32.totalorder %s43, %s45
    %p49 = scmp.eq.s32.totalorder %s9, 0
    %p50 = por %p48, %p49
    %p51 = scmp.ne.s32.totalorder %s43, %s45
    %p52 = scmp.eq.s32.totalorder %s14, 6
    %p53 = por %p51, %p52
    %p54 = scmp.ne.s32.totalorder %s45, %s46
    %p55 = scmp.eq.s32.totalorder %s14, 0
    %p56 = por %p54, %p55
    %p57 = scmp.ne.s32.totalorder %s45, %s46
    %p58 = scmp.eq.s32.totalorder %s15, 6
    %p59 = por %p57, %p58
    %p61 = scmp.ne.s32.totalorder %s46, %s60
    %p62 = scmp.eq.s32.totalorder %s15, 0
    %p63 = por %p61, %p62
    %s65 = sadd.s32 %s64, 1
    %p68 = scmp.eq.s32.totalorder %s9, 6
    %p69 = scmp.ne.s32.totalorder %s64, %s66
    %p70 = scmp.eq.s32.totalorder %s9, 0
    %p71 = por %p69, %p70
    %p72 = scmp.ne.s32.totalorder %s64, %s66
    %p73 = scmp.eq.s32.totalorder %s14, 6
    %p74 = por %p72, %p73
    %p75 = scmp.ne.s32.totalorder %s66, %s67
    %p76 = scmp.eq.s32.totalorder %s14, 0
    %p77 = por %p75, %p76
    %p78 = scmp.ne.s32.totalorder %s66, %s67
    %p79 = scmp.eq.s32.totalorder %s15, 6
    %p80 = por %p78, %p79
    %p82 = scmp.ne.s32.totalorder %s67, %s81
    %p83 = scmp.eq.s32.totalorder %s15, 0
    %p84 = por %p82, %p83
    %s85 = ssub.s32 %s9, %s16
    %p86 = scmp.eq.s32.totalorder %s85, 0
    %s88 = sadd.s32 %s87, 1
    %s89 = scalar_select %p86, %s87, %s88
    %p92 = pneg %p86
    %p93 = scmp.eq.s32.totalorder %s9, 6
    %p94 = por %p92, %p93
    %p95 = scmp.ne.s32.totalorder %s87, %s90
    %p96 = scmp.eq.s32.totalorder %s9, 0
    %p97 = por %p95, %p96
    %p98 = scmp.ne.s32.totalorder %s87, %s90
    %p99 = scmp.eq.s32.totalorder %s14, 6
    %p100 = por %p98, %p99
    %p101 = scmp.ne.s32.totalorder %s90, %s91
    %p102 = scmp.eq.s32.totalorder %s14, 0
    %p103 = por %p101, %p102
    %p104 = scmp.ne.s32.totalorder %s90, %s91
    %p105 = scmp.eq.s32.totalorder %s15, 6
    %p106 = por %p104, %p105
    %p108 = scmp.ne.s32.totalorder %s91, %s107
    %p109 = scmp.eq.s32.totalorder %s15, 0
    %p110 = por %p108, %p109
    %p111 = scmp.le.s32.totalorder 1, %s9
    %p112 = scmp.lt.s32.totalorder %s9, 8
    %p113 = pnand %p111, %p112
    %p114 = pneg %p113
    // Predicated region
    $region9: #{forward.5} parent=5 // pred_check
      _
    $region10: #{forward.5} parent=5 // pred_check_branch
      %116 = sbr.rel (%p113) target = $region12
    $region11: #{forward.5} parent=5 // pred_region
      %s117 = ssub.s32 %s9, 1
      // Predicated region
      $region13: #{forward.5} parent=11 // pred_check
        %p118 = pneg %p56
      $region14: #{forward.5} parent=11 // pred_check_branch
        %120 = sbr.rel (%p118) target = $region16
      $region15: #{forward.5} parent=11 // pred_region
        _
      $region16: #{forward.5} parent=11 // pred_fallthru
        _
      // Predicated region
      $region17: #{forward.5} parent=11 // pred_check
        %p121 = pneg %p77
      $region18: #{forward.5} parent=11 // pred_check_branch
        %123 = sbr.rel (%p121) target = $region20
      $region19: #{forward.5} parent=11 // pred_region
        _
      $region20: #{forward.5} parent=11 // pred_fallthru
        _
    $region12: #{forward.5} parent=5 // pred_fallthru
      _
    %p124 = scmp.lt.s32.totalorder %s9, 7
    // Predicated region
    $region21: #{forward.5} parent=5 // pred_check
      %p125 = pneg %p124
    $region22: #{forward.5} parent=5 // pred_check_branch
      %127 = sbr.rel (%p125) target = $region24
    $region23: #{forward.5} parent=5 // pred_region
      // Predicated region
      $region25: #{forward.5} parent=23 // pred_check
        %p128 = pneg %p29
      $region26: #{forward.5} parent=23 // pred_check_branch
        %130 = sbr.rel (%p128) target = $region28
      $region27: #{forward.5} parent=23 // pred_region
        %s131 = smul.u32 14, %s9
        %p132 = scmp.lt.s32.totalorder %s131, 97
        %s133 = scalar_select %p132, %s131, 97
        %s134 = smul.addr %s133, 2
        %s135 = smul.addr %s134, 4
        %s136 = scalar_lea.vmem %s0, %s135
        %s137 = smul.u32 14, %s9
      $region28: #{forward.5} parent=23 // pred_fallthru
        _
    $region24: #{forward.5} parent=5 // pred_fallthru
      _
    %p138 = scmp.le.s32.totalorder 1, %s9
    %p139 = scmp.lt.s32.totalorder %s9, 8
    %p140 = pnand %p138, %p139
    %p141 = pneg %p140
    // Predicated region
    $region29: #{forward.5} parent=5 // pred_check
      _
    $region30: #{forward.5} parent=5 // pred_check_branch
      %143 = sbr.rel (%p140) target = $region32
    $region31: #{forward.5} parent=5 // pred_region
      %s144 = ssub.s32 %s9, 1
      %s145 = smul.u32 14, %s14
      %p146 = scmp.lt.s32.totalorder %s145, 97
      %s147 = scalar_select %p146, %s145, 97
      %s148 = smul.addr %s147, 2
      %s149 = smul.addr %s148, 4
      %s150 = scalar_lea.vmem %s0, %s149
      %p151 = pneg %p35
      %p152 = pneg %p32
      %p153 = pneg %p56
      %p154 = pneg %p53
      %p155 = pneg %p77
      %p156 = pneg %p74
      %p157 = pneg %p103
      %p158 = pneg %p100
      %s159 = smul.u32 14, %s14
      %p160 = scmp.lt.s32.totalorder %s159, 97
      %s161 = scalar_select %p160, %s159, 97
      %s162 = smul.addr %s161, 2
      %s163 = smul.addr %s162, 8
      %s164 = scalar_lea.vmem %s3, %s163
      %s165 = smul.u32 14, %s14
      %p166 = scmp.lt.s32.totalorder %s165, 97
      %s167 = scalar_select %p166, %s165, 97
      %s168 = smul.addr %s167, 2
      %s169 = smul.addr %s168, 4
      %s170 = scalar_lea.vmem %s0, %s169
      %s171 = smul.u32 14, %s14
      %s172 = smul.u32 14, %s14
      %p173 = scmp.lt.s32.totalorder %s172, 97
      %s174 = scalar_select %p173, %s172, 97
      %s175 = smul.addr %s174, 2
      %s176 = smul.addr %s175, 8
      %s177 = scalar_lea.vmem %s3, %s176
      %s178 = smul.u32 14, %s14
      %v179 = vld [vmem:[%s170] sm:$0xff]
      %v180 = vld [vmem:[%s170 + $0x8] sm:$0xff]
      %v181 = vld [vmem:[%s170 + $0x10] sm:$0xff]
      %v182 = vld [vmem:[%s170 + $0x18] sm:$0xff]
      %v183 = vld [vmem:[%s170 + $0x20] sm:$0xff]
      %v184 = vld [vmem:[%s170 + $0x28] sm:$0xff]
      %v185 = vld [vmem:[%s170 + $0x30] sm:$0xff]
      %v186 = vld [vmem:[%s170 + $0x38] sm:$0xff]
      %v187 = vld [vmem:[%s170 + $0x40] sm:$0xff]
      %v188 = vld [vmem:[%s170 + $0x48] sm:$0xff]
      %v189 = vld [vmem:[%s170 + $0x50] sm:$0xff]
      %v190 = vld [vmem:[%s170 + $0x58] sm:$0xff]
      %v191 = vld [vmem:[%s170 + $0x60] sm:$0xff]
      %v192 = vld [vmem:[%s170 + $0x68] sm:$0xff]
      %v193 = vunpack.c.l.bf16 %v179
      %v194 = vunpack.c.h.bf16 %v179
      %v195 = vunpack.c.l.bf16 %v180
      %v196 = vunpack.c.h.bf16 %v180
      %v197 = vunpack.c.l.bf16 %v181
      %v198 = vunpack.c.h.bf16 %v181
      %v199 = vunpack.c.l.bf16 %v182
      %v200 = vunpack.c.h.bf16 %v182
      %v201 = vunpack.c.l.bf16 %v183
      %v202 = vunpack.c.h.bf16 %v183
      %v203 = vunpack.c.l.bf16 %v184
      %v204 = vunpack.c.h.bf16 %v184
      %v205 = vunpack.c.l.bf16 %v185
      %v206 = vunpack.c.h.bf16 %v185
      %v207 = vunpack.c.l.bf16 %v186
      %v208 = vunpack.c.h.bf16 %v186
      %v209 = vunpack.c.l.bf16 %v187
      %v210 = vunpack.c.h.bf16 %v187
      %v211 = vunpack.c.l.bf16 %v188
      %v212 = vunpack.c.h.bf16 %v188
      %v213 = vunpack.c.l.bf16 %v189
      %v214 = vunpack.c.h.bf16 %v189
      %v215 = vunpack.c.l.bf16 %v190
      %v216 = vunpack.c.h.bf16 %v190
      %v217 = vunpack.c.l.bf16 %v191
      %v218 = vunpack.c.h.bf16 %v191
      %v219 = vunpack.c.l.bf16 %v192
      %v220 = vunpack.c.h.bf16 %v192
      %v221 = vld [vmem:[%s1] sm:$0x3]
      %v223 = vlaneseq
      %v224 = vshrl.u32 %v223, 7
      %v225 = vsub.s32 0, %v224
      %v226 = vrot.slane %v221, %v225
      %v227 = vlaneseq
      %v228 = vshrl.u32 %v227, 7
      %v229 = vsub.s32 1, %v228
      %v230 = vrot.slane %v221, %v229
      %v233 = vmul.f32 %v193, %v226
      %v234 = vmul.f32 %v194, %v230
      %v235 = vmul.f32 %v195, %v226
      %v236 = vmul.f32 %v196, %v230
      %v237 = vmul.f32 %v197, %v226
      %v238 = vmul.f32 %v198, %v230
      %v239 = vmul.f32 %v199, %v226
      %v240 = vmul.f32 %v200, %v230
      %v241 = vmul.f32 %v201, %v226
      %v242 = vmul.f32 %v202, %v230
      %v243 = vmul.f32 %v203, %v226
      %v244 = vmul.f32 %v204, %v230
      %v245 = vmul.f32 %v205, %v226
      %v246 = vmul.f32 %v206, %v230
      %v247 = vmul.f32 %v207, %v226
      %v248 = vmul.f32 %v208, %v230
      %v249 = vmul.f32 %v209, %v226
      %v250 = vmul.f32 %v210, %v230
      %v251 = vmul.f32 %v211, %v226
      %v252 = vmul.f32 %v212, %v230
      %v253 = vmul.f32 %v213, %v226
      %v254 = vmul.f32 %v214, %v230
      %v255 = vmul.f32 %v215, %v226
      %v256 = vmul.f32 %v216, %v230
      %v257 = vmul.f32 %v217, %v226
      %v258 = vmul.f32 %v218, %v230
      %v259 = vmul.f32 %v219, %v226
      %v260 = vmul.f32 %v220, %v230
      %v261 = vld [vmem:[%s2] sm:$0x3]
      %v263 = vlaneseq
      %v264 = vshrl.u32 %v263, 7
      %v265 = vsub.s32 0, %v264
      %v266 = vrot.slane %v261, %v265
      %v267 = vlaneseq
      %v268 = vshrl.u32 %v267, 7
      %v269 = vsub.s32 1, %v268
      %v270 = vrot.slane %v261, %v269
      %v273 = vadd.f32 %v233, %v266
      %v274 = vadd.f32 %v234, %v270
      %v275 = vadd.f32 %v235, %v266
      %v276 = vadd.f32 %v236, %v270
      %v277 = vadd.f32 %v237, %v266
      %v278 = vadd.f32 %v238, %v270
      %v279 = vadd.f32 %v239, %v266
      %v280 = vadd.f32 %v240, %v270
      %v281 = vadd.f32 %v241, %v266
      %v282 = vadd.f32 %v242, %v270
      %v283 = vadd.f32 %v243, %v266
      %v284 = vadd.f32 %v244, %v270
      %v285 = vadd.f32 %v245, %v266
      %v286 = vadd.f32 %v246, %v270
      %v287 = vadd.f32 %v247, %v266
      %v288 = vadd.f32 %v248, %v270
      %v289 = vadd.f32 %v249, %v266
      %v290 = vadd.f32 %v250, %v270
      %v291 = vadd.f32 %v251, %v266
      %v292 = vadd.f32 %v252, %v270
      %v293 = vadd.f32 %v253, %v266
      %v294 = vadd.f32 %v254, %v270
      %v295 = vadd.f32 %v255, %v266
      %v296 = vadd.f32 %v256, %v270
      %v297 = vadd.f32 %v257, %v266
      %v298 = vadd.f32 %v258, %v270
      %v299 = vadd.f32 %v259, %v266
      %v300 = vadd.f32 %v260, %v270
      %301 = vst [vmem:[%s177] sm:$0xff] %v273
      %302 = vst [vmem:[%s177 + $0x8] sm:$0xff] %v274
      %303 = vst [vmem:[%s177 + $0x10] sm:$0xff] %v275
      %304 = vst [vmem:[%s177 + $0x18] sm:$0xff] %v276
      %305 = vst [vmem:[%s177 + $0x20] sm:$0xff] %v277
      %306 = vst [vmem:[%s177 + $0x28] sm:$0xff] %v278
      %307 = vst [vmem:[%s177 + $0x30] sm:$0xff] %v279
      %308 = vst [vmem:[%s177 + $0x38] sm:$0xff] %v280
      %309 = vst [vmem:[%s177 + $0x40] sm:$0xff] %v281
      %310 = vst [vmem:[%s177 + $0x48] sm:$0xff] %v282
      %311 = vst [vmem:[%s177 + $0x50] sm:$0xff] %v283
      %312 = vst [vmem:[%s177 + $0x58] sm:$0xff] %v284
      %313 = vst [vmem:[%s177 + $0x60] sm:$0xff] %v285
      %314 = vst [vmem:[%s177 + $0x68] sm:$0xff] %v286
      %315 = vst [vmem:[%s177 + $0x70] sm:$0xff] %v287
      %316 = vst [vmem:[%s177 + $0x78] sm:$0xff] %v288
      %317 = vst [vmem:[%s177 + $0x80] sm:$0xff] %v289
      %318 = vst [vmem:[%s177 + $0x88] sm:$0xff] %v290
      %319 = vst [vmem:[%s177 + $0x90] sm:$0xff] %v291
      %320 = vst [vmem:[%s177 + $0x98] sm:$0xff] %v292
      %321 = vst [vmem:[%s177 + $0xa0] sm:$0xff] %v293
      %322 = vst [vmem:[%s177 + $0xa8] sm:$0xff] %v294
      %323 = vst [vmem:[%s177 + $0xb0] sm:$0xff] %v295
      %324 = vst [vmem:[%s177 + $0xb8] sm:$0xff] %v296
      %325 = vst [vmem:[%s177 + $0xc0] sm:$0xff] %v297
      %326 = vst [vmem:[%s177 + $0xc8] sm:$0xff] %v298
      %327 = vst [vmem:[%s177 + $0xd0] sm:$0xff] %v299
      %328 = vst [vmem:[%s177 + $0xd8] sm:$0xff] %v300
      %s329 = smul.u32 14, %s14
      %p330 = scmp.lt.s32.totalorder %s329, 97
      %s331 = scalar_select %p330, %s329, 97
      %s332 = smul.addr %s331, 2
      %s333 = smul.addr %s332, 8
      %s334 = scalar_lea.vmem %s3, %s333
      // Predicated region
      $region33: #{forward.5} parent=31 // pred_check
        %p335 = pneg %p100
      $region34: #{forward.5} parent=31 // pred_check_branch
        %337 = sbr.rel (%p335) target = $region36
      $region35: #{forward.5} parent=31 // pred_region
        %s338 = smul.u32 14, %s14
      $region36: #{forward.5} parent=31 // pred_fallthru
        _
    $region32: #{forward.5} parent=5 // pred_fallthru
      _
    %p339 = scmp.le.s32.totalorder 2, %s9
    // Predicated region
    $region37: #{forward.5} parent=5 // pred_check
      %p340 = pneg %p339
    $region38: #{forward.5} parent=5 // pred_check_branch
      %342 = sbr.rel (%p340) target = $region40
    $region39: #{forward.5} parent=5 // pred_region
      %s343 = ssub.s32 %s9, 2
      // Predicated region
      $region41: #{forward.5} parent=39 // pred_check
        %p344 = pneg %p106
      $region42: #{forward.5} parent=39 // pred_check_branch
        %346 = sbr.rel (%p344) target = $region44
      $region43: #{forward.5} parent=39 // pred_region
        %s347 = smul.u32 14, %s15
        %p348 = scmp.lt.s32.totalorder %s347, 97
        %s349 = scalar_select %p348, %s347, 97
        %s350 = smul.addr %s349, 2
        %s351 = smul.addr %s350, 8
        %s352 = scalar_lea.vmem %s3, %s351
      $region44: #{forward.5} parent=39 // pred_fallthru
        _
    $region40: #{forward.5} parent=5 // pred_fallthru
      _
  $region6: #{forward.5} parent=0 // loop_footer
    %s13 = sadd.s32 1, %s9
  $region7: #{forward.5} parent=0 // loop_footer_branch
    %8 = sbr.rel target = $region3
  $region8: #{forward.5} parent=0 // loop_exit
    _

// kernel: forward.4
$region0: #{forward.4}
  #allocation0 [shape = 'u32[]', space=smem, size = 0x4, offset = 0x4, fixed_abs, tag = 'smem constant byte address 0x4 - core index']
  #allocation1 [shape = 'u32[144,128]{1,0:T(1,128)}', space=vmem, size = 0x12000, scoped, tag = 'internal scratch']
  #allocation2 [shape = 'bf16[8,32,256]{2,1,0:T(16,128)(2,1)}', space=vmem, size = 0x20000, scoped, tag = 'scratch operand']
  #allocation3 [shape = 'f32[112,256]{1,0:T(8,128)}', space=vmem, size = 0x1c000, scoped, tag = 'scratch operand']
  %s0 = inlined_call_operand.vmem [shape: f32[1,256], index: 0, kind: input, shape index: {}]
  %s1 = inlined_call_operand.vmem [shape: f32[1,256], index: 1, kind: input, shape index: {}]
  %s2 = inlined_call_operand.vmem [shape: bf16[1,28,28,256], index: 2, kind: input, shape index: {}]
  %s3 = inlined_call_operand.vmem [shape: bf16[9,256,256], index: 3, kind: input, shape index: {}]
  %s4 = inlined_call_operand.vmem [shape: bf16[784,256], index: 4, kind: output, shape index: {0}]
  %s5 = inlined_call_operand.vmem [shape: f32[1,7,2,256], index: 5, kind: output, shape index: {1}]
  %6 = xla_tuple %s4, %s5
  %s7 = sld [smem:[#allocation0]]
  $region89: #{forward.4} parent=0
    _
  %s9 = ssub.s32 1, %s7
  %s10 = scalar_select 0, %s9, %s7
  loop: start=0, step=1, limit=9
  $region2: #{forward.4} parent=0 // loop_pre_header
    _
  $region3: #{forward.4} parent=0 // loop_header
    %s12 = sphi 0, %s16
    %p13 = scmp.ge.s32.totalorder %s12, 9
    %s19 = sphi 0, %s31
    %s20 = sphi 0, %s27
    %s21 = sphi 0, %s19
    %s22 = sphi 0, %s20
    %s23 = sphi 0, %s21
    %s24 = sphi 0, %s22
    %s32 = sphi 0, %s32
    %s34 = sphi 0, %s32
    %s35 = sphi 0, %s34
    %s49 = sphi 0, %s35
    %s53 = sphi 0, %s53
    %s55 = sphi 0, %s53
    %s56 = sphi 0, %s55
    %s70 = sphi 0, %s56
    %s76 = sphi 0, %s78
    %s79 = sphi 0, %s76
    %s80 = sphi 0, %s79
    %s96 = sphi 0, %s80
    %s100 = sphi 0, %s100
    %s102 = sphi 0, %s100
    %s103 = sphi 0, %s102
    %s117 = sphi 0, %s103
    %s127 = sphi 0, %s129
    %s130 = sphi 0, %s127
    %s131 = sphi 0, %s130
    %s147 = sphi 0, %s131
    %s155 = sphi 0, %s157
    %s158 = sphi 0, %s155
    %s159 = sphi 0, %s158
    %s175 = sphi 0, %s159
  $region4: #{forward.4} parent=0 // loop_header_branch
    %15 = sbr.rel (%p13) target = $region8
  $region5: #{forward.4} parent=0 // loop_body
    %s17 = ssub.s32 %s12, 1
    %s18 = ssub.s32 %s12, 2
    %s25 = sadd.s32 1, %s20
    %p26 = scmp.ge.s32.totalorder %s25, 7
    %s27 = scalar_select %p26, 0, %s25
    %s28 = sadd.s32 1, %s19
    %s29 = scalar_select %p26, %s28, %s19
    %p30 = scmp.ge.s32.totalorder %s29, 1
    %s31 = scalar_select %p30, 0, %s29
    %s33 = sadd.s32 %s32, 1
    %p36 = scmp.eq.s32.totalorder %s12, 6
    %p37 = scmp.ne.s32.totalorder %s32, %s34
    %p38 = scmp.eq.s32.totalorder %s12, 0
    %p39 = por %p37, %p38
    %p40 = scmp.ne.s32.totalorder %s32, %s34
    %p41 = scmp.eq.s32.totalorder %s17, 6
    %p42 = por %p40, %p41
    %p43 = scmp.ne.s32.totalorder %s34, %s35
    %p44 = scmp.eq.s32.totalorder %s17, 0
    %p45 = por %p43, %p44
    %p46 = scmp.ne.s32.totalorder %s34, %s35
    %p47 = scmp.eq.s32.totalorder %s18, 6
    %p48 = por %p46, %p47
    %p50 = scmp.ne.s32.totalorder %s35, %s49
    %p51 = scmp.eq.s32.totalorder %s18, 0
    %p52 = por %p50, %p51
    %s54 = sadd.s32 %s53, 1
    %p57 = scmp.eq.s32.totalorder %s12, 6
    %p58 = scmp.ne.s32.totalorder %s53, %s55
    %p59 = scmp.eq.s32.totalorder %s12, 0
    %p60 = por %p58, %p59
    %p61 = scmp.ne.s32.totalorder %s53, %s55
    %p62 = scmp.eq.s32.totalorder %s17, 6
    %p63 = por %p61, %p62
    %p64 = scmp.ne.s32.totalorder %s55, %s56
    %p65 = scmp.eq.s32.totalorder %s17, 0
    %p66 = por %p64, %p65
    %p67 = scmp.ne.s32.totalorder %s55, %s56
    %p68 = scmp.eq.s32.totalorder %s18, 6
    %p69 = por %p67, %p68
    %p71 = scmp.ne.s32.totalorder %s56, %s70
    %p72 = scmp.eq.s32.totalorder %s18, 0
    %p73 = por %p71, %p72
    %s74 = ssub.s32 %s19, %s31
    %p75 = scmp.eq.s32.totalorder %s74, 0
    %s77 = sadd.s32 %s76, 1
    %s78 = scalar_select %p75, %s76, %s77
    %p81 = pneg %p75
    %p82 = scmp.eq.s32.totalorder %s12, 6
    %p83 = por %p81, %p82
    %p84 = scmp.ne.s32.totalorder %s76, %s79
    %p85 = scmp.eq.s32.totalorder %s12, 0
    %p86 = por %p84, %p85
    %p87 = scmp.ne.s32.totalorder %s76, %s79
    %p88 = scmp.eq.s32.totalorder %s17, 6
    %p89 = por %p87, %p88
    %p90 = scmp.ne.s32.totalorder %s79, %s80
    %p91 = scmp.eq.s32.totalorder %s17, 0
    %p92 = por %p90, %p91
    %p93 = scmp.ne.s32.totalorder %s79, %s80
    %p94 = scmp.eq.s32.totalorder %s18, 6
    %p95 = por %p93, %p94
    %p97 = scmp.ne.s32.totalorder %s80, %s96
    %p98 = scmp.eq.s32.totalorder %s18, 0
    %p99 = por %p97, %p98
    %s101 = sadd.s32 %s100, 1
    %p104 = scmp.eq.s32.totalorder %s12, 6
    %p105 = scmp.ne.s32.totalorder %s100, %s102
    %p106 = scmp.eq.s32.totalorder %s12, 0
    %p107 = por %p105, %p106
    %p108 = scmp.ne.s32.totalorder %s100, %s102
    %p109 = scmp.eq.s32.totalorder %s17, 6
    %p110 = por %p108, %p109
    %p111 = scmp.ne.s32.totalorder %s102, %s103
    %p112 = scmp.eq.s32.totalorder %s17, 0
    %p113 = por %p111, %p112
    %p114 = scmp.ne.s32.totalorder %s102, %s103
    %p115 = scmp.eq.s32.totalorder %s18, 6
    %p116 = por %p114, %p115
    %p118 = scmp.ne.s32.totalorder %s103, %s117
    %p119 = scmp.eq.s32.totalorder %s18, 0
    %p120 = por %p118, %p119
    %s121 = smul.u32 %s19, 7
    %s122 = sadd.s32 %s121, %s20
    %s123 = smul.u32 %s31, 7
    %s124 = sadd.s32 %s123, %s27
    %s125 = ssub.s32 %s122, %s124
    %p126 = scmp.eq.s32.totalorder %s125, 0
    %s128 = sadd.s32 %s127, 1
    %s129 = scalar_select %p126, %s127, %s128
    %p132 = pneg %p126
    %p133 = scmp.eq.s32.totalorder %s12, 6
    %p134 = por %p132, %p133
    %p135 = scmp.ne.s32.totalorder %s127, %s130
    %p136 = scmp.eq.s32.totalorder %s12, 0
    %p137 = por %p135, %p136
    %p138 = scmp.ne.s32.totalorder %s127, %s130
    %p139 = scmp.eq.s32.totalorder %s17, 6
    %p140 = por %p138, %p139
    %p141 = scmp.ne.s32.totalorder %s130, %s131
    %p142 = scmp.eq.s32.totalorder %s17, 0
    %p143 = por %p141, %p142
    %p144 = scmp.ne.s32.totalorder %s130, %s131
    %p145 = scmp.eq.s32.totalorder %s18, 6
    %p146 = por %p144, %p145
    %p148 = scmp.ne.s32.totalorder %s131, %s147
    %p149 = scmp.eq.s32.totalorder %s18, 0
    %p150 = por %p148, %p149
    %s151 = ssub.s32 %s19, %s31
    %s152 = ssub.s32 %s20, %s27
    %s153 = sor.u32 %s151, %s152
    %p154 = scmp.eq.s32.totalorder %s153, 0
    %s156 = sadd.s32 %s155, 1
    %s157 = scalar_select %p154, %s155, %s156
    %p160 = pneg %p154
    %p161 = scmp.eq.s32.totalorder %s12, 6
    %p162 = por %p160, %p161
    %p163 = scmp.ne.s32.totalorder %s155, %s158
    %p164 = scmp.eq.s32.totalorder %s12, 0
    %p165 = por %p163, %p164
    %p166 = scmp.ne.s32.totalorder %s155, %s158
    %p167 = scmp.eq.s32.totalorder %s17, 6
    %p168 = por %p166, %p167
    %p169 = scmp.ne.s32.totalorder %s158, %s159
    %p170 = scmp.eq.s32.totalorder %s17, 0
    %p171 = por %p169, %p170
    %p172 = scmp.ne.s32.totalorder %s158, %s159
    %p173 = scmp.eq.s32.totalorder %s18, 6
    %p174 = por %p172, %p173
    %p176 = scmp.ne.s32.totalorder %s159, %s175
    %p177 = scmp.eq.s32.totalorder %s18, 0
    %p178 = por %p176, %p177
    %p179 = scmp.le.s32.totalorder 1, %s12
    %p180 = scmp.lt.s32.totalorder %s12, 8
    %p181 = pnand %p179, %p180
    %p182 = pneg %p181
    // Predicated region
    $region9: #{forward.4} parent=5 // pred_check
      _
    $region10: #{forward.4} parent=5 // pred_check_branch
      %184 = sbr.rel (%p181) target = $region12
    $region11: #{forward.4} parent=5 // pred_region
      %s185 = ssub.s32 %s12, 1
      // Predicated region
      $region13: #{forward.4} parent=11 // pred_check
        %p186 = pneg %p45
      $region14: #{forward.4} parent=11 // pred_check_branch
        %188 = sbr.rel (%p186) target = $region16
      $region15: #{forward.4} parent=11 // pred_region
        _
      $region16: #{forward.4} parent=11 // pred_fallthru
        _
      // Predicated region
      $region17: #{forward.4} parent=11 // pred_check
        %p189 = pneg %p66
      $region18: #{forward.4} parent=11 // pred_check_branch
        %191 = sbr.rel (%p189) target = $region20
      $region19: #{forward.4} parent=11 // pred_region
        _
      $region20: #{forward.4} parent=11 // pred_fallthru
        _
      // Predicated region
      $region21: #{forward.4} parent=11 // pred_check
        %p192 = pneg %p92
      $region22: #{forward.4} parent=11 // pred_check_branch
        %194 = sbr.rel (%p192) target = $region24
      $region23: #{forward.4} parent=11 // pred_region
        %p195 = scmp.lt.s32.totalorder %s21, 0
        %s196 = scalar_select %p195, %s21, 0
        %s197 = smul.addr %s196, 224
        %s198 = smul.addr %s197, 4
        %s199 = scalar_lea.vmem %s2, %s198
      $region24: #{forward.4} parent=11 // pred_fallthru
        _
      // Predicated region
      $region25: #{forward.4} parent=11 // pred_check
        %p200 = pneg %p113
      $region26: #{forward.4} parent=11 // pred_check_branch
        %202 = sbr.rel (%p200) target = $region28
      $region27: #{forward.4} parent=11 // pred_region
        _
      $region28: #{forward.4} parent=11 // pred_fallthru
        _
    $region12: #{forward.4} parent=5 // pred_fallthru
      _
    %p203 = scmp.lt.s32.totalorder %s12, 7
    // Predicated region
    $region29: #{forward.4} parent=5 // pred_check
      %p204 = pneg %p203
    $region30: #{forward.4} parent=5 // pred_check_branch
      %206 = sbr.rel (%p204) target = $region32
    $region31: #{forward.4} parent=5 // pred_region
      _
    $region32: #{forward.4} parent=5 // pred_fallthru
      _
    %p207 = scmp.le.s32.totalorder 1, %s12
    %p208 = scmp.lt.s32.totalorder %s12, 8
    %p209 = pnand %p207, %p208
    %p210 = pneg %p209
    // Predicated region
    $region33: #{forward.4} parent=5 // pred_check
      _
    $region34: #{forward.4} parent=5 // pred_check_branch
      %212 = sbr.rel (%p209) target = $region36
    $region35: #{forward.4} parent=5 // pred_region
      %s213 = ssub.s32 %s12, 1
      %p214 = pneg %p45
      %p215 = pneg %p42
      %p216 = pneg %p66
      %p217 = pneg %p63
      %p218 = scmp.lt.s32.totalorder %s21, 0
      %s219 = scalar_select %p218, %s21, 0
      %s220 = smul.addr %s219, 224
      %s221 = smul.addr %s220, 4
      %s222 = scalar_lea.vmem %s2, %s221
      %p223 = pneg %p92
      %p224 = pneg %p89
      %p225 = pneg %p113
      %p226 = pneg %p110
      %p227 = pneg %p143
      %p228 = pneg %p140
      %s229 = smul.u32 %s21, 7
      %s230 = sadd.s32 %s229, %s22
      %s231 = smul.u32 14, %s230
      %p232 = scmp.lt.s32.totalorder %s231, 97
      %s233 = scalar_select %p232, %s231, 97
      %s234 = smul.addr %s233, 2
      %s235 = smul.addr %s234, 4
      %s236 = scalar_lea.vmem %s4, %s235
      %p237 = pneg %p171
      %p238 = pneg %p168
      %p239 = scmp.lt.s32.totalorder %s21, 0
      %s240 = scalar_select %p239, %s21, 0
      %p241 = scmp.lt.s32.totalorder %s22, 6
      %s242 = scalar_select %p241, %s22, 6
      %s243 = smul.addr %s242, 2
      %s244 = smul.addr %s240, 14
      %s245 = sadd.s32 %s243, %s244
      %s246 = smul.addr %s245, 2
      %s247 = scalar_lea.vmem %s5, %s246
      %p248 = scmp.lt.s32.totalorder %s21, 0
      %s249 = scalar_select %p248, %s21, 0
      %s250 = smul.addr %s249, 224
      %s251 = smul.addr %s250, 4
      %s252 = scalar_lea.vmem %s2, %s251
      %s253 = smul.u32 %s21, 7
      %s254 = sadd.s32 %s253, %s22
      %s255 = smul.u32 14, %s254
      %p256 = scmp.lt.s32.totalorder %s255, 97
      %s257 = scalar_select %p256, %s255, 97
      %s258 = smul.addr %s257, 2
      %s259 = smul.addr %s258, 4
      %s260 = scalar_lea.vmem %s4, %s259
      %s261 = smul.u32 %s21, 7
      %s262 = sadd.s32 %s261, %s22
      %s263 = smul.u32 14, %s262
      %p264 = scmp.lt.s32.totalorder %s21, 0
      %s265 = scalar_select %p264, %s21, 0
      %p266 = scmp.lt.s32.totalorder %s22, 6
      %s267 = scalar_select %p266, %s22, 6
      %s268 = smul.addr %s267, 2
      %s269 = smul.addr %s265, 14
      %s270 = sadd.s32 %s268, %s269
      %s271 = smul.addr %s270, 2
      %s272 = scalar_lea.vmem %s5, %s271
      %274 = vst [vmem:[#allocation2] sm:$0xff] 0
      %275 = vst [vmem:[#allocation2 + $0x8] sm:$0xff] 0
      %276 = vst [vmem:[#allocation2 + $0x10] sm:$0xff] 0
      %277 = vst [vmem:[#allocation2 + $0x18] sm:$0xff] 0
      %278 = vst [vmem:[#allocation2 + $0x20] sm:$0xff] 0
      %279 = vst [vmem:[#allocation2 + $0x28] sm:$0xff] 0
      %280 = vst [vmem:[#allocation2 + $0x30] sm:$0xff] 0
      %281 = vst [vmem:[#allocation2 + $0x38] sm:$0xff] 0
      %282 = vst [vmem:[#allocation2 + $0x40] sm:$0xff] 0
      %283 = vst [vmem:[#allocation2 + $0x48] sm:$0xff] 0
      %284 = vst [vmem:[#allocation2 + $0x50] sm:$0xff] 0
      %285 = vst [vmem:[#allocation2 + $0x58] sm:$0xff] 0
      %286 = vst [vmem:[#allocation2 + $0x60] sm:$0xff] 0
      %287 = vst [vmem:[#allocation2 + $0x68] sm:$0xff] 0
      %288 = vst [vmem:[#allocation2 + $0x70] sm:$0xff] 0
      %289 = vst [vmem:[#allocation2 + $0x78] sm:$0xff] 0
      %290 = vst [vmem:[#allocation2 + $0x80] sm:$0xff] 0
      %291 = vst [vmem:[#allocation2 + $0x88] sm:$0xff] 0
      %292 = vst [vmem:[#allocation2 + $0x90] sm:$0xff] 0
      %293 = vst [vmem:[#allocation2 + $0x98] sm:$0xff] 0
      %294 = vst [vmem:[#allocation2 + $0xa0] sm:$0xff] 0
      %295 = vst [vmem:[#allocation2 + $0xa8] sm:$0xff] 0
      %296 = vst [vmem:[#allocation2 + $0xb0] sm:$0xff] 0
      %297 = vst [vmem:[#allocation2 + $0xb8] sm:$0xff] 0
      %298 = vst [vmem:[#allocation2 + $0xc0] sm:$0xff] 0
      %299 = vst [vmem:[#allocation2 + $0xc8] sm:$0xff] 0
      %300 = vst [vmem:[#allocation2 + $0xd0] sm:$0xff] 0
      %301 = vst [vmem:[#allocation2 + $0xd8] sm:$0xff] 0
      %302 = vst [vmem:[#allocation2 + $0xe0] sm:$0xff] 0
      %303 = vst [vmem:[#allocation2 + $0xe8] sm:$0xff] 0
      %304 = vst [vmem:[#allocation2 + $0xf0] sm:$0xff] 0
      %305 = vst [vmem:[#allocation2 + $0xf8] sm:$0xff] 0
      %v306 = vld [vmem:[%s0] sm:$0x3]
      %v307 = vld [vmem:[%s1] sm:$0x3]
      %s308 = smul.u32 %s22, 4
      %s309 = ssub.s32 %s308, 2
      %p310 = scmp.ge.s32.totalorder %s309, 0
      %p311 = scmp.lt.s32.totalorder %s309, 28
      %p312 = pnand %p310, %p311
      %p313 = pneg %p312
      // Predicated region
      $region37: #{forward.4} parent=35 // pred_check
        _
      $region38: #{forward.4} parent=35 // pred_check_branch
        %315 = sbr.rel (%p312) target = $region40
      $region39: #{forward.4} parent=35 // pred_region
        %s316 = smul.u32 %s309, 8
        %s317 = smul.addr %s316, 4
        %s318 = scalar_lea.vmem %s252, %s317
        %v319 = vld [vmem:[%s318] sm:$0xff]
        %v320 = vld [vmem:[%s318 + $0x8] sm:$0xff]
        %v321 = vld [vmem:[%s318 + $0x10] sm:$0xff]
        %v322 = vld [vmem:[%s318 + $0x18] sm:$0x33]
        %v323 = vunpack.c.l.bf16 %v319
        %v324 = vunpack.c.h.bf16 %v319
        %v325 = vunpack.c.l.bf16 %v320
        %v326 = vunpack.c.h.bf16 %v320
        %v327 = vunpack.c.l.bf16 %v321
        %v328 = vunpack.c.h.bf16 %v321
        %v329 = vunpack.c.l.bf16 %v322
        %v330 = vunpack.c.h.bf16 %v322
        %v332 = vlaneseq
        %v333 = vshrl.u32 %v332, 7
        %v334 = vsub.s32 0, %v333
        %v335 = vrot.slane %v306, %v334
        %v336 = vlaneseq
        %v337 = vshrl.u32 %v336, 7
        %v338 = vsub.s32 1, %v337
        %v339 = vrot.slane %v306, %v338
        %v342 = vmul.f32 %v323, %v335
        %v343 = vmul.f32 %v324, %v339
        %v344 = vmul.f32 %v325, %v335
        %v345 = vmul.f32 %v326, %v339
        %v346 = vmul.f32 %v327, %v335
        %v347 = vmul.f32 %v328, %v339
        %v348 = vmul.f32 %v329, %v335
        %v349 = vmul.f32 %v330, %v339
        %v351 = vlaneseq
        %v352 = vshrl.u32 %v351, 7
        %v353 = vsub.s32 0, %v352
        %v354 = vrot.slane %v307, %v353
        %v355 = vlaneseq
        %v356 = vshrl.u32 %v355, 7
        %v357 = vsub.s32 1, %v356
        %v358 = vrot.slane %v307, %v357
        %v361 = vadd.f32 %v342, %v354
        %v362 = vadd.f32 %v343, %v358
        %v363 = vadd.f32 %v344, %v354
        %v364 = vadd.f32 %v345, %v358
        %v365 = vadd.f32 %v346, %v354
        %v366 = vadd.f32 %v347, %v358
        %v367 = vadd.f32 %v348, %v354
        %v368 = vadd.f32 %v349, %v358
        %v369 = vmax.f32 %v361, 0.0
        %v370 = vmax.f32 %v362, 0.0
        %v371 = vmax.f32 %v363, 0.0
        %v372 = vmax.f32 %v364, 0.0
        %v373 = vmax.f32 %v365, 0.0
        %v374 = vmax.f32 %v366, 0.0
        %v375 = vmax.f32 %v367, 0.0
        %v376 = vmax.f32 %v368, 0.0
        %v377 = vpack.c.bf16 %v371, %v369
        %v378 = vpack.c.bf16 %v372, %v370
        %v379 = vpack.c.bf16 %v375, %v373
        %v380 = vpack.c.bf16 %v376, %v374
        %vm385 = vcmask 1040384
        %v386 = vrot.slane %v377, 7
        %v387 = vrot.slane %v378, 7
        %v388 = vrot.slane %v379, 7
        %v389 = vsel %vm385, %v386, %v388
        %v390 = vrot.slane %v380, 7
        %v391 = vsel %vm385, %v387, %v390
        %396 = vst [vmem:[#allocation2] sm:$0xfe] %v386
        %397 = vst [vmem:[#allocation2 + $0x8] sm:$0xfe] %v387
        %398 = vst [vmem:[#allocation2 + $0x10] sm:$0x7f] %v389
        %399 = vst [vmem:[#allocation2 + $0x18] sm:$0x7f] %v391
      $region40: #{forward.4} parent=35 // pred_fallthru
        _
      %s400 = sadd.s32 %s308, 4294967295
      %p401 = scmp.ge.s32.totalorder %s400, 0
      %p402 = scmp.lt.s32.totalorder %s400, 28
      %p403 = pnand %p401, %p402
      %p404 = pneg %p403
      // Predicated region
      $region41: #{forward.4} parent=35 // pred_check
        _
      $region42: #{forward.4} parent=35 // pred_check_branch
        %406 = sbr.rel (%p403) target = $region44
      $region43: #{forward.4} parent=35 // pred_region
        %s407 = smul.u32 %s400, 8
        %s408 = smul.addr %s407, 4
        %s409 = scalar_lea.vmem %s252, %s408
        %v410 = vld [vmem:[%s409] sm:$0xff]
        %v411 = vld [vmem:[%s409 + $0x8] sm:$0xff]
        %v412 = vld [vmem:[%s409 + $0x10] sm:$0xff]
        %v413 = vld [vmem:[%s409 + $0x18] sm:$0x33]
        %v414 = vunpack.c.l.bf16 %v410
        %v415 = vunpack.c.h.bf16 %v410
        %v416 = vunpack.c.l.bf16 %v411
        %v417 = vunpack.c.h.bf16 %v411
        %v418 = vunpack.c.l.bf16 %v412
        %v419 = vunpack.c.h.bf16 %v412
        %v420 = vunpack.c.l.bf16 %v413
        %v421 = vunpack.c.h.bf16 %v413
        %v423 = vlaneseq
        %v424 = vshrl.u32 %v423, 7
        %v425 = vsub.s32 0, %v424
        %v426 = vrot.slane %v306, %v425
        %v427 = vlaneseq
        %v428 = vshrl.u32 %v427, 7
        %v429 = vsub.s32 1, %v428
        %v430 = vrot.slane %v306, %v429
        %v433 = vmul.f32 %v414, %v426
        %v434 = vmul.f32 %v415, %v430
        %v435 = vmul.f32 %v416, %v426
        %v436 = vmul.f32 %v417, %v430
        %v437 = vmul.f32 %v418, %v426
        %v438 = vmul.f32 %v419, %v430
        %v439 = vmul.f32 %v420, %v426
        %v440 = vmul.f32 %v421, %v430
        %v442 = vlaneseq
        %v443 = vshrl.u32 %v442, 7
        %v444 = vsub.s32 0, %v443
        %v445 = vrot.slane %v307, %v444
        %v446 = vlaneseq
        %v447 = vshrl.u32 %v446, 7
        %v448 = vsub.s32 1, %v447
        %v449 = vrot.slane %v307, %v448
        %v452 = vadd.f32 %v433, %v445
        %v453 = vadd.f32 %v434, %v449
        %v454 = vadd.f32 %v435, %v445
        %v455 = vadd.f32 %v436, %v449
        %v456 = vadd.f32 %v437, %v445
        %v457 = vadd.f32 %v438, %v449
        %v458 = vadd.f32 %v439, %v445
        %v459 = vadd.f32 %v440, %v449
        %v460 = vmax.f32 %v452, 0.0
        %v461 = vmax.f32 %v453, 0.0
        %v462 = vmax.f32 %v454, 0.0
        %v463 = vmax.f32 %v455, 0.0
        %v464 = vmax.f32 %v456, 0.0
        %v465 = vmax.f32 %v457, 0.0
        %v466 = vmax.f32 %v458, 0.0
        %v467 = vmax.f32 %v459, 0.0
        %v468 = vpack.c.bf16 %v462, %v460
        %v469 = vpack.c.bf16 %v463, %v461
        %v470 = vpack.c.bf16 %v466, %v464
        %v471 = vpack.c.bf16 %v467, %v465
        %vm476 = vcmask 1040384
        %v477 = vrot.slane %v468, 7
        %v478 = vrot.slane %v469, 7
        %v479 = vrot.slane %v470, 7
        %v480 = vsel %vm476, %v477, %v479
        %v481 = vrot.slane %v471, 7
        %v482 = vsel %vm476, %v478, %v481
        %s487 = scalar_lea.vmem [#allocation2], 32
        %488 = vst [vmem:[%s487] sm:$0xfe] %v477
        %489 = vst [vmem:[%s487 + $0x8] sm:$0xfe] %v478
        %490 = vst [vmem:[%s487 + $0x10] sm:$0x7f] %v480
        %491 = vst [vmem:[%s487 + $0x18] sm:$0x7f] %v482
      $region44: #{forward.4} parent=35 // pred_fallthru
        _
      %p492 = scmp.ge.s32.totalorder %s308, 0
      %p493 = scmp.lt.s32.totalorder %s308, 28
      %p494 = pnand %p492, %p493
      %p495 = pneg %p494
      // Predicated region
      $region45: #{forward.4} parent=35 // pred_check
        _
      $region46: #{forward.4} parent=35 // pred_check_branch
        %497 = sbr.rel (%p494) target = $region48
      $region47: #{forward.4} parent=35 // pred_region
        %s498 = smul.u32 %s308, 8
        %s499 = smul.addr %s498, 4
        %s500 = scalar_lea.vmem %s252, %s499
        %v501 = vld [vmem:[%s500] sm:$0xff]
        %v502 = vld [vmem:[%s500 + $0x8] sm:$0xff]
        %v503 = vld [vmem:[%s500 + $0x10] sm:$0xff]
        %v504 = vld [vmem:[%s500 + $0x18] sm:$0x33]
        %v505 = vunpack.c.l.bf16 %v501
        %v506 = vunpack.c.h.bf16 %v501
        %v507 = vunpack.c.l.bf16 %v502
        %v508 = vunpack.c.h.bf16 %v502
        %v509 = vunpack.c.l.bf16 %v503
        %v510 = vunpack.c.h.bf16 %v503
        %v511 = vunpack.c.l.bf16 %v504
        %v512 = vunpack.c.h.bf16 %v504
        %v514 = vlaneseq
        %v515 = vshrl.u32 %v514, 7
        %v516 = vsub.s32 0, %v515
        %v517 = vrot.slane %v306, %v516
        %v518 = vlaneseq
        %v519 = vshrl.u32 %v518, 7
        %v520 = vsub.s32 1, %v519
        %v521 = vrot.slane %v306, %v520
        %v524 = vmul.f32 %v505, %v517
        %v525 = vmul.f32 %v506, %v521
        %v526 = vmul.f32 %v507, %v517
        %v527 = vmul.f32 %v508, %v521
        %v528 = vmul.f32 %v509, %v517
        %v529 = vmul.f32 %v510, %v521
        %v530 = vmul.f32 %v511, %v517
        %v531 = vmul.f32 %v512, %v521
        %v533 = vlaneseq
        %v534 = vshrl.u32 %v533, 7
        %v535 = vsub.s32 0, %v534
        %v536 = vrot.slane %v307, %v535
        %v537 = vlaneseq
        %v538 = vshrl.u32 %v537, 7
        %v539 = vsub.s32 1, %v538
        %v540 = vrot.slane %v307, %v539
        %v543 = vadd.f32 %v524, %v536
        %v544 = vadd.f32 %v525, %v540
        %v545 = vadd.f32 %v526, %v536
        %v546 = vadd.f32 %v527, %v540
        %v547 = vadd.f32 %v528, %v536
        %v548 = vadd.f32 %v529, %v540
        %v549 = vadd.f32 %v530, %v536
        %v550 = vadd.f32 %v531, %v540
        %v551 = vmax.f32 %v543, 0.0
        %v552 = vmax.f32 %v544, 0.0
        %v553 = vmax.f32 %v545, 0.0
        %v554 = vmax.f32 %v546, 0.0
        %v555 = vmax.f32 %v547, 0.0
        %v556 = vmax.f32 %v548, 0.0
        %v557 = vmax.f32 %v549, 0.0
        %v558 = vmax.f32 %v550, 0.0
        %v559 = vpack.c.bf16 %v553, %v551
        %v560 = vpack.c.bf16 %v554, %v552
        %v561 = vpack.c.bf16 %v557, %v555
        %v562 = vpack.c.bf16 %v558, %v556
        %vm567 = vcmask 1040384
        %v568 = vrot.slane %v559, 7
        %v569 = vrot.slane %v560, 7
        %v570 = vrot.slane %v561, 7
        %v571 = vsel %vm567, %v568, %v570
        %v572 = vrot.slane %v562, 7
        %v573 = vsel %vm567, %v569, %v572
        %s578 = scalar_lea.vmem [#allocation2], 64
        %579 = vst [vmem:[%s578] sm:$0xfe] %v568
        %580 = vst [vmem:[%s578 + $0x8] sm:$0xfe] %v569
        %581 = vst [vmem:[%s578 + $0x10] sm:$0x7f] %v571
        %582 = vst [vmem:[%s578 + $0x18] sm:$0x7f] %v573
      $region48: #{forward.4} parent=35 // pred_fallthru
        _
      %s583 = sadd.s32 %s308, 1
      %p584 = scmp.ge.s32.totalorder %s583, 0
      %p585 = scmp.lt.s32.totalorder %s583, 28
      %p586 = pnand %p584, %p585
      %p587 = pneg %p586
      // Predicated region
      $region49: #{forward.4} parent=35 // pred_check
        _
      $region50: #{forward.4} parent=35 // pred_check_branch
        %589 = sbr.rel (%p586) target = $region52
      $region51: #{forward.4} parent=35 // pred_region
        %s590 = smul.u32 %s583, 8
        %s591 = smul.addr %s590, 4
        %s592 = scalar_lea.vmem %s252, %s591
        %v593 = vld [vmem:[%s592] sm:$0xff]
        %v594 = vld [vmem:[%s592 + $0x8] sm:$0xff]
        %v595 = vld [vmem:[%s592 + $0x10] sm:$0xff]
        %v596 = vld [vmem:[%s592 + $0x18] sm:$0x33]
        %v597 = vunpack.c.l.bf16 %v593
        %v598 = vunpack.c.h.bf16 %v593
        %v599 = vunpack.c.l.bf16 %v594
        %v600 = vunpack.c.h.bf16 %v594
        %v601 = vunpack.c.l.bf16 %v595
        %v602 = vunpack.c.h.bf16 %v595
        %v603 = vunpack.c.l.bf16 %v596
        %v604 = vunpack.c.h.bf16 %v596
        %v606 = vlaneseq
        %v607 = vshrl.u32 %v606, 7
        %v608 = vsub.s32 0, %v607
        %v609 = vrot.slane %v306, %v608
        %v610 = vlaneseq
        %v611 = vshrl.u32 %v610, 7
        %v612 = vsub.s32 1, %v611
        %v613 = vrot.slane %v306, %v612
        %v616 = vmul.f32 %v597, %v609
        %v617 = vmul.f32 %v598, %v613
        %v618 = vmul.f32 %v599, %v609
        %v619 = vmul.f32 %v600, %v613
        %v620 = vmul.f32 %v601, %v609
        %v621 = vmul.f32 %v602, %v613
        %v622 = vmul.f32 %v603, %v609
        %v623 = vmul.f32 %v604, %v613
        %v625 = vlaneseq
        %v626 = vshrl.u32 %v625, 7
        %v627 = vsub.s32 0, %v626
        %v628 = vrot.slane %v307, %v627
        %v629 = vlaneseq
        %v630 = vshrl.u32 %v629, 7
        %v631 = vsub.s32 1, %v630
        %v632 = vrot.slane %v307, %v631
        %v635 = vadd.f32 %v616, %v628
        %v636 = vadd.f32 %v617, %v632
        %v637 = vadd.f32 %v618, %v628
        %v638 = vadd.f32 %v619, %v632
        %v639 = vadd.f32 %v620, %v628
        %v640 = vadd.f32 %v621, %v632
        %v641 = vadd.f32 %v622, %v628
        %v642 = vadd.f32 %v623, %v632
        %v643 = vmax.f32 %v635, 0.0
        %v644 = vmax.f32 %v636, 0.0
        %v645 = vmax.f32 %v637, 0.0
        %v646 = vmax.f32 %v638, 0.0
        %v647 = vmax.f32 %v639, 0.0
        %v648 = vmax.f32 %v640, 0.0
        %v649 = vmax.f32 %v641, 0.0
        %v650 = vmax.f32 %v642, 0.0
        %v651 = vpack.c.bf16 %v645, %v643
        %v652 = vpack.c.bf16 %v646, %v644
        %v653 = vpack.c.bf16 %v649, %v647
        %v654 = vpack.c.bf16 %v650, %v648
        %vm659 = vcmask 1040384
        %v660 = vrot.slane %v651, 7
        %v661 = vrot.slane %v652, 7
        %v662 = vrot.slane %v653, 7
        %v663 = vsel %vm659, %v660, %v662
        %v664 = vrot.slane %v654, 7
        %v665 = vsel %vm659, %v661, %v664
        %s670 = scalar_lea.vmem [#allocation2], 96
        %671 = vst [vmem:[%s670] sm:$0xfe] %v660
        %672 = vst [vmem:[%s670 + $0x8] sm:$0xfe] %v661
        %673 = vst [vmem:[%s670 + $0x10] sm:$0x7f] %v663
        %674 = vst [vmem:[%s670 + $0x18] sm:$0x7f] %v665
      $region52: #{forward.4} parent=35 // pred_fallthru
        _
      %s675 = sadd.s32 %s308, 2
      %p676 = scmp.ge.s32.totalorder %s675, 0
      %p677 = scmp.lt.s32.totalorder %s675, 28
      %p678 = pnand %p676, %p677
      %p679 = pneg %p678
      // Predicated region
      $region53: #{forward.4} parent=35 // pred_check
        _
      $region54: #{forward.4} parent=35 // pred_check_branch
        %681 = sbr.rel (%p678) target = $region56
      $region55: #{forward.4} parent=35 // pred_region
        %s682 = smul.u32 %s675, 8
        %s683 = smul.addr %s682, 4
        %s684 = scalar_lea.vmem %s252, %s683
        %v685 = vld [vmem:[%s684] sm:$0xff]
        %v686 = vld [vmem:[%s684 + $0x8] sm:$0xff]
        %v687 = vld [vmem:[%s684 + $0x10] sm:$0xff]
        %v688 = vld [vmem:[%s684 + $0x18] sm:$0x33]
        %v689 = vunpack.c.l.bf16 %v685
        %v690 = vunpack.c.h.bf16 %v685
        %v691 = vunpack.c.l.bf16 %v686
        %v692 = vunpack.c.h.bf16 %v686
        %v693 = vunpack.c.l.bf16 %v687
        %v694 = vunpack.c.h.bf16 %v687
        %v695 = vunpack.c.l.bf16 %v688
        %v696 = vunpack.c.h.bf16 %v688
        %v698 = vlaneseq
        %v699 = vshrl.u32 %v698, 7
        %v700 = vsub.s32 0, %v699
        %v701 = vrot.slane %v306, %v700
        %v702 = vlaneseq
        %v703 = vshrl.u32 %v702, 7
        %v704 = vsub.s32 1, %v703
        %v705 = vrot.slane %v306, %v704
        %v708 = vmul.f32 %v689, %v701
        %v709 = vmul.f32 %v690, %v705
        %v710 = vmul.f32 %v691, %v701
        %v711 = vmul.f32 %v692, %v705
        %v712 = vmul.f32 %v693, %v701
        %v713 = vmul.f32 %v694, %v705
        %v714 = vmul.f32 %v695, %v701
        %v715 = vmul.f32 %v696, %v705
        %v717 = vlaneseq
        %v718 = vshrl.u32 %v717, 7
        %v719 = vsub.s32 0, %v718
        %v720 = vrot.slane %v307, %v719
        %v721 = vlaneseq
        %v722 = vshrl.u32 %v721, 7
        %v723 = vsub.s32 1, %v722
        %v724 = vrot.slane %v307, %v723
        %v727 = vadd.f32 %v708, %v720
        %v728 = vadd.f32 %v709, %v724
        %v729 = vadd.f32 %v710, %v720
        %v730 = vadd.f32 %v711, %v724
        %v731 = vadd.f32 %v712, %v720
        %v732 = vadd.f32 %v713, %v724
        %v733 = vadd.f32 %v714, %v720
        %v734 = vadd.f32 %v715, %v724
        %v735 = vmax.f32 %v727, 0.0
        %v736 = vmax.f32 %v728, 0.0
        %v737 = vmax.f32 %v729, 0.0
        %v738 = vmax.f32 %v730, 0.0
        %v739 = vmax.f32 %v731, 0.0
        %v740 = vmax.f32 %v732, 0.0
        %v741 = vmax.f32 %v733, 0.0
        %v742 = vmax.f32 %v734, 0.0
        %v743 = vpack.c.bf16 %v737, %v735
        %v744 = vpack.c.bf16 %v738, %v736
        %v745 = vpack.c.bf16 %v741, %v739
        %v746 = vpack.c.bf16 %v742, %v740
        %vm751 = vcmask 1040384
        %v752 = vrot.slane %v743, 7
        %v753 = vrot.slane %v744, 7
        %v754 = vrot.slane %v745, 7
        %v755 = vsel %vm751, %v752, %v754
        %v756 = vrot.slane %v746, 7
        %v757 = vsel %vm751, %v753, %v756
        %s762 = scalar_lea.vmem [#allocation2], 128
        %763 = vst [vmem:[%s762] sm:$0xfe] %v752
        %764 = vst [vmem:[%s762 + $0x8] sm:$0xfe] %v753
        %765 = vst [vmem:[%s762 + $0x10] sm:$0x7f] %v755
        %766 = vst [vmem:[%s762 + $0x18] sm:$0x7f] %v757
      $region56: #{forward.4} parent=35 // pred_fallthru
        _
      %s767 = sadd.s32 %s308, 3
      %p768 = scmp.ge.s32.totalorder %s767, 0
      %p769 = scmp.lt.s32.totalorder %s767, 28
      %p770 = pnand %p768, %p769
      %p771 = pneg %p770
      // Predicated region
      $region57: #{forward.4} parent=35 // pred_check
        _
      $region58: #{forward.4} parent=35 // pred_check_branch
        %773 = sbr.rel (%p770) target = $region60
      $region59: #{forward.4} parent=35 // pred_region
        %s774 = smul.u32 %s767, 8
        %s775 = smul.addr %s774, 4
        %s776 = scalar_lea.vmem %s252, %s775
        %v777 = vld [vmem:[%s776] sm:$0xff]
        %v778 = vld [vmem:[%s776 + $0x8] sm:$0xff]
        %v779 = vld [vmem:[%s776 + $0x10] sm:$0xff]
        %v780 = vld [vmem:[%s776 + $0x18] sm:$0x33]
        %v781 = vunpack.c.l.bf16 %v777
        %v782 = vunpack.c.h.bf16 %v777
        %v783 = vunpack.c.l.bf16 %v778
        %v784 = vunpack.c.h.bf16 %v778
        %v785 = vunpack.c.l.bf16 %v779
        %v786 = vunpack.c.h.bf16 %v779
        %v787 = vunpack.c.l.bf16 %v780
        %v788 = vunpack.c.h.bf16 %v780
        %v790 = vlaneseq
        %v791 = vshrl.u32 %v790, 7
        %v792 = vsub.s32 0, %v791
        %v793 = vrot.slane %v306, %v792
        %v794 = vlaneseq
        %v795 = vshrl.u32 %v794, 7
        %v796 = vsub.s32 1, %v795
        %v797 = vrot.slane %v306, %v796
        %v800 = vmul.f32 %v781, %v793
        %v801 = vmul.f32 %v782, %v797
        %v802 = vmul.f32 %v783, %v793
        %v803 = vmul.f32 %v784, %v797
        %v804 = vmul.f32 %v785, %v793
        %v805 = vmul.f32 %v786, %v797
        %v806 = vmul.f32 %v787, %v793
        %v807 = vmul.f32 %v788, %v797
        %v809 = vlaneseq
        %v810 = vshrl.u32 %v809, 7
        %v811 = vsub.s32 0, %v810
        %v812 = vrot.slane %v307, %v811
        %v813 = vlaneseq
        %v814 = vshrl.u32 %v813, 7
        %v815 = vsub.s32 1, %v814
        %v816 = vrot.slane %v307, %v815
        %v819 = vadd.f32 %v800, %v812
        %v820 = vadd.f32 %v801, %v816
        %v821 = vadd.f32 %v802, %v812
        %v822 = vadd.f32 %v803, %v816
        %v823 = vadd.f32 %v804, %v812
        %v824 = vadd.f32 %v805, %v816
        %v825 = vadd.f32 %v806, %v812
        %v826 = vadd.f32 %v807, %v816
        %v827 = vmax.f32 %v819, 0.0
        %v828 = vmax.f32 %v820, 0.0
        %v829 = vmax.f32 %v821, 0.0
        %v830 = vmax.f32 %v822, 0.0
        %v831 = vmax.f32 %v823, 0.0
        %v832 = vmax.f32 %v824, 0.0
        %v833 = vmax.f32 %v825, 0.0
        %v834 = vmax.f32 %v826, 0.0
        %v835 = vpack.c.bf16 %v829, %v827
        %v836 = vpack.c.bf16 %v830, %v828
        %v837 = vpack.c.bf16 %v833, %v831
        %v838 = vpack.c.bf16 %v834, %v832
        %vm843 = vcmask 1040384
        %v844 = vrot.slane %v835, 7
        %v845 = vrot.slane %v836, 7
        %v846 = vrot.slane %v837, 7
        %v847 = vsel %vm843, %v844, %v846
        %v848 = vrot.slane %v838, 7
        %v849 = vsel %vm843, %v845, %v848
        %s854 = scalar_lea.vmem [#allocation2], 160
        %855 = vst [vmem:[%s854] sm:$0xfe] %v844
        %856 = vst [vmem:[%s854 + $0x8] sm:$0xfe] %v845
        %857 = vst [vmem:[%s854 + $0x10] sm:$0x7f] %v847
        %858 = vst [vmem:[%s854 + $0x18] sm:$0x7f] %v849
      $region60: #{forward.4} parent=35 // pred_fallthru
        _
      %s859 = sadd.s32 %s308, 4
      %p860 = scmp.ge.s32.totalorder %s859, 0
      %p861 = scmp.lt.s32.totalorder %s859, 28
      %p862 = pnand %p860, %p861
      %p863 = pneg %p862
      // Predicated region
      $region61: #{forward.4} parent=35 // pred_check
        _
      $region62: #{forward.4} parent=35 // pred_check_branch
        %865 = sbr.rel (%p862) target = $region64
      $region63: #{forward.4} parent=35 // pred_region
        %s866 = smul.u32 %s859, 8
        %s867 = smul.addr %s866, 4
        %s868 = scalar_lea.vmem %s252, %s867
        %v869 = vld [vmem:[%s868] sm:$0xff]
        %v870 = vld [vmem:[%s868 + $0x8] sm:$0xff]
        %v871 = vld [vmem:[%s868 + $0x10] sm:$0xff]
        %v872 = vld [vmem:[%s868 + $0x18] sm:$0x33]
        %v873 = vunpack.c.l.bf16 %v869
        %v874 = vunpack.c.h.bf16 %v869
        %v875 = vunpack.c.l.bf16 %v870
        %v876 = vunpack.c.h.bf16 %v870
        %v877 = vunpack.c.l.bf16 %v871
        %v878 = vunpack.c.h.bf16 %v871
        %v879 = vunpack.c.l.bf16 %v872
        %v880 = vunpack.c.h.bf16 %v872
        %v882 = vlaneseq
        %v883 = vshrl.u32 %v882, 7
        %v884 = vsub.s32 0, %v883
        %v885 = vrot.slane %v306, %v884
        %v886 = vlaneseq
        %v887 = vshrl.u32 %v886, 7
        %v888 = vsub.s32 1, %v887
        %v889 = vrot.slane %v306, %v888
        %v892 = vmul.f32 %v873, %v885
        %v893 = vmul.f32 %v874, %v889
        %v894 = vmul.f32 %v875, %v885
        %v895 = vmul.f32 %v876, %v889
        %v896 = vmul.f32 %v877, %v885
        %v897 = vmul.f32 %v878, %v889
        %v898 = vmul.f32 %v879, %v885
        %v899 = vmul.f32 %v880, %v889
        %v901 = vlaneseq
        %v902 = vshrl.u32 %v901, 7
        %v903 = vsub.s32 0, %v902
        %v904 = vrot.slane %v307, %v903
        %v905 = vlaneseq
        %v906 = vshrl.u32 %v905, 7
        %v907 = vsub.s32 1, %v906
        %v908 = vrot.slane %v307, %v907
        %v911 = vadd.f32 %v892, %v904
        %v912 = vadd.f32 %v893, %v908
        %v913 = vadd.f32 %v894, %v904
        %v914 = vadd.f32 %v895, %v908
        %v915 = vadd.f32 %v896, %v904
        %v916 = vadd.f32 %v897, %v908
        %v917 = vadd.f32 %v898, %v904
        %v918 = vadd.f32 %v899, %v908
        %v919 = vmax.f32 %v911, 0.0
        %v920 = vmax.f32 %v912, 0.0
        %v921 = vmax.f32 %v913, 0.0
        %v922 = vmax.f32 %v914, 0.0
        %v923 = vmax.f32 %v915, 0.0
        %v924 = vmax.f32 %v916, 0.0
        %v925 = vmax.f32 %v917, 0.0
        %v926 = vmax.f32 %v918, 0.0
        %v927 = vpack.c.bf16 %v921, %v919
        %v928 = vpack.c.bf16 %v922, %v920
        %v929 = vpack.c.bf16 %v925, %v923
        %v930 = vpack.c.bf16 %v926, %v924
        %vm935 = vcmask 1040384
        %v936 = vrot.slane %v927, 7
        %v937 = vrot.slane %v928, 7
        %v938 = vrot.slane %v929, 7
        %v939 = vsel %vm935, %v936, %v938
        %v940 = vrot.slane %v930, 7
        %v941 = vsel %vm935, %v937, %v940
        %s946 = scalar_lea.vmem [#allocation2], 192
        %947 = vst [vmem:[%s946] sm:$0xfe] %v936
        %948 = vst [vmem:[%s946 + $0x8] sm:$0xfe] %v937
        %949 = vst [vmem:[%s946 + $0x10] sm:$0x7f] %v939
        %950 = vst [vmem:[%s946 + $0x18] sm:$0x7f] %v941
      $region64: #{forward.4} parent=35 // pred_fallthru
        _
      %s951 = sadd.s32 %s308, 5
      %p952 = scmp.ge.s32.totalorder %s951, 0
      %p953 = scmp.lt.s32.totalorder %s951, 28
      %p954 = pnand %p952, %p953
      %p955 = pneg %p954
      // Predicated region
      $region65: #{forward.4} parent=35 // pred_check
        _
      $region66: #{forward.4} parent=35 // pred_check_branch
        %957 = sbr.rel (%p954) target = $region68
      $region67: #{forward.4} parent=35 // pred_region
        %s958 = smul.u32 %s951, 8
        %s959 = smul.addr %s958, 4
        %s960 = scalar_lea.vmem %s252, %s959
        %v961 = vld [vmem:[%s960] sm:$0xff]
        %v962 = vld [vmem:[%s960 + $0x8] sm:$0xff]
        %v963 = vld [vmem:[%s960 + $0x10] sm:$0xff]
        %v964 = vld [vmem:[%s960 + $0x18] sm:$0x33]
        %v965 = vunpack.c.l.bf16 %v961
        %v966 = vunpack.c.h.bf16 %v961
        %v967 = vunpack.c.l.bf16 %v962
        %v968 = vunpack.c.h.bf16 %v962
        %v969 = vunpack.c.l.bf16 %v963
        %v970 = vunpack.c.h.bf16 %v963
        %v971 = vunpack.c.l.bf16 %v964
        %v972 = vunpack.c.h.bf16 %v964
        %v974 = vlaneseq
        %v975 = vshrl.u32 %v974, 7
        %v976 = vsub.s32 0, %v975
        %v977 = vrot.slane %v306, %v976
        %v978 = vlaneseq
        %v979 = vshrl.u32 %v978, 7
        %v980 = vsub.s32 1, %v979
        %v981 = vrot.slane %v306, %v980
        %v984 = vmul.f32 %v965, %v977
        %v985 = vmul.f32 %v966, %v981
        %v986 = vmul.f32 %v967, %v977
        %v987 = vmul.f32 %v968, %v981
        %v988 = vmul.f32 %v969, %v977
        %v989 = vmul.f32 %v970, %v981
        %v990 = vmul.f32 %v971, %v977
        %v991 = vmul.f32 %v972, %v981
        %v993 = vlaneseq
        %v994 = vshrl.u32 %v993, 7
        %v995 = vsub.s32 0, %v994
        %v996 = vrot.slane %v307, %v995
        %v997 = vlaneseq
        %v998 = vshrl.u32 %v997, 7
        %v999 = vsub.s32 1, %v998
        %v1000 = vrot.slane %v307, %v999
        %v1003 = vadd.f32 %v984, %v996
        %v1004 = vadd.f32 %v985, %v1000
        %v1005 = vadd.f32 %v986, %v996
        %v1006 = vadd.f32 %v987, %v1000
        %v1007 = vadd.f32 %v988, %v996
        %v1008 = vadd.f32 %v989, %v1000
        %v1009 = vadd.f32 %v990, %v996
        %v1010 = vadd.f32 %v991, %v1000
        %v1011 = vmax.f32 %v1003, 0.0
        %v1012 = vmax.f32 %v1004, 0.0
        %v1013 = vmax.f32 %v1005, 0.0
        %v1014 = vmax.f32 %v1006, 0.0
        %v1015 = vmax.f32 %v1007, 0.0
        %v1016 = vmax.f32 %v1008, 0.0
        %v1017 = vmax.f32 %v1009, 0.0
        %v1018 = vmax.f32 %v1010, 0.0
        %v1019 = vpack.c.bf16 %v1013, %v1011
        %v1020 = vpack.c.bf16 %v1014, %v1012
        %v1021 = vpack.c.bf16 %v1017, %v1015
        %v1022 = vpack.c.bf16 %v1018, %v1016
        %vm1027 = vcmask 1040384
        %v1028 = vrot.slane %v1019, 7
        %v1029 = vrot.slane %v1020, 7
        %v1030 = vrot.slane %v1021, 7
        %v1031 = vsel %vm1027, %v1028, %v1030
        %v1032 = vrot.slane %v1022, 7
        %v1033 = vsel %vm1027, %v1029, %v1032
        %s1038 = scalar_lea.vmem [#allocation2], 224
        %1039 = vst [vmem:[%s1038] sm:$0xfe] %v1028
        %1040 = vst [vmem:[%s1038 + $0x8] sm:$0xfe] %v1029
        %1041 = vst [vmem:[%s1038 + $0x10] sm:$0x7f] %v1031
        %1042 = vst [vmem:[%s1038 + $0x18] sm:$0x7f] %v1033
      $region68: #{forward.4} parent=35 // pred_fallthru
        _
      %v1043 = vld [vmem:[#allocation2] sm:$0xff]
      %v1044 = vld [vmem:[#allocation2 + $0x8] sm:$0xff]
      %v1045 = vld [vmem:[#allocation2 + $0x10] sm:$0x3f]
      %v1046 = vld [vmem:[#allocation2 + $0x18] sm:$0x3f]
      %v1047 = vld [vmem:[#allocation2 + $0x20] sm:$0xff]
      %v1048 = vld [vmem:[#allocation2 + $0x28] sm:$0xff]
      %v1049 = vld [vmem:[#allocation2 + $0x30] sm:$0x3f]
      %v1050 = vld [vmem:[#allocation2 + $0x38] sm:$0x3f]
      %v1051 = vld [vmem:[#allocation2 + $0x40] sm:$0xff]
      %v1052 = vld [vmem:[#allocation2 + $0x48] sm:$0xff]
      %v1053 = vld [vmem:[#allocation2 + $0x50] sm:$0x3f]
      %v1054 = vld [vmem:[#allocation2 + $0x58] sm:$0x3f]
      %v1055 = vld [vmem:[#allocation2 + $0x60] sm:$0xff]
      %v1056 = vld [vmem:[#allocation2 + $0x68] sm:$0xff]
      %v1057 = vld [vmem:[#allocation2 + $0x70] sm:$0x3f]
      %v1058 = vld [vmem:[#allocation2 + $0x78] sm:$0x3f]
      %v1075 = vcombine.low %v1043, %v1044
      %v1076 = vcombine.high %v1043, %v1044
      %v1078 = vunpack.c.l.s4 1983009808
      %v1079 = vunpack.c.0.s8 %v1078
      %v1080 = vlaneseq
      %v1081 = vshrl.u32 %v1080, 7
      %v1082 = vsub.s32 %v1079, %v1081
      %v1083 = vrot.slane %v1075, %v1082
      %v1085 = vunpack.c.l.s4 1983009808
      %v1086 = vunpack.c.0.s8 %v1085
      %v1087 = vlaneseq
      %v1088 = vshrl.u32 %v1087, 7
      %v1089 = vsub.s32 %v1086, %v1088
      %v1090 = vrot.slane %v1076, %v1089
      %v1091 = vcombine.high %v1083, %v1083
      %v1092 = vcombine.high %v1090, %v1090
      %v1093 = vcombine.low %v1045, %v1046
      %v1094 = vcombine.high %v1045, %v1046
      %v1096 = vunpack.c.l.s4 1983009808
      %v1097 = vunpack.c.0.s8 %v1096
      %v1098 = vlaneseq
      %v1099 = vshrl.u32 %v1098, 7
      %v1100 = vsub.s32 %v1097, %v1099
      %v1101 = vrot.slane %v1093, %v1100
      %v1103 = vunpack.c.l.s4 1983009808
      %v1104 = vunpack.c.0.s8 %v1103
      %v1105 = vlaneseq
      %v1106 = vshrl.u32 %v1105, 7
      %v1107 = vsub.s32 %v1104, %v1106
      %v1108 = vrot.slane %v1094, %v1107
      %v1109 = vcombine.high %v1101, %v1101
      %v1110 = vcombine.low %v1047, %v1048
      %v1111 = vcombine.high %v1047, %v1048
      %v1113 = vunpack.c.l.s4 1983009808
      %v1114 = vunpack.c.0.s8 %v1113
      %v1115 = vlaneseq
      %v1116 = vshrl.u32 %v1115, 7
      %v1117 = vsub.s32 %v1114, %v1116
      %v1118 = vrot.slane %v1110, %v1117
      %v1120 = vunpack.c.l.s4 1983009808
      %v1121 = vunpack.c.0.s8 %v1120
      %v1122 = vlaneseq
      %v1123 = vshrl.u32 %v1122, 7
      %v1124 = vsub.s32 %v1121, %v1123
      %v1125 = vrot.slane %v1111, %v1124
      %v1126 = vcombine.high %v1118, %v1118
      %v1127 = vcombine.high %v1125, %v1125
      %v1128 = vcombine.low %v1049, %v1050
      %v1129 = vcombine.high %v1049, %v1050
      %v1131 = vunpack.c.l.s4 1983009808
      %v1132 = vunpack.c.0.s8 %v1131
      %v1133 = vlaneseq
      %v1134 = vshrl.u32 %v1133, 7
      %v1135 = vsub.s32 %v1132, %v1134
      %v1136 = vrot.slane %v1128, %v1135
      %v1138 = vunpack.c.l.s4 1983009808
      %v1139 = vunpack.c.0.s8 %v1138
      %v1140 = vlaneseq
      %v1141 = vshrl.u32 %v1140, 7
      %v1142 = vsub.s32 %v1139, %v1141
      %v1143 = vrot.slane %v1129, %v1142
      %v1144 = vcombine.high %v1136, %v1136
      %v1145 = vcombine.low %v1051, %v1052
      %v1146 = vcombine.high %v1051, %v1052
      %v1148 = vunpack.c.l.s4 1983009808
      %v1149 = vunpack.c.0.s8 %v1148
      %v1150 = vlaneseq
      %v1151 = vshrl.u32 %v1150, 7
      %v1152 = vsub.s32 %v1149, %v1151
      %v1153 = vrot.slane %v1145, %v1152
      %v1155 = vunpack.c.l.s4 1983009808
      %v1156 = vunpack.c.0.s8 %v1155
      %v1157 = vlaneseq
      %v1158 = vshrl.u32 %v1157, 7
      %v1159 = vsub.s32 %v1156, %v1158
      %v1160 = vrot.slane %v1146, %v1159
      %v1161 = vcombine.high %v1153, %v1153
      %v1162 = vcombine.high %v1160, %v1160
      %v1163 = vcombine.low %v1053, %v1054
      %v1164 = vcombine.high %v1053, %v1054
      %v1166 = vunpack.c.l.s4 1983009808
      %v1167 = vunpack.c.0.s8 %v1166
      %v1168 = vlaneseq
      %v1169 = vshrl.u32 %v1168, 7
      %v1170 = vsub.s32 %v1167, %v1169
      %v1171 = vrot.slane %v1163, %v1170
      %v1173 = vunpack.c.l.s4 1983009808
      %v1174 = vunpack.c.0.s8 %v1173
      %v1175 = vlaneseq
      %v1176 = vshrl.u32 %v1175, 7
      %v1177 = vsub.s32 %v1174, %v1176
      %v1178 = vrot.slane %v1164, %v1177
      %v1179 = vcombine.high %v1171, %v1171
      %v1180 = vcombine.low %v1055, %v1056
      %v1181 = vcombine.high %v1055, %v1056
      %v1183 = vunpack.c.l.s4 1983009808
      %v1184 = vunpack.c.0.s8 %v1183
      %v1185 = vlaneseq
      %v1186 = vshrl.u32 %v1185, 7
      %v1187 = vsub.s32 %v1184, %v1186
      %v1188 = vrot.slane %v1180, %v1187
      %v1190 = vunpack.c.l.s4 1983009808
      %v1191 = vunpack.c.0.s8 %v1190
      %v1192 = vlaneseq
      %v1193 = vshrl.u32 %v1192, 7
      %v1194 = vsub.s32 %v1191, %v1193
      %v1195 = vrot.slane %v1181, %v1194
      %v1196 = vcombine.high %v1188, %v1188
      %v1197 = vcombine.high %v1195, %v1195
      %v1198 = vcombine.low %v1057, %v1058
      %v1199 = vcombine.high %v1057, %v1058
      %v1201 = vunpack.c.l.s4 1983009808
      %v1202 = vunpack.c.0.s8 %v1201
      %v1203 = vlaneseq
      %v1204 = vshrl.u32 %v1203, 7
      %v1205 = vsub.s32 %v1202, %v1204
      %v1206 = vrot.slane %v1198, %v1205
      %v1208 = vunpack.c.l.s4 1983009808
      %v1209 = vunpack.c.0.s8 %v1208
      %v1210 = vlaneseq
      %v1211 = vshrl.u32 %v1210, 7
      %v1212 = vsub.s32 %v1209, %v1211
      %v1213 = vrot.slane %v1199, %v1212
      %v1214 = vcombine.high %v1206, %v1206
      %v1215 = vld [vmem:[%s3] sm:$0xff]
      %v1216 = vld [vmem:[%s3 + $0x8] sm:$0xff]
      %v1217 = vld [vmem:[%s3 + $0x10] sm:$0xff]
      %v1218 = vld [vmem:[%s3 + $0x18] sm:$0xff]
      %v1219 = vld [vmem:[%s3 + $0x20] sm:$0xff]
      %v1220 = vld [vmem:[%s3 + $0x28] sm:$0xff]
      %v1221 = vld [vmem:[%s3 + $0x30] sm:$0xff]
      %v1222 = vld [vmem:[%s3 + $0x38] sm:$0xff]
      %v1223 = vld [vmem:[%s3 + $0x40] sm:$0xff]
      %v1224 = vld [vmem:[%s3 + $0x48] sm:$0xff]
      %v1225 = vld [vmem:[%s3 + $0x50] sm:$0xff]
      %v1226 = vld [vmem:[%s3 + $0x58] sm:$0xff]
      %v1227 = vld [vmem:[%s3 + $0x60] sm:$0xff]
      %v1228 = vld [vmem:[%s3 + $0x68] sm:$0xff]
      %v1229 = vld [vmem:[%s3 + $0x70] sm:$0xff]
      %v1230 = vld [vmem:[%s3 + $0x78] sm:$0xff]
      %v1231 = vld [vmem:[%s3 + $0x80] sm:$0xff]
      %v1232 = vld [vmem:[%s3 + $0x88] sm:$0xff]
      %v1233 = vld [vmem:[%s3 + $0x90] sm:$0xff]
      %v1234 = vld [vmem:[%s3 + $0x98] sm:$0xff]
      %v1235 = vld [vmem:[%s3 + $0xa0] sm:$0xff]
      %v1236 = vld [vmem:[%s3 + $0xa8] sm:$0xff]
      %v1237 = vld [vmem:[%s3 + $0xb0] sm:$0xff]
      %v1238 = vld [vmem:[%s3 + $0xb8] sm:$0xff]
      %v1239 = vld [vmem:[%s3 + $0xc0] sm:$0xff]
      %v1240 = vld [vmem:[%s3 + $0xc8] sm:$0xff]
      %v1241 = vld [vmem:[%s3 + $0xd0] sm:$0xff]
      %v1242 = vld [vmem:[%s3 + $0xd8] sm:$0xff]
      %v1243 = vld [vmem:[%s3 + $0xe0] sm:$0xff]
      %v1244 = vld [vmem:[%s3 + $0xe8] sm:$0xff]
      %v1245 = vld [vmem:[%s3 + $0xf0] sm:$0xff]
      %v1246 = vld [vmem:[%s3 + $0xf8] sm:$0xff]
      %v1247 = vcombine.low %v1083, %v1091
      %v1248 = vcombine.low %v1090, %v1092
      %v1250 = vunpack.c.l.s4 1983009808
      %v1251 = vunpack.c.0.s8 %v1250
      %v1252 = vlaneseq
      %v1253 = vshrl.u32 %v1252, 7
      %v1254 = vsub.s32 %v1251, %v1253
      %v1255 = vrot.slane %v1247, %v1254
      %v1257 = vunpack.c.l.s4 1983009808
      %v1258 = vunpack.c.0.s8 %v1257
      %v1259 = vlaneseq
      %v1260 = vshrl.u32 %v1259, 7
      %v1261 = vsub.s32 %v1258, %v1260
      %v1262 = vrot.slane %v1248, %v1261
      %v1263 = vcombine.low %v1255, %v1262
      %v1264 = vcombine.high %v1255, %v1262
      %v1265 = vcombine.low %v1101, %v1109
      %v1266 = vcombine.low %v1108, %v1118
      %v1268 = vunpack.c.l.s4 1983009808
      %v1269 = vunpack.c.0.s8 %v1268
      %v1270 = vlaneseq
      %v1271 = vshrl.u32 %v1270, 7
      %v1272 = vsub.s32 %v1269, %v1271
      %v1273 = vrot.slane %v1265, %v1272
      %v1275 = vunpack.c.l.s4 1983009808
      %v1276 = vunpack.c.0.s8 %v1275
      %v1277 = vlaneseq
      %v1278 = vshrl.u32 %v1277, 7
      %v1279 = vsub.s32 %v1276, %v1278
      %v1280 = vrot.slane %v1266, %v1279
      %v1281 = vcombine.low %v1273, %v1280
      %v1282 = vcombine.high %v1273, %v1280
      %v1283 = vcombine.low %v1126, %v1125
      %v1284 = vcombine.low %v1127, %v1136
      %v1286 = vunpack.c.l.s4 1983009808
      %v1287 = vunpack.c.0.s8 %v1286
      %v1288 = vlaneseq
      %v1289 = vshrl.u32 %v1288, 7
      %v1290 = vsub.s32 %v1287, %v1289
      %v1291 = vrot.slane %v1283, %v1290
      %v1293 = vunpack.c.l.s4 1983009808
      %v1294 = vunpack.c.0.s8 %v1293
      %v1295 = vlaneseq
      %v1296 = vshrl.u32 %v1295, 7
      %v1297 = vsub.s32 %v1294, %v1296
      %v1298 = vrot.slane %v1284, %v1297
      %v1299 = vcombine.low %v1291, %v1298
      %v1300 = vcombine.high %v1291, %v1298
      %v1301 = vcombine.low %v1144, %v1143
      %v1302 = vcombine.low %v1153, %v1161
      %v1304 = vunpack.c.l.s4 1983009808
      %v1305 = vunpack.c.0.s8 %v1304
      %v1306 = vlaneseq
      %v1307 = vshrl.u32 %v1306, 7
      %v1308 = vsub.s32 %v1305, %v1307
      %v1309 = vrot.slane %v1301, %v1308
      %v1311 = vunpack.c.l.s4 1983009808
      %v1312 = vunpack.c.0.s8 %v1311
      %v1313 = vlaneseq
      %v1314 = vshrl.u32 %v1313, 7
      %v1315 = vsub.s32 %v1312, %v1314
      %v1316 = vrot.slane %v1302, %v1315
      %v1317 = vcombine.low %v1309, %v1316
      %v1318 = vcombine.high %v1309, %v1316
      %v1319 = vcombine.low %v1160, %v1162
      %v1320 = vcombine.low %v1171, %v1179
      %v1322 = vunpack.c.l.s4 1983009808
      %v1323 = vunpack.c.0.s8 %v1322
      %v1324 = vlaneseq
      %v1325 = vshrl.u32 %v1324, 7
      %v1326 = vsub.s32 %v1323, %v1325
      %v1327 = vrot.slane %v1319, %v1326
      %v1329 = vunpack.c.l.s4 1983009808
      %v1330 = vunpack.c.0.s8 %v1329
      %v1331 = vlaneseq
      %v1332 = vshrl.u32 %v1331, 7
      %v1333 = vsub.s32 %v1330, %v1332
      %v1334 = vrot.slane %v1320, %v1333
      %v1335 = vcombine.low %v1327, %v1334
      %v1336 = vcombine.high %v1327, %v1334
      %v1337 = vcombine.low %v1178, %v1188
      %v1338 = vcombine.low %v1196, %v1195
      %v1340 = vunpack.c.l.s4 1983009808
      %v1341 = vunpack.c.0.s8 %v1340
      %v1342 = vlaneseq
      %v1343 = vshrl.u32 %v1342, 7
      %v1344 = vsub.s32 %v1341, %v1343
      %v1345 = vrot.slane %v1337, %v1344
      %v1347 = vunpack.c.l.s4 1983009808
      %v1348 = vunpack.c.0.s8 %v1347
      %v1349 = vlaneseq
      %v1350 = vshrl.u32 %v1349, 7
      %v1351 = vsub.s32 %v1348, %v1350
      %v1352 = vrot.slane %v1338, %v1351
      %v1353 = vcombine.low %v1345, %v1352
      %v1354 = vcombine.high %v1345, %v1352
      %v1355 = vcombine.low %v1197, %v1206
      %v1356 = vcombine.low %v1214, %v1213
      %v1358 = vunpack.c.l.s4 1983009808
      %v1359 = vunpack.c.0.s8 %v1358
      %v1360 = vlaneseq
      %v1361 = vshrl.u32 %v1360, 7
      %v1362 = vsub.s32 %v1359, %v1361
      %v1363 = vrot.slane %v1355, %v1362
      %v1365 = vunpack.c.l.s4 1983009808
      %v1366 = vunpack.c.0.s8 %v1365
      %v1367 = vlaneseq
      %v1368 = vshrl.u32 %v1367, 7
      %v1369 = vsub.s32 %v1366, %v1368
      %v1370 = vrot.slane %v1356, %v1369
      %v1371 = vcombine.low %v1363, %v1370
      %v1372 = vcombine.high %v1363, %v1370
      %v1419 = vunpack.c.l.b16 %v1215
      %v1420 = vunpack.c.h.b16 %v1215
      %v1421 = vunpack.c.l.b16 %v1216
      %v1422 = vunpack.c.h.b16 %v1216
      %v1423 = vunpack.c.l.b16 %v1217
      %v1424 = vunpack.c.h.b16 %v1217
      %v1425 = vunpack.c.l.b16 %v1218
      %v1426 = vunpack.c.h.b16 %v1218
      %v1427 = vunpack.c.l.b16 %v1219
      %v1428 = vunpack.c.h.b16 %v1219
      %v1429 = vunpack.c.l.b16 %v1220
      %v1430 = vunpack.c.h.b16 %v1220
      %v1431 = vunpack.c.l.b16 %v1221
      %v1432 = vunpack.c.h.b16 %v1221
      %v1433 = vunpack.c.l.b16 %v1222
      %v1434 = vunpack.c.h.b16 %v1222
      %v1435 = vunpack.c.l.b16 %v1223
      %v1436 = vunpack.c.h.b16 %v1223
      %v1437 = vunpack.c.l.b16 %v1224
      %v1438 = vunpack.c.h.b16 %v1224
      %v1439 = vunpack.c.l.b16 %v1225
      %v1440 = vunpack.c.h.b16 %v1225
      %v1441 = vunpack.c.l.b16 %v1226
      %v1442 = vunpack.c.h.b16 %v1226
      %v1443 = vunpack.c.l.b16 %v1227
      %v1444 = vunpack.c.h.b16 %v1227
      %v1445 = vunpack.c.l.b16 %v1228
      %v1446 = vunpack.c.h.b16 %v1228
      %v1447 = vunpack.c.l.b16 %v1229
      %v1448 = vunpack.c.h.b16 %v1229
      %v1449 = vunpack.c.l.b16 %v1230
      %v1450 = vunpack.c.h.b16 %v1230
      %v1451 = vunpack.c.l.b16 %v1231
      %v1452 = vunpack.c.h.b16 %v1231
      %v1453 = vunpack.c.l.b16 %v1232
      %v1454 = vunpack.c.h.b16 %v1232
      %v1455 = vunpack.c.l.b16 %v1233
      %v1456 = vunpack.c.h.b16 %v1233
      %v1457 = vunpack.c.l.b16 %v1234
      %v1458 = vunpack.c.h.b16 %v1234
      %v1459 = vunpack.c.l.b16 %v1235
      %v1460 = vunpack.c.h.b16 %v1235
      %v1461 = vunpack.c.l.b16 %v1236
      %v1462 = vunpack.c.h.b16 %v1236
      %v1463 = vunpack.c.l.b16 %v1237
      %v1464 = vunpack.c.h.b16 %v1237
      %v1465 = vunpack.c.l.b16 %v1238
      %v1466 = vunpack.c.h.b16 %v1238
      %v1467 = vunpack.c.l.b16 %v1239
      %v1468 = vunpack.c.h.b16 %v1239
      %v1469 = vunpack.c.l.b16 %v1240
      %v1470 = vunpack.c.h.b16 %v1240
      %v1471 = vunpack.c.l.b16 %v1241
      %v1472 = vunpack.c.h.b16 %v1241
      %v1473 = vunpack.c.l.b16 %v1242
      %v1474 = vunpack.c.h.b16 %v1242
      %v1475 = vunpack.c.l.b16 %v1243
      %v1476 = vunpack.c.h.b16 %v1243
      %v1477 = vunpack.c.l.b16 %v1244
      %v1478 = vunpack.c.h.b16 %v1244
      %v1479 = vunpack.c.l.b16 %v1245
      %v1480 = vunpack.c.h.b16 %v1245
      %v1481 = vunpack.c.l.b16 %v1246
      %v1482 = vunpack.c.h.b16 %v1246
      %v1483 = vpack.c.b16 %v1421, %v1419
      %v1484 = vpack.c.b16 %v1422, %v1420
      %v1485 = vpack.c.b16 %v1425, %v1423
      %v1486 = vpack.c.b16 %v1426, %v1424
      %v1487 = vpack.c.b16 %v1429, %v1427
      %v1488 = vpack.c.b16 %v1430, %v1428
      %v1489 = vpack.c.b16 %v1433, %v1431
      %v1490 = vpack.c.b16 %v1434, %v1432
      %v1491 = vpack.c.b16 %v1437, %v1435
      %v1492 = vpack.c.b16 %v1438, %v1436
      %v1493 = vpack.c.b16 %v1441, %v1439
      %v1494 = vpack.c.b16 %v1442, %v1440
      %v1495 = vpack.c.b16 %v1445, %v1443
      %v1496 = vpack.c.b16 %v1446, %v1444
      %v1497 = vpack.c.b16 %v1449, %v1447
      %v1498 = vpack.c.b16 %v1450, %v1448
      %v1499 = vpack.c.b16 %v1453, %v1451
      %v1500 = vpack.c.b16 %v1454, %v1452
      %v1501 = vpack.c.b16 %v1457, %v1455
      %v1502 = vpack.c.b16 %v1458, %v1456
      %v1503 = vpack.c.b16 %v1461, %v1459
      %v1504 = vpack.c.b16 %v1462, %v1460
      %v1505 = vpack.c.b16 %v1465, %v1463
      %v1506 = vpack.c.b16 %v1466, %v1464
      %v1507 = vpack.c.b16 %v1469, %v1467
      %v1508 = vpack.c.b16 %v1470, %v1468
      %v1509 = vpack.c.b16 %v1473, %v1471
      %v1510 = vpack.c.b16 %v1474, %v1472
      %v1511 = vpack.c.b16 %v1477, %v1475
      %v1512 = vpack.c.b16 %v1478, %v1476
      %v1513 = vpack.c.b16 %v1481, %v1479
      %v1514 = vpack.c.b16 %v1482, %v1480
      %1547 = vmatprep.subr.bf16.mxu0 %v1484
      %1548 = vmatpush1.bf16.msra.mxu0 %v1483
      %1549 = vmatprep.subr.bf16.mxu0 %v1486
      %1550 = vmatpush1.bf16.msra.mxu0 %v1485
      %1551 = vmatprep.subr.bf16.mxu0 %v1488
      %1552 = vmatpush1.bf16.msra.mxu0 %v1487
      %1553 = vmatprep.subr.bf16.mxu0 %v1490
      %1554 = vmatpush1.bf16.msra.mxu0 %v1489
      %1555 = vmatprep.subr.bf16.mxu0 %v1492
      %1556 = vmatpush1.bf16.msra.mxu0 %v1491
      %1557 = vmatprep.subr.bf16.mxu0 %v1494
      %1558 = vmatpush1.bf16.msra.mxu0 %v1493
      %1559 = vmatprep.subr.bf16.mxu0 %v1496
      %1560 = vmatpush1.bf16.msra.mxu0 %v1495
      %1561 = vmatprep.subr.bf16.mxu0 %v1498
      %1562 = vmatpush1.bf16.msra.mxu0 %v1497
      %1563 = vmatprep.subr.bf16.mxu0 %v1500
      %1564 = vmatpush1.bf16.msra.mxu0 %v1499
      %1565 = vmatprep.subr.bf16.mxu0 %v1502
      %1566 = vmatpush1.bf16.msra.mxu0 %v1501
      %1567 = vmatprep.subr.bf16.mxu0 %v1504
      %1568 = vmatpush1.bf16.msra.mxu0 %v1503
      %1569 = vmatprep.subr.bf16.mxu0 %v1506
      %1570 = vmatpush1.bf16.msra.mxu0 %v1505
      %1571 = vmatprep.subr.bf16.mxu0 %v1508
      %1572 = vmatpush1.bf16.msra.mxu0 %v1507
      %1573 = vmatprep.subr.bf16.mxu0 %v1510
      %1574 = vmatpush1.bf16.msra.mxu0 %v1509
      %1575 = vmatprep.subr.bf16.mxu0 %v1512
      %1576 = vmatpush1.bf16.msra.mxu0 %v1511
      %1577 = vmatprep.subr.bf16.mxu0 %v1514
      %1578 = vmatpush1.bf16.msra.mxu0 %v1513
      %1579 = vmatprep.mubr.bf16.mxu0 %v1264
      %1580 = vmatmul.mubr.bf16.gmra.mrb[0].mxu0 %v1263
      %v1581 = vpop.f32.mrb[0].mxu0
      %v1582 = vadd.f32 0.0, %v1581
      %v1583 = vpop.f32.mrb[0].mxu0
      %v1584 = vadd.f32 0.0, %v1583
      %v1585 = vpop.f32.mrb[0].mxu0
      %v1586 = vadd.f32 0.0, %v1585
      %v1587 = vpop.f32.mrb[0].mxu0
      %v1588 = vadd.f32 0.0, %v1587
      %1589 = vmatprep.mubr.bf16.mxu0 %v1282
      %1590 = vmatmul.mubr.bf16.gmra.mrb[0].mxu0 %v1281
      %v1591 = vpop.f32.mrb[0].mxu0
      %v1592 = vadd.f32 0.0, %v1591
      %v1593 = vpop.f32.mrb[0].mxu0
      %v1594 = vadd.f32 0.0, %v1593
      %v1595 = vpop.f32.mrb[0].mxu0
      %v1596 = vadd.f32 0.0, %v1595
      %v1597 = vpop.f32.mrb[0].mxu0
      %v1598 = vadd.f32 0.0, %v1597
      %1599 = vmatprep.mubr.bf16.mxu0 %v1300
      %1600 = vmatmul.mubr.bf16.gmra.mrb[0].mxu0 %v1299
      %v1601 = vpop.f32.mrb[0].mxu0
      %v1602 = vadd.f32 0.0, %v1601
      %v1603 = vpop.f32.mrb[0].mxu0
      %v1604 = vadd.f32 0.0, %v1603
      %v1605 = vpop.f32.mrb[0].mxu0
      %v1606 = vadd.f32 0.0, %v1605
      %v1607 = vpop.f32.mrb[0].mxu0
      %v1608 = vadd.f32 0.0, %v1607
      %1609 = vmatprep.mubr.bf16.mxu0 %v1318
      %1610 = vmatmul.mubr.bf16.gmra.mrb[0].mxu0 %v1317
      %v1611 = vpop.f32.mrb[0].mxu0
      %v1612 = vadd.f32 0.0, %v1611
      %v1613 = vpop.f32.mrb[0].mxu0
      %v1614 = vadd.f32 0.0, %v1613
      %v1615 = vpop.f32.mrb[0].mxu0
      %v1616 = vadd.f32 0.0, %v1615
      %v1617 = vpop.f32.mrb[0].mxu0
      %v1618 = vadd.f32 0.0, %v1617
      %1619 = vmatprep.mubr.bf16.mxu0 %v1336
      %1620 = vmatmul.mubr.bf16.gmra.mrb[0].mxu0 %v1335
      %v1621 = vpop.f32.mrb[0].mxu0
      %v1622 = vadd.f32 0.0, %v1621
      %v1623 = vpop.f32.mrb[0].mxu0
      %v1624 = vadd.f32 0.0, %v1623
      %v1625 = vpop.f32.mrb[0].mxu0
      %v1626 = vadd.f32 0.0, %v1625
      %v1627 = vpop.f32.mrb[0].mxu0
      %v1628 = vadd.f32 0.0, %v1627
      %1629 = vmatprep.mubr.bf16.mxu0 %v1354
      %1630 = vmatmul.mubr.bf16.gmra.mrb[0].mxu0 %v1353
      %v1631 = vpop.f32.mrb[0].mxu0
      %v1632 = vadd.f32 0.0, %v1631
      %v1633 = vpop.f32.mrb[0].mxu0
      %v1634 = vadd.f32 0.0, %v1633
      %v1635 = vpop.f32.mrb[0].mxu0
      %v1636 = vadd.f32 0.0, %v1635
      %v1637 = vpop.f32.mrb[0].mxu0
      %v1638 = vadd.f32 0.0, %v1637
      %1639 = vmatprep.mubr.bf16.mxu0 %v1372
      %1640 = vmatmul.mubr.bf16.gmra.mrb[0].mxu0 %v1371
      %v1641 = vpop.f32.mrb[0].mxu0
      %v1642 = vadd.f32 0.0, %v1641
      %v1643 = vpop.f32.mrb[0].mxu0
      %v1644 = vadd.f32 0.0, %v1643
      %v1645 = vpop.f32.mrb[0].mxu0
      %v1646 = vadd.f32 0.0, %v1645
      %v1647 = vpop.f32.mrb[0].mxu0
      %v1648 = vadd.f32 0.0, %v1647
      %1649 = vdwg.mxu0
      %1650 = vst [vmem:[#allocation3] sm:$0xff] %v1582
      %1651 = vst [vmem:[#allocation3 + $0x8] sm:$0xff] %v1584
      %1652 = vst [vmem:[#allocation3 + $0x10] sm:$0xff] %v1586
      %1653 = vst [vmem:[#allocation3 + $0x18] sm:$0xff] %v1588
      %1654 = vst [vmem:[#allocation3 + $0x20] sm:$0xff] %v1592
      %1655 = vst [vmem:[#allocation3 + $0x28] sm:$0xff] %v1594
      %1656 = vst [vmem:[#allocation3 + $0x30] sm:$0xff] %v1596
      %1657 = vst [vmem:[#allocation3 + $0x38] sm:$0xff] %v1598
      %1658 = vst [vmem:[#allocation3 + $0x40] sm:$0xff] %v1602
      %1659 = vst [vmem:[#allocation3 + $0x48] sm:$0xff] %v1604
      %1660 = vst [vmem:[#allocation3 + $0x50] sm:$0xff] %v1606
      %1661 = vst [vmem:[#allocation3 + $0x58] sm:$0xff] %v1608
      %1662 = vst [vmem:[#allocation3 + $0x60] sm:$0xff] %v1612
      %1663 = vst [vmem:[#allocation3 + $0x68] sm:$0xff] %v1614
      %1664 = vst [vmem:[#allocation3 + $0x70] sm:$0xff] %v1616
      %1665 = vst [vmem:[#allocation3 + $0x78] sm:$0xff] %v1618
      %1666 = vst [vmem:[#allocation3 + $0x80] sm:$0xff] %v1622
      %1667 = vst [vmem:[#allocation3 + $0x88] sm:$0xff] %v1624
      %1668 = vst [vmem:[#allocation3 + $0x90] sm:$0xff] %v1626
      %1669 = vst [vmem:[#allocation3 + $0x98] sm:$0xff] %v1628
      %1670 = vst [vmem:[#allocation3 + $0xa0] sm:$0xff] %v1632
      %1671 = vst [vmem:[#allocation3 + $0xa8] sm:$0xff] %v1634
      %1672 = vst [vmem:[#allocation3 + $0xb0] sm:$0xff] %v1636
      %1673 = vst [vmem:[#allocation3 + $0xb8] sm:$0xff] %v1638
      %1674 = vst [vmem:[#allocation3 + $0xc0] sm:$0xff] %v1642
      %1675 = vst [vmem:[#allocation3 + $0xc8] sm:$0xff] %v1644
      %1676 = vst [vmem:[#allocation3 + $0xd0] sm:$0xff] %v1646
      %1677 = vst [vmem:[#allocation3 + $0xd8] sm:$0xff] %v1648
      %v1678 = vld [vmem:[#allocation2] sm:$0xfe]
      %v1679 = vld [vmem:[#allocation2 + $0x8] sm:$0xfe]
      %v1680 = vld [vmem:[#allocation2 + $0x10] sm:$0x7f]
      %v1681 = vld [vmem:[#allocation2 + $0x18] sm:$0x7f]
      %v1682 = vld [vmem:[#allocation2 + $0x20] sm:$0xfe]
      %v1683 = vld [vmem:[#allocation2 + $0x28] sm:$0xfe]
      %v1684 = vld [vmem:[#allocation2 + $0x30] sm:$0x7f]
      %v1685 = vld [vmem:[#allocation2 + $0x38] sm:$0x7f]
      %v1686 = vld [vmem:[#allocation2 + $0x40] sm:$0xfe]
      %v1687 = vld [vmem:[#allocation2 + $0x48] sm:$0xfe]
      %v1688 = vld [vmem:[#allocation2 + $0x50] sm:$0x7f]
      %v1689 = vld [vmem:[#allocation2 + $0x58] sm:$0x7f]
      %v1690 = vld [vmem:[#allocation2 + $0x60] sm:$0xfe]
      %v1691 = vld [vmem:[#allocation2 + $0x68] sm:$0xfe]
      %v1692 = vld [vmem:[#allocation2 + $0x70] sm:$0x7f]
      %v1693 = vld [vmem:[#allocation2 + $0x78] sm:$0x7f]
      %v1710 = vcombine.low %v1678, %v1679
      %v1711 = vcombine.high %v1678, %v1679
      %v1713 = vunpack.c.l.s4 1983009808
      %v1714 = vunpack.c.0.s8 %v1713
      %v1715 = vlaneseq
      %v1716 = vshrl.u32 %v1715, 7
      %v1717 = vsub.s32 %v1714, %v1716
      %v1718 = vrot.slane %v1710, %v1717
      %v1720 = vunpack.c.l.s4 1983009808
      %v1721 = vunpack.c.0.s8 %v1720
      %v1722 = vlaneseq
      %v1723 = vshrl.u32 %v1722, 7
      %v1724 = vsub.s32 %v1721, %v1723
      %v1725 = vrot.slane %v1711, %v1724
      %v1726 = vcombine.high %v1718, %v1718
      %v1727 = vcombine.high %v1725, %v1725
      %v1728 = vcombine.low %v1680, %v1681
      %v1729 = vcombine.high %v1680, %v1681
      %v1731 = vunpack.c.l.s4 1983009808
      %v1732 = vunpack.c.0.s8 %v1731
      %v1733 = vlaneseq
      %v1734 = vshrl.u32 %v1733, 7
      %v1735 = vsub.s32 %v1732, %v1734
      %v1736 = vrot.slane %v1728, %v1735
      %v1738 = vunpack.c.l.s4 1983009808
      %v1739 = vunpack.c.0.s8 %v1738
      %v1740 = vlaneseq
      %v1741 = vshrl.u32 %v1740, 7
      %v1742 = vsub.s32 %v1739, %v1741
      %v1743 = vrot.slane %v1729, %v1742
      %v1744 = vcombine.high %v1736, %v1736
      %v1745 = vcombine.high %v1743, %v1743
      %v1746 = vcombine.low %v1682, %v1683
      %v1747 = vcombine.high %v1682, %v1683
      %v1749 = vunpack.c.l.s4 1983009808
      %v1750 = vunpack.c.0.s8 %v1749
      %v1751 = vlaneseq
      %v1752 = vshrl.u32 %v1751, 7
      %v1753 = vsub.s32 %v1750, %v1752
      %v1754 = vrot.slane %v1746, %v1753
      %v1756 = vunpack.c.l.s4 1983009808
      %v1757 = vunpack.c.0.s8 %v1756
      %v1758 = vlaneseq
      %v1759 = vshrl.u32 %v1758, 7
      %v1760 = vsub.s32 %v1757, %v1759
      %v1761 = vrot.slane %v1747, %v1760
      %v1762 = vcombine.high %v1754, %v1754
      %v1763 = vcombine.high %v1761, %v1761
      %v1764 = vcombine.low %v1684, %v1685
      %v1765 = vcombine.high %v1684, %v1685
      %v1767 = vunpack.c.l.s4 1983009808
      %v1768 = vunpack.c.0.s8 %v1767
      %v1769 = vlaneseq
      %v1770 = vshrl.u32 %v1769, 7
      %v1771 = vsub.s32 %v1768, %v1770
      %v1772 = vrot.slane %v1764, %v1771
      %v1774 = vunpack.c.l.s4 1983009808
      %v1775 = vunpack.c.0.s8 %v1774
      %v1776 = vlaneseq
      %v1777 = vshrl.u32 %v1776, 7
      %v1778 = vsub.s32 %v1775, %v1777
      %v1779 = vrot.slane %v1765, %v1778
      %v1780 = vcombine.high %v1772, %v1772
      %v1781 = vcombine.high %v1779, %v1779
      %v1782 = vcombine.low %v1686, %v1687
      %v1783 = vcombine.high %v1686, %v1687
      %v1785 = vunpack.c.l.s4 1983009808
      %v1786 = vunpack.c.0.s8 %v1785
      %v1787 = vlaneseq
      %v1788 = vshrl.u32 %v1787, 7
      %v1789 = vsub.s32 %v1786, %v1788
      %v1790 = vrot.slane %v1782, %v1789
      %v1792 = vunpack.c.l.s4 1983009808
      %v1793 = vunpack.c.0.s8 %v1792
      %v1794 = vlaneseq
      %v1795 = vshrl.u32 %v1794, 7
      %v1796 = vsub.s32 %v1793, %v1795
      %v1797 = vrot.slane %v1783, %v1796
      %v1798 = vcombine.high %v1790, %v1790
      %v1799 = vcombine.high %v1797, %v1797
      %v1800 = vcombine.low %v1688, %v1689
      %v1801 = vcombine.high %v1688, %v1689
      %v1803 = vunpack.c.l.s4 1983009808
      %v1804 = vunpack.c.0.s8 %v1803
      %v1805 = vlaneseq
      %v1806 = vshrl.u32 %v1805, 7
      %v1807 = vsub.s32 %v1804, %v1806
      %v1808 = vrot.slane %v1800, %v1807
      %v1810 = vunpack.c.l.s4 1983009808
      %v1811 = vunpack.c.0.s8 %v1810
      %v1812 = vlaneseq
      %v1813 = vshrl.u32 %v1812, 7
      %v1814 = vsub.s32 %v1811, %v1813
      %v1815 = vrot.slane %v1801, %v1814
      %v1816 = vcombine.high %v1808, %v1808
      %v1817 = vcombine.high %v1815, %v1815
      %v1818 = vcombine.low %v1690, %v1691
      %v1819 = vcombine.high %v1690, %v1691
      %v1821 = vunpack.c.l.s4 1983009808
      %v1822 = vunpack.c.0.s8 %v1821
      %v1823 = vlaneseq
      %v1824 = vshrl.u32 %v1823, 7
      %v1825 = vsub.s32 %v1822, %v1824
      %v1826 = vrot.slane %v1818, %v1825
      %v1828 = vunpack.c.l.s4 1983009808
      %v1829 = vunpack.c.0.s8 %v1828
      %v1830 = vlaneseq
      %v1831 = vshrl.u32 %v1830, 7
      %v1832 = vsub.s32 %v1829, %v1831
      %v1833 = vrot.slane %v1819, %v1832
      %v1834 = vcombine.high %v1826, %v1826
      %v1835 = vcombine.high %v1833, %v1833
      %v1836 = vcombine.low %v1692, %v1693
      %v1837 = vcombine.high %v1692, %v1693
      %v1839 = vunpack.c.l.s4 1983009808
      %v1840 = vunpack.c.0.s8 %v1839
      %v1841 = vlaneseq
      %v1842 = vshrl.u32 %v1841, 7
      %v1843 = vsub.s32 %v1840, %v1842
      %v1844 = vrot.slane %v1836, %v1843
      %v1846 = vunpack.c.l.s4 1983009808
      %v1847 = vunpack.c.0.s8 %v1846
      %v1848 = vlaneseq
      %v1849 = vshrl.u32 %v1848, 7
      %v1850 = vsub.s32 %v1847, %v1849
      %v1851 = vrot.slane %v1837, %v1850
      %v1852 = vcombine.high %v1844, %v1844
      %v1853 = vcombine.high %v1851, %v1851
      %vm1854 = vcmask 1040384
      %vm1855 = vcmask 1042434
      %vm1856 = vmor %vm1854, %vm1855
      %vm1857 = vcmask 1044484
      %vm1858 = vmor %vm1856, %vm1857
      %vm1859 = vcmask 1046534
      %vm1860 = vmor %vm1858, %vm1859
      %v1861 = vrot.slane %v1718, 7
      %v1862 = vrot.slane %v1861, 2
      %v1863 = vrot.slane %v1726, 7
      %v1864 = vsel %vm1860, %v1862, %v1863
      %v1865 = vrot.slane %v1863, 2
      %v1866 = vrot.slane %v1725, 7
      %v1867 = vsel %vm1860, %v1865, %v1866
      %v1868 = vrot.slane %v1866, 2
      %v1869 = vrot.slane %v1727, 7
      %v1870 = vsel %vm1860, %v1868, %v1869
      %v1871 = vrot.slane %v1869, 2
      %v1872 = vrot.slane %v1736, 7
      %v1873 = vsel %vm1860, %v1871, %v1872
      %v1874 = vrot.slane %v1872, 2
      %v1875 = vrot.slane %v1744, 7
      %v1876 = vsel %vm1860, %v1874, %v1875
      %v1877 = vrot.slane %v1875, 2
      %v1878 = vrot.slane %v1743, 7
      %v1879 = vsel %vm1860, %v1877, %v1878
      %v1880 = vrot.slane %v1878, 2
      %v1881 = vrot.slane %v1745, 7
      %v1882 = vsel %vm1860, %v1880, %v1881
      %v1883 = vrot.slane %v1754, 7
      %v1884 = vrot.slane %v1883, 2
      %v1885 = vrot.slane %v1762, 7
      %v1886 = vsel %vm1860, %v1884, %v1885
      %v1887 = vrot.slane %v1885, 2
      %v1888 = vrot.slane %v1761, 7
      %v1889 = vsel %vm1860, %v1887, %v1888
      %v1890 = vrot.slane %v1888, 2
      %v1891 = vrot.slane %v1763, 7
      %v1892 = vsel %vm1860, %v1890, %v1891
      %v1893 = vrot.slane %v1891, 2
      %v1894 = vrot.slane %v1772, 7
      %v1895 = vsel %vm1860, %v1893, %v1894
      %v1896 = vrot.slane %v1894, 2
      %v1897 = vrot.slane %v1780, 7
      %v1898 = vsel %vm1860, %v1896, %v1897
      %v1899 = vrot.slane %v1897, 2
      %v1900 = vrot.slane %v1779, 7
      %v1901 = vsel %vm1860, %v1899, %v1900
      %v1902 = vrot.slane %v1900, 2
      %v1903 = vrot.slane %v1781, 7
      %v1904 = vsel %vm1860, %v1902, %v1903
      %v1905 = vrot.slane %v1790, 7
      %v1906 = vrot.slane %v1905, 2
      %v1907 = vrot.slane %v1798, 7
      %v1908 = vsel %vm1860, %v1906, %v1907
      %v1909 = vrot.slane %v1907, 2
      %v1910 = vrot.slane %v1797, 7
      %v1911 = vsel %vm1860, %v1909, %v1910
      %v1912 = vrot.slane %v1910, 2
      %v1913 = vrot.slane %v1799, 7
      %v1914 = vsel %vm1860, %v1912, %v1913
      %v1915 = vrot.slane %v1913, 2
      %v1916 = vrot.slane %v1808, 7
      %v1917 = vsel %vm1860, %v1915, %v1916
      %v1918 = vrot.slane %v1916, 2
      %v1919 = vrot.slane %v1816, 7
      %v1920 = vsel %vm1860, %v1918, %v1919
      %v1921 = vrot.slane %v1919, 2
      %v1922 = vrot.slane %v1815, 7
      %v1923 = vsel %vm1860, %v1921, %v1922
      %v1924 = vrot.slane %v1922, 2
      %v1925 = vrot.slane %v1817, 7
      %v1926 = vsel %vm1860, %v1924, %v1925
      %v1927 = vrot.slane %v1826, 7
      %v1928 = vrot.slane %v1927, 2
      %v1929 = vrot.slane %v1834, 7
      %v1930 = vsel %vm1860, %v1928, %v1929
      %v1931 = vrot.slane %v1929, 2
      %v1932 = vrot.slane %v1833, 7
      %v1933 = vsel %vm1860, %v1931, %v1932
      %v1934 = vrot.slane %v1932, 2
      %v1935 = vrot.slane %v1835, 7
      %v1936 = vsel %vm1860, %v1934, %v1935
      %v1937 = vrot.slane %v1935, 2
      %v1938 = vrot.slane %v1844, 7
      %v1939 = vsel %vm1860, %v1937, %v1938
      %v1940 = vrot.slane %v1938, 2
      %v1941 = vrot.slane %v1852, 7
      %v1942 = vsel %vm1860, %v1940, %v1941
      %v1943 = vrot.slane %v1941, 2
      %v1944 = vrot.slane %v1851, 7
      %v1945 = vsel %vm1860, %v1943, %v1944
      %v1946 = vrot.slane %v1944, 2
      %v1947 = vrot.slane %v1853, 7
      %v1948 = vsel %vm1860, %v1946, %v1947
      %s1949 = scalar_lea.vmem %s3, 256
      %v1950 = vld [vmem:[%s1949] sm:$0xff]
      %v1951 = vld [vmem:[%s1949 + $0x8] sm:$0xff]
      %v1952 = vld [vmem:[%s1949 + $0x10] sm:$0xff]
      %v1953 = vld [vmem:[%s1949 + $0x18] sm:$0xff]
      %v1954 = vld [vmem:[%s1949 + $0x20] sm:$0xff]
      %v1955 = vld [vmem:[%s1949 + $0x28] sm:$0xff]
      %v1956 = vld [vmem:[%s1949 + $0x30] sm:$0xff]
      %v1957 = vld [vmem:[%s1949 + $0x38] sm:$0xff]
      %v1958 = vld [vmem:[%s1949 + $0x40] sm:$0xff]
      %v1959 = vld [vmem:[%s1949 + $0x48] sm:$0xff]
      %v1960 = vld [vmem:[%s1949 + $0x50] sm:$0xff]
      %v1961 = vld [vmem:[%s1949 + $0x58] sm:$0xff]
      %v1962 = vld [vmem:[%s1949 + $0x60] sm:$0xff]
      %v1963 = vld [vmem:[%s1949 + $0x68] sm:$0xff]
      %v1964 = vld [vmem:[%s1949 + $0x70] sm:$0xff]
      %v1965 = vld [vmem:[%s1949 + $0x78] sm:$0xff]
      %v1966 = vld [vmem:[%s1949 + $0x80] sm:$0xff]
      %v1967 = vld [vmem:[%s1949 + $0x88] sm:$0xff]
      %v1968 = vld [vmem:[%s1949 + $0x90] sm:$0xff]
      %v1969 = vld [vmem:[%s1949 + $0x98] sm:$0xff]
      %v1970 = vld [vmem:[%s1949 + $0xa0] sm:$0xff]
      %v1971 = vld [vmem:[%s1949 + $0xa8] sm:$0xff]
      %v1972 = vld [vmem:[%s1949 + $0xb0] sm:$0xff]
      %v1973 = vld [vmem:[%s1949 + $0xb8] sm:$0xff]
      %v1974 = vld [vmem:[%s1949 + $0xc0] sm:$0xff]
      %v1975 = vld [vmem:[%s1949 + $0xc8] sm:$0xff]
      %v1976 = vld [vmem:[%s1949 + $0xd0] sm:$0xff]
      %v1977 = vld [vmem:[%s1949 + $0xd8] sm:$0xff]
      %v1978 = vld [vmem:[%s1949 + $0xe0] sm:$0xff]
      %v1979 = vld [vmem:[%s1949 + $0xe8] sm:$0xff]
      %v1980 = vld [vmem:[%s1949 + $0xf0] sm:$0xff]
      %v1981 = vld [vmem:[%s1949 + $0xf8] sm:$0xff]
      %v1982 = vcombine.low %v1864, %v1867
      %v1983 = vcombine.low %v1870, %v1873
      %v1985 = vunpack.c.l.s4 1983009808
      %v1986 = vunpack.c.0.s8 %v1985
      %v1987 = vlaneseq
      %v1988 = vshrl.u32 %v1987, 7
      %v1989 = vsub.s32 %v1986, %v1988
      %v1990 = vrot.slane %v1982, %v1989
      %v1992 = vunpack.c.l.s4 1983009808
      %v1993 = vunpack.c.0.s8 %v1992
      %v1994 = vlaneseq
      %v1995 = vshrl.u32 %v1994, 7
      %v1996 = vsub.s32 %v1993, %v1995
      %v1997 = vrot.slane %v1983, %v1996
      %v1998 = vcombine.low %v1990, %v1997
      %v1999 = vcombine.high %v1990, %v1997
      %v2000 = vcombine.low %v1876, %v1879
      %v2001 = vcombine.low %v1882, %v1886
      %v2003 = vunpack.c.l.s4 1983009808
      %v2004 = vunpack.c.0.s8 %v2003
      %v2005 = vlaneseq
      %v2006 = vshrl.u32 %v2005, 7
      %v2007 = vsub.s32 %v2004, %v2006
      %v2008 = vrot.slane %v2000, %v2007
      %v2010 = vunpack.c.l.s4 1983009808
      %v2011 = vunpack.c.0.s8 %v2010
      %v2012 = vlaneseq
      %v2013 = vshrl.u32 %v2012, 7
      %v2014 = vsub.s32 %v2011, %v2013
      %v2015 = vrot.slane %v2001, %v2014
      %v2016 = vcombine.low %v2008, %v2015
      %v2017 = vcombine.high %v2008, %v2015
      %v2018 = vcombine.low %v1889, %v1892
      %v2019 = vcombine.low %v1895, %v1898
      %v2021 = vunpack.c.l.s4 1983009808
      %v2022 = vunpack.c.0.s8 %v2021
      %v2023 = vlaneseq
      %v2024 = vshrl.u32 %v2023, 7
      %v2025 = vsub.s32 %v2022, %v2024
      %v2026 = vrot.slane %v2018, %v2025
      %v2028 = vunpack.c.l.s4 1983009808
      %v2029 = vunpack.c.0.s8 %v2028
      %v2030 = vlaneseq
      %v2031 = vshrl.u32 %v2030, 7
      %v2032 = vsub.s32 %v2029, %v2031
      %v2033 = vrot.slane %v2019, %v2032
      %v2034 = vcombine.low %v2026, %v2033
      %v2035 = vcombine.high %v2026, %v2033
      %v2036 = vcombine.low %v1901, %v1904
      %v2037 = vcombine.low %v1908, %v1911
      %v2039 = vunpack.c.l.s4 1983009808
      %v2040 = vunpack.c.0.s8 %v2039
      %v2041 = vlaneseq
      %v2042 = vshrl.u32 %v2041, 7
      %v2043 = vsub.s32 %v2040, %v2042
      %v2044 = vrot.slane %v2036, %v2043
      %v2046 = vunpack.c.l.s4 1983009808
      %v2047 = vunpack.c.0.s8 %v2046
      %v2048 = vlaneseq
      %v2049 = vshrl.u32 %v2048, 7
      %v2050 = vsub.s32 %v2047, %v2049
      %v2051 = vrot.slane %v2037, %v2050
      %v2052 = vcombine.low %v2044, %v2051
      %v2053 = vcombine.high %v2044, %v2051
      %v2054 = vcombine.low %v1914, %v1917
      %v2055 = vcombine.low %v1920, %v1923
      %v2057 = vunpack.c.l.s4 1983009808
      %v2058 = vunpack.c.0.s8 %v2057
      %v2059 = vlaneseq
      %v2060 = vshrl.u32 %v2059, 7
      %v2061 = vsub.s32 %v2058, %v2060
      %v2062 = vrot.slane %v2054, %v2061
      %v2064 = vunpack.c.l.s4 1983009808
      %v2065 = vunpack.c.0.s8 %v2064
      %v2066 = vlaneseq
      %v2067 = vshrl.u32 %v2066, 7
      %v2068 = vsub.s32 %v2065, %v2067
      %v2069 = vrot.slane %v2055, %v2068
      %v2070 = vcombine.low %v2062, %v2069
      %v2071 = vcombine.high %v2062, %v2069
      %v2072 = vcombine.low %v1926, %v1930
      %v2073 = vcombine.low %v1933, %v1936
      %v2075 = vunpack.c.l.s4 1983009808
      %v2076 = vunpack.c.0.s8 %v2075
      %v2077 = vlaneseq
      %v2078 = vshrl.u32 %v2077, 7
      %v2079 = vsub.s32 %v2076, %v2078
      %v2080 = vrot.slane %v2072, %v2079
      %v2082 = vunpack.c.l.s4 1983009808
      %v2083 = vunpack.c.0.s8 %v2082
      %v2084 = vlaneseq
      %v2085 = vshrl.u32 %v2084, 7
      %v2086 = vsub.s32 %v2083, %v2085
      %v2087 = vrot.slane %v2073, %v2086
      %v2088 = vcombine.low %v2080, %v2087
      %v2089 = vcombine.high %v2080, %v2087
      %v2090 = vcombine.low %v1939, %v1942
      %v2091 = vcombine.low %v1945, %v1948
      %v2093 = vunpack.c.l.s4 1983009808
      %v2094 = vunpack.c.0.s8 %v2093
      %v2095 = vlaneseq
      %v2096 = vshrl.u32 %v2095, 7
      %v2097 = vsub.s32 %v2094, %v2096
      %v2098 = vrot.slane %v2090, %v2097
      %v2100 = vunpack.c.l.s4 1983009808
      %v2101 = vunpack.c.0.s8 %v2100
      %v2102 = vlaneseq
      %v2103 = vshrl.u32 %v2102, 7
      %v2104 = vsub.s32 %v2101, %v2103
      %v2105 = vrot.slane %v2091, %v2104
      %v2106 = vcombine.low %v2098, %v2105
      %v2107 = vcombine.high %v2098, %v2105
      %v2154 = vunpack.c.l.b16 %v1950
      %v2155 = vunpack.c.h.b16 %v1950
      %v2156 = vunpack.c.l.b16 %v1951
      %v2157 = vunpack.c.h.b16 %v1951
      %v2158 = vunpack.c.l.b16 %v1952
      %v2159 = vunpack.c.h.b16 %v1952
      %v2160 = vunpack.c.l.b16 %v1953
      %v2161 = vunpack.c.h.b16 %v1953
      %v2162 = vunpack.c.l.b16 %v1954
      %v2163 = vunpack.c.h.b16 %v1954
      %v2164 = vunpack.c.l.b16 %v1955
      %v2165 = vunpack.c.h.b16 %v1955
      %v2166 = vunpack.c.l.b16 %v1956
      %v2167 = vunpack.c.h.b16 %v1956
      %v2168 = vunpack.c.l.b16 %v1957
      %v2169 = vunpack.c.h.b16 %v1957
      %v2170 = vunpack.c.l.b16 %v1958
      %v2171 = vunpack.c.h.b16 %v1958
      %v2172 = vunpack.c.l.b16 %v1959
      %v2173 = vunpack.c.h.b16 %v1959
      %v2174 = vunpack.c.l.b16 %v1960
      %v2175 = vunpack.c.h.b16 %v1960
      %v2176 = vunpack.c.l.b16 %v1961
      %v2177 = vunpack.c.h.b16 %v1961
      %v2178 = vunpack.c.l.b16 %v1962
      %v2179 = vunpack.c.h.b16 %v1962
      %v2180 = vunpack.c.l.b16 %v1963
      %v2181 = vunpack.c.h.b16 %v1963
      %v2182 = vunpack.c.l.b16 %v1964
      %v2183 = vunpack.c.h.b16 %v1964
      %v2184 = vunpack.c.l.b16 %v1965
      %v2185 = vunpack.c.h.b16 %v1965
      %v2186 = vunpack.c.l.b16 %v1966
      %v2187 = vunpack.c.h.b16 %v1966
      %v2188 = vunpack.c.l.b16 %v1967
      %v2189 = vunpack.c.h.b16 %v1967
      %v2190 = vunpack.c.l.b16 %v1968
      %v2191 = vunpack.c.h.b16 %v1968
      %v2192 = vunpack.c.l.b16 %v1969
      %v2193 = vunpack.c.h.b16 %v1969
      %v2194 = vunpack.c.l.b16 %v1970
      %v2195 = vunpack.c.h.b16 %v1970
      %v2196 = vunpack.c.l.b16 %v1971
      %v2197 = vunpack.c.h.b16 %v1971
      %v2198 = vunpack.c.l.b16 %v1972
      %v2199 = vunpack.c.h.b16 %v1972
      %v2200 = vunpack.c.l.b16 %v1973
      %v2201 = vunpack.c.h.b16 %v1973
      %v2202 = vunpack.c.l.b16 %v1974
      %v2203 = vunpack.c.h.b16 %v1974
      %v2204 = vunpack.c.l.b16 %v1975
      %v2205 = vunpack.c.h.b16 %v1975
      %v2206 = vunpack.c.l.b16 %v1976
      %v2207 = vunpack.c.h.b16 %v1976
      %v2208 = vunpack.c.l.b16 %v1977
      %v2209 = vunpack.c.h.b16 %v1977
      %v2210 = vunpack.c.l.b16 %v1978
      %v2211 = vunpack.c.h.b16 %v1978
      %v2212 = vunpack.c.l.b16 %v1979
      %v2213 = vunpack.c.h.b16 %v1979
      %v2214 = vunpack.c.l.b16 %v1980
      %v2215 = vunpack.c.h.b16 %v1980
      %v2216 = vunpack.c.l.b16 %v1981
      %v2217 = vunpack.c.h.b16 %v1981
      %v2218 = vpack.c.b16 %v2156, %v2154
      %v2219 = vpack.c.b16 %v2157, %v2155
      %v2220 = vpack.c.b16 %v2160, %v2158
      %v2221 = vpack.c.b16 %v2161, %v2159
      %v2222 = vpack.c.b16 %v2164, %v2162
      %v2223 = vpack.c.b16 %v2165, %v2163
      %v2224 = vpack.c.b16 %v2168, %v2166
      %v2225 = vpack.c.b16 %v2169, %v2167
      %v2226 = vpack.c.b16 %v2172, %v2170
      %v2227 = vpack.c.b16 %v2173, %v2171
      %v2228 = vpack.c.b16 %v2176, %v2174
      %v2229 = vpack.c.b16 %v2177, %v2175
      %v2230 = vpack.c.b16 %v2180, %v2178
      %v2231 = vpack.c.b16 %v2181, %v2179
      %v2232 = vpack.c.b16 %v2184, %v2182
      %v2233 = vpack.c.b16 %v2185, %v2183
      %v2234 = vpack.c.b16 %v2188, %v2186
      %v2235 = vpack.c.b16 %v2189, %v2187
      %v2236 = vpack.c.b16 %v2192, %v2190
      %v2237 = vpack.c.b16 %v2193, %v2191
      %v2238 = vpack.c.b16 %v2196, %v2194
      %v2239 = vpack.c.b16 %v2197, %v2195
      %v2240 = vpack.c.b16 %v2200, %v2198
      %v2241 = vpack.c.b16 %v2201, %v2199
      %v2242 = vpack.c.b16 %v2204, %v2202
      %v2243 = vpack.c.b16 %v2205, %v2203
      %v2244 = vpack.c.b16 %v2208, %v2206
      %v2245 = vpack.c.b16 %v2209, %v2207
      %v2246 = vpack.c.b16 %v2212, %v2210
      %v2247 = vpack.c.b16 %v2213, %v2211
      %v2248 = vpack.c.b16 %v2216, %v2214
      %v2249 = vpack.c.b16 %v2217, %v2215
      %2282 = vmatprep.subr.bf16.mxu0 %v2219
      %2283 = vmatpush1.bf16.msra.mxu0 %v2218
      %2284 = vmatprep.subr.bf16.mxu0 %v2221
      %2285 = vmatpush1.bf16.msra.mxu0 %v2220
      %2286 = vmatprep.subr.bf16.mxu0 %v2223
      %2287 = vmatpush1.bf16.msra.mxu0 %v2222
      %2288 = vmatprep.subr.bf16.mxu0 %v2225
      %2289 = vmatpush1.bf16.msra.mxu0 %v2224
      %2290 = vmatprep.subr.bf16.mxu0 %v2227
      %2291 = vmatpush1.bf16.msra.mxu0 %v2226
      %2292 = vmatprep.subr.bf16.mxu0 %v2229
      %2293 = vmatpush1.bf16.msra.mxu0 %v2228
      %2294 = vmatprep.subr.bf16.mxu0 %v2231
      %2295 = vmatpush1.bf16.msra.mxu0 %v2230
      %2296 = vmatprep.subr.bf16.mxu0 %v2233
      %2297 = vmatpush1.bf16.msra.mxu0 %v2232
      %2298 = vmatprep.subr.bf16.mxu0 %v2235
      %2299 = vmatpush1.bf16.msra.mxu0 %v2234
      %2300 = vmatprep.subr.bf16.mxu0 %v2237
      %2301 = vmatpush1.bf16.msra.mxu0 %v2236
      %2302 = vmatprep.subr.bf16.mxu0 %v2239
      %2303 = vmatpush1.bf16.msra.mxu0 %v2238
      %2304 = vmatprep.subr.bf16.mxu0 %v2241
      %2305 = vmatpush1.bf16.msra.mxu0 %v2240
      %2306 = vmatprep.subr.bf16.mxu0 %v2243
      %2307 = vmatpush1.bf16.msra.mxu0 %v2242
      %2308 = vmatprep.subr.bf16.mxu0 %v2245
      %2309 = vmatpush1.bf16.msra.mxu0 %v2244
      %2310 = vmatprep.subr.bf16.mxu0 %v2247
      %2311 = vmatpush1.bf16.msra.mxu0 %v2246
      %2312 = vmatprep.subr.bf16.mxu0 %v2249
      %2313 = vmatpush1.bf16.msra.mxu0 %v2248
      %2314 = vmatprep.mubr.bf16.mxu0 %v1999
      %2315 = vmatmul.mubr.bf16.gmra.mrb[0].mxu0 %v1998
      %v2316 = vpop.f32.mrb[0].mxu0
      %v2317 = vadd.f32 0.0, %v2316
      %v2318 = vpop.f32.mrb[0].mxu0
      %v2319 = vadd.f32 0.0, %v2318
      %v2320 = vpop.f32.mrb[0].mxu0
      %v2321 = vadd.f32 0.0, %v2320
      %v2322 = vpop.f32.mrb[0].mxu0
      %v2323 = vadd.f32 0.0, %v2322
      %2324 = vmatprep.mubr.bf16.mxu0 %v2017
      %2325 = vmatmul.mubr.bf16.gmra.mrb[0].mxu0 %v2016
      %v2326 = vpop.f32.mrb[0].mxu0
      %v2327 = vadd.f32 0.0, %v2326
      %v2328 = vpop.f32.mrb[0].mxu0
      %v2329 = vadd.f32 0.0, %v2328
      %v2330 = vpop.f32.mrb[0].mxu0
      %v2331 = vadd.f32 0.0, %v2330
      %v2332 = vpop.f32.mrb[0].mxu0
      %v2333 = vadd.f32 0.0, %v2332
      %2334 = vmatprep.mubr.bf16.mxu0 %v2035
      %2335 = vmatmul.mubr.bf16.gmra.mrb[0].mxu0 %v2034
      %v2336 = vpop.f32.mrb[0].mxu0
      %v2337 = vadd.f32 0.0, %v2336
      %v2338 = vpop.f32.mrb[0].mxu0
      %v2339 = vadd.f32 0.0, %v2338
      %v2340 = vpop.f32.mrb[0].mxu0
      %v2341 = vadd.f32 0.0, %v2340
      %v2342 = vpop.f32.mrb[0].mxu0
      %v2343 = vadd.f32 0.0, %v2342
      %2344 = vmatprep.mubr.bf16.mxu0 %v2053
      %2345 = vmatmul.mubr.bf16.gmra.mrb[0].mxu0 %v2052
      %v2346 = vpop.f32.mrb[0].mxu0
      %v2347 = vadd.f32 0.0, %v2346
      %v2348 = vpop.f32.mrb[0].mxu0
      %v2349 = vadd.f32 0.0, %v2348
      %v2350 = vpop.f32.mrb[0].mxu0
      %v2351 = vadd.f32 0.0, %v2350
      %v2352 = vpop.f32.mrb[0].mxu0
      %v2353 = vadd.f32 0.0, %v2352
      %2354 = vmatprep.mubr.bf16.mxu0 %v2071
      %2355 = vmatmul.mubr.bf16.gmra.mrb[0].mxu0 %v2070
      %v2356 = vpop.f32.mrb[0].mxu0
      %v2357 = vadd.f32 0.0, %v2356
      %v2358 = vpop.f32.mrb[0].mxu0
      %v2359 = vadd.f32 0.0, %v2358
      %v2360 = vpop.f32.mrb[0].mxu0
      %v2361 = vadd.f32 0.0, %v2360
      %v2362 = vpop.f32.mrb[0].mxu0
      %v2363 = vadd.f32 0.0, %v2362
      %2364 = vmatprep.mubr.bf16.mxu0 %v2089
      %2365 = vmatmul.mubr.bf16.gmra.mrb[0].mxu0 %v2088
      %v2366 = vpop.f32.mrb[0].mxu0
      %v2367 = vadd.f32 0.0, %v2366
      %v2368 = vpop.f32.mrb[0].mxu0
      %v2369 = vadd.f32 0.0, %v2368
      %v2370 = vpop.f32.mrb[0].mxu0
      %v2371 = vadd.f32 0.0, %v2370
      %v2372 = vpop.f32.mrb[0].mxu0
      %v2373 = vadd.f32 0.0, %v2372
      %2374 = vmatprep.mubr.bf16.mxu0 %v2107
      %2375 = vmatmul.mubr.bf16.gmra.mrb[0].mxu0 %v2106
      %v2376 = vpop.f32.mrb[0].mxu0
      %v2377 = vadd.f32 0.0, %v2376
      %v2378 = vpop.f32.mrb[0].mxu0
      %v2379 = vadd.f32 0.0, %v2378
      %v2380 = vpop.f32.mrb[0].mxu0
      %v2381 = vadd.f32 0.0, %v2380
      %v2382 = vpop.f32.mrb[0].mxu0
      %v2383 = vadd.f32 0.0, %v2382
      %2384 = vdwg.mxu0
      %v2385 = vld [vmem:[#allocation3] sm:$0xff]
      %v2386 = vld [vmem:[#allocation3 + $0x8] sm:$0xff]
      %v2387 = vld [vmem:[#allocation3 + $0x10] sm:$0xff]
      %v2388 = vld [vmem:[#allocation3 + $0x18] sm:$0xff]
      %v2389 = vld [vmem:[#allocation3 + $0x20] sm:$0xff]
      %v2390 = vld [vmem:[#allocation3 + $0x28] sm:$0xff]
      %v2391 = vld [vmem:[#allocation3 + $0x30] sm:$0xff]
      %v2392 = vld [vmem:[#allocation3 + $0x38] sm:$0xff]
      %v2393 = vld [vmem:[#allocation3 + $0x40] sm:$0xff]
      %v2394 = vld [vmem:[#allocation3 + $0x48] sm:$0xff]
      %v2395 = vld [vmem:[#allocation3 + $0x50] sm:$0xff]
      %v2396 = vld [vmem:[#allocation3 + $0x58] sm:$0xff]
      %v2397 = vld [vmem:[#allocation3 + $0x60] sm:$0xff]
      %v2398 = vld [vmem:[#allocation3 + $0x68] sm:$0xff]
      %v2399 = vld [vmem:[#allocation3 + $0x70] sm:$0xff]
      %v2400 = vld [vmem:[#allocation3 + $0x78] sm:$0xff]
      %v2401 = vld [vmem:[#allocation3 + $0x80] sm:$0xff]
      %v2402 = vld [vmem:[#allocation3 + $0x88] sm:$0xff]
      %v2403 = vld [vmem:[#allocation3 + $0x90] sm:$0xff]
      %v2404 = vld [vmem:[#allocation3 + $0x98] sm:$0xff]
      %v2405 = vld [vmem:[#allocation3 + $0xa0] sm:$0xff]
      %v2406 = vld [vmem:[#allocation3 + $0xa8] sm:$0xff]
      %v2407 = vld [vmem:[#allocation3 + $0xb0] sm:$0xff]
      %v2408 = vld [vmem:[#allocation3 + $0xb8] sm:$0xff]
      %v2409 = vld [vmem:[#allocation3 + $0xc0] sm:$0xff]
      %v2410 = vld [vmem:[#allocation3 + $0xc8] sm:$0xff]
      %v2411 = vld [vmem:[#allocation3 + $0xd0] sm:$0xff]
      %v2412 = vld [vmem:[#allocation3 + $0xd8] sm:$0xff]
      %v2413 = vadd.f32 %v2385, %v2317
      %v2414 = vadd.f32 %v2386, %v2319
      %v2415 = vadd.f32 %v2387, %v2321
      %v2416 = vadd.f32 %v2388, %v2323
      %v2417 = vadd.f32 %v2389, %v2327
      %v2418 = vadd.f32 %v2390, %v2329
      %v2419 = vadd.f32 %v2391, %v2331
      %v2420 = vadd.f32 %v2392, %v2333
      %v2421 = vadd.f32 %v2393, %v2337
      %v2422 = vadd.f32 %v2394, %v2339
      %v2423 = vadd.f32 %v2395, %v2341
      %v2424 = vadd.f32 %v2396, %v2343
      %v2425 = vadd.f32 %v2397, %v2347
      %v2426 = vadd.f32 %v2398, %v2349
      %v2427 = vadd.f32 %v2399, %v2351
      %v2428 = vadd.f32 %v2400, %v2353
      %v2429 = vadd.f32 %v2401, %v2357
      %v2430 = vadd.f32 %v2402, %v2359
      %v2431 = vadd.f32 %v2403, %v2361
      %v2432 = vadd.f32 %v2404, %v2363
      %v2433 = vadd.f32 %v2405, %v2367
      %v2434 = vadd.f32 %v2406, %v2369
      %v2435 = vadd.f32 %v2407, %v2371
      %v2436 = vadd.f32 %v2408, %v2373
      %v2437 = vadd.f32 %v2409, %v2377
      %v2438 = vadd.f32 %v2410, %v2379
      %v2439 = vadd.f32 %v2411, %v2381
      %v2440 = vadd.f32 %v2412, %v2383
      %2441 = vst [vmem:[#allocation3] sm:$0xff] %v2413
      %2442 = vst [vmem:[#allocation3 + $0x8] sm:$0xff] %v2414
      %2443 = vst [vmem:[#allocation3 + $0x10] sm:$0xff] %v2415
      %2444 = vst [vmem:[#allocation3 + $0x18] sm:$0xff] %v2416
      %2445 = vst [vmem:[#allocation3 + $0x20] sm:$0xff] %v2417
      %2446 = vst [vmem:[#allocation3 + $0x28] sm:$0xff] %v2418
      %2447 = vst [vmem:[#allocation3 + $0x30] sm:$0xff] %v2419
      %2448 = vst [vmem:[#allocation3 + $0x38] sm:$0xff] %v2420
      %2449 = vst [vmem:[#allocation3 + $0x40] sm:$0xff] %v2421
      %2450 = vst [vmem:[#allocation3 + $0x48] sm:$0xff] %v2422
      %2451 = vst [vmem:[#allocation3 + $0x50] sm:$0xff] %v2423
      %2452 = vst [vmem:[#allocation3 + $0x58] sm:$0xff] %v2424
      %2453 = vst [vmem:[#allocation3 + $0x60] sm:$0xff] %v2425
      %2454 = vst [vmem:[#allocation3 + $0x68] sm:$0xff] %v2426
      %2455 = vst [vmem:[#allocation3 + $0x70] sm:$0xff] %v2427
      %2456 = vst [vmem:[#allocation3 + $0x78] sm:$0xff] %v2428
      %2457 = vst [vmem:[#allocation3 + $0x80] sm:$0xff] %v2429
      %2458 = vst [vmem:[#allocation3 + $0x88] sm:$0xff] %v2430
      %2459 = vst [vmem:[#allocation3 + $0x90] sm:$0xff] %v2431
      %2460 = vst [vmem:[#allocation3 + $0x98] sm:$0xff] %v2432
      %2461 = vst [vmem:[#allocation3 + $0xa0] sm:$0xff] %v2433
      %2462 = vst [vmem:[#allocation3 + $0xa8] sm:$0xff] %v2434
      %2463 = vst [vmem:[#allocation3 + $0xb0] sm:$0xff] %v2435
      %2464 = vst [vmem:[#allocation3 + $0xb8] sm:$0xff] %v2436
      %2465 = vst [vmem:[#allocation3 + $0xc0] sm:$0xff] %v2437
      %2466 = vst [vmem:[#allocation3 + $0xc8] sm:$0xff] %v2438
      %2467 = vst [vmem:[#allocation3 + $0xd0] sm:$0xff] %v2439
      %2468 = vst [vmem:[#allocation3 + $0xd8] sm:$0xff] %v2440
      %v2469 = vld [vmem:[#allocation2] sm:$0xfc]
      %v2470 = vld [vmem:[#allocation2 + $0x8] sm:$0xfc]
      %v2471 = vld [vmem:[#allocation2 + $0x10] sm:$0xff]
      %v2472 = vld [vmem:[#allocation2 + $0x18] sm:$0xff]
      %v2473 = vld [vmem:[#allocation2 + $0x20] sm:$0xfc]
      %v2474 = vld [vmem:[#allocation2 + $0x28] sm:$0xfc]
      %v2475 = vld [vmem:[#allocation2 + $0x30] sm:$0xff]
      %v2476 = vld [vmem:[#allocation2 + $0x38] sm:$0xff]
      %v2477 = vld [vmem:[#allocation2 + $0x40] sm:$0xfc]
      %v2478 = vld [vmem:[#allocation2 + $0x48] sm:$0xfc]
      %v2479 = vld [vmem:[#allocation2 + $0x50] sm:$0xff]
      %v2480 = vld [vmem:[#allocation2 + $0x58] sm:$0xff]
      %v2481 = vld [vmem:[#allocation2 + $0x60] sm:$0xfc]
      %v2482 = vld [vmem:[#allocation2 + $0x68] sm:$0xfc]
      %v2483 = vld [vmem:[#allocation2 + $0x70] sm:$0xff]
      %v2484 = vld [vmem:[#allocation2 + $0x78] sm:$0xff]
      %v2501 = vcombine.low %v2469, %v2470
      %v2502 = vcombine.high %v2469, %v2470
      %v2504 = vunpack.c.l.s4 1983009808
      %v2505 = vunpack.c.0.s8 %v2504
      %v2506 = vlaneseq
      %v2507 = vshrl.u32 %v2506, 7
      %v2508 = vsub.s32 %v2505, %v2507
      %v2509 = vrot.slane %v2501, %v2508
      %v2511 = vunpack.c.l.s4 1983009808
      %v2512 = vunpack.c.0.s8 %v2511
      %v2513 = vlaneseq
      %v2514 = vshrl.u32 %v2513, 7
      %v2515 = vsub.s32 %v2512, %v2514
      %v2516 = vrot.slane %v2502, %v2515
      %v2517 = vcombine.high %v2509, %v2509
      %v2518 = vcombine.high %v2516, %v2516
      %v2519 = vcombine.low %v2471, %v2472
      %v2520 = vcombine.high %v2471, %v2472
      %v2522 = vunpack.c.l.s4 1983009808
      %v2523 = vunpack.c.0.s8 %v2522
      %v2524 = vlaneseq
      %v2525 = vshrl.u32 %v2524, 7
      %v2526 = vsub.s32 %v2523, %v2525
      %v2527 = vrot.slane %v2519, %v2526
      %v2529 = vunpack.c.l.s4 1983009808
      %v2530 = vunpack.c.0.s8 %v2529
      %v2531 = vlaneseq
      %v2532 = vshrl.u32 %v2531, 7
      %v2533 = vsub.s32 %v2530, %v2532
      %v2534 = vrot.slane %v2520, %v2533
      %v2535 = vcombine.high %v2527, %v2527
      %v2536 = vcombine.high %v2534, %v2534
      %v2537 = vcombine.low %v2473, %v2474
      %v2538 = vcombine.high %v2473, %v2474
      %v2540 = vunpack.c.l.s4 1983009808
      %v2541 = vunpack.c.0.s8 %v2540
      %v2542 = vlaneseq
      %v2543 = vshrl.u32 %v2542, 7
      %v2544 = vsub.s32 %v2541, %v2543
      %v2545 = vrot.slane %v2537, %v2544
      %v2547 = vunpack.c.l.s4 1983009808
      %v2548 = vunpack.c.0.s8 %v2547
      %v2549 = vlaneseq
      %v2550 = vshrl.u32 %v2549, 7
      %v2551 = vsub.s32 %v2548, %v2550
      %v2552 = vrot.slane %v2538, %v2551
      %v2553 = vcombine.high %v2545, %v2545
      %v2554 = vcombine.high %v2552, %v2552
      %v2555 = vcombine.low %v2475, %v2476
      %v2556 = vcombine.high %v2475, %v2476
      %v2558 = vunpack.c.l.s4 1983009808
      %v2559 = vunpack.c.0.s8 %v2558
      %v2560 = vlaneseq
      %v2561 = vshrl.u32 %v2560, 7
      %v2562 = vsub.s32 %v2559, %v2561
      %v2563 = vrot.slane %v2555, %v2562
      %v2565 = vunpack.c.l.s4 1983009808
      %v2566 = vunpack.c.0.s8 %v2565
      %v2567 = vlaneseq
      %v2568 = vshrl.u32 %v2567, 7
      %v2569 = vsub.s32 %v2566, %v2568
      %v2570 = vrot.slane %v2556, %v2569
      %v2571 = vcombine.high %v2563, %v2563
      %v2572 = vcombine.high %v2570, %v2570
      %v2573 = vcombine.low %v2477, %v2478
      %v2574 = vcombine.high %v2477, %v2478
      %v2576 = vunpack.c.l.s4 1983009808
      %v2577 = vunpack.c.0.s8 %v2576
      %v2578 = vlaneseq
      %v2579 = vshrl.u32 %v2578, 7
      %v2580 = vsub.s32 %v2577, %v2579
      %v2581 = vrot.slane %v2573, %v2580
      %v2583 = vunpack.c.l.s4 1983009808
      %v2584 = vunpack.c.0.s8 %v2583
      %v2585 = vlaneseq
      %v2586 = vshrl.u32 %v2585, 7
      %v2587 = vsub.s32 %v2584, %v2586
      %v2588 = vrot.slane %v2574, %v2587
      %v2589 = vcombine.high %v2581, %v2581
      %v2590 = vcombine.high %v2588, %v2588
      %v2591 = vcombine.low %v2479, %v2480
      %v2592 = vcombine.high %v2479, %v2480
      %v2594 = vunpack.c.l.s4 1983009808
      %v2595 = vunpack.c.0.s8 %v2594
      %v2596 = vlaneseq
      %v2597 = vshrl.u32 %v2596, 7
      %v2598 = vsub.s32 %v2595, %v2597
      %v2599 = vrot.slane %v2591, %v2598
      %v2601 = vunpack.c.l.s4 1983009808
      %v2602 = vunpack.c.0.s8 %v2601
      %v2603 = vlaneseq
      %v2604 = vshrl.u32 %v2603, 7
      %v2605 = vsub.s32 %v2602, %v2604
      %v2606 = vrot.slane %v2592, %v2605
      %v2607 = vcombine.high %v2599, %v2599
      %v2608 = vcombine.high %v2606, %v2606
      %v2609 = vcombine.low %v2481, %v2482
      %v2610 = vcombine.high %v2481, %v2482
      %v2612 = vunpack.c.l.s4 1983009808
      %v2613 = vunpack.c.0.s8 %v2612
      %v2614 = vlaneseq
      %v2615 = vshrl.u32 %v2614, 7
      %v2616 = vsub.s32 %v2613, %v2615
      %v2617 = vrot.slane %v2609, %v2616
      %v2619 = vunpack.c.l.s4 1983009808
      %v2620 = vunpack.c.0.s8 %v2619
      %v2621 = vlaneseq
      %v2622 = vshrl.u32 %v2621, 7
      %v2623 = vsub.s32 %v2620, %v2622
      %v2624 = vrot.slane %v2610, %v2623
      %v2625 = vcombine.high %v2617, %v2617
      %v2626 = vcombine.high %v2624, %v2624
      %v2627 = vcombine.low %v2483, %v2484
      %v2628 = vcombine.high %v2483, %v2484
      %v2630 = vunpack.c.l.s4 1983009808
      %v2631 = vunpack.c.0.s8 %v2630
      %v2632 = vlaneseq
      %v2633 = vshrl.u32 %v2632, 7
      %v2634 = vsub.s32 %v2631, %v2633
      %v2635 = vrot.slane %v2627, %v2634
      %v2637 = vunpack.c.l.s4 1983009808
      %v2638 = vunpack.c.0.s8 %v2637
      %v2639 = vlaneseq
      %v2640 = vshrl.u32 %v2639, 7
      %v2641 = vsub.s32 %v2638, %v2640
      %v2642 = vrot.slane %v2628, %v2641
      %v2643 = vcombine.high %v2635, %v2635
      %v2644 = vcombine.high %v2642, %v2642
      %s2645 = scalar_lea.vmem %s3, 512
      %v2646 = vld [vmem:[%s2645] sm:$0xff]
      %v2647 = vld [vmem:[%s2645 + $0x8] sm:$0xff]
      %v2648 = vld [vmem:[%s2645 + $0x10] sm:$0xff]
      %v2649 = vld [vmem:[%s2645 + $0x18] sm:$0xff]
      %v2650 = vld [vmem:[%s2645 + $0x20] sm:$0xff]
      %v2651 = vld [vmem:[%s2645 + $0x28] sm:$0xff]
      %v2652 = vld [vmem:[%s2645 + $0x30] sm:$0xff]
      %v2653 = vld [vmem:[%s2645 + $0x38] sm:$0xff]
      %v2654 = vld [vmem:[%s2645 + $0x40] sm:$0xff]
      %v2655 = vld [vmem:[%s2645 + $0x48] sm:$0xff]
      %v2656 = vld [vmem:[%s2645 + $0x50] sm:$0xff]
      %v2657 = vld [vmem:[%s2645 + $0x58] sm:$0xff]
      %v2658 = vld [vmem:[%s2645 + $0x60] sm:$0xff]
      %v2659 = vld [vmem:[%s2645 + $0x68] sm:$0xff]
      %v2660 = vld [vmem:[%s2645 + $0x70] sm:$0xff]
      %v2661 = vld [vmem:[%s2645 + $0x78] sm:$0xff]
      %v2662 = vld [vmem:[%s2645 + $0x80] sm:$0xff]
      %v2663 = vld [vmem:[%s2645 + $0x88] sm:$0xff]
      %v2664 = vld [vmem:[%s2645 + $0x90] sm:$0xff]
      %v2665 = vld [vmem:[%s2645 + $0x98] sm:$0xff]
      %v2666 = vld [vmem:[%s2645 + $0xa0] sm:$0xff]
      %v2667 = vld [vmem:[%s2645 + $0xa8] sm:$0xff]
      %v2668 = vld [vmem:[%s2645 + $0xb0] sm:$0xff]
      %v2669 = vld [vmem:[%s2645 + $0xb8] sm:$0xff]
      %v2670 = vld [vmem:[%s2645 + $0xc0] sm:$0xff]
      %v2671 = vld [vmem:[%s2645 + $0xc8] sm:$0xff]
      %v2672 = vld [vmem:[%s2645 + $0xd0] sm:$0xff]
      %v2673 = vld [vmem:[%s2645 + $0xd8] sm:$0xff]
      %v2674 = vld [vmem:[%s2645 + $0xe0] sm:$0xff]
      %v2675 = vld [vmem:[%s2645 + $0xe8] sm:$0xff]
      %v2676 = vld [vmem:[%s2645 + $0xf0] sm:$0xff]
      %v2677 = vld [vmem:[%s2645 + $0xf8] sm:$0xff]
      %v2678 = vcombine.low %v2517, %v2516
      %v2679 = vcombine.low %v2518, %v2527
      %v2681 = vunpack.c.l.s4 1983009808
      %v2682 = vunpack.c.0.s8 %v2681
      %v2683 = vlaneseq
      %v2684 = vshrl.u32 %v2683, 7
      %v2685 = vsub.s32 %v2682, %v2684
      %v2686 = vrot.slane %v2678, %v2685
      %v2688 = vunpack.c.l.s4 1983009808
      %v2689 = vunpack.c.0.s8 %v2688
      %v2690 = vlaneseq
      %v2691 = vshrl.u32 %v2690, 7
      %v2692 = vsub.s32 %v2689, %v2691
      %v2693 = vrot.slane %v2679, %v2692
      %v2694 = vcombine.low %v2686, %v2693
      %v2695 = vcombine.high %v2686, %v2693
      %v2696 = vcombine.low %v2535, %v2534
      %v2697 = vcombine.low %v2536, %v2553
      %v2699 = vunpack.c.l.s4 1983009808
      %v2700 = vunpack.c.0.s8 %v2699
      %v2701 = vlaneseq
      %v2702 = vshrl.u32 %v2701, 7
      %v2703 = vsub.s32 %v2700, %v2702
      %v2704 = vrot.slane %v2696, %v2703
      %v2706 = vunpack.c.l.s4 1983009808
      %v2707 = vunpack.c.0.s8 %v2706
      %v2708 = vlaneseq
      %v2709 = vshrl.u32 %v2708, 7
      %v2710 = vsub.s32 %v2707, %v2709
      %v2711 = vrot.slane %v2697, %v2710
      %v2712 = vcombine.low %v2704, %v2711
      %v2713 = vcombine.high %v2704, %v2711
      %v2714 = vcombine.low %v2552, %v2554
      %v2715 = vcombine.low %v2563, %v2571
      %v2717 = vunpack.c.l.s4 1983009808
      %v2718 = vunpack.c.0.s8 %v2717
      %v2719 = vlaneseq
      %v2720 = vshrl.u32 %v2719, 7
      %v2721 = vsub.s32 %v2718, %v2720
      %v2722 = vrot.slane %v2714, %v2721
      %v2724 = vunpack.c.l.s4 1983009808
      %v2725 = vunpack.c.0.s8 %v2724
      %v2726 = vlaneseq
      %v2727 = vshrl.u32 %v2726, 7
      %v2728 = vsub.s32 %v2725, %v2727
      %v2729 = vrot.slane %v2715, %v2728
      %v2730 = vcombine.low %v2722, %v2729
      %v2731 = vcombine.high %v2722, %v2729
      %v2732 = vcombine.low %v2570, %v2572
      %v2733 = vcombine.low %v2589, %v2588
      %v2735 = vunpack.c.l.s4 1983009808
      %v2736 = vunpack.c.0.s8 %v2735
      %v2737 = vlaneseq
      %v2738 = vshrl.u32 %v2737, 7
      %v2739 = vsub.s32 %v2736, %v2738
      %v2740 = vrot.slane %v2732, %v2739
      %v2742 = vunpack.c.l.s4 1983009808
      %v2743 = vunpack.c.0.s8 %v2742
      %v2744 = vlaneseq
      %v2745 = vshrl.u32 %v2744, 7
      %v2746 = vsub.s32 %v2743, %v2745
      %v2747 = vrot.slane %v2733, %v2746
      %v2748 = vcombine.low %v2740, %v2747
      %v2749 = vcombine.high %v2740, %v2747
      %v2750 = vcombine.low %v2590, %v2599
      %v2751 = vcombine.low %v2607, %v2606
      %v2753 = vunpack.c.l.s4 1983009808
      %v2754 = vunpack.c.0.s8 %v2753
      %v2755 = vlaneseq
      %v2756 = vshrl.u32 %v2755, 7
      %v2757 = vsub.s32 %v2754, %v2756
      %v2758 = vrot.slane %v2750, %v2757
      %v2760 = vunpack.c.l.s4 1983009808
      %v2761 = vunpack.c.0.s8 %v2760
      %v2762 = vlaneseq
      %v2763 = vshrl.u32 %v2762, 7
      %v2764 = vsub.s32 %v2761, %v2763
      %v2765 = vrot.slane %v2751, %v2764
      %v2766 = vcombine.low %v2758, %v2765
      %v2767 = vcombine.high %v2758, %v2765
      %v2768 = vcombine.low %v2608, %v2625
      %v2769 = vcombine.low %v2624, %v2626
      %v2771 = vunpack.c.l.s4 1983009808
      %v2772 = vunpack.c.0.s8 %v2771
      %v2773 = vlaneseq
      %v2774 = vshrl.u32 %v2773, 7
      %v2775 = vsub.s32 %v2772, %v2774
      %v2776 = vrot.slane %v2768, %v2775
      %v2778 = vunpack.c.l.s4 1983009808
      %v2779 = vunpack.c.0.s8 %v2778
      %v2780 = vlaneseq
      %v2781 = vshrl.u32 %v2780, 7
      %v2782 = vsub.s32 %v2779, %v2781
      %v2783 = vrot.slane %v2769, %v2782
      %v2784 = vcombine.low %v2776, %v2783
      %v2785 = vcombine.high %v2776, %v2783
      %v2786 = vcombine.low %v2635, %v2643
      %v2787 = vcombine.low %v2642, %v2644
      %v2789 = vunpack.c.l.s4 1983009808
      %v2790 = vunpack.c.0.s8 %v2789
      %v2791 = vlaneseq
      %v2792 = vshrl.u32 %v2791, 7
      %v2793 = vsub.s32 %v2790, %v2792
      %v2794 = vrot.slane %v2786, %v2793
      %v2796 = vunpack.c.l.s4 1983009808
      %v2797 = vunpack.c.0.s8 %v2796
      %v2798 = vlaneseq
      %v2799 = vshrl.u32 %v2798, 7
      %v2800 = vsub.s32 %v2797, %v2799
      %v2801 = vrot.slane %v2787, %v2800
      %v2802 = vcombine.low %v2794, %v2801
      %v2803 = vcombine.high %v2794, %v2801
      %v2850 = vunpack.c.l.b16 %v2646
      %v2851 = vunpack.c.h.b16 %v2646
      %v2852 = vunpack.c.l.b16 %v2647
      %v2853 = vunpack.c.h.b16 %v2647
      %v2854 = vunpack.c.l.b16 %v2648
      %v2855 = vunpack.c.h.b16 %v2648
      %v2856 = vunpack.c.l.b16 %v2649
      %v2857 = vunpack.c.h.b16 %v2649
      %v2858 = vunpack.c.l.b16 %v2650
      %v2859 = vunpack.c.h.b16 %v2650
      %v2860 = vunpack.c.l.b16 %v2651
      %v2861 = vunpack.c.h.b16 %v2651
      %v2862 = vunpack.c.l.b16 %v2652
      %v2863 = vunpack.c.h.b16 %v2652
      %v2864 = vunpack.c.l.b16 %v2653
      %v2865 = vunpack.c.h.b16 %v2653
      %v2866 = vunpack.c.l.b16 %v2654
      %v2867 = vunpack.c.h.b16 %v2654
      %v2868 = vunpack.c.l.b16 %v2655
      %v2869 = vunpack.c.h.b16 %v2655
      %v2870 = vunpack.c.l.b16 %v2656
      %v2871 = vunpack.c.h.b16 %v2656
      %v2872 = vunpack.c.l.b16 %v2657
      %v2873 = vunpack.c.h.b16 %v2657
      %v2874 = vunpack.c.l.b16 %v2658
      %v2875 = vunpack.c.h.b16 %v2658
      %v2876 = vunpack.c.l.b16 %v2659
      %v2877 = vunpack.c.h.b16 %v2659
      %v2878 = vunpack.c.l.b16 %v2660
      %v2879 = vunpack.c.h.b16 %v2660
      %v2880 = vunpack.c.l.b16 %v2661
      %v2881 = vunpack.c.h.b16 %v2661
      %v2882 = vunpack.c.l.b16 %v2662
      %v2883 = vunpack.c.h.b16 %v2662
      %v2884 = vunpack.c.l.b16 %v2663
      %v2885 = vunpack.c.h.b16 %v2663
      %v2886 = vunpack.c.l.b16 %v2664
      %v2887 = vunpack.c.h.b16 %v2664
      %v2888 = vunpack.c.l.b16 %v2665
      %v2889 = vunpack.c.h.b16 %v2665
      %v2890 = vunpack.c.l.b16 %v2666
      %v2891 = vunpack.c.h.b16 %v2666
      %v2892 = vunpack.c.l.b16 %v2667
      %v2893 = vunpack.c.h.b16 %v2667
      %v2894 = vunpack.c.l.b16 %v2668
      %v2895 = vunpack.c.h.b16 %v2668
      %v2896 = vunpack.c.l.b16 %v2669
      %v2897 = vunpack.c.h.b16 %v2669
      %v2898 = vunpack.c.l.b16 %v2670
      %v2899 = vunpack.c.h.b16 %v2670
      %v2900 = vunpack.c.l.b16 %v2671
      %v2901 = vunpack.c.h.b16 %v2671
      %v2902 = vunpack.c.l.b16 %v2672
      %v2903 = vunpack.c.h.b16 %v2672
      %v2904 = vunpack.c.l.b16 %v2673
      %v2905 = vunpack.c.h.b16 %v2673
      %v2906 = vunpack.c.l.b16 %v2674
      %v2907 = vunpack.c.h.b16 %v2674
      %v2908 = vunpack.c.l.b16 %v2675
      %v2909 = vunpack.c.h.b16 %v2675
      %v2910 = vunpack.c.l.b16 %v2676
      %v2911 = vunpack.c.h.b16 %v2676
      %v2912 = vunpack.c.l.b16 %v2677
      %v2913 = vunpack.c.h.b16 %v2677
      %v2914 = vpack.c.b16 %v2852, %v2850
      %v2915 = vpack.c.b16 %v2853, %v2851
      %v2916 = vpack.c.b16 %v2856, %v2854
      %v2917 = vpack.c.b16 %v2857, %v2855
      %v2918 = vpack.c.b16 %v2860, %v2858
      %v2919 = vpack.c.b16 %v2861, %v2859
      %v2920 = vpack.c.b16 %v2864, %v2862
      %v2921 = vpack.c.b16 %v2865, %v2863
      %v2922 = vpack.c.b16 %v2868, %v2866
      %v2923 = vpack.c.b16 %v2869, %v2867
      %v2924 = vpack.c.b16 %v2872, %v2870
      %v2925 = vpack.c.b16 %v2873, %v2871
      %v2926 = vpack.c.b16 %v2876, %v2874
      %v2927 = vpack.c.b16 %v2877, %v2875
      %v2928 = vpack.c.b16 %v2880, %v2878
      %v2929 = vpack.c.b16 %v2881, %v2879
      %v2930 = vpack.c.b16 %v2884, %v2882
      %v2931 = vpack.c.b16 %v2885, %v2883
      %v2932 = vpack.c.b16 %v2888, %v2886
      %v2933 = vpack.c.b16 %v2889, %v2887
      %v2934 = vpack.c.b16 %v2892, %v2890
      %v2935 = vpack.c.b16 %v2893, %v2891
      %v2936 = vpack.c.b16 %v2896, %v2894
      %v2937 = vpack.c.b16 %v2897, %v2895
      %v2938 = vpack.c.b16 %v2900, %v2898
      %v2939 = vpack.c.b16 %v2901, %v2899
      %v2940 = vpack.c.b16 %v2904, %v2902
      %v2941 = vpack.c.b16 %v2905, %v2903
      %v2942 = vpack.c.b16 %v2908, %v2906
      %v2943 = vpack.c.b16 %v2909, %v2907
      %v2944 = vpack.c.b16 %v2912, %v2910
      %v2945 = vpack.c.b16 %v2913, %v2911
      %2978 = vmatprep.subr.bf16.mxu0 %v2915
      %2979 = vmatpush1.bf16.msra.mxu0 %v2914
      %2980 = vmatprep.subr.bf16.mxu0 %v2917
      %2981 = vmatpush1.bf16.msra.mxu0 %v2916
      %2982 = vmatprep.subr.bf16.mxu0 %v2919
      %2983 = vmatpush1.bf16.msra.mxu0 %v2918
      %2984 = vmatprep.subr.bf16.mxu0 %v2921
      %2985 = vmatpush1.bf16.msra.mxu0 %v2920
      %2986 = vmatprep.subr.bf16.mxu0 %v2923
      %2987 = vmatpush1.bf16.msra.mxu0 %v2922
      %2988 = vmatprep.subr.bf16.mxu0 %v2925
      %2989 = vmatpush1.bf16.msra.mxu0 %v2924
      %2990 = vmatprep.subr.bf16.mxu0 %v2927
      %2991 = vmatpush1.bf16.msra.mxu0 %v2926
      %2992 = vmatprep.subr.bf16.mxu0 %v2929
      %2993 = vmatpush1.bf16.msra.mxu0 %v2928
      %2994 = vmatprep.subr.bf16.mxu0 %v2931
      %2995 = vmatpush1.bf16.msra.mxu0 %v2930
      %2996 = vmatprep.subr.bf16.mxu0 %v2933
      %2997 = vmatpush1.bf16.msra.mxu0 %v2932
      %2998 = vmatprep.subr.bf16.mxu0 %v2935
      %2999 = vmatpush1.bf16.msra.mxu0 %v2934
      %3000 = vmatprep.subr.bf16.mxu0 %v2937
      %3001 = vmatpush1.bf16.msra.mxu0 %v2936
      %3002 = vmatprep.subr.bf16.mxu0 %v2939
      %3003 = vmatpush1.bf16.msra.mxu0 %v2938
      %3004 = vmatprep.subr.bf16.mxu0 %v2941
      %3005 = vmatpush1.bf16.msra.mxu0 %v2940
      %3006 = vmatprep.subr.bf16.mxu0 %v2943
      %3007 = vmatpush1.bf16.msra.mxu0 %v2942
      %3008 = vmatprep.subr.bf16.mxu0 %v2945
      %3009 = vmatpush1.bf16.msra.mxu0 %v2944
      %3010 = vmatprep.mubr.bf16.mxu0 %v2695
      %3011 = vmatmul.mubr.bf16.gmra.mrb[0].mxu0 %v2694
      %v3012 = vpop.f32.mrb[0].mxu0
      %v3013 = vadd.f32 0.0, %v3012
      %v3014 = vpop.f32.mrb[0].mxu0
      %v3015 = vadd.f32 0.0, %v3014
      %v3016 = vpop.f32.mrb[0].mxu0
      %v3017 = vadd.f32 0.0, %v3016
      %v3018 = vpop.f32.mrb[0].mxu0
      %v3019 = vadd.f32 0.0, %v3018
      %3020 = vmatprep.mubr.bf16.mxu0 %v2713
      %3021 = vmatmul.mubr.bf16.gmra.mrb[0].mxu0 %v2712
      %v3022 = vpop.f32.mrb[0].mxu0
      %v3023 = vadd.f32 0.0, %v3022
      %v3024 = vpop.f32.mrb[0].mxu0
      %v3025 = vadd.f32 0.0, %v3024
      %v3026 = vpop.f32.mrb[0].mxu0
      %v3027 = vadd.f32 0.0, %v3026
      %v3028 = vpop.f32.mrb[0].mxu0
      %v3029 = vadd.f32 0.0, %v3028
      %3030 = vmatprep.mubr.bf16.mxu0 %v2731
      %3031 = vmatmul.mubr.bf16.gmra.mrb[0].mxu0 %v2730
      %v3032 = vpop.f32.mrb[0].mxu0
      %v3033 = vadd.f32 0.0, %v3032
      %v3034 = vpop.f32.mrb[0].mxu0
      %v3035 = vadd.f32 0.0, %v3034
      %v3036 = vpop.f32.mrb[0].mxu0
      %v3037 = vadd.f32 0.0, %v3036
      %v3038 = vpop.f32.mrb[0].mxu0
      %v3039 = vadd.f32 0.0, %v3038
      %3040 = vmatprep.mubr.bf16.mxu0 %v2749
      %3041 = vmatmul.mubr.bf16.gmra.mrb[0].mxu0 %v2748
      %v3042 = vpop.f32.mrb[0].mxu0
      %v3043 = vadd.f32 0.0, %v3042
      %v3044 = vpop.f32.mrb[0].mxu0
      %v3045 = vadd.f32 0.0, %v3044
      %v3046 = vpop.f32.mrb[0].mxu0
      %v3047 = vadd.f32 0.0, %v3046
      %v3048 = vpop.f32.mrb[0].mxu0
      %v3049 = vadd.f32 0.0, %v3048
      %3050 = vmatprep.mubr.bf16.mxu0 %v2767
      %3051 = vmatmul.mubr.bf16.gmra.mrb[0].mxu0 %v2766
      %v3052 = vpop.f32.mrb[0].mxu0
      %v3053 = vadd.f32 0.0, %v3052
      %v3054 = vpop.f32.mrb[0].mxu0
      %v3055 = vadd.f32 0.0, %v3054
      %v3056 = vpop.f32.mrb[0].mxu0
      %v3057 = vadd.f32 0.0, %v3056
      %v3058 = vpop.f32.mrb[0].mxu0
      %v3059 = vadd.f32 0.0, %v3058
      %3060 = vmatprep.mubr.bf16.mxu0 %v2785
      %3061 = vmatmul.mubr.bf16.gmra.mrb[0].mxu0 %v2784
      %v3062 = vpop.f32.mrb[0].mxu0
      %v3063 = vadd.f32 0.0, %v3062
      %v3064 = vpop.f32.mrb[0].mxu0
      %v3065 = vadd.f32 0.0, %v3064
      %v3066 = vpop.f32.mrb[0].mxu0
      %v3067 = vadd.f32 0.0, %v3066
      %v3068 = vpop.f32.mrb[0].mxu0
      %v3069 = vadd.f32 0.0, %v3068
      %3070 = vmatprep.mubr.bf16.mxu0 %v2803
      %3071 = vmatmul.mubr.bf16.gmra.mrb[0].mxu0 %v2802
      %v3072 = vpop.f32.mrb[0].mxu0
      %v3073 = vadd.f32 0.0, %v3072
      %v3074 = vpop.f32.mrb[0].mxu0
      %v3075 = vadd.f32 0.0, %v3074
      %v3076 = vpop.f32.mrb[0].mxu0
      %v3077 = vadd.f32 0.0, %v3076
      %v3078 = vpop.f32.mrb[0].mxu0
      %v3079 = vadd.f32 0.0, %v3078
      %3080 = vdwg.mxu0
      %v3081 = vld [vmem:[#allocation3] sm:$0xff]
      %v3082 = vld [vmem:[#allocation3 + $0x8] sm:$0xff]
      %v3083 = vld [vmem:[#allocation3 + $0x10] sm:$0xff]
      %v3084 = vld [vmem:[#allocation3 + $0x18] sm:$0xff]
      %v3085 = vld [vmem:[#allocation3 + $0x20] sm:$0xff]
      %v3086 = vld [vmem:[#allocation3 + $0x28] sm:$0xff]
      %v3087 = vld [vmem:[#allocation3 + $0x30] sm:$0xff]
      %v3088 = vld [vmem:[#allocation3 + $0x38] sm:$0xff]
      %v3089 = vld [vmem:[#allocation3 + $0x40] sm:$0xff]
      %v3090 = vld [vmem:[#allocation3 + $0x48] sm:$0xff]
      %v3091 = vld [vmem:[#allocation3 + $0x50] sm:$0xff]
      %v3092 = vld [vmem:[#allocation3 + $0x58] sm:$0xff]
      %v3093 = vld [vmem:[#allocation3 + $0x60] sm:$0xff]
      %v3094 = vld [vmem:[#allocation3 + $0x68] sm:$0xff]
      %v3095 = vld [vmem:[#allocation3 + $0x70] sm:$0xff]
      %v3096 = vld [vmem:[#allocation3 + $0x78] sm:$0xff]
      %v3097 = vld [vmem:[#allocation3 + $0x80] sm:$0xff]
      %v3098 = vld [vmem:[#allocation3 + $0x88] sm:$0xff]
      %v3099 = vld [vmem:[#allocation3 + $0x90] sm:$0xff]
      %v3100 = vld [vmem:[#allocation3 + $0x98] sm:$0xff]
      %v3101 = vld [vmem:[#allocation3 + $0xa0] sm:$0xff]
      %v3102 = vld [vmem:[#allocation3 + $0xa8] sm:$0xff]
      %v3103 = vld [vmem:[#allocation3 + $0xb0] sm:$0xff]
      %v3104 = vld [vmem:[#allocation3 + $0xb8] sm:$0xff]
      %v3105 = vld [vmem:[#allocation3 + $0xc0] sm:$0xff]
      %v3106 = vld [vmem:[#allocation3 + $0xc8] sm:$0xff]
      %v3107 = vld [vmem:[#allocation3 + $0xd0] sm:$0xff]
      %v3108 = vld [vmem:[#allocation3 + $0xd8] sm:$0xff]
      %v3109 = vadd.f32 %v3081, %v3013
      %v3110 = vadd.f32 %v3082, %v3015
      %v3111 = vadd.f32 %v3083, %v3017
      %v3112 = vadd.f32 %v3084, %v3019
      %v3113 = vadd.f32 %v3085, %v3023
      %v3114 = vadd.f32 %v3086, %v3025
      %v3115 = vadd.f32 %v3087, %v3027
      %v3116 = vadd.f32 %v3088, %v3029
      %v3117 = vadd.f32 %v3089, %v3033
      %v3118 = vadd.f32 %v3090, %v3035
      %v3119 = vadd.f32 %v3091, %v3037
      %v3120 = vadd.f32 %v3092, %v3039
      %v3121 = vadd.f32 %v3093, %v3043
      %v3122 = vadd.f32 %v3094, %v3045
      %v3123 = vadd.f32 %v3095, %v3047
      %v3124 = vadd.f32 %v3096, %v3049
      %v3125 = vadd.f32 %v3097, %v3053
      %v3126 = vadd.f32 %v3098, %v3055
      %v3127 = vadd.f32 %v3099, %v3057
      %v3128 = vadd.f32 %v3100, %v3059
      %v3129 = vadd.f32 %v3101, %v3063
      %v3130 = vadd.f32 %v3102, %v3065
      %v3131 = vadd.f32 %v3103, %v3067
      %v3132 = vadd.f32 %v3104, %v3069
      %v3133 = vadd.f32 %v3105, %v3073
      %v3134 = vadd.f32 %v3106, %v3075
      %v3135 = vadd.f32 %v3107, %v3077
      %v3136 = vadd.f32 %v3108, %v3079
      %3137 = vst [vmem:[#allocation3] sm:$0xff] %v3109
      %3138 = vst [vmem:[#allocation3 + $0x8] sm:$0xff] %v3110
      %3139 = vst [vmem:[#allocation3 + $0x10] sm:$0xff] %v3111
      %3140 = vst [vmem:[#allocation3 + $0x18] sm:$0xff] %v3112
      %3141 = vst [vmem:[#allocation3 + $0x20] sm:$0xff] %v3113
      %3142 = vst [vmem:[#allocation3 + $0x28] sm:$0xff] %v3114
      %3143 = vst [vmem:[#allocation3 + $0x30] sm:$0xff] %v3115
      %3144 = vst [vmem:[#allocation3 + $0x38] sm:$0xff] %v3116
      %3145 = vst [vmem:[#allocation3 + $0x40] sm:$0xff] %v3117
      %3146 = vst [vmem:[#allocation3 + $0x48] sm:$0xff] %v3118
      %3147 = vst [vmem:[#allocation3 + $0x50] sm:$0xff] %v3119
      %3148 = vst [vmem:[#allocation3 + $0x58] sm:$0xff] %v3120
      %3149 = vst [vmem:[#allocation3 + $0x60] sm:$0xff] %v3121
      %3150 = vst [vmem:[#allocation3 + $0x68] sm:$0xff] %v3122
      %3151 = vst [vmem:[#allocation3 + $0x70] sm:$0xff] %v3123
      %3152 = vst [vmem:[#allocation3 + $0x78] sm:$0xff] %v3124
      %3153 = vst [vmem:[#allocation3 + $0x80] sm:$0xff] %v3125
      %3154 = vst [vmem:[#allocation3 + $0x88] sm:$0xff] %v3126
      %3155 = vst [vmem:[#allocation3 + $0x90] sm:$0xff] %v3127
      %3156 = vst [vmem:[#allocation3 + $0x98] sm:$0xff] %v3128
      %3157 = vst [vmem:[#allocation3 + $0xa0] sm:$0xff] %v3129
      %3158 = vst [vmem:[#allocation3 + $0xa8] sm:$0xff] %v3130
      %3159 = vst [vmem:[#allocation3 + $0xb0] sm:$0xff] %v3131
      %3160 = vst [vmem:[#allocation3 + $0xb8] sm:$0xff] %v3132
      %3161 = vst [vmem:[#allocation3 + $0xc0] sm:$0xff] %v3133
      %3162 = vst [vmem:[#allocation3 + $0xc8] sm:$0xff] %v3134
      %3163 = vst [vmem:[#allocation3 + $0xd0] sm:$0xff] %v3135
      %3164 = vst [vmem:[#allocation3 + $0xd8] sm:$0xff] %v3136
      %s3165 = scalar_lea.vmem [#allocation2], 64
      %v3166 = vld [vmem:[%s3165] sm:$0xff]
      %v3167 = vld [vmem:[%s3165 + $0x8] sm:$0xff]
      %v3168 = vld [vmem:[%s3165 + $0x10] sm:$0x3f]
      %v3169 = vld [vmem:[%s3165 + $0x18] sm:$0x3f]
      %v3170 = vld [vmem:[%s3165 + $0x20] sm:$0xff]
      %v3171 = vld [vmem:[%s3165 + $0x28] sm:$0xff]
      %v3172 = vld [vmem:[%s3165 + $0x30] sm:$0x3f]
      %v3173 = vld [vmem:[%s3165 + $0x38] sm:$0x3f]
      %v3174 = vld [vmem:[%s3165 + $0x40] sm:$0xff]
      %v3175 = vld [vmem:[%s3165 + $0x48] sm:$0xff]
      %v3176 = vld [vmem:[%s3165 + $0x50] sm:$0x3f]
      %v3177 = vld [vmem:[%s3165 + $0x58] sm:$0x3f]
      %v3178 = vld [vmem:[%s3165 + $0x60] sm:$0xff]
      %v3179 = vld [vmem:[%s3165 + $0x68] sm:$0xff]
      %v3180 = vld [vmem:[%s3165 + $0x70] sm:$0x3f]
      %v3181 = vld [vmem:[%s3165 + $0x78] sm:$0x3f]
      %v3198 = vcombine.low %v3166, %v3167
      %v3199 = vcombine.high %v3166, %v3167
      %v3201 = vunpack.c.l.s4 1983009808
      %v3202 = vunpack.c.0.s8 %v3201
      %v3203 = vlaneseq
      %v3204 = vshrl.u32 %v3203, 7
      %v3205 = vsub.s32 %v3202, %v3204
      %v3206 = vrot.slane %v3198, %v3205
      %v3208 = vunpack.c.l.s4 1983009808
      %v3209 = vunpack.c.0.s8 %v3208
      %v3210 = vlaneseq
      %v3211 = vshrl.u32 %v3210, 7
      %v3212 = vsub.s32 %v3209, %v3211
      %v3213 = vrot.slane %v3199, %v3212
      %v3214 = vcombine.high %v3206, %v3206
      %v3215 = vcombine.high %v3213, %v3213
      %v3216 = vcombine.low %v3168, %v3169
      %v3217 = vcombine.high %v3168, %v3169
      %v3219 = vunpack.c.l.s4 1983009808
      %v3220 = vunpack.c.0.s8 %v3219
      %v3221 = vlaneseq
      %v3222 = vshrl.u32 %v3221, 7
      %v3223 = vsub.s32 %v3220, %v3222
      %v3224 = vrot.slane %v3216, %v3223
      %v3226 = vunpack.c.l.s4 1983009808
      %v3227 = vunpack.c.0.s8 %v3226
      %v3228 = vlaneseq
      %v3229 = vshrl.u32 %v3228, 7
      %v3230 = vsub.s32 %v3227, %v3229
      %v3231 = vrot.slane %v3217, %v3230
      %v3232 = vcombine.high %v3224, %v3224
      %v3233 = vcombine.low %v3170, %v3171
      %v3234 = vcombine.high %v3170, %v3171
      %v3236 = vunpack.c.l.s4 1983009808
      %v3237 = vunpack.c.0.s8 %v3236
      %v3238 = vlaneseq
      %v3239 = vshrl.u32 %v3238, 7
      %v3240 = vsub.s32 %v3237, %v3239
      %v3241 = vrot.slane %v3233, %v3240
      %v3243 = vunpack.c.l.s4 1983009808
      %v3244 = vunpack.c.0.s8 %v3243
      %v3245 = vlaneseq
      %v3246 = vshrl.u32 %v3245, 7
      %v3247 = vsub.s32 %v3244, %v3246
      %v3248 = vrot.slane %v3234, %v3247
      %v3249 = vcombine.high %v3241, %v3241
      %v3250 = vcombine.high %v3248, %v3248
      %v3251 = vcombine.low %v3172, %v3173
      %v3252 = vcombine.high %v3172, %v3173
      %v3254 = vunpack.c.l.s4 1983009808
      %v3255 = vunpack.c.0.s8 %v3254
      %v3256 = vlaneseq
      %v3257 = vshrl.u32 %v3256, 7
      %v3258 = vsub.s32 %v3255, %v3257
      %v3259 = vrot.slane %v3251, %v3258
      %v3261 = vunpack.c.l.s4 1983009808
      %v3262 = vunpack.c.0.s8 %v3261
      %v3263 = vlaneseq
      %v3264 = vshrl.u32 %v3263, 7
      %v3265 = vsub.s32 %v3262, %v3264
      %v3266 = vrot.slane %v3252, %v3265
      %v3267 = vcombine.high %v3259, %v3259
      %v3268 = vcombine.low %v3174, %v3175
      %v3269 = vcombine.high %v3174, %v3175
      %v3271 = vunpack.c.l.s4 1983009808
      %v3272 = vunpack.c.0.s8 %v3271
      %v3273 = vlaneseq
      %v3274 = vshrl.u32 %v3273, 7
      %v3275 = vsub.s32 %v3272, %v3274
      %v3276 = vrot.slane %v3268, %v3275
      %v3278 = vunpack.c.l.s4 1983009808
      %v3279 = vunpack.c.0.s8 %v3278
      %v3280 = vlaneseq
      %v3281 = vshrl.u32 %v3280, 7
      %v3282 = vsub.s32 %v3279, %v3281
      %v3283 = vrot.slane %v3269, %v3282
      %v3284 = vcombine.high %v3276, %v3276
      %v3285 = vcombine.high %v3283, %v3283
      %v3286 = vcombine.low %v3176, %v3177
      %v3287 = vcombine.high %v3176, %v3177
      %v3289 = vunpack.c.l.s4 1983009808
      %v3290 = vunpack.c.0.s8 %v3289
      %v3291 = vlaneseq
      %v3292 = vshrl.u32 %v3291, 7
      %v3293 = vsub.s32 %v3290, %v3292
      %v3294 = vrot.slane %v3286, %v3293
      %v3296 = vunpack.c.l.s4 1983009808
      %v3297 = vunpack.c.0.s8 %v3296
      %v3298 = vlaneseq
      %v3299 = vshrl.u32 %v3298, 7
      %v3300 = vsub.s32 %v3297, %v3299
      %v3301 = vrot.slane %v3287, %v3300
      %v3302 = vcombine.high %v3294, %v3294
      %v3303 = vcombine.low %v3178, %v3179
      %v3304 = vcombine.high %v3178, %v3179
      %v3306 = vunpack.c.l.s4 1983009808
      %v3307 = vunpack.c.0.s8 %v3306
      %v3308 = vlaneseq
      %v3309 = vshrl.u32 %v3308, 7
      %v3310 = vsub.s32 %v3307, %v3309
      %v3311 = vrot.slane %v3303, %v3310
      %v3313 = vunpack.c.l.s4 1983009808
      %v3314 = vunpack.c.0.s8 %v3313
      %v3315 = vlaneseq
      %v3316 = vshrl.u32 %v3315, 7
      %v3317 = vsub.s32 %v3314, %v3316
      %v3318 = vrot.slane %v3304, %v3317
      %v3319 = vcombine.high %v3311, %v3311
      %v3320 = vcombine.high %v3318, %v3318
      %v3321 = vcombine.low %v3180, %v3181
      %v3322 = vcombine.high %v3180, %v3181
      %v3324 = vunpack.c.l.s4 1983009808
      %v3325 = vunpack.c.0.s8 %v3324
      %v3326 = vlaneseq
      %v3327 = vshrl.u32 %v3326, 7
      %v3328 = vsub.s32 %v3325, %v3327
      %v3329 = vrot.slane %v3321, %v3328
      %v3331 = vunpack.c.l.s4 1983009808
      %v3332 = vunpack.c.0.s8 %v3331
      %v3333 = vlaneseq
      %v3334 = vshrl.u32 %v3333, 7
      %v3335 = vsub.s32 %v3332, %v3334
      %v3336 = vrot.slane %v3322, %v3335
      %v3337 = vcombine.high %v3329, %v3329
      %s3338 = scalar_lea.vmem %s3, 768
      %v3339 = vld [vmem:[%s3338] sm:$0xff]
      %v3340 = vld [vmem:[%s3338 + $0x8] sm:$0xff]
      %v3341 = vld [vmem:[%s3338 + $0x10] sm:$0xff]
      %v3342 = vld [vmem:[%s3338 + $0x18] sm:$0xff]
      %v3343 = vld [vmem:[%s3338 + $0x20] sm:$0xff]
      %v3344 = vld [vmem:[%s3338 + $0x28] sm:$0xff]
      %v3345 = vld [vmem:[%s3338 + $0x30] sm:$0xff]
      %v3346 = vld [vmem:[%s3338 + $0x38] sm:$0xff]
      %v3347 = vld [vmem:[%s3338 + $0x40] sm:$0xff]
      %v3348 = vld [vmem:[%s3338 + $0x48] sm:$0xff]
      %v3349 = vld [vmem:[%s3338 + $0x50] sm:$0xff]
      %v3350 = vld [vmem:[%s3338 + $0x58] sm:$0xff]
      %v3351 = vld [vmem:[%s3338 + $0x60] sm:$0xff]
      %v3352 = vld [vmem:[%s3338 + $0x68] sm:$0xff]
      %v3353 = vld [vmem:[%s3338 + $0x70] sm:$0xff]
      %v3354 = vld [vmem:[%s3338 + $0x78] sm:$0xff]
      %v3355 = vld [vmem:[%s3338 + $0x80] sm:$0xff]
      %v3356 = vld [vmem:[%s3338 + $0x88] sm:$0xff]
      %v3357 = vld [vmem:[%s3338 + $0x90] sm:$0xff]
      %v3358 = vld [vmem:[%s3338 + $0x98] sm:$0xff]
      %v3359 = vld [vmem:[%s3338 + $0xa0] sm:$0xff]
      %v3360 = vld [vmem:[%s3338 + $0xa8] sm:$0xff]
      %v3361 = vld [vmem:[%s3338 + $0xb0] sm:$0xff]
      %v3362 = vld [vmem:[%s3338 + $0xb8] sm:$0xff]
      %v3363 = vld [vmem:[%s3338 + $0xc0] sm:$0xff]
      %v3364 = vld [vmem:[%s3338 + $0xc8] sm:$0xff]
      %v3365 = vld [vmem:[%s3338 + $0xd0] sm:$0xff]
      %v3366 = vld [vmem:[%s3338 + $0xd8] sm:$0xff]
      %v3367 = vld [vmem:[%s3338 + $0xe0] sm:$0xff]
      %v3368 = vld [vmem:[%s3338 + $0xe8] sm:$0xff]
      %v3369 = vld [vmem:[%s3338 + $0xf0] sm:$0xff]
      %v3370 = vld [vmem:[%s3338 + $0xf8] sm:$0xff]
      %v3371 = vcombine.low %v3206, %v3214
      %v3372 = vcombine.low %v3213, %v3215
      %v3374 = vunpack.c.l.s4 1983009808
      %v3375 = vunpack.c.0.s8 %v3374
      %v3376 = vlaneseq
      %v3377 = vshrl.u32 %v3376, 7
      %v3378 = vsub.s32 %v3375, %v3377
      %v3379 = vrot.slane %v3371, %v3378
      %v3381 = vunpack.c.l.s4 1983009808
      %v3382 = vunpack.c.0.s8 %v3381
      %v3383 = vlaneseq
      %v3384 = vshrl.u32 %v3383, 7
      %v3385 = vsub.s32 %v3382, %v3384
      %v3386 = vrot.slane %v3372, %v3385
      %v3387 = vcombine.low %v3379, %v3386
      %v3388 = vcombine.high %v3379, %v3386
      %v3389 = vcombine.low %v3224, %v3232
      %v3390 = vcombine.low %v3231, %v3241
      %v3392 = vunpack.c.l.s4 1983009808
      %v3393 = vunpack.c.0.s8 %v3392
      %v3394 = vlaneseq
      %v3395 = vshrl.u32 %v3394, 7
      %v3396 = vsub.s32 %v3393, %v3395
      %v3397 = vrot.slane %v3389, %v3396
      %v3399 = vunpack.c.l.s4 1983009808
      %v3400 = vunpack.c.0.s8 %v3399
      %v3401 = vlaneseq
      %v3402 = vshrl.u32 %v3401, 7
      %v3403 = vsub.s32 %v3400, %v3402
      %v3404 = vrot.slane %v3390, %v3403
      %v3405 = vcombine.low %v3397, %v3404
      %v3406 = vcombine.high %v3397, %v3404
      %v3407 = vcombine.low %v3249, %v3248
      %v3408 = vcombine.low %v3250, %v3259
      %v3410 = vunpack.c.l.s4 1983009808
      %v3411 = vunpack.c.0.s8 %v3410
      %v3412 = vlaneseq
      %v3413 = vshrl.u32 %v3412, 7
      %v3414 = vsub.s32 %v3411, %v3413
      %v3415 = vrot.slane %v3407, %v3414
      %v3417 = vunpack.c.l.s4 1983009808
      %v3418 = vunpack.c.0.s8 %v3417
      %v3419 = vlaneseq
      %v3420 = vshrl.u32 %v3419, 7
      %v3421 = vsub.s32 %v3418, %v3420
      %v3422 = vrot.slane %v3408, %v3421
      %v3423 = vcombine.low %v3415, %v3422
      %v3424 = vcombine.high %v3415, %v3422
      %v3425 = vcombine.low %v3267, %v3266
      %v3426 = vcombine.low %v3276, %v3284
      %v3428 = vunpack.c.l.s4 1983009808
      %v3429 = vunpack.c.0.s8 %v3428
      %v3430 = vlaneseq
      %v3431 = vshrl.u32 %v3430, 7
      %v3432 = vsub.s32 %v3429, %v3431
      %v3433 = vrot.slane %v3425, %v3432
      %v3435 = vunpack.c.l.s4 1983009808
      %v3436 = vunpack.c.0.s8 %v3435
      %v3437 = vlaneseq
      %v3438 = vshrl.u32 %v3437, 7
      %v3439 = vsub.s32 %v3436, %v3438
      %v3440 = vrot.slane %v3426, %v3439
      %v3441 = vcombine.low %v3433, %v3440
      %v3442 = vcombine.high %v3433, %v3440
      %v3443 = vcombine.low %v3283, %v3285
      %v3444 = vcombine.low %v3294, %v3302
      %v3446 = vunpack.c.l.s4 1983009808
      %v3447 = vunpack.c.0.s8 %v3446
      %v3448 = vlaneseq
      %v3449 = vshrl.u32 %v3448, 7
      %v3450 = vsub.s32 %v3447, %v3449
      %v3451 = vrot.slane %v3443, %v3450
      %v3453 = vunpack.c.l.s4 1983009808
      %v3454 = vunpack.c.0.s8 %v3453
      %v3455 = vlaneseq
      %v3456 = vshrl.u32 %v3455, 7
      %v3457 = vsub.s32 %v3454, %v3456
      %v3458 = vrot.slane %v3444, %v3457
      %v3459 = vcombine.low %v3451, %v3458
      %v3460 = vcombine.high %v3451, %v3458
      %v3461 = vcombine.low %v3301, %v3311
      %v3462 = vcombine.low %v3319, %v3318
      %v3464 = vunpack.c.l.s4 1983009808
      %v3465 = vunpack.c.0.s8 %v3464
      %v3466 = vlaneseq
      %v3467 = vshrl.u32 %v3466, 7
      %v3468 = vsub.s32 %v3465, %v3467
      %v3469 = vrot.slane %v3461, %v3468
      %v3471 = vunpack.c.l.s4 1983009808
      %v3472 = vunpack.c.0.s8 %v3471
      %v3473 = vlaneseq
      %v3474 = vshrl.u32 %v3473, 7
      %v3475 = vsub.s32 %v3472, %v3474
      %v3476 = vrot.slane %v3462, %v3475
      %v3477 = vcombine.low %v3469, %v3476
      %v3478 = vcombine.high %v3469, %v3476
      %v3479 = vcombine.low %v3320, %v3329
      %v3480 = vcombine.low %v3337, %v3336
      %v3482 = vunpack.c.l.s4 1983009808
      %v3483 = vunpack.c.0.s8 %v3482
      %v3484 = vlaneseq
      %v3485 = vshrl.u32 %v3484, 7
      %v3486 = vsub.s32 %v3483, %v3485
      %v3487 = vrot.slane %v3479, %v3486
      %v3489 = vunpack.c.l.s4 1983009808
      %v3490 = vunpack.c.0.s8 %v3489
      %v3491 = vlaneseq
      %v3492 = vshrl.u32 %v3491, 7
      %v3493 = vsub.s32 %v3490, %v3492
      %v3494 = vrot.slane %v3480, %v3493
      %v3495 = vcombine.low %v3487, %v3494
      %v3496 = vcombine.high %v3487, %v3494
      %v3543 = vunpack.c.l.b16 %v3339
      %v3544 = vunpack.c.h.b16 %v3339
      %v3545 = vunpack.c.l.b16 %v3340
      %v3546 = vunpack.c.h.b16 %v3340
      %v3547 = vunpack.c.l.b16 %v3341
      %v3548 = vunpack.c.h.b16 %v3341
      %v3549 = vunpack.c.l.b16 %v3342
      %v3550 = vunpack.c.h.b16 %v3342
      %v3551 = vunpack.c.l.b16 %v3343
      %v3552 = vunpack.c.h.b16 %v3343
      %v3553 = vunpack.c.l.b16 %v3344
      %v3554 = vunpack.c.h.b16 %v3344
      %v3555 = vunpack.c.l.b16 %v3345
      %v3556 = vunpack.c.h.b16 %v3345
      %v3557 = vunpack.c.l.b16 %v3346
      %v3558 = vunpack.c.h.b16 %v3346
      %v3559 = vunpack.c.l.b16 %v3347
      %v3560 = vunpack.c.h.b16 %v3347
      %v3561 = vunpack.c.l.b16 %v3348
      %v3562 = vunpack.c.h.b16 %v3348
      %v3563 = vunpack.c.l.b16 %v3349
      %v3564 = vunpack.c.h.b16 %v3349
      %v3565 = vunpack.c.l.b16 %v3350
      %v3566 = vunpack.c.h.b16 %v3350
      %v3567 = vunpack.c.l.b16 %v3351
      %v3568 = vunpack.c.h.b16 %v3351
      %v3569 = vunpack.c.l.b16 %v3352
      %v3570 = vunpack.c.h.b16 %v3352
      %v3571 = vunpack.c.l.b16 %v3353
      %v3572 = vunpack.c.h.b16 %v3353
      %v3573 = vunpack.c.l.b16 %v3354
      %v3574 = vunpack.c.h.b16 %v3354
      %v3575 = vunpack.c.l.b16 %v3355
      %v3576 = vunpack.c.h.b16 %v3355
      %v3577 = vunpack.c.l.b16 %v3356
      %v3578 = vunpack.c.h.b16 %v3356
      %v3579 = vunpack.c.l.b16 %v3357
      %v3580 = vunpack.c.h.b16 %v3357
      %v3581 = vunpack.c.l.b16 %v3358
      %v3582 = vunpack.c.h.b16 %v3358
      %v3583 = vunpack.c.l.b16 %v3359
      %v3584 = vunpack.c.h.b16 %v3359
      %v3585 = vunpack.c.l.b16 %v3360
      %v3586 = vunpack.c.h.b16 %v3360
      %v3587 = vunpack.c.l.b16 %v3361
      %v3588 = vunpack.c.h.b16 %v3361
      %v3589 = vunpack.c.l.b16 %v3362
      %v3590 = vunpack.c.h.b16 %v3362
      %v3591 = vunpack.c.l.b16 %v3363
      %v3592 = vunpack.c.h.b16 %v3363
      %v3593 = vunpack.c.l.b16 %v3364
      %v3594 = vunpack.c.h.b16 %v3364
      %v3595 = vunpack.c.l.b16 %v3365
      %v3596 = vunpack.c.h.b16 %v3365
      %v3597 = vunpack.c.l.b16 %v3366
      %v3598 = vunpack.c.h.b16 %v3366
      %v3599 = vunpack.c.l.b16 %v3367
      %v3600 = vunpack.c.h.b16 %v3367
      %v3601 = vunpack.c.l.b16 %v3368
      %v3602 = vunpack.c.h.b16 %v3368
      %v3603 = vunpack.c.l.b16 %v3369
      %v3604 = vunpack.c.h.b16 %v3369
      %v3605 = vunpack.c.l.b16 %v3370
      %v3606 = vunpack.c.h.b16 %v3370
      %v3607 = vpack.c.b16 %v3545, %v3543
      %v3608 = vpack.c.b16 %v3546, %v3544
      %v3609 = vpack.c.b16 %v3549, %v3547
      %v3610 = vpack.c.b16 %v3550, %v3548
      %v3611 = vpack.c.b16 %v3553, %v3551
      %v3612 = vpack.c.b16 %v3554, %v3552
      %v3613 = vpack.c.b16 %v3557, %v3555
      %v3614 = vpack.c.b16 %v3558, %v3556
      %v3615 = vpack.c.b16 %v3561, %v3559
      %v3616 = vpack.c.b16 %v3562, %v3560
      %v3617 = vpack.c.b16 %v3565, %v3563
      %v3618 = vpack.c.b16 %v3566, %v3564
      %v3619 = vpack.c.b16 %v3569, %v3567
      %v3620 = vpack.c.b16 %v3570, %v3568
      %v3621 = vpack.c.b16 %v3573, %v3571
      %v3622 = vpack.c.b16 %v3574, %v3572
      %v3623 = vpack.c.b16 %v3577, %v3575
      %v3624 = vpack.c.b16 %v3578, %v3576
      %v3625 = vpack.c.b16 %v3581, %v3579
      %v3626 = vpack.c.b16 %v3582, %v3580
      %v3627 = vpack.c.b16 %v3585, %v3583
      %v3628 = vpack.c.b16 %v3586, %v3584
      %v3629 = vpack.c.b16 %v3589, %v3587
      %v3630 = vpack.c.b16 %v3590, %v3588
      %v3631 = vpack.c.b16 %v3593, %v3591
      %v3632 = vpack.c.b16 %v3594, %v3592
      %v3633 = vpack.c.b16 %v3597, %v3595
      %v3634 = vpack.c.b16 %v3598, %v3596
      %v3635 = vpack.c.b16 %v3601, %v3599
      %v3636 = vpack.c.b16 %v3602, %v3600
      %v3637 = vpack.c.b16 %v3605, %v3603
      %v3638 = vpack.c.b16 %v3606, %v3604
      %3671 = vmatprep.subr.bf16.mxu0 %v3608
      %3672 = vmatpush1.bf16.msra.mxu0 %v3607
      %3673 = vmatprep.subr.bf16.mxu0 %v3610
      %3674 = vmatpush1.bf16.msra.mxu0 %v3609
      %3675 = vmatprep.subr.bf16.mxu0 %v3612
      %3676 = vmatpush1.bf16.msra.mxu0 %v3611
      %3677 = vmatprep.subr.bf16.mxu0 %v3614
      %3678 = vmatpush1.bf16.msra.mxu0 %v3613
      %3679 = vmatprep.subr.bf16.mxu0 %v3616
      %3680 = vmatpush1.bf16.msra.mxu0 %v3615
      %3681 = vmatprep.subr.bf16.mxu0 %v3618
      %3682 = vmatpush1.bf16.msra.mxu0 %v3617
      %3683 = vmatprep.subr.bf16.mxu0 %v3620
      %3684 = vmatpush1.bf16.msra.mxu0 %v3619
      %3685 = vmatprep.subr.bf16.mxu0 %v3622
      %3686 = vmatpush1.bf16.msra.mxu0 %v3621
      %3687 = vmatprep.subr.bf16.mxu0 %v3624
      %3688 = vmatpush1.bf16.msra.mxu0 %v3623
      %3689 = vmatprep.subr.bf16.mxu0 %v3626
      %3690 = vmatpush1.bf16.msra.mxu0 %v3625
      %3691 = vmatprep.subr.bf16.mxu0 %v3628
      %3692 = vmatpush1.bf16.msra.mxu0 %v3627
      %3693 = vmatprep.subr.bf16.mxu0 %v3630
      %3694 = vmatpush1.bf16.msra.mxu0 %v3629
      %3695 = vmatprep.subr.bf16.mxu0 %v3632
      %3696 = vmatpush1.bf16.msra.mxu0 %v3631
      %3697 = vmatprep.subr.bf16.mxu0 %v3634
      %3698 = vmatpush1.bf16.msra.mxu0 %v3633
      %3699 = vmatprep.subr.bf16.mxu0 %v3636
      %3700 = vmatpush1.bf16.msra.mxu0 %v3635
      %3701 = vmatprep.subr.bf16.mxu0 %v3638
      %3702 = vmatpush1.bf16.msra.mxu0 %v3637
      %3703 = vmatprep.mubr.bf16.mxu0 %v3388
      %3704 = vmatmul.mubr.bf16.gmra.mrb[0].mxu0 %v3387
      %v3705 = vpop.f32.mrb[0].mxu0
      %v3706 = vadd.f32 0.0, %v3705
      %v3707 = vpop.f32.mrb[0].mxu0
      %v3708 = vadd.f32 0.0, %v3707
      %v3709 = vpop.f32.mrb[0].mxu0
      %v3710 = vadd.f32 0.0, %v3709
      %v3711 = vpop.f32.mrb[0].mxu0
      %v3712 = vadd.f32 0.0, %v3711
      %3713 = vmatprep.mubr.bf16.mxu0 %v3406
      %3714 = vmatmul.mubr.bf16.gmra.mrb[0].mxu0 %v3405
      %v3715 = vpop.f32.mrb[0].mxu0
      %v3716 = vadd.f32 0.0, %v3715
      %v3717 = vpop.f32.mrb[0].mxu0
      %v3718 = vadd.f32 0.0, %v3717
      %v3719 = vpop.f32.mrb[0].mxu0
      %v3720 = vadd.f32 0.0, %v3719
      %v3721 = vpop.f32.mrb[0].mxu0
      %v3722 = vadd.f32 0.0, %v3721
      %3723 = vmatprep.mubr.bf16.mxu0 %v3424
      %3724 = vmatmul.mubr.bf16.gmra.mrb[0].mxu0 %v3423
      %v3725 = vpop.f32.mrb[0].mxu0
      %v3726 = vadd.f32 0.0, %v3725
      %v3727 = vpop.f32.mrb[0].mxu0
      %v3728 = vadd.f32 0.0, %v3727
      %v3729 = vpop.f32.mrb[0].mxu0
      %v3730 = vadd.f32 0.0, %v3729
      %v3731 = vpop.f32.mrb[0].mxu0
      %v3732 = vadd.f32 0.0, %v3731
      %3733 = vmatprep.mubr.bf16.mxu0 %v3442
      %3734 = vmatmul.mubr.bf16.gmra.mrb[0].mxu0 %v3441
      %v3735 = vpop.f32.mrb[0].mxu0
      %v3736 = vadd.f32 0.0, %v3735
      %v3737 = vpop.f32.mrb[0].mxu0
      %v3738 = vadd.f32 0.0, %v3737
      %v3739 = vpop.f32.mrb[0].mxu0
      %v3740 = vadd.f32 0.0, %v3739
      %v3741 = vpop.f32.mrb[0].mxu0
      %v3742 = vadd.f32 0.0, %v3741
      %3743 = vmatprep.mubr.bf16.mxu0 %v3460
      %3744 = vmatmul.mubr.bf16.gmra.mrb[0].mxu0 %v3459
      %v3745 = vpop.f32.mrb[0].mxu0
      %v3746 = vadd.f32 0.0, %v3745
      %v3747 = vpop.f32.mrb[0].mxu0
      %v3748 = vadd.f32 0.0, %v3747
      %v3749 = vpop.f32.mrb[0].mxu0
      %v3750 = vadd.f32 0.0, %v3749
      %v3751 = vpop.f32.mrb[0].mxu0
      %v3752 = vadd.f32 0.0, %v3751
      %3753 = vmatprep.mubr.bf16.mxu0 %v3478
      %3754 = vmatmul.mubr.bf16.gmra.mrb[0].mxu0 %v3477
      %v3755 = vpop.f32.mrb[0].mxu0
      %v3756 = vadd.f32 0.0, %v3755
      %v3757 = vpop.f32.mrb[0].mxu0
      %v3758 = vadd.f32 0.0, %v3757
      %v3759 = vpop.f32.mrb[0].mxu0
      %v3760 = vadd.f32 0.0, %v3759
      %v3761 = vpop.f32.mrb[0].mxu0
      %v3762 = vadd.f32 0.0, %v3761
      %3763 = vmatprep.mubr.bf16.mxu0 %v3496
      %3764 = vmatmul.mubr.bf16.gmra.mrb[0].mxu0 %v3495
      %v3765 = vpop.f32.mrb[0].mxu0
      %v3766 = vadd.f32 0.0, %v3765
      %v3767 = vpop.f32.mrb[0].mxu0
      %v3768 = vadd.f32 0.0, %v3767
      %v3769 = vpop.f32.mrb[0].mxu0
      %v3770 = vadd.f32 0.0, %v3769
      %v3771 = vpop.f32.mrb[0].mxu0
      %v3772 = vadd.f32 0.0, %v3771
      %3773 = vdwg.mxu0
      %v3774 = vld [vmem:[#allocation3] sm:$0xff]
      %v3775 = vld [vmem:[#allocation3 + $0x8] sm:$0xff]
      %v3776 = vld [vmem:[#allocation3 + $0x10] sm:$0xff]
      %v3777 = vld [vmem:[#allocation3 + $0x18] sm:$0xff]
      %v3778 = vld [vmem:[#allocation3 + $0x20] sm:$0xff]
      %v3779 = vld [vmem:[#allocation3 + $0x28] sm:$0xff]
      %v3780 = vld [vmem:[#allocation3 + $0x30] sm:$0xff]
      %v3781 = vld [vmem:[#allocation3 + $0x38] sm:$0xff]
      %v3782 = vld [vmem:[#allocation3 + $0x40] sm:$0xff]
      %v3783 = vld [vmem:[#allocation3 + $0x48] sm:$0xff]
      %v3784 = vld [vmem:[#allocation3 + $0x50] sm:$0xff]
      %v3785 = vld [vmem:[#allocation3 + $0x58] sm:$0xff]
      %v3786 = vld [vmem:[#allocation3 + $0x60] sm:$0xff]
      %v3787 = vld [vmem:[#allocation3 + $0x68] sm:$0xff]
      %v3788 = vld [vmem:[#allocation3 + $0x70] sm:$0xff]
      %v3789 = vld [vmem:[#allocation3 + $0x78] sm:$0xff]
      %v3790 = vld [vmem:[#allocation3 + $0x80] sm:$0xff]
      %v3791 = vld [vmem:[#allocation3 + $0x88] sm:$0xff]
      %v3792 = vld [vmem:[#allocation3 + $0x90] sm:$0xff]
      %v3793 = vld [vmem:[#allocation3 + $0x98] sm:$0xff]
      %v3794 = vld [vmem:[#allocation3 + $0xa0] sm:$0xff]
      %v3795 = vld [vmem:[#allocation3 + $0xa8] sm:$0xff]
      %v3796 = vld [vmem:[#allocation3 + $0xb0] sm:$0xff]
      %v3797 = vld [vmem:[#allocation3 + $0xb8] sm:$0xff]
      %v3798 = vld [vmem:[#allocation3 + $0xc0] sm:$0xff]
      %v3799 = vld [vmem:[#allocation3 + $0xc8] sm:$0xff]
      %v3800 = vld [vmem:[#allocation3 + $0xd0] sm:$0xff]
      %v3801 = vld [vmem:[#allocation3 + $0xd8] sm:$0xff]
      %v3802 = vadd.f32 %v3774, %v3706
      %v3803 = vadd.f32 %v3775, %v3708
      %v3804 = vadd.f32 %v3776, %v3710
      %v3805 = vadd.f32 %v3777, %v3712
      %v3806 = vadd.f32 %v3778, %v3716
      %v3807 = vadd.f32 %v3779, %v3718
      %v3808 = vadd.f32 %v3780, %v3720
      %v3809 = vadd.f32 %v3781, %v3722
      %v3810 = vadd.f32 %v3782, %v3726
      %v3811 = vadd.f32 %v3783, %v3728
      %v3812 = vadd.f32 %v3784, %v3730
      %v3813 = vadd.f32 %v3785, %v3732
      %v3814 = vadd.f32 %v3786, %v3736
      %v3815 = vadd.f32 %v3787, %v3738
      %v3816 = vadd.f32 %v3788, %v3740
      %v3817 = vadd.f32 %v3789, %v3742
      %v3818 = vadd.f32 %v3790, %v3746
      %v3819 = vadd.f32 %v3791, %v3748
      %v3820 = vadd.f32 %v3792, %v3750
      %v3821 = vadd.f32 %v3793, %v3752
      %v3822 = vadd.f32 %v3794, %v3756
      %v3823 = vadd.f32 %v3795, %v3758
      %v3824 = vadd.f32 %v3796, %v3760
      %v3825 = vadd.f32 %v3797, %v3762
      %v3826 = vadd.f32 %v3798, %v3766
      %v3827 = vadd.f32 %v3799, %v3768
      %v3828 = vadd.f32 %v3800, %v3770
      %v3829 = vadd.f32 %v3801, %v3772
      %3830 = vst [vmem:[#allocation3] sm:$0xff] %v3802
      %3831 = vst [vmem:[#allocation3 + $0x8] sm:$0xff] %v3803
      %3832 = vst [vmem:[#allocation3 + $0x10] sm:$0xff] %v3804
      %3833 = vst [vmem:[#allocation3 + $0x18] sm:$0xff] %v3805
      %3834 = vst [vmem:[#allocation3 + $0x20] sm:$0xff] %v3806
      %3835 = vst [vmem:[#allocation3 + $0x28] sm:$0xff] %v3807
      %3836 = vst [vmem:[#allocation3 + $0x30] sm:$0xff] %v3808
      %3837 = vst [vmem:[#allocation3 + $0x38] sm:$0xff] %v3809
      %3838 = vst [vmem:[#allocation3 + $0x40] sm:$0xff] %v3810
      %3839 = vst [vmem:[#allocation3 + $0x48] sm:$0xff] %v3811
      %3840 = vst [vmem:[#allocation3 + $0x50] sm:$0xff] %v3812
      %3841 = vst [vmem:[#allocation3 + $0x58] sm:$0xff] %v3813
      %3842 = vst [vmem:[#allocation3 + $0x60] sm:$0xff] %v3814
      %3843 = vst [vmem:[#allocation3 + $0x68] sm:$0xff] %v3815
      %3844 = vst [vmem:[#allocation3 + $0x70] sm:$0xff] %v3816
      %3845 = vst [vmem:[#allocation3 + $0x78] sm:$0xff] %v3817
      %3846 = vst [vmem:[#allocation3 + $0x80] sm:$0xff] %v3818
      %3847 = vst [vmem:[#allocation3 + $0x88] sm:$0xff] %v3819
      %3848 = vst [vmem:[#allocation3 + $0x90] sm:$0xff] %v3820
      %3849 = vst [vmem:[#allocation3 + $0x98] sm:$0xff] %v3821
      %3850 = vst [vmem:[#allocation3 + $0xa0] sm:$0xff] %v3822
      %3851 = vst [vmem:[#allocation3 + $0xa8] sm:$0xff] %v3823
      %3852 = vst [vmem:[#allocation3 + $0xb0] sm:$0xff] %v3824
      %3853 = vst [vmem:[#allocation3 + $0xb8] sm:$0xff] %v3825
      %3854 = vst [vmem:[#allocation3 + $0xc0] sm:$0xff] %v3826
      %3855 = vst [vmem:[#allocation3 + $0xc8] sm:$0xff] %v3827
      %3856 = vst [vmem:[#allocation3 + $0xd0] sm:$0xff] %v3828
      %3857 = vst [vmem:[#allocation3 + $0xd8] sm:$0xff] %v3829
      %v3858 = vld [vmem:[%s3165] sm:$0xfe]
      %v3859 = vld [vmem:[%s3165 + $0x8] sm:$0xfe]
      %v3860 = vld [vmem:[%s3165 + $0x10] sm:$0x7f]
      %v3861 = vld [vmem:[%s3165 + $0x18] sm:$0x7f]
      %v3862 = vld [vmem:[%s3165 + $0x20] sm:$0xfe]
      %v3863 = vld [vmem:[%s3165 + $0x28] sm:$0xfe]
      %v3864 = vld [vmem:[%s3165 + $0x30] sm:$0x7f]
      %v3865 = vld [vmem:[%s3165 + $0x38] sm:$0x7f]
      %v3866 = vld [vmem:[%s3165 + $0x40] sm:$0xfe]
      %v3867 = vld [vmem:[%s3165 + $0x48] sm:$0xfe]
      %v3868 = vld [vmem:[%s3165 + $0x50] sm:$0x7f]
      %v3869 = vld [vmem:[%s3165 + $0x58] sm:$0x7f]
      %v3870 = vld [vmem:[%s3165 + $0x60] sm:$0xfe]
      %v3871 = vld [vmem:[%s3165 + $0x68] sm:$0xfe]
      %v3872 = vld [vmem:[%s3165 + $0x70] sm:$0x7f]
      %v3873 = vld [vmem:[%s3165 + $0x78] sm:$0x7f]
      %v3890 = vcombine.low %v3858, %v3859
      %v3891 = vcombine.high %v3858, %v3859
      %v3893 = vunpack.c.l.s4 1983009808
      %v3894 = vunpack.c.0.s8 %v3893
      %v3895 = vlaneseq
      %v3896 = vshrl.u32 %v3895, 7
      %v3897 = vsub.s32 %v3894, %v3896
      %v3898 = vrot.slane %v3890, %v3897
      %v3900 = vunpack.c.l.s4 1983009808
      %v3901 = vunpack.c.0.s8 %v3900
      %v3902 = vlaneseq
      %v3903 = vshrl.u32 %v3902, 7
      %v3904 = vsub.s32 %v3901, %v3903
      %v3905 = vrot.slane %v3891, %v3904
      %v3906 = vcombine.high %v3898, %v3898
      %v3907 = vcombine.high %v3905, %v3905
      %v3908 = vcombine.low %v3860, %v3861
      %v3909 = vcombine.high %v3860, %v3861
      %v3911 = vunpack.c.l.s4 1983009808
      %v3912 = vunpack.c.0.s8 %v3911
      %v3913 = vlaneseq
      %v3914 = vshrl.u32 %v3913, 7
      %v3915 = vsub.s32 %v3912, %v3914
      %v3916 = vrot.slane %v3908, %v3915
      %v3918 = vunpack.c.l.s4 1983009808
      %v3919 = vunpack.c.0.s8 %v3918
      %v3920 = vlaneseq
      %v3921 = vshrl.u32 %v3920, 7
      %v3922 = vsub.s32 %v3919, %v3921
      %v3923 = vrot.slane %v3909, %v3922
      %v3924 = vcombine.high %v3916, %v3916
      %v3925 = vcombine.high %v3923, %v3923
      %v3926 = vcombine.low %v3862, %v3863
      %v3927 = vcombine.high %v3862, %v3863
      %v3929 = vunpack.c.l.s4 1983009808
      %v3930 = vunpack.c.0.s8 %v3929
      %v3931 = vlaneseq
      %v3932 = vshrl.u32 %v3931, 7
      %v3933 = vsub.s32 %v3930, %v3932
      %v3934 = vrot.slane %v3926, %v3933
      %v3936 = vunpack.c.l.s4 1983009808
      %v3937 = vunpack.c.0.s8 %v3936
      %v3938 = vlaneseq
      %v3939 = vshrl.u32 %v3938, 7
      %v3940 = vsub.s32 %v3937, %v3939
      %v3941 = vrot.slane %v3927, %v3940
      %v3942 = vcombine.high %v3934, %v3934
      %v3943 = vcombine.high %v3941, %v3941
      %v3944 = vcombine.low %v3864, %v3865
      %v3945 = vcombine.high %v3864, %v3865
      %v3947 = vunpack.c.l.s4 1983009808
      %v3948 = vunpack.c.0.s8 %v3947
      %v3949 = vlaneseq
      %v3950 = vshrl.u32 %v3949, 7
      %v3951 = vsub.s32 %v3948, %v3950
      %v3952 = vrot.slane %v3944, %v3951
      %v3954 = vunpack.c.l.s4 1983009808
      %v3955 = vunpack.c.0.s8 %v3954
      %v3956 = vlaneseq
      %v3957 = vshrl.u32 %v3956, 7
      %v3958 = vsub.s32 %v3955, %v3957
      %v3959 = vrot.slane %v3945, %v3958
      %v3960 = vcombine.high %v3952, %v3952
      %v3961 = vcombine.high %v3959, %v3959
      %v3962 = vcombine.low %v3866, %v3867
      %v3963 = vcombine.high %v3866, %v3867
      %v3965 = vunpack.c.l.s4 1983009808
      %v3966 = vunpack.c.0.s8 %v3965
      %v3967 = vlaneseq
      %v3968 = vshrl.u32 %v3967, 7
      %v3969 = vsub.s32 %v3966, %v3968
      %v3970 = vrot.slane %v3962, %v3969
      %v3972 = vunpack.c.l.s4 1983009808
      %v3973 = vunpack.c.0.s8 %v3972
      %v3974 = vlaneseq
      %v3975 = vshrl.u32 %v3974, 7
      %v3976 = vsub.s32 %v3973, %v3975
      %v3977 = vrot.slane %v3963, %v3976
      %v3978 = vcombine.high %v3970, %v3970
      %v3979 = vcombine.high %v3977, %v3977
      %v3980 = vcombine.low %v3868, %v3869
      %v3981 = vcombine.high %v3868, %v3869
      %v3983 = vunpack.c.l.s4 1983009808
      %v3984 = vunpack.c.0.s8 %v3983
      %v3985 = vlaneseq
      %v3986 = vshrl.u32 %v3985, 7
      %v3987 = vsub.s32 %v3984, %v3986
      %v3988 = vrot.slane %v3980, %v3987
      %v3990 = vunpack.c.l.s4 1983009808
      %v3991 = vunpack.c.0.s8 %v3990
      %v3992 = vlaneseq
      %v3993 = vshrl.u32 %v3992, 7
      %v3994 = vsub.s32 %v3991, %v3993
      %v3995 = vrot.slane %v3981, %v3994
      %v3996 = vcombine.high %v3988, %v3988
      %v3997 = vcombine.high %v3995, %v3995
      %v3998 = vcombine.low %v3870, %v3871
      %v3999 = vcombine.high %v3870, %v3871
      %v4001 = vunpack.c.l.s4 1983009808
      %v4002 = vunpack.c.0.s8 %v4001
      %v4003 = vlaneseq
      %v4004 = vshrl.u32 %v4003, 7
      %v4005 = vsub.s32 %v4002, %v4004
      %v4006 = vrot.slane %v3998, %v4005
      %v4008 = vunpack.c.l.s4 1983009808
      %v4009 = vunpack.c.0.s8 %v4008
      %v4010 = vlaneseq
      %v4011 = vshrl.u32 %v4010, 7
      %v4012 = vsub.s32 %v4009, %v4011
      %v4013 = vrot.slane %v3999, %v4012
      %v4014 = vcombine.high %v4006, %v4006
      %v4015 = vcombine.high %v4013, %v4013
      %v4016 = vcombine.low %v3872, %v3873
      %v4017 = vcombine.high %v3872, %v3873
      %v4019 = vunpack.c.l.s4 1983009808
      %v4020 = vunpack.c.0.s8 %v4019
      %v4021 = vlaneseq
      %v4022 = vshrl.u32 %v4021, 7
      %v4023 = vsub.s32 %v4020, %v4022
      %v4024 = vrot.slane %v4016, %v4023
      %v4026 = vunpack.c.l.s4 1983009808
      %v4027 = vunpack.c.0.s8 %v4026
      %v4028 = vlaneseq
      %v4029 = vshrl.u32 %v4028, 7
      %v4030 = vsub.s32 %v4027, %v4029
      %v4031 = vrot.slane %v4017, %v4030
      %v4032 = vcombine.high %v4024, %v4024
      %v4033 = vcombine.high %v4031, %v4031
      %v4034 = vrot.slane %v3898, 7
      %v4035 = vrot.slane %v4034, 2
      %v4036 = vrot.slane %v3906, 7
      %v4037 = vsel %vm1860, %v4035, %v4036
      %v4038 = vrot.slane %v4036, 2
      %v4039 = vrot.slane %v3905, 7
      %v4040 = vsel %vm1860, %v4038, %v4039
      %v4041 = vrot.slane %v4039, 2
      %v4042 = vrot.slane %v3907, 7
      %v4043 = vsel %vm1860, %v4041, %v4042
      %v4044 = vrot.slane %v4042, 2
      %v4045 = vrot.slane %v3916, 7
      %v4046 = vsel %vm1860, %v4044, %v4045
      %v4047 = vrot.slane %v4045, 2
      %v4048 = vrot.slane %v3924, 7
      %v4049 = vsel %vm1860, %v4047, %v4048
      %v4050 = vrot.slane %v4048, 2
      %v4051 = vrot.slane %v3923, 7
      %v4052 = vsel %vm1860, %v4050, %v4051
      %v4053 = vrot.slane %v4051, 2
      %v4054 = vrot.slane %v3925, 7
      %v4055 = vsel %vm1860, %v4053, %v4054
      %v4056 = vrot.slane %v3934, 7
      %v4057 = vrot.slane %v4056, 2
      %v4058 = vrot.slane %v3942, 7
      %v4059 = vsel %vm1860, %v4057, %v4058
      %v4060 = vrot.slane %v4058, 2
      %v4061 = vrot.slane %v3941, 7
      %v4062 = vsel %vm1860, %v4060, %v4061
      %v4063 = vrot.slane %v4061, 2
      %v4064 = vrot.slane %v3943, 7
      %v4065 = vsel %vm1860, %v4063, %v4064
      %v4066 = vrot.slane %v4064, 2
      %v4067 = vrot.slane %v3952, 7
      %v4068 = vsel %vm1860, %v4066, %v4067
      %v4069 = vrot.slane %v4067, 2
      %v4070 = vrot.slane %v3960, 7
      %v4071 = vsel %vm1860, %v4069, %v4070
      %v4072 = vrot.slane %v4070, 2
      %v4073 = vrot.slane %v3959, 7
      %v4074 = vsel %vm1860, %v4072, %v4073
      %v4075 = vrot.slane %v4073, 2
      %v4076 = vrot.slane %v3961, 7
      %v4077 = vsel %vm1860, %v4075, %v4076
      %v4078 = vrot.slane %v3970, 7
      %v4079 = vrot.slane %v4078, 2
      %v4080 = vrot.slane %v3978, 7
      %v4081 = vsel %vm1860, %v4079, %v4080
      %v4082 = vrot.slane %v4080, 2
      %v4083 = vrot.slane %v3977, 7
      %v4084 = vsel %vm1860, %v4082, %v4083
      %v4085 = vrot.slane %v4083, 2
      %v4086 = vrot.slane %v3979, 7
      %v4087 = vsel %vm1860, %v4085, %v4086
      %v4088 = vrot.slane %v4086, 2
      %v4089 = vrot.slane %v3988, 7
      %v4090 = vsel %vm1860, %v4088, %v4089
      %v4091 = vrot.slane %v4089, 2
      %v4092 = vrot.slane %v3996, 7
      %v4093 = vsel %vm1860, %v4091, %v4092
      %v4094 = vrot.slane %v4092, 2
      %v4095 = vrot.slane %v3995, 7
      %v4096 = vsel %vm1860, %v4094, %v4095
      %v4097 = vrot.slane %v4095, 2
      %v4098 = vrot.slane %v3997, 7
      %v4099 = vsel %vm1860, %v4097, %v4098
      %v4100 = vrot.slane %v4006, 7
      %v4101 = vrot.slane %v4100, 2
      %v4102 = vrot.slane %v4014, 7
      %v4103 = vsel %vm1860, %v4101, %v4102
      %v4104 = vrot.slane %v4102, 2
      %v4105 = vrot.slane %v4013, 7
      %v4106 = vsel %vm1860, %v4104, %v4105
      %v4107 = vrot.slane %v4105, 2
      %v4108 = vrot.slane %v4015, 7
      %v4109 = vsel %vm1860, %v4107, %v4108
      %v4110 = vrot.slane %v4108, 2
      %v4111 = vrot.slane %v4024, 7
      %v4112 = vsel %vm1860, %v4110, %v4111
      %v4113 = vrot.slane %v4111, 2
      %v4114 = vrot.slane %v4032, 7
      %v4115 = vsel %vm1860, %v4113, %v4114
      %v4116 = vrot.slane %v4114, 2
      %v4117 = vrot.slane %v4031, 7
      %v4118 = vsel %vm1860, %v4116, %v4117
      %v4119 = vrot.slane %v4117, 2
      %v4120 = vrot.slane %v4033, 7
      %v4121 = vsel %vm1860, %v4119, %v4120
      %s4122 = scalar_lea.vmem %s3, 1024
      %v4123 = vld [vmem:[%s4122] sm:$0xff]
      %v4124 = vld [vmem:[%s4122 + $0x8] sm:$0xff]
      %v4125 = vld [vmem:[%s4122 + $0x10] sm:$0xff]
      %v4126 = vld [vmem:[%s4122 + $0x18] sm:$0xff]
      %v4127 = vld [vmem:[%s4122 + $0x20] sm:$0xff]
      %v4128 = vld [vmem:[%s4122 + $0x28] sm:$0xff]
      %v4129 = vld [vmem:[%s4122 + $0x30] sm:$0xff]
      %v4130 = vld [vmem:[%s4122 + $0x38] sm:$0xff]
      %v4131 = vld [vmem:[%s4122 + $0x40] sm:$0xff]
      %v4132 = vld [vmem:[%s4122 + $0x48] sm:$0xff]
      %v4133 = vld [vmem:[%s4122 + $0x50] sm:$0xff]
      %v4134 = vld [vmem:[%s4122 + $0x58] sm:$0xff]
      %v4135 = vld [vmem:[%s4122 + $0x60] sm:$0xff]
      %v4136 = vld [vmem:[%s4122 + $0x68] sm:$0xff]
      %v4137 = vld [vmem:[%s4122 + $0x70] sm:$0xff]
      %v4138 = vld [vmem:[%s4122 + $0x78] sm:$0xff]
      %v4139 = vld [vmem:[%s4122 + $0x80] sm:$0xff]
      %v4140 = vld [vmem:[%s4122 + $0x88] sm:$0xff]
      %v4141 = vld [vmem:[%s4122 + $0x90] sm:$0xff]
      %v4142 = vld [vmem:[%s4122 + $0x98] sm:$0xff]
      %v4143 = vld [vmem:[%s4122 + $0xa0] sm:$0xff]
      %v4144 = vld [vmem:[%s4122 + $0xa8] sm:$0xff]
      %v4145 = vld [vmem:[%s4122 + $0xb0] sm:$0xff]
      %v4146 = vld [vmem:[%s4122 + $0xb8] sm:$0xff]
      %v4147 = vld [vmem:[%s4122 + $0xc0] sm:$0xff]
      %v4148 = vld [vmem:[%s4122 + $0xc8] sm:$0xff]
      %v4149 = vld [vmem:[%s4122 + $0xd0] sm:$0xff]
      %v4150 = vld [vmem:[%s4122 + $0xd8] sm:$0xff]
      %v4151 = vld [vmem:[%s4122 + $0xe0] sm:$0xff]
      %v4152 = vld [vmem:[%s4122 + $0xe8] sm:$0xff]
      %v4153 = vld [vmem:[%s4122 + $0xf0] sm:$0xff]
      %v4154 = vld [vmem:[%s4122 + $0xf8] sm:$0xff]
      %v4155 = vcombine.low %v4037, %v4040
      %v4156 = vcombine.low %v4043, %v4046
      %v4158 = vunpack.c.l.s4 1983009808
      %v4159 = vunpack.c.0.s8 %v4158
      %v4160 = vlaneseq
      %v4161 = vshrl.u32 %v4160, 7
      %v4162 = vsub.s32 %v4159, %v4161
      %v4163 = vrot.slane %v4155, %v4162
      %v4165 = vunpack.c.l.s4 1983009808
      %v4166 = vunpack.c.0.s8 %v4165
      %v4167 = vlaneseq
      %v4168 = vshrl.u32 %v4167, 7
      %v4169 = vsub.s32 %v4166, %v4168
      %v4170 = vrot.slane %v4156, %v4169
      %v4171 = vcombine.low %v4163, %v4170
      %v4172 = vcombine.high %v4163, %v4170
      %v4173 = vcombine.low %v4049, %v4052
      %v4174 = vcombine.low %v4055, %v4059
      %v4176 = vunpack.c.l.s4 1983009808
      %v4177 = vunpack.c.0.s8 %v4176
      %v4178 = vlaneseq
      %v4179 = vshrl.u32 %v4178, 7
      %v4180 = vsub.s32 %v4177, %v4179
      %v4181 = vrot.slane %v4173, %v4180
      %v4183 = vunpack.c.l.s4 1983009808
      %v4184 = vunpack.c.0.s8 %v4183
      %v4185 = vlaneseq
      %v4186 = vshrl.u32 %v4185, 7
      %v4187 = vsub.s32 %v4184, %v4186
      %v4188 = vrot.slane %v4174, %v4187
      %v4189 = vcombine.low %v4181, %v4188
      %v4190 = vcombine.high %v4181, %v4188
      %v4191 = vcombine.low %v4062, %v4065
      %v4192 = vcombine.low %v4068, %v4071
      %v4194 = vunpack.c.l.s4 1983009808
      %v4195 = vunpack.c.0.s8 %v4194
      %v4196 = vlaneseq
      %v4197 = vshrl.u32 %v4196, 7
      %v4198 = vsub.s32 %v4195, %v4197
      %v4199 = vrot.slane %v4191, %v4198
      %v4201 = vunpack.c.l.s4 1983009808
      %v4202 = vunpack.c.0.s8 %v4201
      %v4203 = vlaneseq
      %v4204 = vshrl.u32 %v4203, 7
      %v4205 = vsub.s32 %v4202, %v4204
      %v4206 = vrot.slane %v4192, %v4205
      %v4207 = vcombine.low %v4199, %v4206
      %v4208 = vcombine.high %v4199, %v4206
      %v4209 = vcombine.low %v4074, %v4077
      %v4210 = vcombine.low %v4081, %v4084
      %v4212 = vunpack.c.l.s4 1983009808
      %v4213 = vunpack.c.0.s8 %v4212
      %v4214 = vlaneseq
      %v4215 = vshrl.u32 %v4214, 7
      %v4216 = vsub.s32 %v4213, %v4215
      %v4217 = vrot.slane %v4209, %v4216
      %v4219 = vunpack.c.l.s4 1983009808
      %v4220 = vunpack.c.0.s8 %v4219
      %v4221 = vlaneseq
      %v4222 = vshrl.u32 %v4221, 7
      %v4223 = vsub.s32 %v4220, %v4222
      %v4224 = vrot.slane %v4210, %v4223
      %v4225 = vcombine.low %v4217, %v4224
      %v4226 = vcombine.high %v4217, %v4224
      %v4227 = vcombine.low %v4087, %v4090
      %v4228 = vcombine.low %v4093, %v4096
      %v4230 = vunpack.c.l.s4 1983009808
      %v4231 = vunpack.c.0.s8 %v4230
      %v4232 = vlaneseq
      %v4233 = vshrl.u32 %v4232, 7
      %v4234 = vsub.s32 %v4231, %v4233
      %v4235 = vrot.slane %v4227, %v4234
      %v4237 = vunpack.c.l.s4 1983009808
      %v4238 = vunpack.c.0.s8 %v4237
      %v4239 = vlaneseq
      %v4240 = vshrl.u32 %v4239, 7
      %v4241 = vsub.s32 %v4238, %v4240
      %v4242 = vrot.slane %v4228, %v4241
      %v4243 = vcombine.low %v4235, %v4242
      %v4244 = vcombine.high %v4235, %v4242
      %v4245 = vcombine.low %v4099, %v4103
      %v4246 = vcombine.low %v4106, %v4109
      %v4248 = vunpack.c.l.s4 1983009808
      %v4249 = vunpack.c.0.s8 %v4248
      %v4250 = vlaneseq
      %v4251 = vshrl.u32 %v4250, 7
      %v4252 = vsub.s32 %v4249, %v4251
      %v4253 = vrot.slane %v4245, %v4252
      %v4255 = vunpack.c.l.s4 1983009808
      %v4256 = vunpack.c.0.s8 %v4255
      %v4257 = vlaneseq
      %v4258 = vshrl.u32 %v4257, 7
      %v4259 = vsub.s32 %v4256, %v4258
      %v4260 = vrot.slane %v4246, %v4259
      %v4261 = vcombine.low %v4253, %v4260
      %v4262 = vcombine.high %v4253, %v4260
      %v4263 = vcombine.low %v4112, %v4115
      %v4264 = vcombine.low %v4118, %v4121
      %v4266 = vunpack.c.l.s4 1983009808
      %v4267 = vunpack.c.0.s8 %v4266
      %v4268 = vlaneseq
      %v4269 = vshrl.u32 %v4268, 7
      %v4270 = vsub.s32 %v4267, %v4269
      %v4271 = vrot.slane %v4263, %v4270
      %v4273 = vunpack.c.l.s4 1983009808
      %v4274 = vunpack.c.0.s8 %v4273
      %v4275 = vlaneseq
      %v4276 = vshrl.u32 %v4275, 7
      %v4277 = vsub.s32 %v4274, %v4276
      %v4278 = vrot.slane %v4264, %v4277
      %v4279 = vcombine.low %v4271, %v4278
      %v4280 = vcombine.high %v4271, %v4278
      %v4327 = vunpack.c.l.b16 %v4123
      %v4328 = vunpack.c.h.b16 %v4123
      %v4329 = vunpack.c.l.b16 %v4124
      %v4330 = vunpack.c.h.b16 %v4124
      %v4331 = vunpack.c.l.b16 %v4125
      %v4332 = vunpack.c.h.b16 %v4125
      %v4333 = vunpack.c.l.b16 %v4126
      %v4334 = vunpack.c.h.b16 %v4126
      %v4335 = vunpack.c.l.b16 %v4127
      %v4336 = vunpack.c.h.b16 %v4127
      %v4337 = vunpack.c.l.b16 %v4128
      %v4338 = vunpack.c.h.b16 %v4128
      %v4339 = vunpack.c.l.b16 %v4129
      %v4340 = vunpack.c.h.b16 %v4129
      %v4341 = vunpack.c.l.b16 %v4130
      %v4342 = vunpack.c.h.b16 %v4130
      %v4343 = vunpack.c.l.b16 %v4131
      %v4344 = vunpack.c.h.b16 %v4131
      %v4345 = vunpack.c.l.b16 %v4132
      %v4346 = vunpack.c.h.b16 %v4132
      %v4347 = vunpack.c.l.b16 %v4133
      %v4348 = vunpack.c.h.b16 %v4133
      %v4349 = vunpack.c.l.b16 %v4134
      %v4350 = vunpack.c.h.b16 %v4134
      %v4351 = vunpack.c.l.b16 %v4135
      %v4352 = vunpack.c.h.b16 %v4135
      %v4353 = vunpack.c.l.b16 %v4136
      %v4354 = vunpack.c.h.b16 %v4136
      %v4355 = vunpack.c.l.b16 %v4137
      %v4356 = vunpack.c.h.b16 %v4137
      %v4357 = vunpack.c.l.b16 %v4138
      %v4358 = vunpack.c.h.b16 %v4138
      %v4359 = vunpack.c.l.b16 %v4139
      %v4360 = vunpack.c.h.b16 %v4139
      %v4361 = vunpack.c.l.b16 %v4140
      %v4362 = vunpack.c.h.b16 %v4140
      %v4363 = vunpack.c.l.b16 %v4141
      %v4364 = vunpack.c.h.b16 %v4141
      %v4365 = vunpack.c.l.b16 %v4142
      %v4366 = vunpack.c.h.b16 %v4142
      %v4367 = vunpack.c.l.b16 %v4143
      %v4368 = vunpack.c.h.b16 %v4143
      %v4369 = vunpack.c.l.b16 %v4144
      %v4370 = vunpack.c.h.b16 %v4144
      %v4371 = vunpack.c.l.b16 %v4145
      %v4372 = vunpack.c.h.b16 %v4145
      %v4373 = vunpack.c.l.b16 %v4146
      %v4374 = vunpack.c.h.b16 %v4146
      %v4375 = vunpack.c.l.b16 %v4147
      %v4376 = vunpack.c.h.b16 %v4147
      %v4377 = vunpack.c.l.b16 %v4148
      %v4378 = vunpack.c.h.b16 %v4148
      %v4379 = vunpack.c.l.b16 %v4149
      %v4380 = vunpack.c.h.b16 %v4149
      %v4381 = vunpack.c.l.b16 %v4150
      %v4382 = vunpack.c.h.b16 %v4150
      %v4383 = vunpack.c.l.b16 %v4151
      %v4384 = vunpack.c.h.b16 %v4151
      %v4385 = vunpack.c.l.b16 %v4152
      %v4386 = vunpack.c.h.b16 %v4152
      %v4387 = vunpack.c.l.b16 %v4153
      %v4388 = vunpack.c.h.b16 %v4153
      %v4389 = vunpack.c.l.b16 %v4154
      %v4390 = vunpack.c.h.b16 %v4154
      %v4391 = vpack.c.b16 %v4329, %v4327
      %v4392 = vpack.c.b16 %v4330, %v4328
      %v4393 = vpack.c.b16 %v4333, %v4331
      %v4394 = vpack.c.b16 %v4334, %v4332
      %v4395 = vpack.c.b16 %v4337, %v4335
      %v4396 = vpack.c.b16 %v4338, %v4336
      %v4397 = vpack.c.b16 %v4341, %v4339
      %v4398 = vpack.c.b16 %v4342, %v4340
      %v4399 = vpack.c.b16 %v4345, %v4343
      %v4400 = vpack.c.b16 %v4346, %v4344
      %v4401 = vpack.c.b16 %v4349, %v4347
      %v4402 = vpack.c.b16 %v4350, %v4348
      %v4403 = vpack.c.b16 %v4353, %v4351
      %v4404 = vpack.c.b16 %v4354, %v4352
      %v4405 = vpack.c.b16 %v4357, %v4355
      %v4406 = vpack.c.b16 %v4358, %v4356
      %v4407 = vpack.c.b16 %v4361, %v4359
      %v4408 = vpack.c.b16 %v4362, %v4360
      %v4409 = vpack.c.b16 %v4365, %v4363
      %v4410 = vpack.c.b16 %v4366, %v4364
      %v4411 = vpack.c.b16 %v4369, %v4367
      %v4412 = vpack.c.b16 %v4370, %v4368
      %v4413 = vpack.c.b16 %v4373, %v4371
      %v4414 = vpack.c.b16 %v4374, %v4372
      %v4415 = vpack.c.b16 %v4377, %v4375
      %v4416 = vpack.c.b16 %v4378, %v4376
      %v4417 = vpack.c.b16 %v4381, %v4379
      %v4418 = vpack.c.b16 %v4382, %v4380
      %v4419 = vpack.c.b16 %v4385, %v4383
      %v4420 = vpack.c.b16 %v4386, %v4384
      %v4421 = vpack.c.b16 %v4389, %v4387
      %v4422 = vpack.c.b16 %v4390, %v4388
      %4455 = vmatprep.subr.bf16.mxu0 %v4392
      %4456 = vmatpush1.bf16.msra.mxu0 %v4391
      %4457 = vmatprep.subr.bf16.mxu0 %v4394
      %4458 = vmatpush1.bf16.msra.mxu0 %v4393
      %4459 = vmatprep.subr.bf16.mxu0 %v4396
      %4460 = vmatpush1.bf16.msra.mxu0 %v4395
      %4461 = vmatprep.subr.bf16.mxu0 %v4398
      %4462 = vmatpush1.bf16.msra.mxu0 %v4397
      %4463 = vmatprep.subr.bf16.mxu0 %v4400
      %4464 = vmatpush1.bf16.msra.mxu0 %v4399
      %4465 = vmatprep.subr.bf16.mxu0 %v4402
      %4466 = vmatpush1.bf16.msra.mxu0 %v4401
      %4467 = vmatprep.subr.bf16.mxu0 %v4404
      %4468 = vmatpush1.bf16.msra.mxu0 %v4403
      %4469 = vmatprep.subr.bf16.mxu0 %v4406
      %4470 = vmatpush1.bf16.msra.mxu0 %v4405
      %4471 = vmatprep.subr.bf16.mxu0 %v4408
      %4472 = vmatpush1.bf16.msra.mxu0 %v4407
      %4473 = vmatprep.subr.bf16.mxu0 %v4410
      %4474 = vmatpush1.bf16.msra.mxu0 %v4409
      %4475 = vmatprep.subr.bf16.mxu0 %v4412
      %4476 = vmatpush1.bf16.msra.mxu0 %v4411
      %4477 = vmatprep.subr.bf16.mxu0 %v4414
      %4478 = vmatpush1.bf16.msra.mxu0 %v4413
      %4479 = vmatprep.subr.bf16.mxu0 %v4416
      %4480 = vmatpush1.bf16.msra.mxu0 %v4415
      %4481 = vmatprep.subr.bf16.mxu0 %v4418
      %4482 = vmatpush1.bf16.msra.mxu0 %v4417
      %4483 = vmatprep.subr.bf16.mxu0 %v4420
      %4484 = vmatpush1.bf16.msra.mxu0 %v4419
      %4485 = vmatprep.subr.bf16.mxu0 %v4422
      %4486 = vmatpush1.bf16.msra.mxu0 %v4421
      %4487 = vmatprep.mubr.bf16.mxu0 %v4172
      %4488 = vmatmul.mubr.bf16.gmra.mrb[0].mxu0 %v4171
      %v4489 = vpop.f32.mrb[0].mxu0
      %v4490 = vadd.f32 0.0, %v4489
      %v4491 = vpop.f32.mrb[0].mxu0
      %v4492 = vadd.f32 0.0, %v4491
      %v4493 = vpop.f32.mrb[0].mxu0
      %v4494 = vadd.f32 0.0, %v4493
      %v4495 = vpop.f32.mrb[0].mxu0
      %v4496 = vadd.f32 0.0, %v4495
      %4497 = vmatprep.mubr.bf16.mxu0 %v4190
      %4498 = vmatmul.mubr.bf16.gmra.mrb[0].mxu0 %v4189
      %v4499 = vpop.f32.mrb[0].mxu0
      %v4500 = vadd.f32 0.0, %v4499
      %v4501 = vpop.f32.mrb[0].mxu0
      %v4502 = vadd.f32 0.0, %v4501
      %v4503 = vpop.f32.mrb[0].mxu0
      %v4504 = vadd.f32 0.0, %v4503
      %v4505 = vpop.f32.mrb[0].mxu0
      %v4506 = vadd.f32 0.0, %v4505
      %4507 = vmatprep.mubr.bf16.mxu0 %v4208
      %4508 = vmatmul.mubr.bf16.gmra.mrb[0].mxu0 %v4207
      %v4509 = vpop.f32.mrb[0].mxu0
      %v4510 = vadd.f32 0.0, %v4509
      %v4511 = vpop.f32.mrb[0].mxu0
      %v4512 = vadd.f32 0.0, %v4511
      %v4513 = vpop.f32.mrb[0].mxu0
      %v4514 = vadd.f32 0.0, %v4513
      %v4515 = vpop.f32.mrb[0].mxu0
      %v4516 = vadd.f32 0.0, %v4515
      %4517 = vmatprep.mubr.bf16.mxu0 %v4226
      %4518 = vmatmul.mubr.bf16.gmra.mrb[0].mxu0 %v4225
      %v4519 = vpop.f32.mrb[0].mxu0
      %v4520 = vadd.f32 0.0, %v4519
      %v4521 = vpop.f32.mrb[0].mxu0
      %v4522 = vadd.f32 0.0, %v4521
      %v4523 = vpop.f32.mrb[0].mxu0
      %v4524 = vadd.f32 0.0, %v4523
      %v4525 = vpop.f32.mrb[0].mxu0
      %v4526 = vadd.f32 0.0, %v4525
      %4527 = vmatprep.mubr.bf16.mxu0 %v4244
      %4528 = vmatmul.mubr.bf16.gmra.mrb[0].mxu0 %v4243
      %v4529 = vpop.f32.mrb[0].mxu0
      %v4530 = vadd.f32 0.0, %v4529
      %v4531 = vpop.f32.mrb[0].mxu0
      %v4532 = vadd.f32 0.0, %v4531
      %v4533 = vpop.f32.mrb[0].mxu0
      %v4534 = vadd.f32 0.0, %v4533
      %v4535 = vpop.f32.mrb[0].mxu0
      %v4536 = vadd.f32 0.0, %v4535
      %4537 = vmatprep.mubr.bf16.mxu0 %v4262
      %4538 = vmatmul.mubr.bf16.gmra.mrb[0].mxu0 %v4261
      %v4539 = vpop.f32.mrb[0].mxu0
      %v4540 = vadd.f32 0.0, %v4539
      %v4541 = vpop.f32.mrb[0].mxu0
      %v4542 = vadd.f32 0.0, %v4541
      %v4543 = vpop.f32.mrb[0].mxu0
      %v4544 = vadd.f32 0.0, %v4543
      %v4545 = vpop.f32.mrb[0].mxu0
      %v4546 = vadd.f32 0.0, %v4545
      %4547 = vmatprep.mubr.bf16.mxu0 %v4280
      %4548 = vmatmul.mubr.bf16.gmra.mrb[0].mxu0 %v4279
      %v4549 = vpop.f32.mrb[0].mxu0
      %v4550 = vadd.f32 0.0, %v4549
      %v4551 = vpop.f32.mrb[0].mxu0
      %v4552 = vadd.f32 0.0, %v4551
      %v4553 = vpop.f32.mrb[0].mxu0
      %v4554 = vadd.f32 0.0, %v4553
      %v4555 = vpop.f32.mrb[0].mxu0
      %v4556 = vadd.f32 0.0, %v4555
      %4557 = vdwg.mxu0
      %v4558 = vld [vmem:[#allocation3] sm:$0xff]
      %v4559 = vld [vmem:[#allocation3 + $0x8] sm:$0xff]
      %v4560 = vld [vmem:[#allocation3 + $0x10] sm:$0xff]
      %v4561 = vld [vmem:[#allocation3 + $0x18] sm:$0xff]
      %v4562 = vld [vmem:[#allocation3 + $0x20] sm:$0xff]
      %v4563 = vld [vmem:[#allocation3 + $0x28] sm:$0xff]
      %v4564 = vld [vmem:[#allocation3 + $0x30] sm:$0xff]
      %v4565 = vld [vmem:[#allocation3 + $0x38] sm:$0xff]
      %v4566 = vld [vmem:[#allocation3 + $0x40] sm:$0xff]
      %v4567 = vld [vmem:[#allocation3 + $0x48] sm:$0xff]
      %v4568 = vld [vmem:[#allocation3 + $0x50] sm:$0xff]
      %v4569 = vld [vmem:[#allocation3 + $0x58] sm:$0xff]
      %v4570 = vld [vmem:[#allocation3 + $0x60] sm:$0xff]
      %v4571 = vld [vmem:[#allocation3 + $0x68] sm:$0xff]
      %v4572 = vld [vmem:[#allocation3 + $0x70] sm:$0xff]
      %v4573 = vld [vmem:[#allocation3 + $0x78] sm:$0xff]
      %v4574 = vld [vmem:[#allocation3 + $0x80] sm:$0xff]
      %v4575 = vld [vmem:[#allocation3 + $0x88] sm:$0xff]
      %v4576 = vld [vmem:[#allocation3 + $0x90] sm:$0xff]
      %v4577 = vld [vmem:[#allocation3 + $0x98] sm:$0xff]
      %v4578 = vld [vmem:[#allocation3 + $0xa0] sm:$0xff]
      %v4579 = vld [vmem:[#allocation3 + $0xa8] sm:$0xff]
      %v4580 = vld [vmem:[#allocation3 + $0xb0] sm:$0xff]
      %v4581 = vld [vmem:[#allocation3 + $0xb8] sm:$0xff]
      %v4582 = vld [vmem:[#allocation3 + $0xc0] sm:$0xff]
      %v4583 = vld [vmem:[#allocation3 + $0xc8] sm:$0xff]
      %v4584 = vld [vmem:[#allocation3 + $0xd0] sm:$0xff]
      %v4585 = vld [vmem:[#allocation3 + $0xd8] sm:$0xff]
      %v4586 = vadd.f32 %v4558, %v4490
      %v4587 = vadd.f32 %v4559, %v4492
      %v4588 = vadd.f32 %v4560, %v4494
      %v4589 = vadd.f32 %v4561, %v4496
      %v4590 = vadd.f32 %v4562, %v4500
      %v4591 = vadd.f32 %v4563, %v4502
      %v4592 = vadd.f32 %v4564, %v4504
      %v4593 = vadd.f32 %v4565, %v4506
      %v4594 = vadd.f32 %v4566, %v4510
      %v4595 = vadd.f32 %v4567, %v4512
      %v4596 = vadd.f32 %v4568, %v4514
      %v4597 = vadd.f32 %v4569, %v4516
      %v4598 = vadd.f32 %v4570, %v4520
      %v4599 = vadd.f32 %v4571, %v4522
      %v4600 = vadd.f32 %v4572, %v4524
      %v4601 = vadd.f32 %v4573, %v4526
      %v4602 = vadd.f32 %v4574, %v4530
      %v4603 = vadd.f32 %v4575, %v4532
      %v4604 = vadd.f32 %v4576, %v4534
      %v4605 = vadd.f32 %v4577, %v4536
      %v4606 = vadd.f32 %v4578, %v4540
      %v4607 = vadd.f32 %v4579, %v4542
      %v4608 = vadd.f32 %v4580, %v4544
      %v4609 = vadd.f32 %v4581, %v4546
      %v4610 = vadd.f32 %v4582, %v4550
      %v4611 = vadd.f32 %v4583, %v4552
      %v4612 = vadd.f32 %v4584, %v4554
      %v4613 = vadd.f32 %v4585, %v4556
      %4614 = vst [vmem:[#allocation3] sm:$0xff] %v4586
      %4615 = vst [vmem:[#allocation3 + $0x8] sm:$0xff] %v4587
      %4616 = vst [vmem:[#allocation3 + $0x10] sm:$0xff] %v4588
      %4617 = vst [vmem:[#allocation3 + $0x18] sm:$0xff] %v4589
      %4618 = vst [vmem:[#allocation3 + $0x20] sm:$0xff] %v4590
      %4619 = vst [vmem:[#allocation3 + $0x28] sm:$0xff] %v4591
      %4620 = vst [vmem:[#allocation3 + $0x30] sm:$0xff] %v4592
      %4621 = vst [vmem:[#allocation3 + $0x38] sm:$0xff] %v4593
      %4622 = vst [vmem:[#allocation3 + $0x40] sm:$0xff] %v4594
      %4623 = vst [vmem:[#allocation3 + $0x48] sm:$0xff] %v4595
      %4624 = vst [vmem:[#allocation3 + $0x50] sm:$0xff] %v4596
      %4625 = vst [vmem:[#allocation3 + $0x58] sm:$0xff] %v4597
      %4626 = vst [vmem:[#allocation3 + $0x60] sm:$0xff] %v4598
      %4627 = vst [vmem:[#allocation3 + $0x68] sm:$0xff] %v4599
      %4628 = vst [vmem:[#allocation3 + $0x70] sm:$0xff] %v4600
      %4629 = vst [vmem:[#allocation3 + $0x78] sm:$0xff] %v4601
      %4630 = vst [vmem:[#allocation3 + $0x80] sm:$0xff] %v4602
      %4631 = vst [vmem:[#allocation3 + $0x88] sm:$0xff] %v4603
      %4632 = vst [vmem:[#allocation3 + $0x90] sm:$0xff] %v4604
      %4633 = vst [vmem:[#allocation3 + $0x98] sm:$0xff] %v4605
      %4634 = vst [vmem:[#allocation3 + $0xa0] sm:$0xff] %v4606
      %4635 = vst [vmem:[#allocation3 + $0xa8] sm:$0xff] %v4607
      %4636 = vst [vmem:[#allocation3 + $0xb0] sm:$0xff] %v4608
      %4637 = vst [vmem:[#allocation3 + $0xb8] sm:$0xff] %v4609
      %4638 = vst [vmem:[#allocation3 + $0xc0] sm:$0xff] %v4610
      %4639 = vst [vmem:[#allocation3 + $0xc8] sm:$0xff] %v4611
      %4640 = vst [vmem:[#allocation3 + $0xd0] sm:$0xff] %v4612
      %4641 = vst [vmem:[#allocation3 + $0xd8] sm:$0xff] %v4613
      %v4642 = vld [vmem:[%s3165] sm:$0xfc]
      %v4643 = vld [vmem:[%s3165 + $0x8] sm:$0xfc]
      %v4644 = vld [vmem:[%s3165 + $0x10] sm:$0xff]
      %v4645 = vld [vmem:[%s3165 + $0x18] sm:$0xff]
      %v4646 = vld [vmem:[%s3165 + $0x20] sm:$0xfc]
      %v4647 = vld [vmem:[%s3165 + $0x28] sm:$0xfc]
      %v4648 = vld [vmem:[%s3165 + $0x30] sm:$0xff]
      %v4649 = vld [vmem:[%s3165 + $0x38] sm:$0xff]
      %v4650 = vld [vmem:[%s3165 + $0x40] sm:$0xfc]
      %v4651 = vld [vmem:[%s3165 + $0x48] sm:$0xfc]
      %v4652 = vld [vmem:[%s3165 + $0x50] sm:$0xff]
      %v4653 = vld [vmem:[%s3165 + $0x58] sm:$0xff]
      %v4654 = vld [vmem:[%s3165 + $0x60] sm:$0xfc]
      %v4655 = vld [vmem:[%s3165 + $0x68] sm:$0xfc]
      %v4656 = vld [vmem:[%s3165 + $0x70] sm:$0xff]
      %v4657 = vld [vmem:[%s3165 + $0x78] sm:$0xff]
      %v4674 = vcombine.low %v4642, %v4643
      %v4675 = vcombine.high %v4642, %v4643
      %v4677 = vunpack.c.l.s4 1983009808
      %v4678 = vunpack.c.0.s8 %v4677
      %v4679 = vlaneseq
      %v4680 = vshrl.u32 %v4679, 7
      %v4681 = vsub.s32 %v4678, %v4680
      %v4682 = vrot.slane %v4674, %v4681
      %v4684 = vunpack.c.l.s4 1983009808
      %v4685 = vunpack.c.0.s8 %v4684
      %v4686 = vlaneseq
      %v4687 = vshrl.u32 %v4686, 7
      %v4688 = vsub.s32 %v4685, %v4687
      %v4689 = vrot.slane %v4675, %v4688
      %v4690 = vcombine.high %v4682, %v4682
      %v4691 = vcombine.high %v4689, %v4689
      %v4692 = vcombine.low %v4644, %v4645
      %v4693 = vcombine.high %v4644, %v4645
      %v4695 = vunpack.c.l.s4 1983009808
      %v4696 = vunpack.c.0.s8 %v4695
      %v4697 = vlaneseq
      %v4698 = vshrl.u32 %v4697, 7
      %v4699 = vsub.s32 %v4696, %v4698
      %v4700 = vrot.slane %v4692, %v4699
      %v4702 = vunpack.c.l.s4 1983009808
      %v4703 = vunpack.c.0.s8 %v4702
      %v4704 = vlaneseq
      %v4705 = vshrl.u32 %v4704, 7
      %v4706 = vsub.s32 %v4703, %v4705
      %v4707 = vrot.slane %v4693, %v4706
      %v4708 = vcombine.high %v4700, %v4700
      %v4709 = vcombine.high %v4707, %v4707
      %v4710 = vcombine.low %v4646, %v4647
      %v4711 = vcombine.high %v4646, %v4647
      %v4713 = vunpack.c.l.s4 1983009808
      %v4714 = vunpack.c.0.s8 %v4713
      %v4715 = vlaneseq
      %v4716 = vshrl.u32 %v4715, 7
      %v4717 = vsub.s32 %v4714, %v4716
      %v4718 = vrot.slane %v4710, %v4717
      %v4720 = vunpack.c.l.s4 1983009808
      %v4721 = vunpack.c.0.s8 %v4720
      %v4722 = vlaneseq
      %v4723 = vshrl.u32 %v4722, 7
      %v4724 = vsub.s32 %v4721, %v4723
      %v4725 = vrot.slane %v4711, %v4724
      %v4726 = vcombine.high %v4718, %v4718
      %v4727 = vcombine.high %v4725, %v4725
      %v4728 = vcombine.low %v4648, %v4649
      %v4729 = vcombine.high %v4648, %v4649
      %v4731 = vunpack.c.l.s4 1983009808
      %v4732 = vunpack.c.0.s8 %v4731
      %v4733 = vlaneseq
      %v4734 = vshrl.u32 %v4733, 7
      %v4735 = vsub.s32 %v4732, %v4734
      %v4736 = vrot.slane %v4728, %v4735
      %v4738 = vunpack.c.l.s4 1983009808
      %v4739 = vunpack.c.0.s8 %v4738
      %v4740 = vlaneseq
      %v4741 = vshrl.u32 %v4740, 7
      %v4742 = vsub.s32 %v4739, %v4741
      %v4743 = vrot.slane %v4729, %v4742
      %v4744 = vcombine.high %v4736, %v4736
      %v4745 = vcombine.high %v4743, %v4743
      %v4746 = vcombine.low %v4650, %v4651
      %v4747 = vcombine.high %v4650, %v4651
      %v4749 = vunpack.c.l.s4 1983009808
      %v4750 = vunpack.c.0.s8 %v4749
      %v4751 = vlaneseq
      %v4752 = vshrl.u32 %v4751, 7
      %v4753 = vsub.s32 %v4750, %v4752
      %v4754 = vrot.slane %v4746, %v4753
      %v4756 = vunpack.c.l.s4 1983009808
      %v4757 = vunpack.c.0.s8 %v4756
      %v4758 = vlaneseq
      %v4759 = vshrl.u32 %v4758, 7
      %v4760 = vsub.s32 %v4757, %v4759
      %v4761 = vrot.slane %v4747, %v4760
      %v4762 = vcombine.high %v4754, %v4754
      %v4763 = vcombine.high %v4761, %v4761
      %v4764 = vcombine.low %v4652, %v4653
      %v4765 = vcombine.high %v4652, %v4653
      %v4767 = vunpack.c.l.s4 1983009808
      %v4768 = vunpack.c.0.s8 %v4767
      %v4769 = vlaneseq
      %v4770 = vshrl.u32 %v4769, 7
      %v4771 = vsub.s32 %v4768, %v4770
      %v4772 = vrot.slane %v4764, %v4771
      %v4774 = vunpack.c.l.s4 1983009808
      %v4775 = vunpack.c.0.s8 %v4774
      %v4776 = vlaneseq
      %v4777 = vshrl.u32 %v4776, 7
      %v4778 = vsub.s32 %v4775, %v4777
      %v4779 = vrot.slane %v4765, %v4778
      %v4780 = vcombine.high %v4772, %v4772
      %v4781 = vcombine.high %v4779, %v4779
      %v4782 = vcombine.low %v4654, %v4655
      %v4783 = vcombine.high %v4654, %v4655
      %v4785 = vunpack.c.l.s4 1983009808
      %v4786 = vunpack.c.0.s8 %v4785
      %v4787 = vlaneseq
      %v4788 = vshrl.u32 %v4787, 7
      %v4789 = vsub.s32 %v4786, %v4788
      %v4790 = vrot.slane %v4782, %v4789
      %v4792 = vunpack.c.l.s4 1983009808
      %v4793 = vunpack.c.0.s8 %v4792
      %v4794 = vlaneseq
      %v4795 = vshrl.u32 %v4794, 7
      %v4796 = vsub.s32 %v4793, %v4795
      %v4797 = vrot.slane %v4783, %v4796
      %v4798 = vcombine.high %v4790, %v4790
      %v4799 = vcombine.high %v4797, %v4797
      %v4800 = vcombine.low %v4656, %v4657
      %v4801 = vcombine.high %v4656, %v4657
      %v4803 = vunpack.c.l.s4 1983009808
      %v4804 = vunpack.c.0.s8 %v4803
      %v4805 = vlaneseq
      %v4806 = vshrl.u32 %v4805, 7
      %v4807 = vsub.s32 %v4804, %v4806
      %v4808 = vrot.slane %v4800, %v4807
      %v4810 = vunpack.c.l.s4 1983009808
      %v4811 = vunpack.c.0.s8 %v4810
      %v4812 = vlaneseq
      %v4813 = vshrl.u32 %v4812, 7
      %v4814 = vsub.s32 %v4811, %v4813
      %v4815 = vrot.slane %v4801, %v4814
      %v4816 = vcombine.high %v4808, %v4808
      %v4817 = vcombine.high %v4815, %v4815
      %s4818 = scalar_lea.vmem %s3, 1280
      %v4819 = vld [vmem:[%s4818] sm:$0xff]
      %v4820 = vld [vmem:[%s4818 + $0x8] sm:$0xff]
      %v4821 = vld [vmem:[%s4818 + $0x10] sm:$0xff]
      %v4822 = vld [vmem:[%s4818 + $0x18] sm:$0xff]
      %v4823 = vld [vmem:[%s4818 + $0x20] sm:$0xff]
      %v4824 = vld [vmem:[%s4818 + $0x28] sm:$0xff]
      %v4825 = vld [vmem:[%s4818 + $0x30] sm:$0xff]
      %v4826 = vld [vmem:[%s4818 + $0x38] sm:$0xff]
      %v4827 = vld [vmem:[%s4818 + $0x40] sm:$0xff]
      %v4828 = vld [vmem:[%s4818 + $0x48] sm:$0xff]
      %v4829 = vld [vmem:[%s4818 + $0x50] sm:$0xff]
      %v4830 = vld [vmem:[%s4818 + $0x58] sm:$0xff]
      %v4831 = vld [vmem:[%s4818 + $0x60] sm:$0xff]
      %v4832 = vld [vmem:[%s4818 + $0x68] sm:$0xff]
      %v4833 = vld [vmem:[%s4818 + $0x70] sm:$0xff]
      %v4834 = vld [vmem:[%s4818 + $0x78] sm:$0xff]
      %v4835 = vld [vmem:[%s4818 + $0x80] sm:$0xff]
      %v4836 = vld [vmem:[%s4818 + $0x88] sm:$0xff]
      %v4837 = vld [vmem:[%s4818 + $0x90] sm:$0xff]
      %v4838 = vld [vmem:[%s4818 + $0x98] sm:$0xff]
      %v4839 = vld [vmem:[%s4818 + $0xa0] sm:$0xff]
      %v4840 = vld [vmem:[%s4818 + $0xa8] sm:$0xff]
      %v4841 = vld [vmem:[%s4818 + $0xb0] sm:$0xff]
      %v4842 = vld [vmem:[%s4818 + $0xb8] sm:$0xff]
      %v4843 = vld [vmem:[%s4818 + $0xc0] sm:$0xff]
      %v4844 = vld [vmem:[%s4818 + $0xc8] sm:$0xff]
      %v4845 = vld [vmem:[%s4818 + $0xd0] sm:$0xff]
      %v4846 = vld [vmem:[%s4818 + $0xd8] sm:$0xff]
      %v4847 = vld [vmem:[%s4818 + $0xe0] sm:$0xff]
      %v4848 = vld [vmem:[%s4818 + $0xe8] sm:$0xff]
      %v4849 = vld [vmem:[%s4818 + $0xf0] sm:$0xff]
      %v4850 = vld [vmem:[%s4818 + $0xf8] sm:$0xff]
      %v4851 = vcombine.low %v4690, %v4689
      %v4852 = vcombine.low %v4691, %v4700
      %v4854 = vunpack.c.l.s4 1983009808
      %v4855 = vunpack.c.0.s8 %v4854
      %v4856 = vlaneseq
      %v4857 = vshrl.u32 %v4856, 7
      %v4858 = vsub.s32 %v4855, %v4857
      %v4859 = vrot.slane %v4851, %v4858
      %v4861 = vunpack.c.l.s4 1983009808
      %v4862 = vunpack.c.0.s8 %v4861
      %v4863 = vlaneseq
      %v4864 = vshrl.u32 %v4863, 7
      %v4865 = vsub.s32 %v4862, %v4864
      %v4866 = vrot.slane %v4852, %v4865
      %v4867 = vcombine.low %v4859, %v4866
      %v4868 = vcombine.high %v4859, %v4866
      %v4869 = vcombine.low %v4708, %v4707
      %v4870 = vcombine.low %v4709, %v4726
      %v4872 = vunpack.c.l.s4 1983009808
      %v4873 = vunpack.c.0.s8 %v4872
      %v4874 = vlaneseq
      %v4875 = vshrl.u32 %v4874, 7
      %v4876 = vsub.s32 %v4873, %v4875
      %v4877 = vrot.slane %v4869, %v4876
      %v4879 = vunpack.c.l.s4 1983009808
      %v4880 = vunpack.c.0.s8 %v4879
      %v4881 = vlaneseq
      %v4882 = vshrl.u32 %v4881, 7
      %v4883 = vsub.s32 %v4880, %v4882
      %v4884 = vrot.slane %v4870, %v4883
      %v4885 = vcombine.low %v4877, %v4884
      %v4886 = vcombine.high %v4877, %v4884
      %v4887 = vcombine.low %v4725, %v4727
      %v4888 = vcombine.low %v4736, %v4744
      %v4890 = vunpack.c.l.s4 1983009808
      %v4891 = vunpack.c.0.s8 %v4890
      %v4892 = vlaneseq
      %v4893 = vshrl.u32 %v4892, 7
      %v4894 = vsub.s32 %v4891, %v4893
      %v4895 = vrot.slane %v4887, %v4894
      %v4897 = vunpack.c.l.s4 1983009808
      %v4898 = vunpack.c.0.s8 %v4897
      %v4899 = vlaneseq
      %v4900 = vshrl.u32 %v4899, 7
      %v4901 = vsub.s32 %v4898, %v4900
      %v4902 = vrot.slane %v4888, %v4901
      %v4903 = vcombine.low %v4895, %v4902
      %v4904 = vcombine.high %v4895, %v4902
      %v4905 = vcombine.low %v4743, %v4745
      %v4906 = vcombine.low %v4762, %v4761
      %v4908 = vunpack.c.l.s4 1983009808
      %v4909 = vunpack.c.0.s8 %v4908
      %v4910 = vlaneseq
      %v4911 = vshrl.u32 %v4910, 7
      %v4912 = vsub.s32 %v4909, %v4911
      %v4913 = vrot.slane %v4905, %v4912
      %v4915 = vunpack.c.l.s4 1983009808
      %v4916 = vunpack.c.0.s8 %v4915
      %v4917 = vlaneseq
      %v4918 = vshrl.u32 %v4917, 7
      %v4919 = vsub.s32 %v4916, %v4918
      %v4920 = vrot.slane %v4906, %v4919
      %v4921 = vcombine.low %v4913, %v4920
      %v4922 = vcombine.high %v4913, %v4920
      %v4923 = vcombine.low %v4763, %v4772
      %v4924 = vcombine.low %v4780, %v4779
      %v4926 = vunpack.c.l.s4 1983009808
      %v4927 = vunpack.c.0.s8 %v4926
      %v4928 = vlaneseq
      %v4929 = vshrl.u32 %v4928, 7
      %v4930 = vsub.s32 %v4927, %v4929
      %v4931 = vrot.slane %v4923, %v4930
      %v4933 = vunpack.c.l.s4 1983009808
      %v4934 = vunpack.c.0.s8 %v4933
      %v4935 = vlaneseq
      %v4936 = vshrl.u32 %v4935, 7
      %v4937 = vsub.s32 %v4934, %v4936
      %v4938 = vrot.slane %v4924, %v4937
      %v4939 = vcombine.low %v4931, %v4938
      %v4940 = vcombine.high %v4931, %v4938
      %v4941 = vcombine.low %v4781, %v4798
      %v4942 = vcombine.low %v4797, %v4799
      %v4944 = vunpack.c.l.s4 1983009808
      %v4945 = vunpack.c.0.s8 %v4944
      %v4946 = vlaneseq
      %v4947 = vshrl.u32 %v4946, 7
      %v4948 = vsub.s32 %v4945, %v4947
      %v4949 = vrot.slane %v4941, %v4948
      %v4951 = vunpack.c.l.s4 1983009808
      %v4952 = vunpack.c.0.s8 %v4951
      %v4953 = vlaneseq
      %v4954 = vshrl.u32 %v4953, 7
      %v4955 = vsub.s32 %v4952, %v4954
      %v4956 = vrot.slane %v4942, %v4955
      %v4957 = vcombine.low %v4949, %v4956
      %v4958 = vcombine.high %v4949, %v4956
      %v4959 = vcombine.low %v4808, %v4816
      %v4960 = vcombine.low %v4815, %v4817
      %v4962 = vunpack.c.l.s4 1983009808
      %v4963 = vunpack.c.0.s8 %v4962
      %v4964 = vlaneseq
      %v4965 = vshrl.u32 %v4964, 7
      %v4966 = vsub.s32 %v4963, %v4965
      %v4967 = vrot.slane %v4959, %v4966
      %v4969 = vunpack.c.l.s4 1983009808
      %v4970 = vunpack.c.0.s8 %v4969
      %v4971 = vlaneseq
      %v4972 = vshrl.u32 %v4971, 7
      %v4973 = vsub.s32 %v4970, %v4972
      %v4974 = vrot.slane %v4960, %v4973
      %v4975 = vcombine.low %v4967, %v4974
      %v4976 = vcombine.high %v4967, %v4974
      %v5023 = vunpack.c.l.b16 %v4819
      %v5024 = vunpack.c.h.b16 %v4819
      %v5025 = vunpack.c.l.b16 %v4820
      %v5026 = vunpack.c.h.b16 %v4820
      %v5027 = vunpack.c.l.b16 %v4821
      %v5028 = vunpack.c.h.b16 %v4821
      %v5029 = vunpack.c.l.b16 %v4822
      %v5030 = vunpack.c.h.b16 %v4822
      %v5031 = vunpack.c.l.b16 %v4823
      %v5032 = vunpack.c.h.b16 %v4823
      %v5033 = vunpack.c.l.b16 %v4824
      %v5034 = vunpack.c.h.b16 %v4824
      %v5035 = vunpack.c.l.b16 %v4825
      %v5036 = vunpack.c.h.b16 %v4825
      %v5037 = vunpack.c.l.b16 %v4826
      %v5038 = vunpack.c.h.b16 %v4826
      %v5039 = vunpack.c.l.b16 %v4827
      %v5040 = vunpack.c.h.b16 %v4827
      %v5041 = vunpack.c.l.b16 %v4828
      %v5042 = vunpack.c.h.b16 %v4828
      %v5043 = vunpack.c.l.b16 %v4829
      %v5044 = vunpack.c.h.b16 %v4829
      %v5045 = vunpack.c.l.b16 %v4830
      %v5046 = vunpack.c.h.b16 %v4830
      %v5047 = vunpack.c.l.b16 %v4831
      %v5048 = vunpack.c.h.b16 %v4831
      %v5049 = vunpack.c.l.b16 %v4832
      %v5050 = vunpack.c.h.b16 %v4832
      %v5051 = vunpack.c.l.b16 %v4833
      %v5052 = vunpack.c.h.b16 %v4833
      %v5053 = vunpack.c.l.b16 %v4834
      %v5054 = vunpack.c.h.b16 %v4834
      %v5055 = vunpack.c.l.b16 %v4835
      %v5056 = vunpack.c.h.b16 %v4835
      %v5057 = vunpack.c.l.b16 %v4836
      %v5058 = vunpack.c.h.b16 %v4836
      %v5059 = vunpack.c.l.b16 %v4837
      %v5060 = vunpack.c.h.b16 %v4837
      %v5061 = vunpack.c.l.b16 %v4838
      %v5062 = vunpack.c.h.b16 %v4838
      %v5063 = vunpack.c.l.b16 %v4839
      %v5064 = vunpack.c.h.b16 %v4839
      %v5065 = vunpack.c.l.b16 %v4840
      %v5066 = vunpack.c.h.b16 %v4840
      %v5067 = vunpack.c.l.b16 %v4841
      %v5068 = vunpack.c.h.b16 %v4841
      %v5069 = vunpack.c.l.b16 %v4842
      %v5070 = vunpack.c.h.b16 %v4842
      %v5071 = vunpack.c.l.b16 %v4843
      %v5072 = vunpack.c.h.b16 %v4843
      %v5073 = vunpack.c.l.b16 %v4844
      %v5074 = vunpack.c.h.b16 %v4844
      %v5075 = vunpack.c.l.b16 %v4845
      %v5076 = vunpack.c.h.b16 %v4845
      %v5077 = vunpack.c.l.b16 %v4846
      %v5078 = vunpack.c.h.b16 %v4846
      %v5079 = vunpack.c.l.b16 %v4847
      %v5080 = vunpack.c.h.b16 %v4847
      %v5081 = vunpack.c.l.b16 %v4848
      %v5082 = vunpack.c.h.b16 %v4848
      %v5083 = vunpack.c.l.b16 %v4849
      %v5084 = vunpack.c.h.b16 %v4849
      %v5085 = vunpack.c.l.b16 %v4850
      %v5086 = vunpack.c.h.b16 %v4850
      %v5087 = vpack.c.b16 %v5025, %v5023
      %v5088 = vpack.c.b16 %v5026, %v5024
      %v5089 = vpack.c.b16 %v5029, %v5027
      %v5090 = vpack.c.b16 %v5030, %v5028
      %v5091 = vpack.c.b16 %v5033, %v5031
      %v5092 = vpack.c.b16 %v5034, %v5032
      %v5093 = vpack.c.b16 %v5037, %v5035
      %v5094 = vpack.c.b16 %v5038, %v5036
      %v5095 = vpack.c.b16 %v5041, %v5039
      %v5096 = vpack.c.b16 %v5042, %v5040
      %v5097 = vpack.c.b16 %v5045, %v5043
      %v5098 = vpack.c.b16 %v5046, %v5044
      %v5099 = vpack.c.b16 %v5049, %v5047
      %v5100 = vpack.c.b16 %v5050, %v5048
      %v5101 = vpack.c.b16 %v5053, %v5051
      %v5102 = vpack.c.b16 %v5054, %v5052
      %v5103 = vpack.c.b16 %v5057, %v5055
      %v5104 = vpack.c.b16 %v5058, %v5056
      %v5105 = vpack.c.b16 %v5061, %v5059
      %v5106 = vpack.c.b16 %v5062, %v5060
      %v5107 = vpack.c.b16 %v5065, %v5063
      %v5108 = vpack.c.b16 %v5066, %v5064
      %v5109 = vpack.c.b16 %v5069, %v5067
      %v5110 = vpack.c.b16 %v5070, %v5068
      %v5111 = vpack.c.b16 %v5073, %v5071
      %v5112 = vpack.c.b16 %v5074, %v5072
      %v5113 = vpack.c.b16 %v5077, %v5075
      %v5114 = vpack.c.b16 %v5078, %v5076
      %v5115 = vpack.c.b16 %v5081, %v5079
      %v5116 = vpack.c.b16 %v5082, %v5080
      %v5117 = vpack.c.b16 %v5085, %v5083
      %v5118 = vpack.c.b16 %v5086, %v5084
      %5151 = vmatprep.subr.bf16.mxu0 %v5088
      %5152 = vmatpush1.bf16.msra.mxu0 %v5087
      %5153 = vmatprep.subr.bf16.mxu0 %v5090
      %5154 = vmatpush1.bf16.msra.mxu0 %v5089
      %5155 = vmatprep.subr.bf16.mxu0 %v5092
      %5156 = vmatpush1.bf16.msra.mxu0 %v5091
      %5157 = vmatprep.subr.bf16.mxu0 %v5094
      %5158 = vmatpush1.bf16.msra.mxu0 %v5093
      %5159 = vmatprep.subr.bf16.mxu0 %v5096
      %5160 = vmatpush1.bf16.msra.mxu0 %v5095
      %5161 = vmatprep.subr.bf16.mxu0 %v5098
      %5162 = vmatpush1.bf16.msra.mxu0 %v5097
      %5163 = vmatprep.subr.bf16.mxu0 %v5100
      %5164 = vmatpush1.bf16.msra.mxu0 %v5099
      %5165 = vmatprep.subr.bf16.mxu0 %v5102
      %5166 = vmatpush1.bf16.msra.mxu0 %v5101
      %5167 = vmatprep.subr.bf16.mxu0 %v5104
      %5168 = vmatpush1.bf16.msra.mxu0 %v5103
      %5169 = vmatprep.subr.bf16.mxu0 %v5106
      %5170 = vmatpush1.bf16.msra.mxu0 %v5105
      %5171 = vmatprep.subr.bf16.mxu0 %v5108
      %5172 = vmatpush1.bf16.msra.mxu0 %v5107
      %5173 = vmatprep.subr.bf16.mxu0 %v5110
      %5174 = vmatpush1.bf16.msra.mxu0 %v5109
      %5175 = vmatprep.subr.bf16.mxu0 %v5112
      %5176 = vmatpush1.bf16.msra.mxu0 %v5111
      %5177 = vmatprep.subr.bf16.mxu0 %v5114
      %5178 = vmatpush1.bf16.msra.mxu0 %v5113
      %5179 = vmatprep.subr.bf16.mxu0 %v5116
      %5180 = vmatpush1.bf16.msra.mxu0 %v5115
      %5181 = vmatprep.subr.bf16.mxu0 %v5118
      %5182 = vmatpush1.bf16.msra.mxu0 %v5117
      %5183 = vmatprep.mubr.bf16.mxu0 %v4868
      %5184 = vmatmul.mubr.bf16.gmra.mrb[0].mxu0 %v4867
      %v5185 = vpop.f32.mrb[0].mxu0
      %v5186 = vadd.f32 0.0, %v5185
      %v5187 = vpop.f32.mrb[0].mxu0
      %v5188 = vadd.f32 0.0, %v5187
      %v5189 = vpop.f32.mrb[0].mxu0
      %v5190 = vadd.f32 0.0, %v5189
      %v5191 = vpop.f32.mrb[0].mxu0
      %v5192 = vadd.f32 0.0, %v5191
      %5193 = vmatprep.mubr.bf16.mxu0 %v4886
      %5194 = vmatmul.mubr.bf16.gmra.mrb[0].mxu0 %v4885
      %v5195 = vpop.f32.mrb[0].mxu0
      %v5196 = vadd.f32 0.0, %v5195
      %v5197 = vpop.f32.mrb[0].mxu0
      %v5198 = vadd.f32 0.0, %v5197
      %v5199 = vpop.f32.mrb[0].mxu0
      %v5200 = vadd.f32 0.0, %v5199
      %v5201 = vpop.f32.mrb[0].mxu0
      %v5202 = vadd.f32 0.0, %v5201
      %5203 = vmatprep.mubr.bf16.mxu0 %v4904
      %5204 = vmatmul.mubr.bf16.gmra.mrb[0].mxu0 %v4903
      %v5205 = vpop.f32.mrb[0].mxu0
      %v5206 = vadd.f32 0.0, %v5205
      %v5207 = vpop.f32.mrb[0].mxu0
      %v5208 = vadd.f32 0.0, %v5207
      %v5209 = vpop.f32.mrb[0].mxu0
      %v5210 = vadd.f32 0.0, %v5209
      %v5211 = vpop.f32.mrb[0].mxu0
      %v5212 = vadd.f32 0.0, %v5211
      %5213 = vmatprep.mubr.bf16.mxu0 %v4922
      %5214 = vmatmul.mubr.bf16.gmra.mrb[0].mxu0 %v4921
      %v5215 = vpop.f32.mrb[0].mxu0
      %v5216 = vadd.f32 0.0, %v5215
      %v5217 = vpop.f32.mrb[0].mxu0
      %v5218 = vadd.f32 0.0, %v5217
      %v5219 = vpop.f32.mrb[0].mxu0
      %v5220 = vadd.f32 0.0, %v5219
      %v5221 = vpop.f32.mrb[0].mxu0
      %v5222 = vadd.f32 0.0, %v5221
      %5223 = vmatprep.mubr.bf16.mxu0 %v4940
      %5224 = vmatmul.mubr.bf16.gmra.mrb[0].mxu0 %v4939
      %v5225 = vpop.f32.mrb[0].mxu0
      %v5226 = vadd.f32 0.0, %v5225
      %v5227 = vpop.f32.mrb[0].mxu0
      %v5228 = vadd.f32 0.0, %v5227
      %v5229 = vpop.f32.mrb[0].mxu0
      %v5230 = vadd.f32 0.0, %v5229
      %v5231 = vpop.f32.mrb[0].mxu0
      %v5232 = vadd.f32 0.0, %v5231
      %5233 = vmatprep.mubr.bf16.mxu0 %v4958
      %5234 = vmatmul.mubr.bf16.gmra.mrb[0].mxu0 %v4957
      %v5235 = vpop.f32.mrb[0].mxu0
      %v5236 = vadd.f32 0.0, %v5235
      %v5237 = vpop.f32.mrb[0].mxu0
      %v5238 = vadd.f32 0.0, %v5237
      %v5239 = vpop.f32.mrb[0].mxu0
      %v5240 = vadd.f32 0.0, %v5239
      %v5241 = vpop.f32.mrb[0].mxu0
      %v5242 = vadd.f32 0.0, %v5241
      %5243 = vmatprep.mubr.bf16.mxu0 %v4976
      %5244 = vmatmul.mubr.bf16.gmra.mrb[0].mxu0 %v4975
      %v5245 = vpop.f32.mrb[0].mxu0
      %v5246 = vadd.f32 0.0, %v5245
      %v5247 = vpop.f32.mrb[0].mxu0
      %v5248 = vadd.f32 0.0, %v5247
      %v5249 = vpop.f32.mrb[0].mxu0
      %v5250 = vadd.f32 0.0, %v5249
      %v5251 = vpop.f32.mrb[0].mxu0
      %v5252 = vadd.f32 0.0, %v5251
      %5253 = vdwg.mxu0
      %v5254 = vld [vmem:[#allocation3] sm:$0xff]
      %v5255 = vld [vmem:[#allocation3 + $0x8] sm:$0xff]
      %v5256 = vld [vmem:[#allocation3 + $0x10] sm:$0xff]
      %v5257 = vld [vmem:[#allocation3 + $0x18] sm:$0xff]
      %v5258 = vld [vmem:[#allocation3 + $0x20] sm:$0xff]
      %v5259 = vld [vmem:[#allocation3 + $0x28] sm:$0xff]
      %v5260 = vld [vmem:[#allocation3 + $0x30] sm:$0xff]
      %v5261 = vld [vmem:[#allocation3 + $0x38] sm:$0xff]
      %v5262 = vld [vmem:[#allocation3 + $0x40] sm:$0xff]
      %v5263 = vld [vmem:[#allocation3 + $0x48] sm:$0xff]
      %v5264 = vld [vmem:[#allocation3 + $0x50] sm:$0xff]
      %v5265 = vld [vmem:[#allocation3 + $0x58] sm:$0xff]
      %v5266 = vld [vmem:[#allocation3 + $0x60] sm:$0xff]
      %v5267 = vld [vmem:[#allocation3 + $0x68] sm:$0xff]
      %v5268 = vld [vmem:[#allocation3 + $0x70] sm:$0xff]
      %v5269 = vld [vmem:[#allocation3 + $0x78] sm:$0xff]
      %v5270 = vld [vmem:[#allocation3 + $0x80] sm:$0xff]
      %v5271 = vld [vmem:[#allocation3 + $0x88] sm:$0xff]
      %v5272 = vld [vmem:[#allocation3 + $0x90] sm:$0xff]
      %v5273 = vld [vmem:[#allocation3 + $0x98] sm:$0xff]
      %v5274 = vld [vmem:[#allocation3 + $0xa0] sm:$0xff]
      %v5275 = vld [vmem:[#allocation3 + $0xa8] sm:$0xff]
      %v5276 = vld [vmem:[#allocation3 + $0xb0] sm:$0xff]
      %v5277 = vld [vmem:[#allocation3 + $0xb8] sm:$0xff]
      %v5278 = vld [vmem:[#allocation3 + $0xc0] sm:$0xff]
      %v5279 = vld [vmem:[#allocation3 + $0xc8] sm:$0xff]
      %v5280 = vld [vmem:[#allocation3 + $0xd0] sm:$0xff]
      %v5281 = vld [vmem:[#allocation3 + $0xd8] sm:$0xff]
      %v5282 = vadd.f32 %v5254, %v5186
      %v5283 = vadd.f32 %v5255, %v5188
      %v5284 = vadd.f32 %v5256, %v5190
      %v5285 = vadd.f32 %v5257, %v5192
      %v5286 = vadd.f32 %v5258, %v5196
      %v5287 = vadd.f32 %v5259, %v5198
      %v5288 = vadd.f32 %v5260, %v5200
      %v5289 = vadd.f32 %v5261, %v5202
      %v5290 = vadd.f32 %v5262, %v5206
      %v5291 = vadd.f32 %v5263, %v5208
      %v5292 = vadd.f32 %v5264, %v5210
      %v5293 = vadd.f32 %v5265, %v5212
      %v5294 = vadd.f32 %v5266, %v5216
      %v5295 = vadd.f32 %v5267, %v5218
      %v5296 = vadd.f32 %v5268, %v5220
      %v5297 = vadd.f32 %v5269, %v5222
      %v5298 = vadd.f32 %v5270, %v5226
      %v5299 = vadd.f32 %v5271, %v5228
      %v5300 = vadd.f32 %v5272, %v5230
      %v5301 = vadd.f32 %v5273, %v5232
      %v5302 = vadd.f32 %v5274, %v5236
      %v5303 = vadd.f32 %v5275, %v5238
      %v5304 = vadd.f32 %v5276, %v5240
      %v5305 = vadd.f32 %v5277, %v5242
      %v5306 = vadd.f32 %v5278, %v5246
      %v5307 = vadd.f32 %v5279, %v5248
      %v5308 = vadd.f32 %v5280, %v5250
      %v5309 = vadd.f32 %v5281, %v5252
      %5310 = vst [vmem:[#allocation3] sm:$0xff] %v5282
      %5311 = vst [vmem:[#allocation3 + $0x8] sm:$0xff] %v5283
      %5312 = vst [vmem:[#allocation3 + $0x10] sm:$0xff] %v5284
      %5313 = vst [vmem:[#allocation3 + $0x18] sm:$0xff] %v5285
      %5314 = vst [vmem:[#allocation3 + $0x20] sm:$0xff] %v5286
      %5315 = vst [vmem:[#allocation3 + $0x28] sm:$0xff] %v5287
      %5316 = vst [vmem:[#allocation3 + $0x30] sm:$0xff] %v5288
      %5317 = vst [vmem:[#allocation3 + $0x38] sm:$0xff] %v5289
      %5318 = vst [vmem:[#allocation3 + $0x40] sm:$0xff] %v5290
      %5319 = vst [vmem:[#allocation3 + $0x48] sm:$0xff] %v5291
      %5320 = vst [vmem:[#allocation3 + $0x50] sm:$0xff] %v5292
      %5321 = vst [vmem:[#allocation3 + $0x58] sm:$0xff] %v5293
      %5322 = vst [vmem:[#allocation3 + $0x60] sm:$0xff] %v5294
      %5323 = vst [vmem:[#allocation3 + $0x68] sm:$0xff] %v5295
      %5324 = vst [vmem:[#allocation3 + $0x70] sm:$0xff] %v5296
      %5325 = vst [vmem:[#allocation3 + $0x78] sm:$0xff] %v5297
      %5326 = vst [vmem:[#allocation3 + $0x80] sm:$0xff] %v5298
      %5327 = vst [vmem:[#allocation3 + $0x88] sm:$0xff] %v5299
      %5328 = vst [vmem:[#allocation3 + $0x90] sm:$0xff] %v5300
      %5329 = vst [vmem:[#allocation3 + $0x98] sm:$0xff] %v5301
      %5330 = vst [vmem:[#allocation3 + $0xa0] sm:$0xff] %v5302
      %5331 = vst [vmem:[#allocation3 + $0xa8] sm:$0xff] %v5303
      %5332 = vst [vmem:[#allocation3 + $0xb0] sm:$0xff] %v5304
      %5333 = vst [vmem:[#allocation3 + $0xb8] sm:$0xff] %v5305
      %5334 = vst [vmem:[#allocation3 + $0xc0] sm:$0xff] %v5306
      %5335 = vst [vmem:[#allocation3 + $0xc8] sm:$0xff] %v5307
      %5336 = vst [vmem:[#allocation3 + $0xd0] sm:$0xff] %v5308
      %5337 = vst [vmem:[#allocation3 + $0xd8] sm:$0xff] %v5309
      %s5338 = scalar_lea.vmem [#allocation2], 128
      %v5339 = vld [vmem:[%s5338] sm:$0xff]
      %v5340 = vld [vmem:[%s5338 + $0x8] sm:$0xff]
      %v5341 = vld [vmem:[%s5338 + $0x10] sm:$0x3f]
      %v5342 = vld [vmem:[%s5338 + $0x18] sm:$0x3f]
      %v5343 = vld [vmem:[%s5338 + $0x20] sm:$0xff]
      %v5344 = vld [vmem:[%s5338 + $0x28] sm:$0xff]
      %v5345 = vld [vmem:[%s5338 + $0x30] sm:$0x3f]
      %v5346 = vld [vmem:[%s5338 + $0x38] sm:$0x3f]
      %v5347 = vld [vmem:[%s5338 + $0x40] sm:$0xff]
      %v5348 = vld [vmem:[%s5338 + $0x48] sm:$0xff]
      %v5349 = vld [vmem:[%s5338 + $0x50] sm:$0x3f]
      %v5350 = vld [vmem:[%s5338 + $0x58] sm:$0x3f]
      %v5351 = vld [vmem:[%s5338 + $0x60] sm:$0xff]
      %v5352 = vld [vmem:[%s5338 + $0x68] sm:$0xff]
      %v5353 = vld [vmem:[%s5338 + $0x70] sm:$0x3f]
      %v5354 = vld [vmem:[%s5338 + $0x78] sm:$0x3f]
      %v5371 = vcombine.low %v5339, %v5340
      %v5372 = vcombine.high %v5339, %v5340
      %v5374 = vunpack.c.l.s4 1983009808
      %v5375 = vunpack.c.0.s8 %v5374
      %v5376 = vlaneseq
      %v5377 = vshrl.u32 %v5376, 7
      %v5378 = vsub.s32 %v5375, %v5377
      %v5379 = vrot.slane %v5371, %v5378
      %v5381 = vunpack.c.l.s4 1983009808
      %v5382 = vunpack.c.0.s8 %v5381
      %v5383 = vlaneseq
      %v5384 = vshrl.u32 %v5383, 7
      %v5385 = vsub.s32 %v5382, %v5384
      %v5386 = vrot.slane %v5372, %v5385
      %v5387 = vcombine.high %v5379, %v5379
      %v5388 = vcombine.high %v5386, %v5386
      %v5389 = vcombine.low %v5341, %v5342
      %v5390 = vcombine.high %v5341, %v5342
      %v5392 = vunpack.c.l.s4 1983009808
      %v5393 = vunpack.c.0.s8 %v5392
      %v5394 = vlaneseq
      %v5395 = vshrl.u32 %v5394, 7
      %v5396 = vsub.s32 %v5393, %v5395
      %v5397 = vrot.slane %v5389, %v5396
      %v5399 = vunpack.c.l.s4 1983009808
      %v5400 = vunpack.c.0.s8 %v5399
      %v5401 = vlaneseq
      %v5402 = vshrl.u32 %v5401, 7
      %v5403 = vsub.s32 %v5400, %v5402
      %v5404 = vrot.slane %v5390, %v5403
      %v5405 = vcombine.high %v5397, %v5397
      %v5406 = vcombine.low %v5343, %v5344
      %v5407 = vcombine.high %v5343, %v5344
      %v5409 = vunpack.c.l.s4 1983009808
      %v5410 = vunpack.c.0.s8 %v5409
      %v5411 = vlaneseq
      %v5412 = vshrl.u32 %v5411, 7
      %v5413 = vsub.s32 %v5410, %v5412
      %v5414 = vrot.slane %v5406, %v5413
      %v5416 = vunpack.c.l.s4 1983009808
      %v5417 = vunpack.c.0.s8 %v5416
      %v5418 = vlaneseq
      %v5419 = vshrl.u32 %v5418, 7
      %v5420 = vsub.s32 %v5417, %v5419
      %v5421 = vrot.slane %v5407, %v5420
      %v5422 = vcombine.high %v5414, %v5414
      %v5423 = vcombine.high %v5421, %v5421
      %v5424 = vcombine.low %v5345, %v5346
      %v5425 = vcombine.high %v5345, %v5346
      %v5427 = vunpack.c.l.s4 1983009808
      %v5428 = vunpack.c.0.s8 %v5427
      %v5429 = vlaneseq
      %v5430 = vshrl.u32 %v5429, 7
      %v5431 = vsub.s32 %v5428, %v5430
      %v5432 = vrot.slane %v5424, %v5431
      %v5434 = vunpack.c.l.s4 1983009808
      %v5435 = vunpack.c.0.s8 %v5434
      %v5436 = vlaneseq
      %v5437 = vshrl.u32 %v5436, 7
      %v5438 = vsub.s32 %v5435, %v5437
      %v5439 = vrot.slane %v5425, %v5438
      %v5440 = vcombine.high %v5432, %v5432
      %v5441 = vcombine.low %v5347, %v5348
      %v5442 = vcombine.high %v5347, %v5348
      %v5444 = vunpack.c.l.s4 1983009808
      %v5445 = vunpack.c.0.s8 %v5444
      %v5446 = vlaneseq
      %v5447 = vshrl.u32 %v5446, 7
      %v5448 = vsub.s32 %v5445, %v5447
      %v5449 = vrot.slane %v5441, %v5448
      %v5451 = vunpack.c.l.s4 1983009808
      %v5452 = vunpack.c.0.s8 %v5451
      %v5453 = vlaneseq
      %v5454 = vshrl.u32 %v5453, 7
      %v5455 = vsub.s32 %v5452, %v5454
      %v5456 = vrot.slane %v5442, %v5455
      %v5457 = vcombine.high %v5449, %v5449
      %v5458 = vcombine.high %v5456, %v5456
      %v5459 = vcombine.low %v5349, %v5350
      %v5460 = vcombine.high %v5349, %v5350
      %v5462 = vunpack.c.l.s4 1983009808
      %v5463 = vunpack.c.0.s8 %v5462
      %v5464 = vlaneseq
      %v5465 = vshrl.u32 %v5464, 7
      %v5466 = vsub.s32 %v5463, %v5465
      %v5467 = vrot.slane %v5459, %v5466
      %v5469 = vunpack.c.l.s4 1983009808
      %v5470 = vunpack.c.0.s8 %v5469
      %v5471 = vlaneseq
      %v5472 = vshrl.u32 %v5471, 7
      %v5473 = vsub.s32 %v5470, %v5472
      %v5474 = vrot.slane %v5460, %v5473
      %v5475 = vcombine.high %v5467, %v5467
      %v5476 = vcombine.low %v5351, %v5352
      %v5477 = vcombine.high %v5351, %v5352
      %v5479 = vunpack.c.l.s4 1983009808
      %v5480 = vunpack.c.0.s8 %v5479
      %v5481 = vlaneseq
      %v5482 = vshrl.u32 %v5481, 7
      %v5483 = vsub.s32 %v5480, %v5482
      %v5484 = vrot.slane %v5476, %v5483
      %v5486 = vunpack.c.l.s4 1983009808
      %v5487 = vunpack.c.0.s8 %v5486
      %v5488 = vlaneseq
      %v5489 = vshrl.u32 %v5488, 7
      %v5490 = vsub.s32 %v5487, %v5489
      %v5491 = vrot.slane %v5477, %v5490
      %v5492 = vcombine.high %v5484, %v5484
      %v5493 = vcombine.high %v5491, %v5491
      %v5494 = vcombine.low %v5353, %v5354
      %v5495 = vcombine.high %v5353, %v5354
      %v5497 = vunpack.c.l.s4 1983009808
      %v5498 = vunpack.c.0.s8 %v5497
      %v5499 = vlaneseq
      %v5500 = vshrl.u32 %v5499, 7
      %v5501 = vsub.s32 %v5498, %v5500
      %v5502 = vrot.slane %v5494, %v5501
      %v5504 = vunpack.c.l.s4 1983009808
      %v5505 = vunpack.c.0.s8 %v5504
      %v5506 = vlaneseq
      %v5507 = vshrl.u32 %v5506, 7
      %v5508 = vsub.s32 %v5505, %v5507
      %v5509 = vrot.slane %v5495, %v5508
      %v5510 = vcombine.high %v5502, %v5502
      %s5511 = scalar_lea.vmem %s3, 1536
      %v5512 = vld [vmem:[%s5511] sm:$0xff]
      %v5513 = vld [vmem:[%s5511 + $0x8] sm:$0xff]
      %v5514 = vld [vmem:[%s5511 + $0x10] sm:$0xff]
      %v5515 = vld [vmem:[%s5511 + $0x18] sm:$0xff]
      %v5516 = vld [vmem:[%s5511 + $0x20] sm:$0xff]
      %v5517 = vld [vmem:[%s5511 + $0x28] sm:$0xff]
      %v5518 = vld [vmem:[%s5511 + $0x30] sm:$0xff]
      %v5519 = vld [vmem:[%s5511 + $0x38] sm:$0xff]
      %v5520 = vld [vmem:[%s5511 + $0x40] sm:$0xff]
      %v5521 = vld [vmem:[%s5511 + $0x48] sm:$0xff]
      %v5522 = vld [vmem:[%s5511 + $0x50] sm:$0xff]
      %v5523 = vld [vmem:[%s5511 + $0x58] sm:$0xff]
      %v5524 = vld [vmem:[%s5511 + $0x60] sm:$0xff]
      %v5525 = vld [vmem:[%s5511 + $0x68] sm:$0xff]
      %v5526 = vld [vmem:[%s5511 + $0x70] sm:$0xff]
      %v5527 = vld [vmem:[%s5511 + $0x78] sm:$0xff]
      %v5528 = vld [vmem:[%s5511 + $0x80] sm:$0xff]
      %v5529 = vld [vmem:[%s5511 + $0x88] sm:$0xff]
      %v5530 = vld [vmem:[%s5511 + $0x90] sm:$0xff]
      %v5531 = vld [vmem:[%s5511 + $0x98] sm:$0xff]
      %v5532 = vld [vmem:[%s5511 + $0xa0] sm:$0xff]
      %v5533 = vld [vmem:[%s5511 + $0xa8] sm:$0xff]
      %v5534 = vld [vmem:[%s5511 + $0xb0] sm:$0xff]
      %v5535 = vld [vmem:[%s5511 + $0xb8] sm:$0xff]
      %v5536 = vld [vmem:[%s5511 + $0xc0] sm:$0xff]
      %v5537 = vld [vmem:[%s5511 + $0xc8] sm:$0xff]
      %v5538 = vld [vmem:[%s5511 + $0xd0] sm:$0xff]
      %v5539 = vld [vmem:[%s5511 + $0xd8] sm:$0xff]
      %v5540 = vld [vmem:[%s5511 + $0xe0] sm:$0xff]
      %v5541 = vld [vmem:[%s5511 + $0xe8] sm:$0xff]
      %v5542 = vld [vmem:[%s5511 + $0xf0] sm:$0xff]
      %v5543 = vld [vmem:[%s5511 + $0xf8] sm:$0xff]
      %v5544 = vcombine.low %v5379, %v5387
      %v5545 = vcombine.low %v5386, %v5388
      %v5547 = vunpack.c.l.s4 1983009808
      %v5548 = vunpack.c.0.s8 %v5547
      %v5549 = vlaneseq
      %v5550 = vshrl.u32 %v5549, 7
      %v5551 = vsub.s32 %v5548, %v5550
      %v5552 = vrot.slane %v5544, %v5551
      %v5554 = vunpack.c.l.s4 1983009808
      %v5555 = vunpack.c.0.s8 %v5554
      %v5556 = vlaneseq
      %v5557 = vshrl.u32 %v5556, 7
      %v5558 = vsub.s32 %v5555, %v5557
      %v5559 = vrot.slane %v5545, %v5558
      %v5560 = vcombine.low %v5552, %v5559
      %v5561 = vcombine.high %v5552, %v5559
      %v5562 = vcombine.low %v5397, %v5405
      %v5563 = vcombine.low %v5404, %v5414
      %v5565 = vunpack.c.l.s4 1983009808
      %v5566 = vunpack.c.0.s8 %v5565
      %v5567 = vlaneseq
      %v5568 = vshrl.u32 %v5567, 7
      %v5569 = vsub.s32 %v5566, %v5568
      %v5570 = vrot.slane %v5562, %v5569
      %v5572 = vunpack.c.l.s4 1983009808
      %v5573 = vunpack.c.0.s8 %v5572
      %v5574 = vlaneseq
      %v5575 = vshrl.u32 %v5574, 7
      %v5576 = vsub.s32 %v5573, %v5575
      %v5577 = vrot.slane %v5563, %v5576
      %v5578 = vcombine.low %v5570, %v5577
      %v5579 = vcombine.high %v5570, %v5577
      %v5580 = vcombine.low %v5422, %v5421
      %v5581 = vcombine.low %v5423, %v5432
      %v5583 = vunpack.c.l.s4 1983009808
      %v5584 = vunpack.c.0.s8 %v5583
      %v5585 = vlaneseq
      %v5586 = vshrl.u32 %v5585, 7
      %v5587 = vsub.s32 %v5584, %v5586
      %v5588 = vrot.slane %v5580, %v5587
      %v5590 = vunpack.c.l.s4 1983009808
      %v5591 = vunpack.c.0.s8 %v5590
      %v5592 = vlaneseq
      %v5593 = vshrl.u32 %v5592, 7
      %v5594 = vsub.s32 %v5591, %v5593
      %v5595 = vrot.slane %v5581, %v5594
      %v5596 = vcombine.low %v5588, %v5595
      %v5597 = vcombine.high %v5588, %v5595
      %v5598 = vcombine.low %v5440, %v5439
      %v5599 = vcombine.low %v5449, %v5457
      %v5601 = vunpack.c.l.s4 1983009808
      %v5602 = vunpack.c.0.s8 %v5601
      %v5603 = vlaneseq
      %v5604 = vshrl.u32 %v5603, 7
      %v5605 = vsub.s32 %v5602, %v5604
      %v5606 = vrot.slane %v5598, %v5605
      %v5608 = vunpack.c.l.s4 1983009808
      %v5609 = vunpack.c.0.s8 %v5608
      %v5610 = vlaneseq
      %v5611 = vshrl.u32 %v5610, 7
      %v5612 = vsub.s32 %v5609, %v5611
      %v5613 = vrot.slane %v5599, %v5612
      %v5614 = vcombine.low %v5606, %v5613
      %v5615 = vcombine.high %v5606, %v5613
      %v5616 = vcombine.low %v5456, %v5458
      %v5617 = vcombine.low %v5467, %v5475
      %v5619 = vunpack.c.l.s4 1983009808
      %v5620 = vunpack.c.0.s8 %v5619
      %v5621 = vlaneseq
      %v5622 = vshrl.u32 %v5621, 7
      %v5623 = vsub.s32 %v5620, %v5622
      %v5624 = vrot.slane %v5616, %v5623
      %v5626 = vunpack.c.l.s4 1983009808
      %v5627 = vunpack.c.0.s8 %v5626
      %v5628 = vlaneseq
      %v5629 = vshrl.u32 %v5628, 7
      %v5630 = vsub.s32 %v5627, %v5629
      %v5631 = vrot.slane %v5617, %v5630
      %v5632 = vcombine.low %v5624, %v5631
      %v5633 = vcombine.high %v5624, %v5631
      %v5634 = vcombine.low %v5474, %v5484
      %v5635 = vcombine.low %v5492, %v5491
      %v5637 = vunpack.c.l.s4 1983009808
      %v5638 = vunpack.c.0.s8 %v5637
      %v5639 = vlaneseq
      %v5640 = vshrl.u32 %v5639, 7
      %v5641 = vsub.s32 %v5638, %v5640
      %v5642 = vrot.slane %v5634, %v5641
      %v5644 = vunpack.c.l.s4 1983009808
      %v5645 = vunpack.c.0.s8 %v5644
      %v5646 = vlaneseq
      %v5647 = vshrl.u32 %v5646, 7
      %v5648 = vsub.s32 %v5645, %v5647
      %v5649 = vrot.slane %v5635, %v5648
      %v5650 = vcombine.low %v5642, %v5649
      %v5651 = vcombine.high %v5642, %v5649
      %v5652 = vcombine.low %v5493, %v5502
      %v5653 = vcombine.low %v5510, %v5509
      %v5655 = vunpack.c.l.s4 1983009808
      %v5656 = vunpack.c.0.s8 %v5655
      %v5657 = vlaneseq
      %v5658 = vshrl.u32 %v5657, 7
      %v5659 = vsub.s32 %v5656, %v5658
      %v5660 = vrot.slane %v5652, %v5659
      %v5662 = vunpack.c.l.s4 1983009808
      %v5663 = vunpack.c.0.s8 %v5662
      %v5664 = vlaneseq
      %v5665 = vshrl.u32 %v5664, 7
      %v5666 = vsub.s32 %v5663, %v5665
      %v5667 = vrot.slane %v5653, %v5666
      %v5668 = vcombine.low %v5660, %v5667
      %v5669 = vcombine.high %v5660, %v5667
      %v5716 = vunpack.c.l.b16 %v5512
      %v5717 = vunpack.c.h.b16 %v5512
      %v5718 = vunpack.c.l.b16 %v5513
      %v5719 = vunpack.c.h.b16 %v5513
      %v5720 = vunpack.c.l.b16 %v5514
      %v5721 = vunpack.c.h.b16 %v5514
      %v5722 = vunpack.c.l.b16 %v5515
      %v5723 = vunpack.c.h.b16 %v5515
      %v5724 = vunpack.c.l.b16 %v5516
      %v5725 = vunpack.c.h.b16 %v5516
      %v5726 = vunpack.c.l.b16 %v5517
      %v5727 = vunpack.c.h.b16 %v5517
      %v5728 = vunpack.c.l.b16 %v5518
      %v5729 = vunpack.c.h.b16 %v5518
      %v5730 = vunpack.c.l.b16 %v5519
      %v5731 = vunpack.c.h.b16 %v5519
      %v5732 = vunpack.c.l.b16 %v5520
      %v5733 = vunpack.c.h.b16 %v5520
      %v5734 = vunpack.c.l.b16 %v5521
      %v5735 = vunpack.c.h.b16 %v5521
      %v5736 = vunpack.c.l.b16 %v5522
      %v5737 = vunpack.c.h.b16 %v5522
      %v5738 = vunpack.c.l.b16 %v5523
      %v5739 = vunpack.c.h.b16 %v5523
      %v5740 = vunpack.c.l.b16 %v5524
      %v5741 = vunpack.c.h.b16 %v5524
      %v5742 = vunpack.c.l.b16 %v5525
      %v5743 = vunpack.c.h.b16 %v5525
      %v5744 = vunpack.c.l.b16 %v5526
      %v5745 = vunpack.c.h.b16 %v5526
      %v5746 = vunpack.c.l.b16 %v5527
      %v5747 = vunpack.c.h.b16 %v5527
      %v5748 = vunpack.c.l.b16 %v5528
      %v5749 = vunpack.c.h.b16 %v5528
      %v5750 = vunpack.c.l.b16 %v5529
      %v5751 = vunpack.c.h.b16 %v5529
      %v5752 = vunpack.c.l.b16 %v5530
      %v5753 = vunpack.c.h.b16 %v5530
      %v5754 = vunpack.c.l.b16 %v5531
      %v5755 = vunpack.c.h.b16 %v5531
      %v5756 = vunpack.c.l.b16 %v5532
      %v5757 = vunpack.c.h.b16 %v5532
      %v5758 = vunpack.c.l.b16 %v5533
      %v5759 = vunpack.c.h.b16 %v5533
      %v5760 = vunpack.c.l.b16 %v5534
      %v5761 = vunpack.c.h.b16 %v5534
      %v5762 = vunpack.c.l.b16 %v5535
      %v5763 = vunpack.c.h.b16 %v5535
      %v5764 = vunpack.c.l.b16 %v5536
      %v5765 = vunpack.c.h.b16 %v5536
      %v5766 = vunpack.c.l.b16 %v5537
      %v5767 = vunpack.c.h.b16 %v5537
      %v5768 = vunpack.c.l.b16 %v5538
      %v5769 = vunpack.c.h.b16 %v5538
      %v5770 = vunpack.c.l.b16 %v5539
      %v5771 = vunpack.c.h.b16 %v5539
      %v5772 = vunpack.c.l.b16 %v5540
      %v5773 = vunpack.c.h.b16 %v5540
      %v5774 = vunpack.c.l.b16 %v5541
      %v5775 = vunpack.c.h.b16 %v5541
      %v5776 = vunpack.c.l.b16 %v5542
      %v5777 = vunpack.c.h.b16 %v5542
      %v5778 = vunpack.c.l.b16 %v5543
      %v5779 = vunpack.c.h.b16 %v5543
      %v5780 = vpack.c.b16 %v5718, %v5716
      %v5781 = vpack.c.b16 %v5719, %v5717
      %v5782 = vpack.c.b16 %v5722, %v5720
      %v5783 = vpack.c.b16 %v5723, %v5721
      %v5784 = vpack.c.b16 %v5726, %v5724
      %v5785 = vpack.c.b16 %v5727, %v5725
      %v5786 = vpack.c.b16 %v5730, %v5728
      %v5787 = vpack.c.b16 %v5731, %v5729
      %v5788 = vpack.c.b16 %v5734, %v5732
      %v5789 = vpack.c.b16 %v5735, %v5733
      %v5790 = vpack.c.b16 %v5738, %v5736
      %v5791 = vpack.c.b16 %v5739, %v5737
      %v5792 = vpack.c.b16 %v5742, %v5740
      %v5793 = vpack.c.b16 %v5743, %v5741
      %v5794 = vpack.c.b16 %v5746, %v5744
      %v5795 = vpack.c.b16 %v5747, %v5745
      %v5796 = vpack.c.b16 %v5750, %v5748
      %v5797 = vpack.c.b16 %v5751, %v5749
      %v5798 = vpack.c.b16 %v5754, %v5752
      %v5799 = vpack.c.b16 %v5755, %v5753
      %v5800 = vpack.c.b16 %v5758, %v5756
      %v5801 = vpack.c.b16 %v5759, %v5757
      %v5802 = vpack.c.b16 %v5762, %v5760
      %v5803 = vpack.c.b16 %v5763, %v5761
      %v5804 = vpack.c.b16 %v5766, %v5764
      %v5805 = vpack.c.b16 %v5767, %v5765
      %v5806 = vpack.c.b16 %v5770, %v5768
      %v5807 = vpack.c.b16 %v5771, %v5769
      %v5808 = vpack.c.b16 %v5774, %v5772
      %v5809 = vpack.c.b16 %v5775, %v5773
      %v5810 = vpack.c.b16 %v5778, %v5776
      %v5811 = vpack.c.b16 %v5779, %v5777
      %5844 = vmatprep.subr.bf16.mxu0 %v5781
      %5845 = vmatpush1.bf16.msra.mxu0 %v5780
      %5846 = vmatprep.subr.bf16.mxu0 %v5783
      %5847 = vmatpush1.bf16.msra.mxu0 %v5782
      %5848 = vmatprep.subr.bf16.mxu0 %v5785
      %5849 = vmatpush1.bf16.msra.mxu0 %v5784
      %5850 = vmatprep.subr.bf16.mxu0 %v5787
      %5851 = vmatpush1.bf16.msra.mxu0 %v5786
      %5852 = vmatprep.subr.bf16.mxu0 %v5789
      %5853 = vmatpush1.bf16.msra.mxu0 %v5788
      %5854 = vmatprep.subr.bf16.mxu0 %v5791
      %5855 = vmatpush1.bf16.msra.mxu0 %v5790
      %5856 = vmatprep.subr.bf16.mxu0 %v5793
      %5857 = vmatpush1.bf16.msra.mxu0 %v5792
      %5858 = vmatprep.subr.bf16.mxu0 %v5795
      %5859 = vmatpush1.bf16.msra.mxu0 %v5794
      %5860 = vmatprep.subr.bf16.mxu0 %v5797
      %5861 = vmatpush1.bf16.msra.mxu0 %v5796
      %5862 = vmatprep.subr.bf16.mxu0 %v5799
      %5863 = vmatpush1.bf16.msra.mxu0 %v5798
      %5864 = vmatprep.subr.bf16.mxu0 %v5801
      %5865 = vmatpush1.bf16.msra.mxu0 %v5800
      %5866 = vmatprep.subr.bf16.mxu0 %v5803
      %5867 = vmatpush1.bf16.msra.mxu0 %v5802
      %5868 = vmatprep.subr.bf16.mxu0 %v5805
      %5869 = vmatpush1.bf16.msra.mxu0 %v5804
      %5870 = vmatprep.subr.bf16.mxu0 %v5807
      %5871 = vmatpush1.bf16.msra.mxu0 %v5806
      %5872 = vmatprep.subr.bf16.mxu0 %v5809
      %5873 = vmatpush1.bf16.msra.mxu0 %v5808
      %5874 = vmatprep.subr.bf16.mxu0 %v5811
      %5875 = vmatpush1.bf16.msra.mxu0 %v5810
      %5876 = vmatprep.mubr.bf16.mxu0 %v5561
      %5877 = vmatmul.mubr.bf16.gmra.mrb[0].mxu0 %v5560
      %v5878 = vpop.f32.mrb[0].mxu0
      %v5879 = vadd.f32 0.0, %v5878
      %v5880 = vpop.f32.mrb[0].mxu0
      %v5881 = vadd.f32 0.0, %v5880
      %v5882 = vpop.f32.mrb[0].mxu0
      %v5883 = vadd.f32 0.0, %v5882
      %v5884 = vpop.f32.mrb[0].mxu0
      %v5885 = vadd.f32 0.0, %v5884
      %5886 = vmatprep.mubr.bf16.mxu0 %v5579
      %5887 = vmatmul.mubr.bf16.gmra.mrb[0].mxu0 %v5578
      %v5888 = vpop.f32.mrb[0].mxu0
      %v5889 = vadd.f32 0.0, %v5888
      %v5890 = vpop.f32.mrb[0].mxu0
      %v5891 = vadd.f32 0.0, %v5890
      %v5892 = vpop.f32.mrb[0].mxu0
      %v5893 = vadd.f32 0.0, %v5892
      %v5894 = vpop.f32.mrb[0].mxu0
      %v5895 = vadd.f32 0.0, %v5894
      %5896 = vmatprep.mubr.bf16.mxu0 %v5597
      %5897 = vmatmul.mubr.bf16.gmra.mrb[0].mxu0 %v5596
      %v5898 = vpop.f32.mrb[0].mxu0
      %v5899 = vadd.f32 0.0, %v5898
      %v5900 = vpop.f32.mrb[0].mxu0
      %v5901 = vadd.f32 0.0, %v5900
      %v5902 = vpop.f32.mrb[0].mxu0
      %v5903 = vadd.f32 0.0, %v5902
      %v5904 = vpop.f32.mrb[0].mxu0
      %v5905 = vadd.f32 0.0, %v5904
      %5906 = vmatprep.mubr.bf16.mxu0 %v5615
      %5907 = vmatmul.mubr.bf16.gmra.mrb[0].mxu0 %v5614
      %v5908 = vpop.f32.mrb[0].mxu0
      %v5909 = vadd.f32 0.0, %v5908
      %v5910 = vpop.f32.mrb[0].mxu0
      %v5911 = vadd.f32 0.0, %v5910
      %v5912 = vpop.f32.mrb[0].mxu0
      %v5913 = vadd.f32 0.0, %v5912
      %v5914 = vpop.f32.mrb[0].mxu0
      %v5915 = vadd.f32 0.0, %v5914
      %5916 = vmatprep.mubr.bf16.mxu0 %v5633
      %5917 = vmatmul.mubr.bf16.gmra.mrb[0].mxu0 %v5632
      %v5918 = vpop.f32.mrb[0].mxu0
      %v5919 = vadd.f32 0.0, %v5918
      %v5920 = vpop.f32.mrb[0].mxu0
      %v5921 = vadd.f32 0.0, %v5920
      %v5922 = vpop.f32.mrb[0].mxu0
      %v5923 = vadd.f32 0.0, %v5922
      %v5924 = vpop.f32.mrb[0].mxu0
      %v5925 = vadd.f32 0.0, %v5924
      %5926 = vmatprep.mubr.bf16.mxu0 %v5651
      %5927 = vmatmul.mubr.bf16.gmra.mrb[0].mxu0 %v5650
      %v5928 = vpop.f32.mrb[0].mxu0
      %v5929 = vadd.f32 0.0, %v5928
      %v5930 = vpop.f32.mrb[0].mxu0
      %v5931 = vadd.f32 0.0, %v5930
      %v5932 = vpop.f32.mrb[0].mxu0
      %v5933 = vadd.f32 0.0, %v5932
      %v5934 = vpop.f32.mrb[0].mxu0
      %v5935 = vadd.f32 0.0, %v5934
      %5936 = vmatprep.mubr.bf16.mxu0 %v5669
      %5937 = vmatmul.mubr.bf16.gmra.mrb[0].mxu0 %v5668
      %v5938 = vpop.f32.mrb[0].mxu0
      %v5939 = vadd.f32 0.0, %v5938
      %v5940 = vpop.f32.mrb[0].mxu0
      %v5941 = vadd.f32 0.0, %v5940
      %v5942 = vpop.f32.mrb[0].mxu0
      %v5943 = vadd.f32 0.0, %v5942
      %v5944 = vpop.f32.mrb[0].mxu0
      %v5945 = vadd.f32 0.0, %v5944
      %5946 = vdwg.mxu0
      %v5947 = vld [vmem:[#allocation3] sm:$0xff]
      %v5948 = vld [vmem:[#allocation3 + $0x8] sm:$0xff]
      %v5949 = vld [vmem:[#allocation3 + $0x10] sm:$0xff]
      %v5950 = vld [vmem:[#allocation3 + $0x18] sm:$0xff]
      %v5951 = vld [vmem:[#allocation3 + $0x20] sm:$0xff]
      %v5952 = vld [vmem:[#allocation3 + $0x28] sm:$0xff]
      %v5953 = vld [vmem:[#allocation3 + $0x30] sm:$0xff]
      %v5954 = vld [vmem:[#allocation3 + $0x38] sm:$0xff]
      %v5955 = vld [vmem:[#allocation3 + $0x40] sm:$0xff]
      %v5956 = vld [vmem:[#allocation3 + $0x48] sm:$0xff]
      %v5957 = vld [vmem:[#allocation3 + $0x50] sm:$0xff]
      %v5958 = vld [vmem:[#allocation3 + $0x58] sm:$0xff]
      %v5959 = vld [vmem:[#allocation3 + $0x60] sm:$0xff]
      %v5960 = vld [vmem:[#allocation3 + $0x68] sm:$0xff]
      %v5961 = vld [vmem:[#allocation3 + $0x70] sm:$0xff]
      %v5962 = vld [vmem:[#allocation3 + $0x78] sm:$0xff]
      %v5963 = vld [vmem:[#allocation3 + $0x80] sm:$0xff]
      %v5964 = vld [vmem:[#allocation3 + $0x88] sm:$0xff]
      %v5965 = vld [vmem:[#allocation3 + $0x90] sm:$0xff]
      %v5966 = vld [vmem:[#allocation3 + $0x98] sm:$0xff]
      %v5967 = vld [vmem:[#allocation3 + $0xa0] sm:$0xff]
      %v5968 = vld [vmem:[#allocation3 + $0xa8] sm:$0xff]
      %v5969 = vld [vmem:[#allocation3 + $0xb0] sm:$0xff]
      %v5970 = vld [vmem:[#allocation3 + $0xb8] sm:$0xff]
      %v5971 = vld [vmem:[#allocation3 + $0xc0] sm:$0xff]
      %v5972 = vld [vmem:[#allocation3 + $0xc8] sm:$0xff]
      %v5973 = vld [vmem:[#allocation3 + $0xd0] sm:$0xff]
      %v5974 = vld [vmem:[#allocation3 + $0xd8] sm:$0xff]
      %v5975 = vadd.f32 %v5947, %v5879
      %v5976 = vadd.f32 %v5948, %v5881
      %v5977 = vadd.f32 %v5949, %v5883
      %v5978 = vadd.f32 %v5950, %v5885
      %v5979 = vadd.f32 %v5951, %v5889
      %v5980 = vadd.f32 %v5952, %v5891
      %v5981 = vadd.f32 %v5953, %v5893
      %v5982 = vadd.f32 %v5954, %v5895
      %v5983 = vadd.f32 %v5955, %v5899
      %v5984 = vadd.f32 %v5956, %v5901
      %v5985 = vadd.f32 %v5957, %v5903
      %v5986 = vadd.f32 %v5958, %v5905
      %v5987 = vadd.f32 %v5959, %v5909
      %v5988 = vadd.f32 %v5960, %v5911
      %v5989 = vadd.f32 %v5961, %v5913
      %v5990 = vadd.f32 %v5962, %v5915
      %v5991 = vadd.f32 %v5963, %v5919
      %v5992 = vadd.f32 %v5964, %v5921
      %v5993 = vadd.f32 %v5965, %v5923
      %v5994 = vadd.f32 %v5966, %v5925
      %v5995 = vadd.f32 %v5967, %v5929
      %v5996 = vadd.f32 %v5968, %v5931
      %v5997 = vadd.f32 %v5969, %v5933
      %v5998 = vadd.f32 %v5970, %v5935
      %v5999 = vadd.f32 %v5971, %v5939
      %v6000 = vadd.f32 %v5972, %v5941
      %v6001 = vadd.f32 %v5973, %v5943
      %v6002 = vadd.f32 %v5974, %v5945
      %6003 = vst [vmem:[#allocation3] sm:$0xff] %v5975
      %6004 = vst [vmem:[#allocation3 + $0x8] sm:$0xff] %v5976
      %6005 = vst [vmem:[#allocation3 + $0x10] sm:$0xff] %v5977
      %6006 = vst [vmem:[#allocation3 + $0x18] sm:$0xff] %v5978
      %6007 = vst [vmem:[#allocation3 + $0x20] sm:$0xff] %v5979
      %6008 = vst [vmem:[#allocation3 + $0x28] sm:$0xff] %v5980
      %6009 = vst [vmem:[#allocation3 + $0x30] sm:$0xff] %v5981
      %6010 = vst [vmem:[#allocation3 + $0x38] sm:$0xff] %v5982
      %6011 = vst [vmem:[#allocation3 + $0x40] sm:$0xff] %v5983
      %6012 = vst [vmem:[#allocation3 + $0x48] sm:$0xff] %v5984
      %6013 = vst [vmem:[#allocation3 + $0x50] sm:$0xff] %v5985
      %6014 = vst [vmem:[#allocation3 + $0x58] sm:$0xff] %v5986
      %6015 = vst [vmem:[#allocation3 + $0x60] sm:$0xff] %v5987
      %6016 = vst [vmem:[#allocation3 + $0x68] sm:$0xff] %v5988
      %6017 = vst [vmem:[#allocation3 + $0x70] sm:$0xff] %v5989
      %6018 = vst [vmem:[#allocation3 + $0x78] sm:$0xff] %v5990
      %6019 = vst [vmem:[#allocation3 + $0x80] sm:$0xff] %v5991
      %6020 = vst [vmem:[#allocation3 + $0x88] sm:$0xff] %v5992
      %6021 = vst [vmem:[#allocation3 + $0x90] sm:$0xff] %v5993
      %6022 = vst [vmem:[#allocation3 + $0x98] sm:$0xff] %v5994
      %6023 = vst [vmem:[#allocation3 + $0xa0] sm:$0xff] %v5995
      %6024 = vst [vmem:[#allocation3 + $0xa8] sm:$0xff] %v5996
      %6025 = vst [vmem:[#allocation3 + $0xb0] sm:$0xff] %v5997
      %6026 = vst [vmem:[#allocation3 + $0xb8] sm:$0xff] %v5998
      %6027 = vst [vmem:[#allocation3 + $0xc0] sm:$0xff] %v5999
      %6028 = vst [vmem:[#allocation3 + $0xc8] sm:$0xff] %v6000
      %6029 = vst [vmem:[#allocation3 + $0xd0] sm:$0xff] %v6001
      %6030 = vst [vmem:[#allocation3 + $0xd8] sm:$0xff] %v6002
      %v6031 = vld [vmem:[%s5338] sm:$0xfe]
      %v6032 = vld [vmem:[%s5338 + $0x8] sm:$0xfe]
      %v6033 = vld [vmem:[%s5338 + $0x10] sm:$0x7f]
      %v6034 = vld [vmem:[%s5338 + $0x18] sm:$0x7f]
      %v6035 = vld [vmem:[%s5338 + $0x20] sm:$0xfe]
      %v6036 = vld [vmem:[%s5338 + $0x28] sm:$0xfe]
      %v6037 = vld [vmem:[%s5338 + $0x30] sm:$0x7f]
      %v6038 = vld [vmem:[%s5338 + $0x38] sm:$0x7f]
      %v6039 = vld [vmem:[%s5338 + $0x40] sm:$0xfe]
      %v6040 = vld [vmem:[%s5338 + $0x48] sm:$0xfe]
      %v6041 = vld [vmem:[%s5338 + $0x50] sm:$0x7f]
      %v6042 = vld [vmem:[%s5338 + $0x58] sm:$0x7f]
      %v6043 = vld [vmem:[%s5338 + $0x60] sm:$0xfe]
      %v6044 = vld [vmem:[%s5338 + $0x68] sm:$0xfe]
      %v6045 = vld [vmem:[%s5338 + $0x70] sm:$0x7f]
      %v6046 = vld [vmem:[%s5338 + $0x78] sm:$0x7f]
      %v6063 = vcombine.low %v6031, %v6032
      %v6064 = vcombine.high %v6031, %v6032
      %v6066 = vunpack.c.l.s4 1983009808
      %v6067 = vunpack.c.0.s8 %v6066
      %v6068 = vlaneseq
      %v6069 = vshrl.u32 %v6068, 7
      %v6070 = vsub.s32 %v6067, %v6069
      %v6071 = vrot.slane %v6063, %v6070
      %v6073 = vunpack.c.l.s4 1983009808
      %v6074 = vunpack.c.0.s8 %v6073
      %v6075 = vlaneseq
      %v6076 = vshrl.u32 %v6075, 7
      %v6077 = vsub.s32 %v6074, %v6076
      %v6078 = vrot.slane %v6064, %v6077
      %v6079 = vcombine.high %v6071, %v6071
      %v6080 = vcombine.high %v6078, %v6078
      %v6081 = vcombine.low %v6033, %v6034
      %v6082 = vcombine.high %v6033, %v6034
      %v6084 = vunpack.c.l.s4 1983009808
      %v6085 = vunpack.c.0.s8 %v6084
      %v6086 = vlaneseq
      %v6087 = vshrl.u32 %v6086, 7
      %v6088 = vsub.s32 %v6085, %v6087
      %v6089 = vrot.slane %v6081, %v6088
      %v6091 = vunpack.c.l.s4 1983009808
      %v6092 = vunpack.c.0.s8 %v6091
      %v6093 = vlaneseq
      %v6094 = vshrl.u32 %v6093, 7
      %v6095 = vsub.s32 %v6092, %v6094
      %v6096 = vrot.slane %v6082, %v6095
      %v6097 = vcombine.high %v6089, %v6089
      %v6098 = vcombine.high %v6096, %v6096
      %v6099 = vcombine.low %v6035, %v6036
      %v6100 = vcombine.high %v6035, %v6036
      %v6102 = vunpack.c.l.s4 1983009808
      %v6103 = vunpack.c.0.s8 %v6102
      %v6104 = vlaneseq
      %v6105 = vshrl.u32 %v6104, 7
      %v6106 = vsub.s32 %v6103, %v6105
      %v6107 = vrot.slane %v6099, %v6106
      %v6109 = vunpack.c.l.s4 1983009808
      %v6110 = vunpack.c.0.s8 %v6109
      %v6111 = vlaneseq
      %v6112 = vshrl.u32 %v6111, 7
      %v6113 = vsub.s32 %v6110, %v6112
      %v6114 = vrot.slane %v6100, %v6113
      %v6115 = vcombine.high %v6107, %v6107
      %v6116 = vcombine.high %v6114, %v6114
      %v6117 = vcombine.low %v6037, %v6038
      %v6118 = vcombine.high %v6037, %v6038
      %v6120 = vunpack.c.l.s4 1983009808
      %v6121 = vunpack.c.0.s8 %v6120
      %v6122 = vlaneseq
      %v6123 = vshrl.u32 %v6122, 7
      %v6124 = vsub.s32 %v6121, %v6123
      %v6125 = vrot.slane %v6117, %v6124
      %v6127 = vunpack.c.l.s4 1983009808
      %v6128 = vunpack.c.0.s8 %v6127
      %v6129 = vlaneseq
      %v6130 = vshrl.u32 %v6129, 7
      %v6131 = vsub.s32 %v6128, %v6130
      %v6132 = vrot.slane %v6118, %v6131
      %v6133 = vcombine.high %v6125, %v6125
      %v6134 = vcombine.high %v6132, %v6132
      %v6135 = vcombine.low %v6039, %v6040
      %v6136 = vcombine.high %v6039, %v6040
      %v6138 = vunpack.c.l.s4 1983009808
      %v6139 = vunpack.c.0.s8 %v6138
      %v6140 = vlaneseq
      %v6141 = vshrl.u32 %v6140, 7
      %v6142 = vsub.s32 %v6139, %v6141
      %v6143 = vrot.slane %v6135, %v6142
      %v6145 = vunpack.c.l.s4 1983009808
      %v6146 = vunpack.c.0.s8 %v6145
      %v6147 = vlaneseq
      %v6148 = vshrl.u32 %v6147, 7
      %v6149 = vsub.s32 %v6146, %v6148
      %v6150 = vrot.slane %v6136, %v6149
      %v6151 = vcombine.high %v6143, %v6143
      %v6152 = vcombine.high %v6150, %v6150
      %v6153 = vcombine.low %v6041, %v6042
      %v6154 = vcombine.high %v6041, %v6042
      %v6156 = vunpack.c.l.s4 1983009808
      %v6157 = vunpack.c.0.s8 %v6156
      %v6158 = vlaneseq
      %v6159 = vshrl.u32 %v6158, 7
      %v6160 = vsub.s32 %v6157, %v6159
      %v6161 = vrot.slane %v6153, %v6160
      %v6163 = vunpack.c.l.s4 1983009808
      %v6164 = vunpack.c.0.s8 %v6163
      %v6165 = vlaneseq
      %v6166 = vshrl.u32 %v6165, 7
      %v6167 = vsub.s32 %v6164, %v6166
      %v6168 = vrot.slane %v6154, %v6167
      %v6169 = vcombine.high %v6161, %v6161
      %v6170 = vcombine.high %v6168, %v6168
      %v6171 = vcombine.low %v6043, %v6044
      %v6172 = vcombine.high %v6043, %v6044
      %v6174 = vunpack.c.l.s4 1983009808
      %v6175 = vunpack.c.0.s8 %v6174
      %v6176 = vlaneseq
      %v6177 = vshrl.u32 %v6176, 7
      %v6178 = vsub.s32 %v6175, %v6177
      %v6179 = vrot.slane %v6171, %v6178
      %v6181 = vunpack.c.l.s4 1983009808
      %v6182 = vunpack.c.0.s8 %v6181
      %v6183 = vlaneseq
      %v6184 = vshrl.u32 %v6183, 7
      %v6185 = vsub.s32 %v6182, %v6184
      %v6186 = vrot.slane %v6172, %v6185
      %v6187 = vcombine.high %v6179, %v6179
      %v6188 = vcombine.high %v6186, %v6186
      %v6189 = vcombine.low %v6045, %v6046
      %v6190 = vcombine.high %v6045, %v6046
      %v6192 = vunpack.c.l.s4 1983009808
      %v6193 = vunpack.c.0.s8 %v6192
      %v6194 = vlaneseq
      %v6195 = vshrl.u32 %v6194, 7
      %v6196 = vsub.s32 %v6193, %v6195
      %v6197 = vrot.slane %v6189, %v6196
      %v6199 = vunpack.c.l.s4 1983009808
      %v6200 = vunpack.c.0.s8 %v6199
      %v6201 = vlaneseq
      %v6202 = vshrl.u32 %v6201, 7
      %v6203 = vsub.s32 %v6200, %v6202
      %v6204 = vrot.slane %v6190, %v6203
      %v6205 = vcombine.high %v6197, %v6197
      %v6206 = vcombine.high %v6204, %v6204
      %v6207 = vrot.slane %v6071, 7
      %v6208 = vrot.slane %v6207, 2
      %v6209 = vrot.slane %v6079, 7
      %v6210 = vsel %vm1860, %v6208, %v6209
      %v6211 = vrot.slane %v6209, 2
      %v6212 = vrot.slane %v6078, 7
      %v6213 = vsel %vm1860, %v6211, %v6212
      %v6214 = vrot.slane %v6212, 2
      %v6215 = vrot.slane %v6080, 7
      %v6216 = vsel %vm1860, %v6214, %v6215
      %v6217 = vrot.slane %v6215, 2
      %v6218 = vrot.slane %v6089, 7
      %v6219 = vsel %vm1860, %v6217, %v6218
      %v6220 = vrot.slane %v6218, 2
      %v6221 = vrot.slane %v6097, 7
      %v6222 = vsel %vm1860, %v6220, %v6221
      %v6223 = vrot.slane %v6221, 2
      %v6224 = vrot.slane %v6096, 7
      %v6225 = vsel %vm1860, %v6223, %v6224
      %v6226 = vrot.slane %v6224, 2
      %v6227 = vrot.slane %v6098, 7
      %v6228 = vsel %vm1860, %v6226, %v6227
      %v6229 = vrot.slane %v6107, 7
      %v6230 = vrot.slane %v6229, 2
      %v6231 = vrot.slane %v6115, 7
      %v6232 = vsel %vm1860, %v6230, %v6231
      %v6233 = vrot.slane %v6231, 2
      %v6234 = vrot.slane %v6114, 7
      %v6235 = vsel %vm1860, %v6233, %v6234
      %v6236 = vrot.slane %v6234, 2
      %v6237 = vrot.slane %v6116, 7
      %v6238 = vsel %vm1860, %v6236, %v6237
      %v6239 = vrot.slane %v6237, 2
      %v6240 = vrot.slane %v6125, 7
      %v6241 = vsel %vm1860, %v6239, %v6240
      %v6242 = vrot.slane %v6240, 2
      %v6243 = vrot.slane %v6133, 7
      %v6244 = vsel %vm1860, %v6242, %v6243
      %v6245 = vrot.slane %v6243, 2
      %v6246 = vrot.slane %v6132, 7
      %v6247 = vsel %vm1860, %v6245, %v6246
      %v6248 = vrot.slane %v6246, 2
      %v6249 = vrot.slane %v6134, 7
      %v6250 = vsel %vm1860, %v6248, %v6249
      %v6251 = vrot.slane %v6143, 7
      %v6252 = vrot.slane %v6251, 2
      %v6253 = vrot.slane %v6151, 7
      %v6254 = vsel %vm1860, %v6252, %v6253
      %v6255 = vrot.slane %v6253, 2
      %v6256 = vrot.slane %v6150, 7
      %v6257 = vsel %vm1860, %v6255, %v6256
      %v6258 = vrot.slane %v6256, 2
      %v6259 = vrot.slane %v6152, 7
      %v6260 = vsel %vm1860, %v6258, %v6259
      %v6261 = vrot.slane %v6259, 2
      %v6262 = vrot.slane %v6161, 7
      %v6263 = vsel %vm1860, %v6261, %v6262
      %v6264 = vrot.slane %v6262, 2
      %v6265 = vrot.slane %v6169, 7
      %v6266 = vsel %vm1860, %v6264, %v6265
      %v6267 = vrot.slane %v6265, 2
      %v6268 = vrot.slane %v6168, 7
      %v6269 = vsel %vm1860, %v6267, %v6268
      %v6270 = vrot.slane %v6268, 2
      %v6271 = vrot.slane %v6170, 7
      %v6272 = vsel %vm1860, %v6270, %v6271
      %v6273 = vrot.slane %v6179, 7
      %v6274 = vrot.slane %v6273, 2
      %v6275 = vrot.slane %v6187, 7
      %v6276 = vsel %vm1860, %v6274, %v6275
      %v6277 = vrot.slane %v6275, 2
      %v6278 = vrot.slane %v6186, 7
      %v6279 = vsel %vm1860, %v6277, %v6278
      %v6280 = vrot.slane %v6278, 2
      %v6281 = vrot.slane %v6188, 7
      %v6282 = vsel %vm1860, %v6280, %v6281
      %v6283 = vrot.slane %v6281, 2
      %v6284 = vrot.slane %v6197, 7
      %v6285 = vsel %vm1860, %v6283, %v6284
      %v6286 = vrot.slane %v6284, 2
      %v6287 = vrot.slane %v6205, 7
      %v6288 = vsel %vm1860, %v6286, %v6287
      %v6289 = vrot.slane %v6287, 2
      %v6290 = vrot.slane %v6204, 7
      %v6291 = vsel %vm1860, %v6289, %v6290
      %v6292 = vrot.slane %v6290, 2
      %v6293 = vrot.slane %v6206, 7
      %v6294 = vsel %vm1860, %v6292, %v6293
      %s6295 = scalar_lea.vmem %s3, 1792
      %v6296 = vld [vmem:[%s6295] sm:$0xff]
      %v6297 = vld [vmem:[%s6295 + $0x8] sm:$0xff]
      %v6298 = vld [vmem:[%s6295 + $0x10] sm:$0xff]
      %v6299 = vld [vmem:[%s6295 + $0x18] sm:$0xff]
      %v6300 = vld [vmem:[%s6295 + $0x20] sm:$0xff]
      %v6301 = vld [vmem:[%s6295 + $0x28] sm:$0xff]
      %v6302 = vld [vmem:[%s6295 + $0x30] sm:$0xff]
      %v6303 = vld [vmem:[%s6295 + $0x38] sm:$0xff]
      %v6304 = vld [vmem:[%s6295 + $0x40] sm:$0xff]
      %v6305 = vld [vmem:[%s6295 + $0x48] sm:$0xff]
      %v6306 = vld [vmem:[%s6295 + $0x50] sm:$0xff]
      %v6307 = vld [vmem:[%s6295 + $0x58] sm:$0xff]
      %v6308 = vld [vmem:[%s6295 + $0x60] sm:$0xff]
      %v6309 = vld [vmem:[%s6295 + $0x68] sm:$0xff]
      %v6310 = vld [vmem:[%s6295 + $0x70] sm:$0xff]
      %v6311 = vld [vmem:[%s6295 + $0x78] sm:$0xff]
      %v6312 = vld [vmem:[%s6295 + $0x80] sm:$0xff]
      %v6313 = vld [vmem:[%s6295 + $0x88] sm:$0xff]
      %v6314 = vld [vmem:[%s6295 + $0x90] sm:$0xff]
      %v6315 = vld [vmem:[%s6295 + $0x98] sm:$0xff]
      %v6316 = vld [vmem:[%s6295 + $0xa0] sm:$0xff]
      %v6317 = vld [vmem:[%s6295 + $0xa8] sm:$0xff]
      %v6318 = vld [vmem:[%s6295 + $0xb0] sm:$0xff]
      %v6319 = vld [vmem:[%s6295 + $0xb8] sm:$0xff]
      %v6320 = vld [vmem:[%s6295 + $0xc0] sm:$0xff]
      %v6321 = vld [vmem:[%s6295 + $0xc8] sm:$0xff]
      %v6322 = vld [vmem:[%s6295 + $0xd0] sm:$0xff]
      %v6323 = vld [vmem:[%s6295 + $0xd8] sm:$0xff]
      %v6324 = vld [vmem:[%s6295 + $0xe0] sm:$0xff]
      %v6325 = vld [vmem:[%s6295 + $0xe8] sm:$0xff]
      %v6326 = vld [vmem:[%s6295 + $0xf0] sm:$0xff]
      %v6327 = vld [vmem:[%s6295 + $0xf8] sm:$0xff]
      %v6328 = vcombine.low %v6210, %v6213
      %v6329 = vcombine.low %v6216, %v6219
      %v6331 = vunpack.c.l.s4 1983009808
      %v6332 = vunpack.c.0.s8 %v6331
      %v6333 = vlaneseq
      %v6334 = vshrl.u32 %v6333, 7
      %v6335 = vsub.s32 %v6332, %v6334
      %v6336 = vrot.slane %v6328, %v6335
      %v6338 = vunpack.c.l.s4 1983009808
      %v6339 = vunpack.c.0.s8 %v6338
      %v6340 = vlaneseq
      %v6341 = vshrl.u32 %v6340, 7
      %v6342 = vsub.s32 %v6339, %v6341
      %v6343 = vrot.slane %v6329, %v6342
      %v6344 = vcombine.low %v6336, %v6343
      %v6345 = vcombine.high %v6336, %v6343
      %v6346 = vcombine.low %v6222, %v6225
      %v6347 = vcombine.low %v6228, %v6232
      %v6349 = vunpack.c.l.s4 1983009808
      %v6350 = vunpack.c.0.s8 %v6349
      %v6351 = vlaneseq
      %v6352 = vshrl.u32 %v6351, 7
      %v6353 = vsub.s32 %v6350, %v6352
      %v6354 = vrot.slane %v6346, %v6353
      %v6356 = vunpack.c.l.s4 1983009808
      %v6357 = vunpack.c.0.s8 %v6356
      %v6358 = vlaneseq
      %v6359 = vshrl.u32 %v6358, 7
      %v6360 = vsub.s32 %v6357, %v6359
      %v6361 = vrot.slane %v6347, %v6360
      %v6362 = vcombine.low %v6354, %v6361
      %v6363 = vcombine.high %v6354, %v6361
      %v6364 = vcombine.low %v6235, %v6238
      %v6365 = vcombine.low %v6241, %v6244
      %v6367 = vunpack.c.l.s4 1983009808
      %v6368 = vunpack.c.0.s8 %v6367
      %v6369 = vlaneseq
      %v6370 = vshrl.u32 %v6369, 7
      %v6371 = vsub.s32 %v6368, %v6370
      %v6372 = vrot.slane %v6364, %v6371
      %v6374 = vunpack.c.l.s4 1983009808
      %v6375 = vunpack.c.0.s8 %v6374
      %v6376 = vlaneseq
      %v6377 = vshrl.u32 %v6376, 7
      %v6378 = vsub.s32 %v6375, %v6377
      %v6379 = vrot.slane %v6365, %v6378
      %v6380 = vcombine.low %v6372, %v6379
      %v6381 = vcombine.high %v6372, %v6379
      %v6382 = vcombine.low %v6247, %v6250
      %v6383 = vcombine.low %v6254, %v6257
      %v6385 = vunpack.c.l.s4 1983009808
      %v6386 = vunpack.c.0.s8 %v6385
      %v6387 = vlaneseq
      %v6388 = vshrl.u32 %v6387, 7
      %v6389 = vsub.s32 %v6386, %v6388
      %v6390 = vrot.slane %v6382, %v6389
      %v6392 = vunpack.c.l.s4 1983009808
      %v6393 = vunpack.c.0.s8 %v6392
      %v6394 = vlaneseq
      %v6395 = vshrl.u32 %v6394, 7
      %v6396 = vsub.s32 %v6393, %v6395
      %v6397 = vrot.slane %v6383, %v6396
      %v6398 = vcombine.low %v6390, %v6397
      %v6399 = vcombine.high %v6390, %v6397
      %v6400 = vcombine.low %v6260, %v6263
      %v6401 = vcombine.low %v6266, %v6269
      %v6403 = vunpack.c.l.s4 1983009808
      %v6404 = vunpack.c.0.s8 %v6403
      %v6405 = vlaneseq
      %v6406 = vshrl.u32 %v6405, 7
      %v6407 = vsub.s32 %v6404, %v6406
      %v6408 = vrot.slane %v6400, %v6407
      %v6410 = vunpack.c.l.s4 1983009808
      %v6411 = vunpack.c.0.s8 %v6410
      %v6412 = vlaneseq
      %v6413 = vshrl.u32 %v6412, 7
      %v6414 = vsub.s32 %v6411, %v6413
      %v6415 = vrot.slane %v6401, %v6414
      %v6416 = vcombine.low %v6408, %v6415
      %v6417 = vcombine.high %v6408, %v6415
      %v6418 = vcombine.low %v6272, %v6276
      %v6419 = vcombine.low %v6279, %v6282
      %v6421 = vunpack.c.l.s4 1983009808
      %v6422 = vunpack.c.0.s8 %v6421
      %v6423 = vlaneseq
      %v6424 = vshrl.u32 %v6423, 7
      %v6425 = vsub.s32 %v6422, %v6424
      %v6426 = vrot.slane %v6418, %v6425
      %v6428 = vunpack.c.l.s4 1983009808
      %v6429 = vunpack.c.0.s8 %v6428
      %v6430 = vlaneseq
      %v6431 = vshrl.u32 %v6430, 7
      %v6432 = vsub.s32 %v6429, %v6431
      %v6433 = vrot.slane %v6419, %v6432
      %v6434 = vcombine.low %v6426, %v6433
      %v6435 = vcombine.high %v6426, %v6433
      %v6436 = vcombine.low %v6285, %v6288
      %v6437 = vcombine.low %v6291, %v6294
      %v6439 = vunpack.c.l.s4 1983009808
      %v6440 = vunpack.c.0.s8 %v6439
      %v6441 = vlaneseq
      %v6442 = vshrl.u32 %v6441, 7
      %v6443 = vsub.s32 %v6440, %v6442
      %v6444 = vrot.slane %v6436, %v6443
      %v6446 = vunpack.c.l.s4 1983009808
      %v6447 = vunpack.c.0.s8 %v6446
      %v6448 = vlaneseq
      %v6449 = vshrl.u32 %v6448, 7
      %v6450 = vsub.s32 %v6447, %v6449
      %v6451 = vrot.slane %v6437, %v6450
      %v6452 = vcombine.low %v6444, %v6451
      %v6453 = vcombine.high %v6444, %v6451
      %v6500 = vunpack.c.l.b16 %v6296
      %v6501 = vunpack.c.h.b16 %v6296
      %v6502 = vunpack.c.l.b16 %v6297
      %v6503 = vunpack.c.h.b16 %v6297
      %v6504 = vunpack.c.l.b16 %v6298
      %v6505 = vunpack.c.h.b16 %v6298
      %v6506 = vunpack.c.l.b16 %v6299
      %v6507 = vunpack.c.h.b16 %v6299
      %v6508 = vunpack.c.l.b16 %v6300
      %v6509 = vunpack.c.h.b16 %v6300
      %v6510 = vunpack.c.l.b16 %v6301
      %v6511 = vunpack.c.h.b16 %v6301
      %v6512 = vunpack.c.l.b16 %v6302
      %v6513 = vunpack.c.h.b16 %v6302
      %v6514 = vunpack.c.l.b16 %v6303
      %v6515 = vunpack.c.h.b16 %v6303
      %v6516 = vunpack.c.l.b16 %v6304
      %v6517 = vunpack.c.h.b16 %v6304
      %v6518 = vunpack.c.l.b16 %v6305
      %v6519 = vunpack.c.h.b16 %v6305
      %v6520 = vunpack.c.l.b16 %v6306
      %v6521 = vunpack.c.h.b16 %v6306
      %v6522 = vunpack.c.l.b16 %v6307
      %v6523 = vunpack.c.h.b16 %v6307
      %v6524 = vunpack.c.l.b16 %v6308
      %v6525 = vunpack.c.h.b16 %v6308
      %v6526 = vunpack.c.l.b16 %v6309
      %v6527 = vunpack.c.h.b16 %v6309
      %v6528 = vunpack.c.l.b16 %v6310
      %v6529 = vunpack.c.h.b16 %v6310
      %v6530 = vunpack.c.l.b16 %v6311
      %v6531 = vunpack.c.h.b16 %v6311
      %v6532 = vunpack.c.l.b16 %v6312
      %v6533 = vunpack.c.h.b16 %v6312
      %v6534 = vunpack.c.l.b16 %v6313
      %v6535 = vunpack.c.h.b16 %v6313
      %v6536 = vunpack.c.l.b16 %v6314
      %v6537 = vunpack.c.h.b16 %v6314
      %v6538 = vunpack.c.l.b16 %v6315
      %v6539 = vunpack.c.h.b16 %v6315
      %v6540 = vunpack.c.l.b16 %v6316
      %v6541 = vunpack.c.h.b16 %v6316
      %v6542 = vunpack.c.l.b16 %v6317
      %v6543 = vunpack.c.h.b16 %v6317
      %v6544 = vunpack.c.l.b16 %v6318
      %v6545 = vunpack.c.h.b16 %v6318
      %v6546 = vunpack.c.l.b16 %v6319
      %v6547 = vunpack.c.h.b16 %v6319
      %v6548 = vunpack.c.l.b16 %v6320
      %v6549 = vunpack.c.h.b16 %v6320
      %v6550 = vunpack.c.l.b16 %v6321
      %v6551 = vunpack.c.h.b16 %v6321
      %v6552 = vunpack.c.l.b16 %v6322
      %v6553 = vunpack.c.h.b16 %v6322
      %v6554 = vunpack.c.l.b16 %v6323
      %v6555 = vunpack.c.h.b16 %v6323
      %v6556 = vunpack.c.l.b16 %v6324
      %v6557 = vunpack.c.h.b16 %v6324
      %v6558 = vunpack.c.l.b16 %v6325
      %v6559 = vunpack.c.h.b16 %v6325
      %v6560 = vunpack.c.l.b16 %v6326
      %v6561 = vunpack.c.h.b16 %v6326
      %v6562 = vunpack.c.l.b16 %v6327
      %v6563 = vunpack.c.h.b16 %v6327
      %v6564 = vpack.c.b16 %v6502, %v6500
      %v6565 = vpack.c.b16 %v6503, %v6501
      %v6566 = vpack.c.b16 %v6506, %v6504
      %v6567 = vpack.c.b16 %v6507, %v6505
      %v6568 = vpack.c.b16 %v6510, %v6508
      %v6569 = vpack.c.b16 %v6511, %v6509
      %v6570 = vpack.c.b16 %v6514, %v6512
      %v6571 = vpack.c.b16 %v6515, %v6513
      %v6572 = vpack.c.b16 %v6518, %v6516
      %v6573 = vpack.c.b16 %v6519, %v6517
      %v6574 = vpack.c.b16 %v6522, %v6520
      %v6575 = vpack.c.b16 %v6523, %v6521
      %v6576 = vpack.c.b16 %v6526, %v6524
      %v6577 = vpack.c.b16 %v6527, %v6525
      %v6578 = vpack.c.b16 %v6530, %v6528
      %v6579 = vpack.c.b16 %v6531, %v6529
      %v6580 = vpack.c.b16 %v6534, %v6532
      %v6581 = vpack.c.b16 %v6535, %v6533
      %v6582 = vpack.c.b16 %v6538, %v6536
      %v6583 = vpack.c.b16 %v6539, %v6537
      %v6584 = vpack.c.b16 %v6542, %v6540
      %v6585 = vpack.c.b16 %v6543, %v6541
      %v6586 = vpack.c.b16 %v6546, %v6544
      %v6587 = vpack.c.b16 %v6547, %v6545
      %v6588 = vpack.c.b16 %v6550, %v6548
      %v6589 = vpack.c.b16 %v6551, %v6549
      %v6590 = vpack.c.b16 %v6554, %v6552
      %v6591 = vpack.c.b16 %v6555, %v6553
      %v6592 = vpack.c.b16 %v6558, %v6556
      %v6593 = vpack.c.b16 %v6559, %v6557
      %v6594 = vpack.c.b16 %v6562, %v6560
      %v6595 = vpack.c.b16 %v6563, %v6561
      %6628 = vmatprep.subr.bf16.mxu0 %v6565
      %6629 = vmatpush1.bf16.msra.mxu0 %v6564
      %6630 = vmatprep.subr.bf16.mxu0 %v6567
      %6631 = vmatpush1.bf16.msra.mxu0 %v6566
      %6632 = vmatprep.subr.bf16.mxu0 %v6569
      %6633 = vmatpush1.bf16.msra.mxu0 %v6568
      %6634 = vmatprep.subr.bf16.mxu0 %v6571
      %6635 = vmatpush1.bf16.msra.mxu0 %v6570
      %6636 = vmatprep.subr.bf16.mxu0 %v6573
      %6637 = vmatpush1.bf16.msra.mxu0 %v6572
      %6638 = vmatprep.subr.bf16.mxu0 %v6575
      %6639 = vmatpush1.bf16.msra.mxu0 %v6574
      %6640 = vmatprep.subr.bf16.mxu0 %v6577
      %6641 = vmatpush1.bf16.msra.mxu0 %v6576
      %6642 = vmatprep.subr.bf16.mxu0 %v6579
      %6643 = vmatpush1.bf16.msra.mxu0 %v6578
      %6644 = vmatprep.subr.bf16.mxu0 %v6581
      %6645 = vmatpush1.bf16.msra.mxu0 %v6580
      %6646 = vmatprep.subr.bf16.mxu0 %v6583
      %6647 = vmatpush1.bf16.msra.mxu0 %v6582
      %6648 = vmatprep.subr.bf16.mxu0 %v6585
      %6649 = vmatpush1.bf16.msra.mxu0 %v6584
      %6650 = vmatprep.subr.bf16.mxu0 %v6587
      %6651 = vmatpush1.bf16.msra.mxu0 %v6586
      %6652 = vmatprep.subr.bf16.mxu0 %v6589
      %6653 = vmatpush1.bf16.msra.mxu0 %v6588
      %6654 = vmatprep.subr.bf16.mxu0 %v6591
      %6655 = vmatpush1.bf16.msra.mxu0 %v6590
      %6656 = vmatprep.subr.bf16.mxu0 %v6593
      %6657 = vmatpush1.bf16.msra.mxu0 %v6592
      %6658 = vmatprep.subr.bf16.mxu0 %v6595
      %6659 = vmatpush1.bf16.msra.mxu0 %v6594
      %6660 = vmatprep.mubr.bf16.mxu0 %v6345
      %6661 = vmatmul.mubr.bf16.gmra.mrb[0].mxu0 %v6344
      %v6662 = vpop.f32.mrb[0].mxu0
      %v6663 = vadd.f32 0.0, %v6662
      %v6664 = vpop.f32.mrb[0].mxu0
      %v6665 = vadd.f32 0.0, %v6664
      %v6666 = vpop.f32.mrb[0].mxu0
      %v6667 = vadd.f32 0.0, %v6666
      %v6668 = vpop.f32.mrb[0].mxu0
      %v6669 = vadd.f32 0.0, %v6668
      %6670 = vmatprep.mubr.bf16.mxu0 %v6363
      %6671 = vmatmul.mubr.bf16.gmra.mrb[0].mxu0 %v6362
      %v6672 = vpop.f32.mrb[0].mxu0
      %v6673 = vadd.f32 0.0, %v6672
      %v6674 = vpop.f32.mrb[0].mxu0
      %v6675 = vadd.f32 0.0, %v6674
      %v6676 = vpop.f32.mrb[0].mxu0
      %v6677 = vadd.f32 0.0, %v6676
      %v6678 = vpop.f32.mrb[0].mxu0
      %v6679 = vadd.f32 0.0, %v6678
      %6680 = vmatprep.mubr.bf16.mxu0 %v6381
      %6681 = vmatmul.mubr.bf16.gmra.mrb[0].mxu0 %v6380
      %v6682 = vpop.f32.mrb[0].mxu0
      %v6683 = vadd.f32 0.0, %v6682
      %v6684 = vpop.f32.mrb[0].mxu0
      %v6685 = vadd.f32 0.0, %v6684
      %v6686 = vpop.f32.mrb[0].mxu0
      %v6687 = vadd.f32 0.0, %v6686
      %v6688 = vpop.f32.mrb[0].mxu0
      %v6689 = vadd.f32 0.0, %v6688
      %6690 = vmatprep.mubr.bf16.mxu0 %v6399
      %6691 = vmatmul.mubr.bf16.gmra.mrb[0].mxu0 %v6398
      %v6692 = vpop.f32.mrb[0].mxu0
      %v6693 = vadd.f32 0.0, %v6692
      %v6694 = vpop.f32.mrb[0].mxu0
      %v6695 = vadd.f32 0.0, %v6694
      %v6696 = vpop.f32.mrb[0].mxu0
      %v6697 = vadd.f32 0.0, %v6696
      %v6698 = vpop.f32.mrb[0].mxu0
      %v6699 = vadd.f32 0.0, %v6698
      %6700 = vmatprep.mubr.bf16.mxu0 %v6417
      %6701 = vmatmul.mubr.bf16.gmra.mrb[0].mxu0 %v6416
      %v6702 = vpop.f32.mrb[0].mxu0
      %v6703 = vadd.f32 0.0, %v6702
      %v6704 = vpop.f32.mrb[0].mxu0
      %v6705 = vadd.f32 0.0, %v6704
      %v6706 = vpop.f32.mrb[0].mxu0
      %v6707 = vadd.f32 0.0, %v6706
      %v6708 = vpop.f32.mrb[0].mxu0
      %v6709 = vadd.f32 0.0, %v6708
      %6710 = vmatprep.mubr.bf16.mxu0 %v6435
      %6711 = vmatmul.mubr.bf16.gmra.mrb[0].mxu0 %v6434
      %v6712 = vpop.f32.mrb[0].mxu0
      %v6713 = vadd.f32 0.0, %v6712
      %v6714 = vpop.f32.mrb[0].mxu0
      %v6715 = vadd.f32 0.0, %v6714
      %v6716 = vpop.f32.mrb[0].mxu0
      %v6717 = vadd.f32 0.0, %v6716
      %v6718 = vpop.f32.mrb[0].mxu0
      %v6719 = vadd.f32 0.0, %v6718
      %6720 = vmatprep.mubr.bf16.mxu0 %v6453
      %6721 = vmatmul.mubr.bf16.gmra.mrb[0].mxu0 %v6452
      %v6722 = vpop.f32.mrb[0].mxu0
      %v6723 = vadd.f32 0.0, %v6722
      %v6724 = vpop.f32.mrb[0].mxu0
      %v6725 = vadd.f32 0.0, %v6724
      %v6726 = vpop.f32.mrb[0].mxu0
      %v6727 = vadd.f32 0.0, %v6726
      %v6728 = vpop.f32.mrb[0].mxu0
      %v6729 = vadd.f32 0.0, %v6728
      %6730 = vdwg.mxu0
      %v6731 = vld [vmem:[#allocation3] sm:$0xff]
      %v6732 = vld [vmem:[#allocation3 + $0x8] sm:$0xff]
      %v6733 = vld [vmem:[#allocation3 + $0x10] sm:$0xff]
      %v6734 = vld [vmem:[#allocation3 + $0x18] sm:$0xff]
      %v6735 = vld [vmem:[#allocation3 + $0x20] sm:$0xff]
      %v6736 = vld [vmem:[#allocation3 + $0x28] sm:$0xff]
      %v6737 = vld [vmem:[#allocation3 + $0x30] sm:$0xff]
      %v6738 = vld [vmem:[#allocation3 + $0x38] sm:$0xff]
      %v6739 = vld [vmem:[#allocation3 + $0x40] sm:$0xff]
      %v6740 = vld [vmem:[#allocation3 + $0x48] sm:$0xff]
      %v6741 = vld [vmem:[#allocation3 + $0x50] sm:$0xff]
      %v6742 = vld [vmem:[#allocation3 + $0x58] sm:$0xff]
      %v6743 = vld [vmem:[#allocation3 + $0x60] sm:$0xff]
      %v6744 = vld [vmem:[#allocation3 + $0x68] sm:$0xff]
      %v6745 = vld [vmem:[#allocation3 + $0x70] sm:$0xff]
      %v6746 = vld [vmem:[#allocation3 + $0x78] sm:$0xff]
      %v6747 = vld [vmem:[#allocation3 + $0x80] sm:$0xff]
      %v6748 = vld [vmem:[#allocation3 + $0x88] sm:$0xff]
      %v6749 = vld [vmem:[#allocation3 + $0x90] sm:$0xff]
      %v6750 = vld [vmem:[#allocation3 + $0x98] sm:$0xff]
      %v6751 = vld [vmem:[#allocation3 + $0xa0] sm:$0xff]
      %v6752 = vld [vmem:[#allocation3 + $0xa8] sm:$0xff]
      %v6753 = vld [vmem:[#allocation3 + $0xb0] sm:$0xff]
      %v6754 = vld [vmem:[#allocation3 + $0xb8] sm:$0xff]
      %v6755 = vld [vmem:[#allocation3 + $0xc0] sm:$0xff]
      %v6756 = vld [vmem:[#allocation3 + $0xc8] sm:$0xff]
      %v6757 = vld [vmem:[#allocation3 + $0xd0] sm:$0xff]
      %v6758 = vld [vmem:[#allocation3 + $0xd8] sm:$0xff]
      %v6759 = vadd.f32 %v6731, %v6663
      %v6760 = vadd.f32 %v6732, %v6665
      %v6761 = vadd.f32 %v6733, %v6667
      %v6762 = vadd.f32 %v6734, %v6669
      %v6763 = vadd.f32 %v6735, %v6673
      %v6764 = vadd.f32 %v6736, %v6675
      %v6765 = vadd.f32 %v6737, %v6677
      %v6766 = vadd.f32 %v6738, %v6679
      %v6767 = vadd.f32 %v6739, %v6683
      %v6768 = vadd.f32 %v6740, %v6685
      %v6769 = vadd.f32 %v6741, %v6687
      %v6770 = vadd.f32 %v6742, %v6689
      %v6771 = vadd.f32 %v6743, %v6693
      %v6772 = vadd.f32 %v6744, %v6695
      %v6773 = vadd.f32 %v6745, %v6697
      %v6774 = vadd.f32 %v6746, %v6699
      %v6775 = vadd.f32 %v6747, %v6703
      %v6776 = vadd.f32 %v6748, %v6705
      %v6777 = vadd.f32 %v6749, %v6707
      %v6778 = vadd.f32 %v6750, %v6709
      %v6779 = vadd.f32 %v6751, %v6713
      %v6780 = vadd.f32 %v6752, %v6715
      %v6781 = vadd.f32 %v6753, %v6717
      %v6782 = vadd.f32 %v6754, %v6719
      %v6783 = vadd.f32 %v6755, %v6723
      %v6784 = vadd.f32 %v6756, %v6725
      %v6785 = vadd.f32 %v6757, %v6727
      %v6786 = vadd.f32 %v6758, %v6729
      %6787 = vst [vmem:[#allocation3] sm:$0xff] %v6759
      %6788 = vst [vmem:[#allocation3 + $0x8] sm:$0xff] %v6760
      %6789 = vst [vmem:[#allocation3 + $0x10] sm:$0xff] %v6761
      %6790 = vst [vmem:[#allocation3 + $0x18] sm:$0xff] %v6762
      %6791 = vst [vmem:[#allocation3 + $0x20] sm:$0xff] %v6763
      %6792 = vst [vmem:[#allocation3 + $0x28] sm:$0xff] %v6764
      %6793 = vst [vmem:[#allocation3 + $0x30] sm:$0xff] %v6765
      %6794 = vst [vmem:[#allocation3 + $0x38] sm:$0xff] %v6766
      %6795 = vst [vmem:[#allocation3 + $0x40] sm:$0xff] %v6767
      %6796 = vst [vmem:[#allocation3 + $0x48] sm:$0xff] %v6768
      %6797 = vst [vmem:[#allocation3 + $0x50] sm:$0xff] %v6769
      %6798 = vst [vmem:[#allocation3 + $0x58] sm:$0xff] %v6770
      %6799 = vst [vmem:[#allocation3 + $0x60] sm:$0xff] %v6771
      %6800 = vst [vmem:[#allocation3 + $0x68] sm:$0xff] %v6772
      %6801 = vst [vmem:[#allocation3 + $0x70] sm:$0xff] %v6773
      %6802 = vst [vmem:[#allocation3 + $0x78] sm:$0xff] %v6774
      %6803 = vst [vmem:[#allocation3 + $0x80] sm:$0xff] %v6775
      %6804 = vst [vmem:[#allocation3 + $0x88] sm:$0xff] %v6776
      %6805 = vst [vmem:[#allocation3 + $0x90] sm:$0xff] %v6777
      %6806 = vst [vmem:[#allocation3 + $0x98] sm:$0xff] %v6778
      %6807 = vst [vmem:[#allocation3 + $0xa0] sm:$0xff] %v6779
      %6808 = vst [vmem:[#allocation3 + $0xa8] sm:$0xff] %v6780
      %6809 = vst [vmem:[#allocation3 + $0xb0] sm:$0xff] %v6781
      %6810 = vst [vmem:[#allocation3 + $0xb8] sm:$0xff] %v6782
      %6811 = vst [vmem:[#allocation3 + $0xc0] sm:$0xff] %v6783
      %6812 = vst [vmem:[#allocation3 + $0xc8] sm:$0xff] %v6784
      %6813 = vst [vmem:[#allocation3 + $0xd0] sm:$0xff] %v6785
      %6814 = vst [vmem:[#allocation3 + $0xd8] sm:$0xff] %v6786
      %v6815 = vld [vmem:[%s5338] sm:$0xfc]
      %v6816 = vld [vmem:[%s5338 + $0x8] sm:$0xfc]
      %v6817 = vld [vmem:[%s5338 + $0x10] sm:$0xff]
      %v6818 = vld [vmem:[%s5338 + $0x18] sm:$0xff]
      %v6819 = vld [vmem:[%s5338 + $0x20] sm:$0xfc]
      %v6820 = vld [vmem:[%s5338 + $0x28] sm:$0xfc]
      %v6821 = vld [vmem:[%s5338 + $0x30] sm:$0xff]
      %v6822 = vld [vmem:[%s5338 + $0x38] sm:$0xff]
      %v6823 = vld [vmem:[%s5338 + $0x40] sm:$0xfc]
      %v6824 = vld [vmem:[%s5338 + $0x48] sm:$0xfc]
      %v6825 = vld [vmem:[%s5338 + $0x50] sm:$0xff]
      %v6826 = vld [vmem:[%s5338 + $0x58] sm:$0xff]
      %v6827 = vld [vmem:[%s5338 + $0x60] sm:$0xfc]
      %v6828 = vld [vmem:[%s5338 + $0x68] sm:$0xfc]
      %v6829 = vld [vmem:[%s5338 + $0x70] sm:$0xff]
      %v6830 = vld [vmem:[%s5338 + $0x78] sm:$0xff]
      %v6847 = vcombine.low %v6815, %v6816
      %v6848 = vcombine.high %v6815, %v6816
      %v6850 = vunpack.c.l.s4 1983009808
      %v6851 = vunpack.c.0.s8 %v6850
      %v6852 = vlaneseq
      %v6853 = vshrl.u32 %v6852, 7
      %v6854 = vsub.s32 %v6851, %v6853
      %v6855 = vrot.slane %v6847, %v6854
      %v6857 = vunpack.c.l.s4 1983009808
      %v6858 = vunpack.c.0.s8 %v6857
      %v6859 = vlaneseq
      %v6860 = vshrl.u32 %v6859, 7
      %v6861 = vsub.s32 %v6858, %v6860
      %v6862 = vrot.slane %v6848, %v6861
      %v6863 = vcombine.high %v6855, %v6855
      %v6864 = vcombine.high %v6862, %v6862
      %v6865 = vcombine.low %v6817, %v6818
      %v6866 = vcombine.high %v6817, %v6818
      %v6868 = vunpack.c.l.s4 1983009808
      %v6869 = vunpack.c.0.s8 %v6868
      %v6870 = vlaneseq
      %v6871 = vshrl.u32 %v6870, 7
      %v6872 = vsub.s32 %v6869, %v6871
      %v6873 = vrot.slane %v6865, %v6872
      %v6875 = vunpack.c.l.s4 1983009808
      %v6876 = vunpack.c.0.s8 %v6875
      %v6877 = vlaneseq
      %v6878 = vshrl.u32 %v6877, 7
      %v6879 = vsub.s32 %v6876, %v6878
      %v6880 = vrot.slane %v6866, %v6879
      %v6881 = vcombine.high %v6873, %v6873
      %v6882 = vcombine.high %v6880, %v6880
      %v6883 = vcombine.low %v6819, %v6820
      %v6884 = vcombine.high %v6819, %v6820
      %v6886 = vunpack.c.l.s4 1983009808
      %v6887 = vunpack.c.0.s8 %v6886
      %v6888 = vlaneseq
      %v6889 = vshrl.u32 %v6888, 7
      %v6890 = vsub.s32 %v6887, %v6889
      %v6891 = vrot.slane %v6883, %v6890
      %v6893 = vunpack.c.l.s4 1983009808
      %v6894 = vunpack.c.0.s8 %v6893
      %v6895 = vlaneseq
      %v6896 = vshrl.u32 %v6895, 7
      %v6897 = vsub.s32 %v6894, %v6896
      %v6898 = vrot.slane %v6884, %v6897
      %v6899 = vcombine.high %v6891, %v6891
      %v6900 = vcombine.high %v6898, %v6898
      %v6901 = vcombine.low %v6821, %v6822
      %v6902 = vcombine.high %v6821, %v6822
      %v6904 = vunpack.c.l.s4 1983009808
      %v6905 = vunpack.c.0.s8 %v6904
      %v6906 = vlaneseq
      %v6907 = vshrl.u32 %v6906, 7
      %v6908 = vsub.s32 %v6905, %v6907
      %v6909 = vrot.slane %v6901, %v6908
      %v6911 = vunpack.c.l.s4 1983009808
      %v6912 = vunpack.c.0.s8 %v6911
      %v6913 = vlaneseq
      %v6914 = vshrl.u32 %v6913, 7
      %v6915 = vsub.s32 %v6912, %v6914
      %v6916 = vrot.slane %v6902, %v6915
      %v6917 = vcombine.high %v6909, %v6909
      %v6918 = vcombine.high %v6916, %v6916
      %v6919 = vcombine.low %v6823, %v6824
      %v6920 = vcombine.high %v6823, %v6824
      %v6922 = vunpack.c.l.s4 1983009808
      %v6923 = vunpack.c.0.s8 %v6922
      %v6924 = vlaneseq
      %v6925 = vshrl.u32 %v6924, 7
      %v6926 = vsub.s32 %v6923, %v6925
      %v6927 = vrot.slane %v6919, %v6926
      %v6929 = vunpack.c.l.s4 1983009808
      %v6930 = vunpack.c.0.s8 %v6929
      %v6931 = vlaneseq
      %v6932 = vshrl.u32 %v6931, 7
      %v6933 = vsub.s32 %v6930, %v6932
      %v6934 = vrot.slane %v6920, %v6933
      %v6935 = vcombine.high %v6927, %v6927
      %v6936 = vcombine.high %v6934, %v6934
      %v6937 = vcombine.low %v6825, %v6826
      %v6938 = vcombine.high %v6825, %v6826
      %v6940 = vunpack.c.l.s4 1983009808
      %v6941 = vunpack.c.0.s8 %v6940
      %v6942 = vlaneseq
      %v6943 = vshrl.u32 %v6942, 7
      %v6944 = vsub.s32 %v6941, %v6943
      %v6945 = vrot.slane %v6937, %v6944
      %v6947 = vunpack.c.l.s4 1983009808
      %v6948 = vunpack.c.0.s8 %v6947
      %v6949 = vlaneseq
      %v6950 = vshrl.u32 %v6949, 7
      %v6951 = vsub.s32 %v6948, %v6950
      %v6952 = vrot.slane %v6938, %v6951
      %v6953 = vcombine.high %v6945, %v6945
      %v6954 = vcombine.high %v6952, %v6952
      %v6955 = vcombine.low %v6827, %v6828
      %v6956 = vcombine.high %v6827, %v6828
      %v6958 = vunpack.c.l.s4 1983009808
      %v6959 = vunpack.c.0.s8 %v6958
      %v6960 = vlaneseq
      %v6961 = vshrl.u32 %v6960, 7
      %v6962 = vsub.s32 %v6959, %v6961
      %v6963 = vrot.slane %v6955, %v6962
      %v6965 = vunpack.c.l.s4 1983009808
      %v6966 = vunpack.c.0.s8 %v6965
      %v6967 = vlaneseq
      %v6968 = vshrl.u32 %v6967, 7
      %v6969 = vsub.s32 %v6966, %v6968
      %v6970 = vrot.slane %v6956, %v6969
      %v6971 = vcombine.high %v6963, %v6963
      %v6972 = vcombine.high %v6970, %v6970
      %v6973 = vcombine.low %v6829, %v6830
      %v6974 = vcombine.high %v6829, %v6830
      %v6976 = vunpack.c.l.s4 1983009808
      %v6977 = vunpack.c.0.s8 %v6976
      %v6978 = vlaneseq
      %v6979 = vshrl.u32 %v6978, 7
      %v6980 = vsub.s32 %v6977, %v6979
      %v6981 = vrot.slane %v6973, %v6980
      %v6983 = vunpack.c.l.s4 1983009808
      %v6984 = vunpack.c.0.s8 %v6983
      %v6985 = vlaneseq
      %v6986 = vshrl.u32 %v6985, 7
      %v6987 = vsub.s32 %v6984, %v6986
      %v6988 = vrot.slane %v6974, %v6987
      %v6989 = vcombine.high %v6981, %v6981
      %v6990 = vcombine.high %v6988, %v6988
      %s6991 = scalar_lea.vmem %s3, 2048
      %v6992 = vld [vmem:[%s6991] sm:$0xff]
      %v6993 = vld [vmem:[%s6991 + $0x8] sm:$0xff]
      %v6994 = vld [vmem:[%s6991 + $0x10] sm:$0xff]
      %v6995 = vld [vmem:[%s6991 + $0x18] sm:$0xff]
      %v6996 = vld [vmem:[%s6991 + $0x20] sm:$0xff]
      %v6997 = vld [vmem:[%s6991 + $0x28] sm:$0xff]
      %v6998 = vld [vmem:[%s6991 + $0x30] sm:$0xff]
      %v6999 = vld [vmem:[%s6991 + $0x38] sm:$0xff]
      %v7000 = vld [vmem:[%s6991 + $0x40] sm:$0xff]
      %v7001 = vld [vmem:[%s6991 + $0x48] sm:$0xff]
      %v7002 = vld [vmem:[%s6991 + $0x50] sm:$0xff]
      %v7003 = vld [vmem:[%s6991 + $0x58] sm:$0xff]
      %v7004 = vld [vmem:[%s6991 + $0x60] sm:$0xff]
      %v7005 = vld [vmem:[%s6991 + $0x68] sm:$0xff]
      %v7006 = vld [vmem:[%s6991 + $0x70] sm:$0xff]
      %v7007 = vld [vmem:[%s6991 + $0x78] sm:$0xff]
      %v7008 = vld [vmem:[%s6991 + $0x80] sm:$0xff]
      %v7009 = vld [vmem:[%s6991 + $0x88] sm:$0xff]
      %v7010 = vld [vmem:[%s6991 + $0x90] sm:$0xff]
      %v7011 = vld [vmem:[%s6991 + $0x98] sm:$0xff]
      %v7012 = vld [vmem:[%s6991 + $0xa0] sm:$0xff]
      %v7013 = vld [vmem:[%s6991 + $0xa8] sm:$0xff]
      %v7014 = vld [vmem:[%s6991 + $0xb0] sm:$0xff]
      %v7015 = vld [vmem:[%s6991 + $0xb8] sm:$0xff]
      %v7016 = vld [vmem:[%s6991 + $0xc0] sm:$0xff]
      %v7017 = vld [vmem:[%s6991 + $0xc8] sm:$0xff]
      %v7018 = vld [vmem:[%s6991 + $0xd0] sm:$0xff]
      %v7019 = vld [vmem:[%s6991 + $0xd8] sm:$0xff]
      %v7020 = vld [vmem:[%s6991 + $0xe0] sm:$0xff]
      %v7021 = vld [vmem:[%s6991 + $0xe8] sm:$0xff]
      %v7022 = vld [vmem:[%s6991 + $0xf0] sm:$0xff]
      %v7023 = vld [vmem:[%s6991 + $0xf8] sm:$0xff]
      %v7024 = vcombine.low %v6863, %v6862
      %v7025 = vcombine.low %v6864, %v6873
      %v7027 = vunpack.c.l.s4 1983009808
      %v7028 = vunpack.c.0.s8 %v7027
      %v7029 = vlaneseq
      %v7030 = vshrl.u32 %v7029, 7
      %v7031 = vsub.s32 %v7028, %v7030
      %v7032 = vrot.slane %v7024, %v7031
      %v7034 = vunpack.c.l.s4 1983009808
      %v7035 = vunpack.c.0.s8 %v7034
      %v7036 = vlaneseq
      %v7037 = vshrl.u32 %v7036, 7
      %v7038 = vsub.s32 %v7035, %v7037
      %v7039 = vrot.slane %v7025, %v7038
      %v7040 = vcombine.low %v7032, %v7039
      %v7041 = vcombine.high %v7032, %v7039
      %v7042 = vcombine.low %v6881, %v6880
      %v7043 = vcombine.low %v6882, %v6899
      %v7045 = vunpack.c.l.s4 1983009808
      %v7046 = vunpack.c.0.s8 %v7045
      %v7047 = vlaneseq
      %v7048 = vshrl.u32 %v7047, 7
      %v7049 = vsub.s32 %v7046, %v7048
      %v7050 = vrot.slane %v7042, %v7049
      %v7052 = vunpack.c.l.s4 1983009808
      %v7053 = vunpack.c.0.s8 %v7052
      %v7054 = vlaneseq
      %v7055 = vshrl.u32 %v7054, 7
      %v7056 = vsub.s32 %v7053, %v7055
      %v7057 = vrot.slane %v7043, %v7056
      %v7058 = vcombine.low %v7050, %v7057
      %v7059 = vcombine.high %v7050, %v7057
      %v7060 = vcombine.low %v6898, %v6900
      %v7061 = vcombine.low %v6909, %v6917
      %v7063 = vunpack.c.l.s4 1983009808
      %v7064 = vunpack.c.0.s8 %v7063
      %v7065 = vlaneseq
      %v7066 = vshrl.u32 %v7065, 7
      %v7067 = vsub.s32 %v7064, %v7066
      %v7068 = vrot.slane %v7060, %v7067
      %v7070 = vunpack.c.l.s4 1983009808
      %v7071 = vunpack.c.0.s8 %v7070
      %v7072 = vlaneseq
      %v7073 = vshrl.u32 %v7072, 7
      %v7074 = vsub.s32 %v7071, %v7073
      %v7075 = vrot.slane %v7061, %v7074
      %v7076 = vcombine.low %v7068, %v7075
      %v7077 = vcombine.high %v7068, %v7075
      %v7078 = vcombine.low %v6916, %v6918
      %v7079 = vcombine.low %v6935, %v6934
      %v7081 = vunpack.c.l.s4 1983009808
      %v7082 = vunpack.c.0.s8 %v7081
      %v7083 = vlaneseq
      %v7084 = vshrl.u32 %v7083, 7
      %v7085 = vsub.s32 %v7082, %v7084
      %v7086 = vrot.slane %v7078, %v7085
      %v7088 = vunpack.c.l.s4 1983009808
      %v7089 = vunpack.c.0.s8 %v7088
      %v7090 = vlaneseq
      %v7091 = vshrl.u32 %v7090, 7
      %v7092 = vsub.s32 %v7089, %v7091
      %v7093 = vrot.slane %v7079, %v7092
      %v7094 = vcombine.low %v7086, %v7093
      %v7095 = vcombine.high %v7086, %v7093
      %v7096 = vcombine.low %v6936, %v6945
      %v7097 = vcombine.low %v6953, %v6952
      %v7099 = vunpack.c.l.s4 1983009808
      %v7100 = vunpack.c.0.s8 %v7099
      %v7101 = vlaneseq
      %v7102 = vshrl.u32 %v7101, 7
      %v7103 = vsub.s32 %v7100, %v7102
      %v7104 = vrot.slane %v7096, %v7103
      %v7106 = vunpack.c.l.s4 1983009808
      %v7107 = vunpack.c.0.s8 %v7106
      %v7108 = vlaneseq
      %v7109 = vshrl.u32 %v7108, 7
      %v7110 = vsub.s32 %v7107, %v7109
      %v7111 = vrot.slane %v7097, %v7110
      %v7112 = vcombine.low %v7104, %v7111
      %v7113 = vcombine.high %v7104, %v7111
      %v7114 = vcombine.low %v6954, %v6971
      %v7115 = vcombine.low %v6970, %v6972
      %v7117 = vunpack.c.l.s4 1983009808
      %v7118 = vunpack.c.0.s8 %v7117
      %v7119 = vlaneseq
      %v7120 = vshrl.u32 %v7119, 7
      %v7121 = vsub.s32 %v7118, %v7120
      %v7122 = vrot.slane %v7114, %v7121
      %v7124 = vunpack.c.l.s4 1983009808
      %v7125 = vunpack.c.0.s8 %v7124
      %v7126 = vlaneseq
      %v7127 = vshrl.u32 %v7126, 7
      %v7128 = vsub.s32 %v7125, %v7127
      %v7129 = vrot.slane %v7115, %v7128
      %v7130 = vcombine.low %v7122, %v7129
      %v7131 = vcombine.high %v7122, %v7129
      %v7132 = vcombine.low %v6981, %v6989
      %v7133 = vcombine.low %v6988, %v6990
      %v7135 = vunpack.c.l.s4 1983009808
      %v7136 = vunpack.c.0.s8 %v7135
      %v7137 = vlaneseq
      %v7138 = vshrl.u32 %v7137, 7
      %v7139 = vsub.s32 %v7136, %v7138
      %v7140 = vrot.slane %v7132, %v7139
      %v7142 = vunpack.c.l.s4 1983009808
      %v7143 = vunpack.c.0.s8 %v7142
      %v7144 = vlaneseq
      %v7145 = vshrl.u32 %v7144, 7
      %v7146 = vsub.s32 %v7143, %v7145
      %v7147 = vrot.slane %v7133, %v7146
      %v7148 = vcombine.low %v7140, %v7147
      %v7149 = vcombine.high %v7140, %v7147
      %v7196 = vunpack.c.l.b16 %v6992
      %v7197 = vunpack.c.h.b16 %v6992
      %v7198 = vunpack.c.l.b16 %v6993
      %v7199 = vunpack.c.h.b16 %v6993
      %v7200 = vunpack.c.l.b16 %v6994
      %v7201 = vunpack.c.h.b16 %v6994
      %v7202 = vunpack.c.l.b16 %v6995
      %v7203 = vunpack.c.h.b16 %v6995
      %v7204 = vunpack.c.l.b16 %v6996
      %v7205 = vunpack.c.h.b16 %v6996
      %v7206 = vunpack.c.l.b16 %v6997
      %v7207 = vunpack.c.h.b16 %v6997
      %v7208 = vunpack.c.l.b16 %v6998
      %v7209 = vunpack.c.h.b16 %v6998
      %v7210 = vunpack.c.l.b16 %v6999
      %v7211 = vunpack.c.h.b16 %v6999
      %v7212 = vunpack.c.l.b16 %v7000
      %v7213 = vunpack.c.h.b16 %v7000
      %v7214 = vunpack.c.l.b16 %v7001
      %v7215 = vunpack.c.h.b16 %v7001
      %v7216 = vunpack.c.l.b16 %v7002
      %v7217 = vunpack.c.h.b16 %v7002
      %v7218 = vunpack.c.l.b16 %v7003
      %v7219 = vunpack.c.h.b16 %v7003
      %v7220 = vunpack.c.l.b16 %v7004
      %v7221 = vunpack.c.h.b16 %v7004
      %v7222 = vunpack.c.l.b16 %v7005
      %v7223 = vunpack.c.h.b16 %v7005
      %v7224 = vunpack.c.l.b16 %v7006
      %v7225 = vunpack.c.h.b16 %v7006
      %v7226 = vunpack.c.l.b16 %v7007
      %v7227 = vunpack.c.h.b16 %v7007
      %v7228 = vunpack.c.l.b16 %v7008
      %v7229 = vunpack.c.h.b16 %v7008
      %v7230 = vunpack.c.l.b16 %v7009
      %v7231 = vunpack.c.h.b16 %v7009
      %v7232 = vunpack.c.l.b16 %v7010
      %v7233 = vunpack.c.h.b16 %v7010
      %v7234 = vunpack.c.l.b16 %v7011
      %v7235 = vunpack.c.h.b16 %v7011
      %v7236 = vunpack.c.l.b16 %v7012
      %v7237 = vunpack.c.h.b16 %v7012
      %v7238 = vunpack.c.l.b16 %v7013
      %v7239 = vunpack.c.h.b16 %v7013
      %v7240 = vunpack.c.l.b16 %v7014
      %v7241 = vunpack.c.h.b16 %v7014
      %v7242 = vunpack.c.l.b16 %v7015
      %v7243 = vunpack.c.h.b16 %v7015
      %v7244 = vunpack.c.l.b16 %v7016
      %v7245 = vunpack.c.h.b16 %v7016
      %v7246 = vunpack.c.l.b16 %v7017
      %v7247 = vunpack.c.h.b16 %v7017
      %v7248 = vunpack.c.l.b16 %v7018
      %v7249 = vunpack.c.h.b16 %v7018
      %v7250 = vunpack.c.l.b16 %v7019
      %v7251 = vunpack.c.h.b16 %v7019
      %v7252 = vunpack.c.l.b16 %v7020
      %v7253 = vunpack.c.h.b16 %v7020
      %v7254 = vunpack.c.l.b16 %v7021
      %v7255 = vunpack.c.h.b16 %v7021
      %v7256 = vunpack.c.l.b16 %v7022
      %v7257 = vunpack.c.h.b16 %v7022
      %v7258 = vunpack.c.l.b16 %v7023
      %v7259 = vunpack.c.h.b16 %v7023
      %v7260 = vpack.c.b16 %v7198, %v7196
      %v7261 = vpack.c.b16 %v7199, %v7197
      %v7262 = vpack.c.b16 %v7202, %v7200
      %v7263 = vpack.c.b16 %v7203, %v7201
      %v7264 = vpack.c.b16 %v7206, %v7204
      %v7265 = vpack.c.b16 %v7207, %v7205
      %v7266 = vpack.c.b16 %v7210, %v7208
      %v7267 = vpack.c.b16 %v7211, %v7209
      %v7268 = vpack.c.b16 %v7214, %v7212
      %v7269 = vpack.c.b16 %v7215, %v7213
      %v7270 = vpack.c.b16 %v7218, %v7216
      %v7271 = vpack.c.b16 %v7219, %v7217
      %v7272 = vpack.c.b16 %v7222, %v7220
      %v7273 = vpack.c.b16 %v7223, %v7221
      %v7274 = vpack.c.b16 %v7226, %v7224
      %v7275 = vpack.c.b16 %v7227, %v7225
      %v7276 = vpack.c.b16 %v7230, %v7228
      %v7277 = vpack.c.b16 %v7231, %v7229
      %v7278 = vpack.c.b16 %v7234, %v7232
      %v7279 = vpack.c.b16 %v7235, %v7233
      %v7280 = vpack.c.b16 %v7238, %v7236
      %v7281 = vpack.c.b16 %v7239, %v7237
      %v7282 = vpack.c.b16 %v7242, %v7240
      %v7283 = vpack.c.b16 %v7243, %v7241
      %v7284 = vpack.c.b16 %v7246, %v7244
      %v7285 = vpack.c.b16 %v7247, %v7245
      %v7286 = vpack.c.b16 %v7250, %v7248
      %v7287 = vpack.c.b16 %v7251, %v7249
      %v7288 = vpack.c.b16 %v7254, %v7252
      %v7289 = vpack.c.b16 %v7255, %v7253
      %v7290 = vpack.c.b16 %v7258, %v7256
      %v7291 = vpack.c.b16 %v7259, %v7257
      %7324 = vmatprep.subr.bf16.mxu0 %v7261
      %7325 = vmatpush1.bf16.msra.mxu0 %v7260
      %7326 = vmatprep.subr.bf16.mxu0 %v7263
      %7327 = vmatpush1.bf16.msra.mxu0 %v7262
      %7328 = vmatprep.subr.bf16.mxu0 %v7265
      %7329 = vmatpush1.bf16.msra.mxu0 %v7264
      %7330 = vmatprep.subr.bf16.mxu0 %v7267
      %7331 = vmatpush1.bf16.msra.mxu0 %v7266
      %7332 = vmatprep.subr.bf16.mxu0 %v7269
      %7333 = vmatpush1.bf16.msra.mxu0 %v7268
      %7334 = vmatprep.subr.bf16.mxu0 %v7271
      %7335 = vmatpush1.bf16.msra.mxu0 %v7270
      %7336 = vmatprep.subr.bf16.mxu0 %v7273
      %7337 = vmatpush1.bf16.msra.mxu0 %v7272
      %7338 = vmatprep.subr.bf16.mxu0 %v7275
      %7339 = vmatpush1.bf16.msra.mxu0 %v7274
      %7340 = vmatprep.subr.bf16.mxu0 %v7277
      %7341 = vmatpush1.bf16.msra.mxu0 %v7276
      %7342 = vmatprep.subr.bf16.mxu0 %v7279
      %7343 = vmatpush1.bf16.msra.mxu0 %v7278
      %7344 = vmatprep.subr.bf16.mxu0 %v7281
      %7345 = vmatpush1.bf16.msra.mxu0 %v7280
      %7346 = vmatprep.subr.bf16.mxu0 %v7283
      %7347 = vmatpush1.bf16.msra.mxu0 %v7282
      %7348 = vmatprep.subr.bf16.mxu0 %v7285
      %7349 = vmatpush1.bf16.msra.mxu0 %v7284
      %7350 = vmatprep.subr.bf16.mxu0 %v7287
      %7351 = vmatpush1.bf16.msra.mxu0 %v7286
      %7352 = vmatprep.subr.bf16.mxu0 %v7289
      %7353 = vmatpush1.bf16.msra.mxu0 %v7288
      %7354 = vmatprep.subr.bf16.mxu0 %v7291
      %7355 = vmatpush1.bf16.msra.mxu0 %v7290
      %7356 = vmatprep.mubr.bf16.mxu0 %v7041
      %7357 = vmatmul.mubr.bf16.gmra.mrb[0].mxu0 %v7040
      %v7358 = vpop.f32.mrb[0].mxu0
      %v7359 = vadd.f32 0.0, %v7358
      %v7360 = vpop.f32.mrb[0].mxu0
      %v7361 = vadd.f32 0.0, %v7360
      %v7362 = vpop.f32.mrb[0].mxu0
      %v7363 = vadd.f32 0.0, %v7362
      %v7364 = vpop.f32.mrb[0].mxu0
      %v7365 = vadd.f32 0.0, %v7364
      %7366 = vmatprep.mubr.bf16.mxu0 %v7059
      %7367 = vmatmul.mubr.bf16.gmra.mrb[0].mxu0 %v7058
      %v7368 = vpop.f32.mrb[0].mxu0
      %v7369 = vadd.f32 0.0, %v7368
      %v7370 = vpop.f32.mrb[0].mxu0
      %v7371 = vadd.f32 0.0, %v7370
      %v7372 = vpop.f32.mrb[0].mxu0
      %v7373 = vadd.f32 0.0, %v7372
      %v7374 = vpop.f32.mrb[0].mxu0
      %v7375 = vadd.f32 0.0, %v7374
      %7376 = vmatprep.mubr.bf16.mxu0 %v7077
      %7377 = vmatmul.mubr.bf16.gmra.mrb[0].mxu0 %v7076
      %v7378 = vpop.f32.mrb[0].mxu0
      %v7379 = vadd.f32 0.0, %v7378
      %v7380 = vpop.f32.mrb[0].mxu0
      %v7381 = vadd.f32 0.0, %v7380
      %v7382 = vpop.f32.mrb[0].mxu0
      %v7383 = vadd.f32 0.0, %v7382
      %v7384 = vpop.f32.mrb[0].mxu0
      %v7385 = vadd.f32 0.0, %v7384
      %7386 = vmatprep.mubr.bf16.mxu0 %v7095
      %7387 = vmatmul.mubr.bf16.gmra.mrb[0].mxu0 %v7094
      %v7388 = vpop.f32.mrb[0].mxu0
      %v7389 = vadd.f32 0.0, %v7388
      %v7390 = vpop.f32.mrb[0].mxu0
      %v7391 = vadd.f32 0.0, %v7390
      %v7392 = vpop.f32.mrb[0].mxu0
      %v7393 = vadd.f32 0.0, %v7392
      %v7394 = vpop.f32.mrb[0].mxu0
      %v7395 = vadd.f32 0.0, %v7394
      %7396 = vmatprep.mubr.bf16.mxu0 %v7113
      %7397 = vmatmul.mubr.bf16.gmra.mrb[0].mxu0 %v7112
      %v7398 = vpop.f32.mrb[0].mxu0
      %v7399 = vadd.f32 0.0, %v7398
      %v7400 = vpop.f32.mrb[0].mxu0
      %v7401 = vadd.f32 0.0, %v7400
      %v7402 = vpop.f32.mrb[0].mxu0
      %v7403 = vadd.f32 0.0, %v7402
      %v7404 = vpop.f32.mrb[0].mxu0
      %v7405 = vadd.f32 0.0, %v7404
      %7406 = vmatprep.mubr.bf16.mxu0 %v7131
      %7407 = vmatmul.mubr.bf16.gmra.mrb[0].mxu0 %v7130
      %v7408 = vpop.f32.mrb[0].mxu0
      %v7409 = vadd.f32 0.0, %v7408
      %v7410 = vpop.f32.mrb[0].mxu0
      %v7411 = vadd.f32 0.0, %v7410
      %v7412 = vpop.f32.mrb[0].mxu0
      %v7413 = vadd.f32 0.0, %v7412
      %v7414 = vpop.f32.mrb[0].mxu0
      %v7415 = vadd.f32 0.0, %v7414
      %7416 = vmatprep.mubr.bf16.mxu0 %v7149
      %7417 = vmatmul.mubr.bf16.gmra.mrb[0].mxu0 %v7148
      %v7418 = vpop.f32.mrb[0].mxu0
      %v7419 = vadd.f32 0.0, %v7418
      %v7420 = vpop.f32.mrb[0].mxu0
      %v7421 = vadd.f32 0.0, %v7420
      %v7422 = vpop.f32.mrb[0].mxu0
      %v7423 = vadd.f32 0.0, %v7422
      %v7424 = vpop.f32.mrb[0].mxu0
      %v7425 = vadd.f32 0.0, %v7424
      %7426 = vdwg.mxu0
      %v7427 = vld [vmem:[#allocation3] sm:$0xff]
      %v7428 = vld [vmem:[#allocation3 + $0x8] sm:$0xff]
      %v7429 = vld [vmem:[#allocation3 + $0x10] sm:$0xff]
      %v7430 = vld [vmem:[#allocation3 + $0x18] sm:$0xff]
      %v7431 = vld [vmem:[#allocation3 + $0x20] sm:$0xff]
      %v7432 = vld [vmem:[#allocation3 + $0x28] sm:$0xff]
      %v7433 = vld [vmem:[#allocation3 + $0x30] sm:$0xff]
      %v7434 = vld [vmem:[#allocation3 + $0x38] sm:$0xff]
      %v7435 = vld [vmem:[#allocation3 + $0x40] sm:$0xff]
      %v7436 = vld [vmem:[#allocation3 + $0x48] sm:$0xff]
      %v7437 = vld [vmem:[#allocation3 + $0x50] sm:$0xff]
      %v7438 = vld [vmem:[#allocation3 + $0x58] sm:$0xff]
      %v7439 = vld [vmem:[#allocation3 + $0x60] sm:$0xff]
      %v7440 = vld [vmem:[#allocation3 + $0x68] sm:$0xff]
      %v7441 = vld [vmem:[#allocation3 + $0x70] sm:$0xff]
      %v7442 = vld [vmem:[#allocation3 + $0x78] sm:$0xff]
      %v7443 = vld [vmem:[#allocation3 + $0x80] sm:$0xff]
      %v7444 = vld [vmem:[#allocation3 + $0x88] sm:$0xff]
      %v7445 = vld [vmem:[#allocation3 + $0x90] sm:$0xff]
      %v7446 = vld [vmem:[#allocation3 + $0x98] sm:$0xff]
      %v7447 = vld [vmem:[#allocation3 + $0xa0] sm:$0xff]
      %v7448 = vld [vmem:[#allocation3 + $0xa8] sm:$0xff]
      %v7449 = vld [vmem:[#allocation3 + $0xb0] sm:$0xff]
      %v7450 = vld [vmem:[#allocation3 + $0xb8] sm:$0xff]
      %v7451 = vld [vmem:[#allocation3 + $0xc0] sm:$0xff]
      %v7452 = vld [vmem:[#allocation3 + $0xc8] sm:$0xff]
      %v7453 = vld [vmem:[#allocation3 + $0xd0] sm:$0xff]
      %v7454 = vld [vmem:[#allocation3 + $0xd8] sm:$0xff]
      %v7455 = vadd.f32 %v7427, %v7359
      %v7456 = vadd.f32 %v7428, %v7361
      %v7457 = vadd.f32 %v7429, %v7363
      %v7458 = vadd.f32 %v7430, %v7365
      %v7459 = vadd.f32 %v7431, %v7369
      %v7460 = vadd.f32 %v7432, %v7371
      %v7461 = vadd.f32 %v7433, %v7373
      %v7462 = vadd.f32 %v7434, %v7375
      %v7463 = vadd.f32 %v7435, %v7379
      %v7464 = vadd.f32 %v7436, %v7381
      %v7465 = vadd.f32 %v7437, %v7383
      %v7466 = vadd.f32 %v7438, %v7385
      %v7467 = vadd.f32 %v7439, %v7389
      %v7468 = vadd.f32 %v7440, %v7391
      %v7469 = vadd.f32 %v7441, %v7393
      %v7470 = vadd.f32 %v7442, %v7395
      %v7471 = vadd.f32 %v7443, %v7399
      %v7472 = vadd.f32 %v7444, %v7401
      %v7473 = vadd.f32 %v7445, %v7403
      %v7474 = vadd.f32 %v7446, %v7405
      %v7475 = vadd.f32 %v7447, %v7409
      %v7476 = vadd.f32 %v7448, %v7411
      %v7477 = vadd.f32 %v7449, %v7413
      %v7478 = vadd.f32 %v7450, %v7415
      %v7479 = vadd.f32 %v7451, %v7419
      %v7480 = vadd.f32 %v7452, %v7421
      %v7481 = vadd.f32 %v7453, %v7423
      %v7482 = vadd.f32 %v7454, %v7425
      %7483 = vst [vmem:[#allocation3] sm:$0xff] %v7455
      %7484 = vst [vmem:[#allocation3 + $0x8] sm:$0xff] %v7456
      %7485 = vst [vmem:[#allocation3 + $0x10] sm:$0xff] %v7457
      %7486 = vst [vmem:[#allocation3 + $0x18] sm:$0xff] %v7458
      %7487 = vst [vmem:[#allocation3 + $0x20] sm:$0xff] %v7459
      %7488 = vst [vmem:[#allocation3 + $0x28] sm:$0xff] %v7460
      %7489 = vst [vmem:[#allocation3 + $0x30] sm:$0xff] %v7461
      %7490 = vst [vmem:[#allocation3 + $0x38] sm:$0xff] %v7462
      %7491 = vst [vmem:[#allocation3 + $0x40] sm:$0xff] %v7463
      %7492 = vst [vmem:[#allocation3 + $0x48] sm:$0xff] %v7464
      %7493 = vst [vmem:[#allocation3 + $0x50] sm:$0xff] %v7465
      %7494 = vst [vmem:[#allocation3 + $0x58] sm:$0xff] %v7466
      %7495 = vst [vmem:[#allocation3 + $0x60] sm:$0xff] %v7467
      %7496 = vst [vmem:[#allocation3 + $0x68] sm:$0xff] %v7468
      %7497 = vst [vmem:[#allocation3 + $0x70] sm:$0xff] %v7469
      %7498 = vst [vmem:[#allocation3 + $0x78] sm:$0xff] %v7470
      %7499 = vst [vmem:[#allocation3 + $0x80] sm:$0xff] %v7471
      %7500 = vst [vmem:[#allocation3 + $0x88] sm:$0xff] %v7472
      %7501 = vst [vmem:[#allocation3 + $0x90] sm:$0xff] %v7473
      %7502 = vst [vmem:[#allocation3 + $0x98] sm:$0xff] %v7474
      %7503 = vst [vmem:[#allocation3 + $0xa0] sm:$0xff] %v7475
      %7504 = vst [vmem:[#allocation3 + $0xa8] sm:$0xff] %v7476
      %7505 = vst [vmem:[#allocation3 + $0xb0] sm:$0xff] %v7477
      %7506 = vst [vmem:[#allocation3 + $0xb8] sm:$0xff] %v7478
      %7507 = vst [vmem:[#allocation3 + $0xc0] sm:$0xff] %v7479
      %7508 = vst [vmem:[#allocation3 + $0xc8] sm:$0xff] %v7480
      %7509 = vst [vmem:[#allocation3 + $0xd0] sm:$0xff] %v7481
      %7510 = vst [vmem:[#allocation3 + $0xd8] sm:$0xff] %v7482
      %v7511 = vld [vmem:[#allocation3] sm:$0xff]
      %v7512 = vld [vmem:[#allocation3 + $0x8] sm:$0xff]
      %v7513 = vld [vmem:[#allocation3 + $0x10] sm:$0xff]
      %v7514 = vld [vmem:[#allocation3 + $0x18] sm:$0xff]
      %v7515 = vld [vmem:[#allocation3 + $0x20] sm:$0xff]
      %v7516 = vld [vmem:[#allocation3 + $0x28] sm:$0xff]
      %v7517 = vld [vmem:[#allocation3 + $0x30] sm:$0xff]
      %v7518 = vld [vmem:[#allocation3 + $0x38] sm:$0xff]
      %v7519 = vld [vmem:[#allocation3 + $0x40] sm:$0xff]
      %v7520 = vld [vmem:[#allocation3 + $0x48] sm:$0xff]
      %v7521 = vld [vmem:[#allocation3 + $0x50] sm:$0xff]
      %v7522 = vld [vmem:[#allocation3 + $0x58] sm:$0xff]
      %v7523 = vld [vmem:[#allocation3 + $0x60] sm:$0xff]
      %v7524 = vld [vmem:[#allocation3 + $0x68] sm:$0xff]
      %v7525 = vld [vmem:[#allocation3 + $0x70] sm:$0xff]
      %v7526 = vld [vmem:[#allocation3 + $0x78] sm:$0xff]
      %v7527 = vld [vmem:[#allocation3 + $0x80] sm:$0xff]
      %v7528 = vld [vmem:[#allocation3 + $0x88] sm:$0xff]
      %v7529 = vld [vmem:[#allocation3 + $0x90] sm:$0xff]
      %v7530 = vld [vmem:[#allocation3 + $0x98] sm:$0xff]
      %v7531 = vld [vmem:[#allocation3 + $0xa0] sm:$0xff]
      %v7532 = vld [vmem:[#allocation3 + $0xa8] sm:$0xff]
      %v7533 = vld [vmem:[#allocation3 + $0xb0] sm:$0xff]
      %v7534 = vld [vmem:[#allocation3 + $0xb8] sm:$0xff]
      %v7535 = vld [vmem:[#allocation3 + $0xc0] sm:$0xff]
      %v7536 = vld [vmem:[#allocation3 + $0xc8] sm:$0xff]
      %v7537 = vld [vmem:[#allocation3 + $0xd0] sm:$0xff]
      %v7538 = vld [vmem:[#allocation3 + $0xd8] sm:$0xff]
      %v7539 = vpack.c.bf16 %v7513, %v7511
      %v7540 = vpack.c.bf16 %v7514, %v7512
      %v7541 = vpack.c.bf16 %v7517, %v7515
      %v7542 = vpack.c.bf16 %v7518, %v7516
      %v7543 = vpack.c.bf16 %v7521, %v7519
      %v7544 = vpack.c.bf16 %v7522, %v7520
      %v7545 = vpack.c.bf16 %v7525, %v7523
      %v7546 = vpack.c.bf16 %v7526, %v7524
      %v7547 = vpack.c.bf16 %v7529, %v7527
      %v7548 = vpack.c.bf16 %v7530, %v7528
      %v7549 = vpack.c.bf16 %v7533, %v7531
      %v7550 = vpack.c.bf16 %v7534, %v7532
      %v7551 = vpack.c.bf16 %v7537, %v7535
      %v7552 = vpack.c.bf16 %v7538, %v7536
      %v7567 = vunpack.c.l.b16 %v7539
      %v7568 = vunpack.c.l.b16 %v7540
      %v7569 = vunpack.c.h.b16 %v7539
      %v7570 = vunpack.c.h.b16 %v7540
      %v7571 = vunpack.c.l.b16 %v7541
      %v7572 = vunpack.c.l.b16 %v7542
      %v7573 = vunpack.c.h.b16 %v7541
      %v7574 = vunpack.c.h.b16 %v7542
      %v7575 = vunpack.c.l.b16 %v7543
      %v7576 = vunpack.c.l.b16 %v7544
      %v7577 = vunpack.c.h.b16 %v7543
      %v7578 = vunpack.c.h.b16 %v7544
      %v7579 = vunpack.c.l.b16 %v7545
      %v7580 = vunpack.c.l.b16 %v7546
      %v7581 = vunpack.c.h.b16 %v7545
      %v7582 = vunpack.c.h.b16 %v7546
      %v7583 = vunpack.c.l.b16 %v7547
      %v7584 = vunpack.c.l.b16 %v7548
      %v7585 = vunpack.c.h.b16 %v7547
      %v7586 = vunpack.c.h.b16 %v7548
      %v7587 = vunpack.c.l.b16 %v7549
      %v7588 = vunpack.c.l.b16 %v7550
      %v7589 = vunpack.c.h.b16 %v7549
      %v7590 = vunpack.c.h.b16 %v7550
      %v7591 = vunpack.c.l.b16 %v7551
      %v7592 = vunpack.c.l.b16 %v7552
      %v7593 = vunpack.c.h.b16 %v7551
      %v7594 = vunpack.c.h.b16 %v7552
      %v7595 = vpack.c.b16 %v7568, %v7567
      %v7596 = vpack.c.b16 %v7570, %v7569
      %v7597 = vpack.c.b16 %v7572, %v7571
      %v7598 = vpack.c.b16 %v7574, %v7573
      %v7599 = vpack.c.b16 %v7576, %v7575
      %v7600 = vpack.c.b16 %v7578, %v7577
      %v7601 = vpack.c.b16 %v7580, %v7579
      %v7602 = vpack.c.b16 %v7582, %v7581
      %v7603 = vpack.c.b16 %v7584, %v7583
      %v7604 = vpack.c.b16 %v7586, %v7585
      %v7605 = vpack.c.b16 %v7588, %v7587
      %v7606 = vpack.c.b16 %v7590, %v7589
      %v7607 = vpack.c.b16 %v7592, %v7591
      %v7608 = vpack.c.b16 %v7594, %v7593
      %7623 = vst [vmem:[%s260] sm:$0xff] %v7595
      %7624 = vst [vmem:[%s260 + $0x8] sm:$0xff] %v7596
      %7625 = vst [vmem:[%s260 + $0x10] sm:$0xff] %v7597
      %7626 = vst [vmem:[%s260 + $0x18] sm:$0xff] %v7598
      %7627 = vst [vmem:[%s260 + $0x20] sm:$0xff] %v7599
      %7628 = vst [vmem:[%s260 + $0x28] sm:$0xff] %v7600
      %7629 = vst [vmem:[%s260 + $0x30] sm:$0xff] %v7601
      %7630 = vst [vmem:[%s260 + $0x38] sm:$0xff] %v7602
      %7631 = vst [vmem:[%s260 + $0x40] sm:$0xff] %v7603
      %7632 = vst [vmem:[%s260 + $0x48] sm:$0xff] %v7604
      %7633 = vst [vmem:[%s260 + $0x50] sm:$0xff] %v7605
      %7634 = vst [vmem:[%s260 + $0x58] sm:$0xff] %v7606
      %7635 = vst [vmem:[%s260 + $0x60] sm:$0xff] %v7607
      %7636 = vst [vmem:[%s260 + $0x68] sm:$0xff] %v7608
      %v7637 = vadd.f32 %v7511, %v7513
      %v7638 = vadd.f32 %v7637, %v7515
      %v7639 = vadd.f32 %v7638, %v7517
      %v7640 = vadd.f32 %v7639, %v7519
      %v7641 = vadd.f32 %v7640, %v7521
      %v7642 = vadd.f32 %v7641, %v7523
      %v7643 = vadd.f32 %v7642, %v7525
      %v7644 = vadd.f32 %v7643, %v7527
      %v7645 = vadd.f32 %v7644, %v7529
      %v7646 = vadd.f32 %v7645, %v7531
      %v7647 = vadd.f32 %v7646, %v7533
      %v7648 = vadd.f32 %v7647, %v7535
      %v7649 = vadd.f32 %v7648, %v7537
      %v7650 = vrot.slane %v7649, 4
      %v7651 = vadd.f32 %v7649, %v7650
      %v7652 = vrot.slane %v7651, 2
      %v7653 = vadd.f32 %v7651, %v7652
      %v7654 = vrot.slane %v7653, 1
      %v7655 = vadd.f32 %v7653, %v7654
      %v7656 = vadd.f32 %v7512, %v7514
      %v7657 = vadd.f32 %v7656, %v7516
      %v7658 = vadd.f32 %v7657, %v7518
      %v7659 = vadd.f32 %v7658, %v7520
      %v7660 = vadd.f32 %v7659, %v7522
      %v7661 = vadd.f32 %v7660, %v7524
      %v7662 = vadd.f32 %v7661, %v7526
      %v7663 = vadd.f32 %v7662, %v7528
      %v7664 = vadd.f32 %v7663, %v7530
      %v7665 = vadd.f32 %v7664, %v7532
      %v7666 = vadd.f32 %v7665, %v7534
      %v7667 = vadd.f32 %v7666, %v7536
      %v7668 = vadd.f32 %v7667, %v7538
      %v7669 = vrot.slane %v7668, 4
      %v7670 = vadd.f32 %v7668, %v7669
      %v7671 = vrot.slane %v7670, 2
      %v7672 = vadd.f32 %v7670, %v7671
      %v7673 = vrot.slane %v7672, 1
      %v7674 = vadd.f32 %v7672, %v7673
      %v7677 = vcombine.low %v7655, %v7674
      %v7679 = vunpack.c.l.s4 1966171168
      %v7680 = vunpack.c.0.s8 %v7679
      %v7681 = vlaneseq
      %v7682 = vshrl.u32 %v7681, 7
      %v7683 = vsub.s32 %v7680, %v7682
      %v7684 = vrot.slane %v7677, %v7683
      %v7686 = vunpack.c.l.s4 1966171168
      %v7687 = vunpack.c.0.s8 %v7686
      %v7688 = vlaneseq
      %v7689 = vshrl.u32 %v7688, 7
      %v7690 = vsub.s32 %v7687, %v7689
      %v7691 = vrot.slane %v7684, %v7690
      %v7693 = vlaneseq
      %vm7694 = vcmp.ge.s32.totalorder %v7693, 0
      %vm7695 = vcmp.lt.s32.totalorder %v7693, 256
      %vm7696 = vmand %vm7694, %vm7695
      %7697 = vst.msk [vmem:[%s272] ss:$2 sm:$0x3] %vm7696, %v7691
      %v7698 = vmul.f32 %v7511, %v7511
      %v7699 = vmul.f32 %v7512, %v7512
      %v7700 = vmul.f32 %v7513, %v7513
      %v7701 = vmul.f32 %v7514, %v7514
      %v7702 = vmul.f32 %v7515, %v7515
      %v7703 = vmul.f32 %v7516, %v7516
      %v7704 = vmul.f32 %v7517, %v7517
      %v7705 = vmul.f32 %v7518, %v7518
      %v7706 = vmul.f32 %v7519, %v7519
      %v7707 = vmul.f32 %v7520, %v7520
      %v7708 = vmul.f32 %v7521, %v7521
      %v7709 = vmul.f32 %v7522, %v7522
      %v7710 = vmul.f32 %v7523, %v7523
      %v7711 = vmul.f32 %v7524, %v7524
      %v7712 = vmul.f32 %v7525, %v7525
      %v7713 = vmul.f32 %v7526, %v7526
      %v7714 = vmul.f32 %v7527, %v7527
      %v7715 = vmul.f32 %v7528, %v7528
      %v7716 = vmul.f32 %v7529, %v7529
      %v7717 = vmul.f32 %v7530, %v7530
      %v7718 = vmul.f32 %v7531, %v7531
      %v7719 = vmul.f32 %v7532, %v7532
      %v7720 = vmul.f32 %v7533, %v7533
      %v7721 = vmul.f32 %v7534, %v7534
      %v7722 = vmul.f32 %v7535, %v7535
      %v7723 = vmul.f32 %v7536, %v7536
      %v7724 = vmul.f32 %v7537, %v7537
      %v7725 = vmul.f32 %v7538, %v7538
      %v7726 = vadd.f32 %v7698, %v7700
      %v7727 = vadd.f32 %v7726, %v7702
      %v7728 = vadd.f32 %v7727, %v7704
      %v7729 = vadd.f32 %v7728, %v7706
      %v7730 = vadd.f32 %v7729, %v7708
      %v7731 = vadd.f32 %v7730, %v7710
      %v7732 = vadd.f32 %v7731, %v7712
      %v7733 = vadd.f32 %v7732, %v7714
      %v7734 = vadd.f32 %v7733, %v7716
      %v7735 = vadd.f32 %v7734, %v7718
      %v7736 = vadd.f32 %v7735, %v7720
      %v7737 = vadd.f32 %v7736, %v7722
      %v7738 = vadd.f32 %v7737, %v7724
      %v7739 = vrot.slane %v7738, 4
      %v7740 = vadd.f32 %v7738, %v7739
      %v7741 = vrot.slane %v7740, 2
      %v7742 = vadd.f32 %v7740, %v7741
      %v7743 = vrot.slane %v7742, 1
      %v7744 = vadd.f32 %v7742, %v7743
      %v7745 = vadd.f32 %v7699, %v7701
      %v7746 = vadd.f32 %v7745, %v7703
      %v7747 = vadd.f32 %v7746, %v7705
      %v7748 = vadd.f32 %v7747, %v7707
      %v7749 = vadd.f32 %v7748, %v7709
      %v7750 = vadd.f32 %v7749, %v7711
      %v7751 = vadd.f32 %v7750, %v7713
      %v7752 = vadd.f32 %v7751, %v7715
      %v7753 = vadd.f32 %v7752, %v7717
      %v7754 = vadd.f32 %v7753, %v7719
      %v7755 = vadd.f32 %v7754, %v7721
      %v7756 = vadd.f32 %v7755, %v7723
      %v7757 = vadd.f32 %v7756, %v7725
      %v7758 = vrot.slane %v7757, 4
      %v7759 = vadd.f32 %v7757, %v7758
      %v7760 = vrot.slane %v7759, 2
      %v7761 = vadd.f32 %v7759, %v7760
      %v7762 = vrot.slane %v7761, 1
      %v7763 = vadd.f32 %v7761, %v7762
      %v7766 = vcombine.low %v7744, %v7763
      %v7768 = vunpack.c.l.s4 1966171168
      %v7769 = vunpack.c.0.s8 %v7768
      %v7770 = vlaneseq
      %v7771 = vshrl.u32 %v7770, 7
      %v7772 = vsub.s32 %v7769, %v7771
      %v7773 = vrot.slane %v7766, %v7772
      %v7775 = vunpack.c.l.s4 1966171168
      %v7776 = vunpack.c.0.s8 %v7775
      %v7777 = vlaneseq
      %v7778 = vshrl.u32 %v7777, 7
      %v7779 = vsub.s32 %v7776, %v7778
      %v7780 = vrot.slane %v7773, %v7779
      %s7782 = scalar_lea.vmem %s272, 1
      %7783 = vst.msk [vmem:[%s7782] ss:$2 sm:$0x3] %vm7696, %v7780
      %s7784 = smul.u32 %s21, 7
      %s7785 = sadd.s32 %s7784, %s22
      %s7786 = smul.u32 14, %s7785
      %p7787 = scmp.lt.s32.totalorder %s7786, 97
      %s7788 = scalar_select %p7787, %s7786, 97
      %s7789 = smul.addr %s7788, 2
      %s7790 = smul.addr %s7789, 4
      %s7791 = scalar_lea.vmem %s4, %s7790
      %p7792 = scmp.lt.s32.totalorder %s21, 0
      %s7793 = scalar_select %p7792, %s21, 0
      %p7794 = scmp.lt.s32.totalorder %s22, 6
      %s7795 = scalar_select %p7794, %s22, 6
      %s7796 = smul.addr %s7795, 2
      %s7797 = smul.addr %s7793, 14
      %s7798 = sadd.s32 %s7796, %s7797
      %s7799 = smul.addr %s7798, 2
      %s7800 = scalar_lea.vmem %s5, %s7799
      // Predicated region
      $region69: #{forward.4} parent=35 // pred_check
        %p7801 = pneg %p140
      $region70: #{forward.4} parent=35 // pred_check_branch
        %7803 = sbr.rel (%p7801) target = $region72
      $region71: #{forward.4} parent=35 // pred_region
        %s7804 = smul.u32 %s21, 7
        %s7805 = sadd.s32 %s7804, %s22
        %s7806 = smul.u32 14, %s7805
      $region72: #{forward.4} parent=35 // pred_fallthru
        _
      // Predicated region
      $region73: #{forward.4} parent=35 // pred_check
        %p7807 = pneg %p168
      $region74: #{forward.4} parent=35 // pred_check_branch
        %7809 = sbr.rel (%p7807) target = $region76
      $region75: #{forward.4} parent=35 // pred_region
        _
      $region76: #{forward.4} parent=35 // pred_fallthru
        _
    $region36: #{forward.4} parent=5 // pred_fallthru
      _
    %p7810 = scmp.le.s32.totalorder 2, %s12
    // Predicated region
    $region77: #{forward.4} parent=5 // pred_check
      %p7811 = pneg %p7810
    $region78: #{forward.4} parent=5 // pred_check_branch
      %7813 = sbr.rel (%p7811) target = $region80
    $region79: #{forward.4} parent=5 // pred_region
      %s7814 = ssub.s32 %s12, 2
      // Predicated region
      $region81: #{forward.4} parent=79 // pred_check
        %p7815 = pneg %p146
      $region82: #{forward.4} parent=79 // pred_check_branch
        %7817 = sbr.rel (%p7815) target = $region84
      $region83: #{forward.4} parent=79 // pred_region
        %s7818 = smul.u32 %s23, 7
        %s7819 = sadd.s32 %s7818, %s24
        %s7820 = smul.u32 14, %s7819
        %p7821 = scmp.lt.s32.totalorder %s7820, 97
        %s7822 = scalar_select %p7821, %s7820, 97
        %s7823 = smul.addr %s7822, 2
        %s7824 = smul.addr %s7823, 4
        %s7825 = scalar_lea.vmem %s4, %s7824
      $region84: #{forward.4} parent=79 // pred_fallthru
        _
      // Predicated region
      $region85: #{forward.4} parent=79 // pred_check
        %p7826 = pneg %p174
      $region86: #{forward.4} parent=79 // pred_check_branch
        %7828 = sbr.rel (%p7826) target = $region88
      $region87: #{forward.4} parent=79 // pred_region
        %p7829 = scmp.lt.s32.totalorder %s23, 0
        %s7830 = scalar_select %p7829, %s23, 0
        %p7831 = scmp.lt.s32.totalorder %s24, 6
        %s7832 = scalar_select %p7831, %s24, 6
        %s7833 = smul.addr %s7832, 2
        %s7834 = smul.addr %s7830, 14
        %s7835 = sadd.s32 %s7833, %s7834
        %s7836 = smul.addr %s7835, 2
        %s7837 = scalar_lea.vmem %s5, %s7836
      $region88: #{forward.4} parent=79 // pred_fallthru
        _
    $region80: #{forward.4} parent=5 // pred_fallthru
      _
  $region6: #{forward.4} parent=0 // loop_footer
    %s16 = sadd.s32 1, %s12
  $region7: #{forward.4} parent=0 // loop_footer_branch
    %11 = sbr.rel target = $region3
  $region8: #{forward.4} parent=0 // loop_exit
    _

</llo_original>
